<compile_context>
chip_gen: v7x
topology: tpu7x:2x2x1
jax: 0.10.0
libtpu: 0.0.40
codegen_flags: <defaults>
</compile_context>

<pallas_src>
import functools

import numpy as np
import jax
import jax.numpy as jnp
from jax.experimental import pallas as pl
from jax.experimental.pallas import tpu as pltpu

# ----- synthetic problem sizes consistent with the module -----
B, H, T = 2, 4, 8            # batch, history length (args.H), horizon (args.T)
NX, NQ, NU = 4, 2, 1         # env.nx, args.nq, env.nu
HDIM = 32                    # args.hdim
KW = 3                       # args.kernel_width
KW_OUT = 1                   # kernel_width_out
NG = 4                       # num_groups
EXPAND = 4                   # deq_expand
DT = 0.1                     # env.dt
EPS = 1e-5

RE = B * H                   # rows of estimation-branch activations
RP = B * T                   # rows of prediction-branch activations


# --------------------- constant helper matrices (numpy) ---------------------
def _block_diag(n, blk, val):
    m = np.zeros((n, n), np.float32)
    for s in range(0, n, blk):
        m[s:s + blk, s:s + blk] = val
    return m


def _shift(n, blk, d):
    # (S @ x)[r] = x[r + d] within each length-`blk` block, zero at block edges.
    m = np.zeros((n, n), np.float32)
    for s in range(0, n, blk):
        for i in range(blk):
            j = i + d
            if 0 <= j < blk:
                m[s + i, s + j] = 1.0
    return m


def _group_avg(c, g):
    return _block_diag(c, c // g, 1.0 / (c // g))


_sel_last = np.zeros((B, RE), np.float32)      # picks row (b, H-1) of est branch
for _b in range(B):
    _sel_last[_b, _b * H + H - 1] = 1.0
_rep_p = np.zeros((RP, B), np.float32)         # broadcasts (B, h) to pred rows
for _b in range(B):
    _rep_p[_b * T:(_b + 1) * T, _b] = 1.0

_CONSTS = {
    'sm_e': _shift(RE, H, -1), 'sp_e': _shift(RE, H, +1),
    'sm_p': _shift(RP, T, -1), 'sp_p': _shift(RP, T, +1),
    'bb_e': _block_diag(RE, H, 1.0 / H), 'bb_p': _block_diag(RP, T, 1.0 / T),
    'gg_h': _group_avg(HDIM, NG), 'gg_e': _group_avg(HDIM * EXPAND, NG),
    'sel_last': _sel_last, 'rep_p': _rep_p,
}

_ACT_NAMES = ('nodes', 'zest2d', 'zpred2d', 'zlast', 'tH', 'tT')
_CONST_NAMES = ('sm_e', 'sp_e', 'sm_p', 'sp_p', 'bb_e', 'bb_p', 'gg_h', 'gg_e',
                'sel_last', 'rep_p')
_WEIGHT_NAMES = (
    'ne_w', 'ne_b', 'ne_g', 'ne_be',
    'z0_w', 'z0_b', 'z0_g', 'z0_be',
    'oe_c1w', 'oe_c1b', 'oe_c2w', 'oe_c2b', 'oe_gng', 'oe_gnb',
    'ie_c1w', 'ie_c1b', 'ie_c2w', 'ie_c2b', 'ie_gng', 'ie_gnb',
    'de_c1w', 'de_c1b', 'de_c2w', 'de_c2b',
    'de_gn1g', 'de_gn1b', 'de_gn2g', 'de_gn2b', 'de_gn3g', 'de_gn3b',
    'dp_c1w', 'dp_c1b', 'dp_c2w', 'dp_c2b',
    'dp_gn1g', 'dp_gn1b', 'dp_gn2g', 'dp_gn2b', 'dp_gn3g', 'dp_gn3b',
    'lz_w', 'lz_b',
    'o1_c1w', 'o1_c1b', 'o1_gng', 'o1_gnb', 'o1_c2w', 'o1_c2b',
    'op_c1w', 'op_c1b', 'op_gng', 'op_gnb', 'op_c2w', 'op_c2b',
)
_INPUT_NAMES = _ACT_NAMES + _CONST_NAMES + _WEIGHT_NAMES


# ----------------------------- fused kernel -----------------------------
def _fused_forward_kernel(*refs, names):
    r = dict(zip(names, refs))
    outest_ref, outpred_ref, dxest_ref, dxpred_ref = refs[len(names):]
    f32 = jnp.float32

    def v(name):
        return r[name][...]

    def mish(x):
        # x * tanh(softplus(x)) with a single exp; exact (to f32) for x >= 20.
        t = jnp.exp(jnp.minimum(x, 20.0))
        tt = t * (t + 2.0)
        return x * (tt / (tt + 2.0))

    def dense(x, w, b):
        return jnp.dot(x, v(w), preferred_element_type=f32) + v(b)

    def layer_norm_mish(h, g, b):
        mu = jnp.mean(h, axis=-1, keepdims=True)
        var = jnp.mean((h - mu) ** 2, axis=-1, keepdims=True)
        return mish((h - mu) * jax.lax.rsqrt(var + EPS) * v(g) + v(b))

    def conv3(x, sm, sp, w, b):
        # 'same' Conv1d (K=3) as one im2col matmul; sm/sp gather x[l-1]/x[l+1]
        # per batch block (zero at sequence edges) -> no in-kernel padding.
        xm = jnp.dot(sm, x, preferred_element_type=f32)
        xp = jnp.dot(sp, x, preferred_element_type=f32)
        cols = jnp.concatenate([xm, x, xp], axis=-1)           # (R, 3*Cin)
        return jnp.dot(cols, v(w), preferred_element_type=f32) + v(b)

    def group_norm(y, bb, gg, g, b):
        # GroupNorm over (length, channels-in-group) per (batch, group), done
        # with block-averaging matmuls (bb averages rows of a batch block,
        # gg averages channels of a group) -> no slices/concats/reshapes.
        mean = jnp.dot(bb, jnp.dot(y, gg, preferred_element_type=f32),
                       preferred_element_type=f32)
        d = y - mean
        var = jnp.dot(bb, jnp.dot(d * d, gg, preferred_element_type=f32),
                      preferred_element_type=f32)
        return d * jax.lax.rsqrt(var + EPS) * v(g) + v(b)

    sm_e, sp_e, bb_e = v('sm_e'), v('sp_e'), v('bb_e')
    sm_p, sp_p, bb_p = v('sm_p'), v('sp_p'), v('bb_p')
    gg_h, gg_e = v('gg_h'), v('gg_e')

    # ---------------- input_layer ----------------
    # shared node encoder on row-stacked [obs ; x_est ; x]
    ne = layer_norm_mish(dense(v('nodes'), 'ne_w', 'ne_b'), 'ne_g', 'ne_be')
    obs_emb = ne[0:RE]
    xest_emb = ne[RE:2 * RE]
    x_emb = ne[2 * RE:2 * RE + RP]

    # obs_encoder -> xest features (history branch, L = H)
    oi = jnp.concatenate([obs_emb, xest_emb, v('tH')], axis=-1)        # (RE, 3h)
    oi = mish(conv3(oi, sm_e, sp_e, 'oe_c1w', 'oe_c1b'))
    oi = conv3(oi, sm_e, sp_e, 'oe_c2w', 'oe_c2b')
    xest = group_norm(oi, bb_e, gg_h, 'oe_gng', 'oe_gnb')              # (RE, h)

    # input_encoder -> xpred features (prediction branch, L = T)
    x0 = layer_norm_mish(dense(v('zlast'), 'z0_w', 'z0_b'), 'z0_g', 'z0_be')   # (B, h)
    x0_rows = jnp.dot(v('rep_p'), x0, preferred_element_type=f32)              # (RP, h)
    ii = jnp.concatenate([x_emb, x0_rows, v('tT')], axis=-1)           # (RP, 3h)
    ii = mish(conv3(ii, sm_p, sp_p, 'ie_c1w', 'ie_c1b'))
    ii = conv3(ii, sm_p, sp_p, 'ie_c2w', 'ie_c2b')
    xpred = group_norm(ii, bb_p, gg_h, 'ie_gng', 'ie_gnb')             # (RP, h)

    # ---------------- deq_layer ----------------
    zest = v('zest2d')                                                 # (RE, h)
    zpred = v('zpred2d')                                               # (RP, h)

    # estimation branch
    ye = mish(conv3(zest, sm_e, sp_e, 'de_c1w', 'de_c1b'))             # (RE, 4h)
    ye = group_norm(ye, bb_e, gg_e, 'de_gn1g', 'de_gn1b')
    ae = conv3(ye, sm_e, sp_e, 'de_c2w', 'de_c2b')                     # (RE, h)
    ce = group_norm(xest + ae, bb_e, gg_h, 'de_gn2g', 'de_gn2b')
    outest = group_norm(mish(zest + ce), bb_e, gg_h, 'de_gn3g', 'de_gn3b')

    zest_last = jnp.dot(v('sel_last'), outest, preferred_element_type=f32)     # (B, h)
    zest_out = dense(zest_last, 'lz_w', 'lz_b')                                # (B, h)
    zest_rows = jnp.dot(v('rep_p'), zest_out, preferred_element_type=f32)      # (RP, h)

    # prediction branch
    yp = mish(conv3(zpred, sm_p, sp_p, 'dp_c1w', 'dp_c1b'))            # (RP, 4h)
    yp = group_norm(yp, bb_p, gg_e, 'dp_gn1g', 'dp_gn1b')
    ap = conv3(yp, sm_p, sp_p, 'dp_c2w', 'dp_c2b')                     # (RP, h)
    cp = group_norm(xpred + zest_rows + ap, bb_p, gg_h, 'dp_gn2g', 'dp_gn2b')
    outpred = group_norm(mish(zpred + cp), bb_p, gg_h, 'dp_gn3g', 'dp_gn3b')

    # ---------------- output_layer ----------------
    oe = conv3(outest, sm_e, sp_e, 'o1_c1w', 'o1_c1b')
    oe = mish(group_norm(oe, bb_e, gg_h, 'o1_gng', 'o1_gnb'))
    dxest = dense(oe, 'o1_c2w', 'o1_c2b')                              # (RE, nx)

    op = conv3(outpred, sm_p, sp_p, 'op_c1w', 'op_c1b')
    op = mish(group_norm(op, bb_p, gg_h, 'op_gng', 'op_gnb'))
    dxpred = dense(op, 'op_c2w', 'op_c2b')                             # (RP, nx)

    outest_ref[...] = outest
    outpred_ref[...] = outpred
    dxest_ref[...] = dxest
    dxpred_ref[...] = dxpred


_OUT_SHAPES = (
    jax.ShapeDtypeStruct((RE, HDIM), jnp.float32),
    jax.ShapeDtypeStruct((RP, HDIM), jnp.float32),
    jax.ShapeDtypeStruct((RE, NX), jnp.float32),
    jax.ShapeDtypeStruct((RP, NX), jnp.float32),
)

_fused_call = pl.pallas_call(
    functools.partial(_fused_forward_kernel, names=_INPUT_NAMES),
    out_shape=_OUT_SHAPES,
    in_specs=[pl.BlockSpec(memory_space=pltpu.MemorySpace.VMEM)] * len(_INPUT_NAMES),
    out_specs=tuple(pl.BlockSpec(memory_space=pltpu.MemorySpace.VMEM)
                    for _ in range(len(_OUT_SHAPES))),
)


# ----------------------------- parameters -----------------------------
def init_params(key):
    keys = iter(jax.random.split(key, 64))

    def w(shape, scale=0.1):
        return scale * jax.random.normal(next(keys), shape, jnp.float32)

    zeros = lambda s: jnp.zeros(s, jnp.float32)
    ones = lambda s: jnp.ones(s, jnp.float32)
    h, e = HDIM, HDIM * EXPAND
    p = {}
    p['time_emb'] = w((T + H, h), 1.0)
    # node_encoder: Linear(nx,h) + LN + Mish  (shared for obs / x_est / x)
    p['ne_w'], p['ne_b'] = w((NX, h)), zeros((1, h))
    p['ne_g'], p['ne_be'] = ones((1, h)), zeros((1, h))
    # z0_encoder: Linear(h,h) + LN + Mish
    p['z0_w'], p['z0_b'] = w((h, h)), zeros((1, h))
    p['z0_g'], p['z0_be'] = ones((1, h)), zeros((1, h))
    # obs_encoder ('oe') / input_encoder ('ie'): Conv(3h,3h)->Mish->Conv(3h,h)->GN
    for pre in ('oe', 'ie'):
        p[pre + '_c1w'], p[pre + '_c1b'] = w((KW * 3 * h, 3 * h)), zeros((1, 3 * h))
        p[pre + '_c2w'], p[pre + '_c2b'] = w((KW * 3 * h, h)), zeros((1, h))
        p[pre + '_gng'], p[pre + '_gnb'] = ones((1, h)), zeros((1, h))
    # deq cells: est ('de') and pred ('dp')
    for pre in ('de', 'dp'):
        p[pre + '_c1w'], p[pre + '_c1b'] = w((KW * h, e)), zeros((1, e))
        p[pre + '_c2w'], p[pre + '_c2b'] = w((KW * e, h)), zeros((1, h))
        p[pre + '_gn1g'], p[pre + '_gn1b'] = ones((1, e)), zeros((1, e))
        p[pre + '_gn2g'], p[pre + '_gn2b'] = ones((1, h)), zeros((1, h))
        p[pre + '_gn3g'], p[pre + '_gn3b'] = ones((1, h)), zeros((1, h))
    p['lz_w'], p['lz_b'] = w((h, h)), zeros((1, h))
    # out_layer1 ('o1', est) and out_layer ('op', pred):
    #   Conv(h,h,K=3)->GN->Mish->Conv(h,nx,K=1)
    for pre in ('o1', 'op'):
        p[pre + '_c1w'], p[pre + '_c1b'] = w((KW * h, h)), zeros((1, h))
        p[pre + '_gng'], p[pre + '_gnb'] = ones((1, h)), zeros((1, h))
        p[pre + '_c2w'], p[pre + '_c2b'] = w((KW_OUT * h, NX)), zeros((1, NX))
    return p


# ----------------------------- forward pass -----------------------------
@jax.jit
def forward(p, obs, x, z, x_est):
    """obs:(B,H,nx)  x:(B,T,nx)  x_est:(B,H,nx)  z=(zest:(B,H,h), zpred:(B,T,h))."""
    h = HDIM
    zest, zpred = z

    # --- layout plumbing outside the kernel (tiny ops, fused by XLA) ---
    inputs = dict(p)
    inputs.update(_CONSTS)
    inputs['nodes'] = jnp.concatenate(
        [obs.reshape(RE, NX), x_est.reshape(RE, NX), x.reshape(RP, NX)], axis=0)
    inputs['zest2d'] = zest.reshape(RE, h)
    inputs['zpred2d'] = zpred.reshape(RP, h)
    inputs['zlast'] = zest[:, -1]
    inputs['tH'] = jnp.tile(p['time_emb'][:H], (B, 1))
    inputs['tT'] = jnp.tile(p['time_emb'][H:], (B, 1))

    outest2d, outpred2d, dxest2d, dxpred2d = _fused_call(
        *[inputs[k] for k in _INPUT_NAMES])

    outest = outest2d.reshape(B, H, h)
    outpred = outpred2d.reshape(B, T, h)
    dx_refest = dxest2d.reshape(B, H, NX)
    dx_refpred = dxpred2d.reshape(B, T, NX)

    # ---------- final assembly (glue, matches the reference) ----------
    dvel = dx_refest[..., NQ:]
    dpos = dx_refest[..., :NQ] * DT
    x_est_out = jnp.concatenate([dpos + obs[..., :NQ], dvel + obs[..., NQ:]], axis=-1)

    vel_ref = dx_refpred[..., NQ:]
    dpos_ref = dx_refpred[..., :NQ] * DT
    x_ref = jnp.concatenate([dpos_ref + x[..., :NQ], vel_ref], axis=-1)
    u_ref = jnp.zeros_like(x_ref[..., :NU])

    out_mpc_dict = {'x_t': x_ref[:, 0], 'x_ref': x_ref, 'u_ref': u_ref, 'x_est': x_est_out}
    out_aux_dict = {'x': x_ref, 'u': u_ref, 'z': (outest, outpred), 'x_est': x_est_out}
    return out_mpc_dict, out_aux_dict


# ----------------------------- main -----------------------------
if __name__ == "__main__":
    params = init_params(jax.random.PRNGKey(42))

    key = jax.random.PRNGKey(0)
    k1, k2, k3, k4, k5 = jax.random.split(key, 5)
    obs = jax.random.normal(k1, (B, H, NX), jnp.float32)
    x = jax.random.normal(k2, (B, T, NX), jnp.float32)
    x_est = jax.random.normal(k3, (B, H, NX), jnp.float32)
    zest0 = jax.random.normal(k4, (B, H, HDIM), jnp.float32)
    zpred0 = jax.random.normal(k5, (B, T, HDIM), jnp.float32)

    out_mpc, out_aux = forward(params, obs, x, (zest0, zpred0), x_est)
    jax.block_until_ready(out_mpc['x_ref'])
    jax.block_until_ready(out_aux['z'])

    # basic sanity
    assert out_mpc['x_ref'].shape == (B, T, NX)
    assert out_mpc['x_est'].shape == (B, H, NX)
    assert out_mpc['u_ref'].shape == (B, T, NU)
    assert out_aux['z'][0].shape == (B, H, HDIM)
    assert out_aux['z'][1].shape == (B, T, HDIM)
    assert bool(jnp.all(jnp.isfinite(out_mpc['x_ref'])))
    assert bool(jnp.all(jnp.isfinite(out_mpc['x_est'])))
    assert bool(jnp.all(jnp.isfinite(out_aux['z'][0])))
    assert bool(jnp.all(jnp.isfinite(out_aux['z'][1])))

    print("KERNEL_OK")
</pallas_src>

<mosaic_0001>
module attributes {stable_mosaic.version = 11 : i64} {
  func.func @_fused_forward_kernel(%arg0: memref<32x4xf32, #tpu.memory_space<vmem>>, %arg1: memref<8x32xf32, #tpu.memory_space<vmem>>, %arg2: memref<16x32xf32, #tpu.memory_space<vmem>>, %arg3: memref<2x32xf32, #tpu.memory_space<vmem>>, %arg4: memref<8x32xf32, #tpu.memory_space<vmem>>, %arg5: memref<16x32xf32, #tpu.memory_space<vmem>>, %arg6: memref<8x8xf32, #tpu.memory_space<vmem>>, %arg7: memref<8x8xf32, #tpu.memory_space<vmem>>, %arg8: memref<16x16xf32, #tpu.memory_space<vmem>>, %arg9: memref<16x16xf32, #tpu.memory_space<vmem>>, %arg10: memref<8x8xf32, #tpu.memory_space<vmem>>, %arg11: memref<16x16xf32, #tpu.memory_space<vmem>>, %arg12: memref<32x32xf32, #tpu.memory_space<vmem>>, %arg13: memref<128x128xf32, #tpu.memory_space<vmem>>, %arg14: memref<2x8xf32, #tpu.memory_space<vmem>>, %arg15: memref<16x2xf32, #tpu.memory_space<vmem>>, %arg16: memref<4x32xf32, #tpu.memory_space<vmem>>, %arg17: memref<1x32xf32, #tpu.memory_space<vmem>>, %arg18: memref<1x32xf32, #tpu.memory_space<vmem>>, %arg19: memref<1x32xf32, #tpu.memory_space<vmem>>, %arg20: memref<32x32xf32, #tpu.memory_space<vmem>>, %arg21: memref<1x32xf32, #tpu.memory_space<vmem>>, %arg22: memref<1x32xf32, #tpu.memory_space<vmem>>, %arg23: memref<1x32xf32, #tpu.memory_space<vmem>>, %arg24: memref<288x96xf32, #tpu.memory_space<vmem>>, %arg25: memref<1x96xf32, #tpu.memory_space<vmem>>, %arg26: memref<288x32xf32, #tpu.memory_space<vmem>>, %arg27: memref<1x32xf32, #tpu.memory_space<vmem>>, %arg28: memref<1x32xf32, #tpu.memory_space<vmem>>, %arg29: memref<1x32xf32, #tpu.memory_space<vmem>>, %arg30: memref<288x96xf32, #tpu.memory_space<vmem>>, %arg31: memref<1x96xf32, #tpu.memory_space<vmem>>, %arg32: memref<288x32xf32, #tpu.memory_space<vmem>>, %arg33: memref<1x32xf32, #tpu.memory_space<vmem>>, %arg34: memref<1x32xf32, #tpu.memory_space<vmem>>, %arg35: memref<1x32xf32, #tpu.memory_space<vmem>>, %arg36: memref<96x128xf32, #tpu.memory_space<vmem>>, %arg37: memref<1x128xf32, #tpu.memory_space<vmem>>, %arg38: memref<384x32xf32, #tpu.memory_space<vmem>>, %arg39: memref<1x32xf32, #tpu.memory_space<vmem>>, %arg40: memref<1x128xf32, #tpu.memory_space<vmem>>, %arg41: memref<1x128xf32, #tpu.memory_space<vmem>>, %arg42: memref<1x32xf32, #tpu.memory_space<vmem>>, %arg43: memref<1x32xf32, #tpu.memory_space<vmem>>, %arg44: memref<1x32xf32, #tpu.memory_space<vmem>>, %arg45: memref<1x32xf32, #tpu.memory_space<vmem>>, %arg46: memref<96x128xf32, #tpu.memory_space<vmem>>, %arg47: memref<1x128xf32, #tpu.memory_space<vmem>>, %arg48: memref<384x32xf32, #tpu.memory_space<vmem>>, %arg49: memref<1x32xf32, #tpu.memory_space<vmem>>, %arg50: memref<1x128xf32, #tpu.memory_space<vmem>>, %arg51: memref<1x128xf32, #tpu.memory_space<vmem>>, %arg52: memref<1x32xf32, #tpu.memory_space<vmem>>, %arg53: memref<1x32xf32, #tpu.memory_space<vmem>>, %arg54: memref<1x32xf32, #tpu.memory_space<vmem>>, %arg55: memref<1x32xf32, #tpu.memory_space<vmem>>, %arg56: memref<32x32xf32, #tpu.memory_space<vmem>>, %arg57: memref<1x32xf32, #tpu.memory_space<vmem>>, %arg58: memref<96x32xf32, #tpu.memory_space<vmem>>, %arg59: memref<1x32xf32, #tpu.memory_space<vmem>>, %arg60: memref<1x32xf32, #tpu.memory_space<vmem>>, %arg61: memref<1x32xf32, #tpu.memory_space<vmem>>, %arg62: memref<32x4xf32, #tpu.memory_space<vmem>>, %arg63: memref<1x4xf32, #tpu.memory_space<vmem>>, %arg64: memref<96x32xf32, #tpu.memory_space<vmem>>, %arg65: memref<1x32xf32, #tpu.memory_space<vmem>>, %arg66: memref<1x32xf32, #tpu.memory_space<vmem>>, %arg67: memref<1x32xf32, #tpu.memory_space<vmem>>, %arg68: memref<32x4xf32, #tpu.memory_space<vmem>>, %arg69: memref<1x4xf32, #tpu.memory_space<vmem>>, %arg70: memref<8x32xf32, #tpu.memory_space<vmem>>, %arg71: memref<16x32xf32, #tpu.memory_space<vmem>>, %arg72: memref<8x4xf32, #tpu.memory_space<vmem>>, %arg73: memref<16x4xf32, #tpu.memory_space<vmem>>) attributes {dimension_semantics = [], scalar_prefetch = 0 : i64, scratch_operands = 0 : i64, tpu.core_type = #tpu.core_type<tc>} {
    %c0 = arith.constant 0 : index
    %c0_0 = arith.constant 0 : index
    %0 = vector.load %arg6[%c0, %c0_0] : memref<8x8xf32, #tpu.memory_space<vmem>>, vector<8x8xf32>
    %c0_1 = arith.constant 0 : index
    %c0_2 = arith.constant 0 : index
    %1 = vector.load %arg7[%c0_1, %c0_2] : memref<8x8xf32, #tpu.memory_space<vmem>>, vector<8x8xf32>
    %c0_3 = arith.constant 0 : index
    %c0_4 = arith.constant 0 : index
    %2 = vector.load %arg10[%c0_3, %c0_4] : memref<8x8xf32, #tpu.memory_space<vmem>>, vector<8x8xf32>
    %c0_5 = arith.constant 0 : index
    %c0_6 = arith.constant 0 : index
    %3 = vector.load %arg8[%c0_5, %c0_6] : memref<16x16xf32, #tpu.memory_space<vmem>>, vector<16x16xf32>
    %c0_7 = arith.constant 0 : index
    %c0_8 = arith.constant 0 : index
    %4 = vector.load %arg9[%c0_7, %c0_8] : memref<16x16xf32, #tpu.memory_space<vmem>>, vector<16x16xf32>
    %c0_9 = arith.constant 0 : index
    %c0_10 = arith.constant 0 : index
    %5 = vector.load %arg11[%c0_9, %c0_10] : memref<16x16xf32, #tpu.memory_space<vmem>>, vector<16x16xf32>
    %c0_11 = arith.constant 0 : index
    %c0_12 = arith.constant 0 : index
    %6 = vector.load %arg12[%c0_11, %c0_12] : memref<32x32xf32, #tpu.memory_space<vmem>>, vector<32x32xf32>
    %c0_13 = arith.constant 0 : index
    %c0_14 = arith.constant 0 : index
    %7 = vector.load %arg13[%c0_13, %c0_14] : memref<128x128xf32, #tpu.memory_space<vmem>>, vector<128x128xf32>
    %c0_15 = arith.constant 0 : index
    %c0_16 = arith.constant 0 : index
    %8 = vector.load %arg0[%c0_15, %c0_16] : memref<32x4xf32, #tpu.memory_space<vmem>>, vector<32x4xf32>
    %c0_17 = arith.constant 0 : index
    %c0_18 = arith.constant 0 : index
    %9 = vector.load %arg16[%c0_17, %c0_18] : memref<4x32xf32, #tpu.memory_space<vmem>>, vector<4x32xf32>
    %cst = arith.constant dense<0.000000e+00> : vector<32x32xf32>
    %10 = tpu.matmul %8, %9, %cst {dimension_numbers = #tpu.dot_dimension_numbers<[1], [0], [0], [1], [0, 0, 1, 1], [], []>} : vector<32x4xf32>, vector<4x32xf32>, vector<32x32xf32> -> vector<32x32xf32>
    %c0_19 = arith.constant 0 : index
    %c0_20 = arith.constant 0 : index
    %11 = vector.load %arg17[%c0_19, %c0_20] : memref<1x32xf32, #tpu.memory_space<vmem>>, vector<1x32xf32>
    %12 = vector.broadcast %11 : vector<1x32xf32> to vector<32x32xf32>
    %13 = arith.addf %10, %12 : vector<32x32xf32>
    %cst_21 = arith.constant dense<0.000000e+00> : vector<32xf32>
    %14 = vector.multi_reduction <add>, %13, %cst_21 [1] : vector<32x32xf32> to vector<32xf32>
    %15 = vector.shape_cast %14 : vector<32xf32> to vector<32x1xf32>
    %cst_22 = arith.constant 3.200000e+01 : f32
    %16 = vector.broadcast %cst_22 : f32 to vector<32x1xf32>
    %17 = arith.divf %15, %16 : vector<32x1xf32>
    %18 = vector.broadcast %17 : vector<32x1xf32> to vector<32x32xf32>
    %19 = arith.subf %13, %18 : vector<32x32xf32>
    %20 = arith.mulf %19, %19 : vector<32x32xf32>
    %cst_23 = arith.constant dense<0.000000e+00> : vector<32xf32>
    %21 = vector.multi_reduction <add>, %20, %cst_23 [1] : vector<32x32xf32> to vector<32xf32>
    %22 = vector.shape_cast %21 : vector<32xf32> to vector<32x1xf32>
    %cst_24 = arith.constant 3.200000e+01 : f32
    %23 = vector.broadcast %cst_24 : f32 to vector<32x1xf32>
    %24 = arith.divf %22, %23 : vector<32x1xf32>
    %25 = vector.broadcast %17 : vector<32x1xf32> to vector<32x32xf32>
    %26 = arith.subf %13, %25 : vector<32x32xf32>
    %cst_25 = arith.constant 9.99999974E-6 : f32
    %27 = vector.broadcast %cst_25 : f32 to vector<32x1xf32>
    %28 = arith.addf %24, %27 : vector<32x1xf32>
    %29 = math.rsqrt %28 : vector<32x1xf32>
    %30 = vector.broadcast %29 : vector<32x1xf32> to vector<32x32xf32>
    %31 = arith.mulf %26, %30 : vector<32x32xf32>
    %c0_26 = arith.constant 0 : index
    %c0_27 = arith.constant 0 : index
    %32 = vector.load %arg18[%c0_26, %c0_27] : memref<1x32xf32, #tpu.memory_space<vmem>>, vector<1x32xf32>
    %33 = vector.broadcast %32 : vector<1x32xf32> to vector<32x32xf32>
    %34 = arith.mulf %31, %33 : vector<32x32xf32>
    %c0_28 = arith.constant 0 : index
    %c0_29 = arith.constant 0 : index
    %35 = vector.load %arg19[%c0_28, %c0_29] : memref<1x32xf32, #tpu.memory_space<vmem>>, vector<1x32xf32>
    %36 = vector.broadcast %35 : vector<1x32xf32> to vector<32x32xf32>
    %37 = arith.addf %34, %36 : vector<32x32xf32>
    %cst_30 = arith.constant 2.000000e+01 : f32
    %38 = vector.broadcast %cst_30 : f32 to vector<32x32xf32>
    %39 = arith.minimumf %37, %38 : vector<32x32xf32>
    %40 = math.exp %39 : vector<32x32xf32>
    %cst_31 = arith.constant 2.000000e+00 : f32
    %41 = vector.broadcast %cst_31 : f32 to vector<32x32xf32>
    %42 = arith.addf %40, %41 : vector<32x32xf32>
    %43 = arith.mulf %40, %42 : vector<32x32xf32>
    %cst_32 = arith.constant 2.000000e+00 : f32
    %44 = vector.broadcast %cst_32 : f32 to vector<32x32xf32>
    %45 = arith.addf %43, %44 : vector<32x32xf32>
    %46 = arith.divf %43, %45 : vector<32x32xf32>
    %47 = arith.mulf %37, %46 : vector<32x32xf32>
    %48 = vector.extract_strided_slice %47 {offsets = [0, 0], sizes = [8, 32], strides = [1, 1]} : vector<32x32xf32> to vector<8x32xf32>
    %49 = vector.extract_strided_slice %47 {offsets = [8, 0], sizes = [8, 32], strides = [1, 1]} : vector<32x32xf32> to vector<8x32xf32>
    %50 = vector.extract_strided_slice %47 {offsets = [16, 0], sizes = [16, 32], strides = [1, 1]} : vector<32x32xf32> to vector<16x32xf32>
    %c0_33 = arith.constant 0 : index
    %c0_34 = arith.constant 0 : index
    %51 = vector.load %arg4[%c0_33, %c0_34] : memref<8x32xf32, #tpu.memory_space<vmem>>, vector<8x32xf32>
    %52 = tpu.concatenate %48, %49, %51 in 1 : vector<8x32xf32>, vector<8x32xf32>, vector<8x32xf32> -> vector<8x96xf32>
    %cst_35 = arith.constant dense<0.000000e+00> : vector<8x96xf32>
    %53 = tpu.matmul %0, %52, %cst_35 {dimension_numbers = #tpu.dot_dimension_numbers<[1], [0], [0], [1], [0, 0, 1, 1], [], []>} : vector<8x8xf32>, vector<8x96xf32>, vector<8x96xf32> -> vector<8x96xf32>
    %cst_36 = arith.constant dense<0.000000e+00> : vector<8x96xf32>
    %54 = tpu.matmul %1, %52, %cst_36 {dimension_numbers = #tpu.dot_dimension_numbers<[1], [0], [0], [1], [0, 0, 1, 1], [], []>} : vector<8x8xf32>, vector<8x96xf32>, vector<8x96xf32> -> vector<8x96xf32>
    %55 = tpu.concatenate %53, %52, %54 in 1 : vector<8x96xf32>, vector<8x96xf32>, vector<8x96xf32> -> vector<8x288xf32>
    %c0_37 = arith.constant 0 : index
    %c0_38 = arith.constant 0 : index
    %56 = vector.load %arg24[%c0_37, %c0_38] : memref<288x96xf32, #tpu.memory_space<vmem>>, vector<288x96xf32>
    %cst_39 = arith.constant dense<0.000000e+00> : vector<8x96xf32>
    %57 = tpu.matmul %55, %56, %cst_39 {dimension_numbers = #tpu.dot_dimension_numbers<[1], [0], [0], [1], [0, 0, 1, 1], [], []>} : vector<8x288xf32>, vector<288x96xf32>, vector<8x96xf32> -> vector<8x96xf32>
    %c0_40 = arith.constant 0 : index
    %c0_41 = arith.constant 0 : index
    %58 = vector.load %arg25[%c0_40, %c0_41] : memref<1x96xf32, #tpu.memory_space<vmem>>, vector<1x96xf32>
    %59 = vector.broadcast %58 : vector<1x96xf32> to vector<8x96xf32>
    %60 = arith.addf %57, %59 : vector<8x96xf32>
    %cst_42 = arith.constant 2.000000e+01 : f32
    %61 = vector.broadcast %cst_42 : f32 to vector<8x96xf32>
    %62 = arith.minimumf %60, %61 : vector<8x96xf32>
    %63 = math.exp %62 : vector<8x96xf32>
    %cst_43 = arith.constant 2.000000e+00 : f32
    %64 = vector.broadcast %cst_43 : f32 to vector<8x96xf32>
    %65 = arith.addf %63, %64 : vector<8x96xf32>
    %66 = arith.mulf %63, %65 : vector<8x96xf32>
    %cst_44 = arith.constant 2.000000e+00 : f32
    %67 = vector.broadcast %cst_44 : f32 to vector<8x96xf32>
    %68 = arith.addf %66, %67 : vector<8x96xf32>
    %69 = arith.divf %66, %68 : vector<8x96xf32>
    %70 = arith.mulf %60, %69 : vector<8x96xf32>
    %cst_45 = arith.constant dense<0.000000e+00> : vector<8x96xf32>
    %71 = tpu.matmul %0, %70, %cst_45 {dimension_numbers = #tpu.dot_dimension_numbers<[1], [0], [0], [1], [0, 0, 1, 1], [], []>} : vector<8x8xf32>, vector<8x96xf32>, vector<8x96xf32> -> vector<8x96xf32>
    %cst_46 = arith.constant dense<0.000000e+00> : vector<8x96xf32>
    %72 = tpu.matmul %1, %70, %cst_46 {dimension_numbers = #tpu.dot_dimension_numbers<[1], [0], [0], [1], [0, 0, 1, 1], [], []>} : vector<8x8xf32>, vector<8x96xf32>, vector<8x96xf32> -> vector<8x96xf32>
    %73 = tpu.concatenate %71, %70, %72 in 1 : vector<8x96xf32>, vector<8x96xf32>, vector<8x96xf32> -> vector<8x288xf32>
    %c0_47 = arith.constant 0 : index
    %c0_48 = arith.constant 0 : index
    %74 = vector.load %arg26[%c0_47, %c0_48] : memref<288x32xf32, #tpu.memory_space<vmem>>, vector<288x32xf32>
    %cst_49 = arith.constant dense<0.000000e+00> : vector<8x32xf32>
    %75 = tpu.matmul %73, %74, %cst_49 {dimension_numbers = #tpu.dot_dimension_numbers<[1], [0], [0], [1], [0, 0, 1, 1], [], []>} : vector<8x288xf32>, vector<288x32xf32>, vector<8x32xf32> -> vector<8x32xf32>
    %c0_50 = arith.constant 0 : index
    %c0_51 = arith.constant 0 : index
    %76 = vector.load %arg27[%c0_50, %c0_51] : memref<1x32xf32, #tpu.memory_space<vmem>>, vector<1x32xf32>
    %77 = vector.broadcast %76 : vector<1x32xf32> to vector<8x32xf32>
    %78 = arith.addf %75, %77 : vector<8x32xf32>
    %cst_52 = arith.constant dense<0.000000e+00> : vector<8x32xf32>
    %79 = tpu.matmul %78, %6, %cst_52 {dimension_numbers = #tpu.dot_dimension_numbers<[1], [0], [0], [1], [0, 0, 1, 1], [], []>} : vector<8x32xf32>, vector<32x32xf32>, vector<8x32xf32> -> vector<8x32xf32>
    %cst_53 = arith.constant dense<0.000000e+00> : vector<8x32xf32>
    %80 = tpu.matmul %2, %79, %cst_53 {dimension_numbers = #tpu.dot_dimension_numbers<[1], [0], [0], [1], [0, 0, 1, 1], [], []>} : vector<8x8xf32>, vector<8x32xf32>, vector<8x32xf32> -> vector<8x32xf32>
    %81 = arith.subf %78, %80 : vector<8x32xf32>
    %82 = arith.mulf %81, %81 : vector<8x32xf32>
    %cst_54 = arith.constant dense<0.000000e+00> : vector<8x32xf32>
    %83 = tpu.matmul %82, %6, %cst_54 {dimension_numbers = #tpu.dot_dimension_numbers<[1], [0], [0], [1], [0, 0, 1, 1], [], []>} : vector<8x32xf32>, vector<32x32xf32>, vector<8x32xf32> -> vector<8x32xf32>
    %cst_55 = arith.constant dense<0.000000e+00> : vector<8x32xf32>
    %84 = tpu.matmul %2, %83, %cst_55 {dimension_numbers = #tpu.dot_dimension_numbers<[1], [0], [0], [1], [0, 0, 1, 1], [], []>} : vector<8x8xf32>, vector<8x32xf32>, vector<8x32xf32> -> vector<8x32xf32>
    %cst_56 = arith.constant 9.99999974E-6 : f32
    %85 = vector.broadcast %cst_56 : f32 to vector<8x32xf32>
    %86 = arith.addf %84, %85 : vector<8x32xf32>
    %87 = math.rsqrt %86 : vector<8x32xf32>
    %88 = arith.mulf %81, %87 : vector<8x32xf32>
    %c0_57 = arith.constant 0 : index
    %c0_58 = arith.constant 0 : index
    %89 = vector.load %arg28[%c0_57, %c0_58] : memref<1x32xf32, #tpu.memory_space<vmem>>, vector<1x32xf32>
    %90 = vector.broadcast %89 : vector<1x32xf32> to vector<8x32xf32>
    %91 = arith.mulf %88, %90 : vector<8x32xf32>
    %c0_59 = arith.constant 0 : index
    %c0_60 = arith.constant 0 : index
    %92 = vector.load %arg29[%c0_59, %c0_60] : memref<1x32xf32, #tpu.memory_space<vmem>>, vector<1x32xf32>
    %93 = vector.broadcast %92 : vector<1x32xf32> to vector<8x32xf32>
    %94 = arith.addf %91, %93 : vector<8x32xf32>
    %c0_61 = arith.constant 0 : index
    %c0_62 = arith.constant 0 : index
    %95 = vector.load %arg3[%c0_61, %c0_62] : memref<2x32xf32, #tpu.memory_space<vmem>>, vector<2x32xf32>
    %c0_63 = arith.constant 0 : index
    %c0_64 = arith.constant 0 : index
    %96 = vector.load %arg20[%c0_63, %c0_64] : memref<32x32xf32, #tpu.memory_space<vmem>>, vector<32x32xf32>
    %cst_65 = arith.constant dense<0.000000e+00> : vector<2x32xf32>
    %97 = tpu.matmul %95, %96, %cst_65 {dimension_numbers = #tpu.dot_dimension_numbers<[1], [0], [0], [1], [0, 0, 1, 1], [], []>} : vector<2x32xf32>, vector<32x32xf32>, vector<2x32xf32> -> vector<2x32xf32>
    %c0_66 = arith.constant 0 : index
    %c0_67 = arith.constant 0 : index
    %98 = vector.load %arg21[%c0_66, %c0_67] : memref<1x32xf32, #tpu.memory_space<vmem>>, vector<1x32xf32>
    %99 = vector.broadcast %98 : vector<1x32xf32> to vector<2x32xf32>
    %100 = arith.addf %97, %99 : vector<2x32xf32>
    %cst_68 = arith.constant dense<0.000000e+00> : vector<2xf32>
    %101 = vector.multi_reduction <add>, %100, %cst_68 [1] : vector<2x32xf32> to vector<2xf32>
    %102 = vector.shape_cast %101 : vector<2xf32> to vector<2x1xf32>
    %cst_69 = arith.constant 3.200000e+01 : f32
    %103 = vector.broadcast %cst_69 : f32 to vector<2x1xf32>
    %104 = arith.divf %102, %103 : vector<2x1xf32>
    %105 = vector.broadcast %104 : vector<2x1xf32> to vector<2x32xf32>
    %106 = arith.subf %100, %105 : vector<2x32xf32>
    %107 = arith.mulf %106, %106 : vector<2x32xf32>
    %cst_70 = arith.constant dense<0.000000e+00> : vector<2xf32>
    %108 = vector.multi_reduction <add>, %107, %cst_70 [1] : vector<2x32xf32> to vector<2xf32>
    %109 = vector.shape_cast %108 : vector<2xf32> to vector<2x1xf32>
    %cst_71 = arith.constant 3.200000e+01 : f32
    %110 = vector.broadcast %cst_71 : f32 to vector<2x1xf32>
    %111 = arith.divf %109, %110 : vector<2x1xf32>
    %112 = vector.broadcast %104 : vector<2x1xf32> to vector<2x32xf32>
    %113 = arith.subf %100, %112 : vector<2x32xf32>
    %cst_72 = arith.constant 9.99999974E-6 : f32
    %114 = vector.broadcast %cst_72 : f32 to vector<2x1xf32>
    %115 = arith.addf %111, %114 : vector<2x1xf32>
    %116 = math.rsqrt %115 : vector<2x1xf32>
    %117 = vector.broadcast %116 : vector<2x1xf32> to vector<2x32xf32>
    %118 = arith.mulf %113, %117 : vector<2x32xf32>
    %c0_73 = arith.constant 0 : index
    %c0_74 = arith.constant 0 : index
    %119 = vector.load %arg22[%c0_73, %c0_74] : memref<1x32xf32, #tpu.memory_space<vmem>>, vector<1x32xf32>
    %120 = vector.broadcast %119 : vector<1x32xf32> to vector<2x32xf32>
    %121 = arith.mulf %118, %120 : vector<2x32xf32>
    %c0_75 = arith.constant 0 : index
    %c0_76 = arith.constant 0 : index
    %122 = vector.load %arg23[%c0_75, %c0_76] : memref<1x32xf32, #tpu.memory_space<vmem>>, vector<1x32xf32>
    %123 = vector.broadcast %122 : vector<1x32xf32> to vector<2x32xf32>
    %124 = arith.addf %121, %123 : vector<2x32xf32>
    %cst_77 = arith.constant 2.000000e+01 : f32
    %125 = vector.broadcast %cst_77 : f32 to vector<2x32xf32>
    %126 = arith.minimumf %124, %125 : vector<2x32xf32>
    %127 = math.exp %126 : vector<2x32xf32>
    %cst_78 = arith.constant 2.000000e+00 : f32
    %128 = vector.broadcast %cst_78 : f32 to vector<2x32xf32>
    %129 = arith.addf %127, %128 : vector<2x32xf32>
    %130 = arith.mulf %127, %129 : vector<2x32xf32>
    %cst_79 = arith.constant 2.000000e+00 : f32
    %131 = vector.broadcast %cst_79 : f32 to vector<2x32xf32>
    %132 = arith.addf %130, %131 : vector<2x32xf32>
    %133 = arith.divf %130, %132 : vector<2x32xf32>
    %134 = arith.mulf %124, %133 : vector<2x32xf32>
    %c0_80 = arith.constant 0 : index
    %c0_81 = arith.constant 0 : index
    %135 = vector.load %arg15[%c0_80, %c0_81] : memref<16x2xf32, #tpu.memory_space<vmem>>, vector<16x2xf32>
    %cst_82 = arith.constant dense<0.000000e+00> : vector<16x32xf32>
    %136 = tpu.matmul %135, %134, %cst_82 {dimension_numbers = #tpu.dot_dimension_numbers<[1], [0], [0], [1], [0, 0, 1, 1], [], []>} : vector<16x2xf32>, vector<2x32xf32>, vector<16x32xf32> -> vector<16x32xf32>
    %c0_83 = arith.constant 0 : index
    %c0_84 = arith.constant 0 : index
    %137 = vector.load %arg5[%c0_83, %c0_84] : memref<16x32xf32, #tpu.memory_space<vmem>>, vector<16x32xf32>
    %138 = tpu.concatenate %50, %136, %137 in 1 : vector<16x32xf32>, vector<16x32xf32>, vector<16x32xf32> -> vector<16x96xf32>
    %cst_85 = arith.constant dense<0.000000e+00> : vector<16x96xf32>
    %139 = tpu.matmul %3, %138, %cst_85 {dimension_numbers = #tpu.dot_dimension_numbers<[1], [0], [0], [1], [0, 0, 1, 1], [], []>} : vector<16x16xf32>, vector<16x96xf32>, vector<16x96xf32> -> vector<16x96xf32>
    %cst_86 = arith.constant dense<0.000000e+00> : vector<16x96xf32>
    %140 = tpu.matmul %4, %138, %cst_86 {dimension_numbers = #tpu.dot_dimension_numbers<[1], [0], [0], [1], [0, 0, 1, 1], [], []>} : vector<16x16xf32>, vector<16x96xf32>, vector<16x96xf32> -> vector<16x96xf32>
    %141 = tpu.concatenate %139, %138, %140 in 1 : vector<16x96xf32>, vector<16x96xf32>, vector<16x96xf32> -> vector<16x288xf32>
    %c0_87 = arith.constant 0 : index
    %c0_88 = arith.constant 0 : index
    %142 = vector.load %arg30[%c0_87, %c0_88] : memref<288x96xf32, #tpu.memory_space<vmem>>, vector<288x96xf32>
    %cst_89 = arith.constant dense<0.000000e+00> : vector<16x96xf32>
    %143 = tpu.matmul %141, %142, %cst_89 {dimension_numbers = #tpu.dot_dimension_numbers<[1], [0], [0], [1], [0, 0, 1, 1], [], []>} : vector<16x288xf32>, vector<288x96xf32>, vector<16x96xf32> -> vector<16x96xf32>
    %c0_90 = arith.constant 0 : index
    %c0_91 = arith.constant 0 : index
    %144 = vector.load %arg31[%c0_90, %c0_91] : memref<1x96xf32, #tpu.memory_space<vmem>>, vector<1x96xf32>
    %145 = vector.broadcast %144 : vector<1x96xf32> to vector<16x96xf32>
    %146 = arith.addf %143, %145 : vector<16x96xf32>
    %cst_92 = arith.constant 2.000000e+01 : f32
    %147 = vector.broadcast %cst_92 : f32 to vector<16x96xf32>
    %148 = arith.minimumf %146, %147 : vector<16x96xf32>
    %149 = math.exp %148 : vector<16x96xf32>
    %cst_93 = arith.constant 2.000000e+00 : f32
    %150 = vector.broadcast %cst_93 : f32 to vector<16x96xf32>
    %151 = arith.addf %149, %150 : vector<16x96xf32>
    %152 = arith.mulf %149, %151 : vector<16x96xf32>
    %cst_94 = arith.constant 2.000000e+00 : f32
    %153 = vector.broadcast %cst_94 : f32 to vector<16x96xf32>
    %154 = arith.addf %152, %153 : vector<16x96xf32>
    %155 = arith.divf %152, %154 : vector<16x96xf32>
    %156 = arith.mulf %146, %155 : vector<16x96xf32>
    %cst_95 = arith.constant dense<0.000000e+00> : vector<16x96xf32>
    %157 = tpu.matmul %3, %156, %cst_95 {dimension_numbers = #tpu.dot_dimension_numbers<[1], [0], [0], [1], [0, 0, 1, 1], [], []>} : vector<16x16xf32>, vector<16x96xf32>, vector<16x96xf32> -> vector<16x96xf32>
    %cst_96 = arith.constant dense<0.000000e+00> : vector<16x96xf32>
    %158 = tpu.matmul %4, %156, %cst_96 {dimension_numbers = #tpu.dot_dimension_numbers<[1], [0], [0], [1], [0, 0, 1, 1], [], []>} : vector<16x16xf32>, vector<16x96xf32>, vector<16x96xf32> -> vector<16x96xf32>
    %159 = tpu.concatenate %157, %156, %158 in 1 : vector<16x96xf32>, vector<16x96xf32>, vector<16x96xf32> -> vector<16x288xf32>
    %c0_97 = arith.constant 0 : index
    %c0_98 = arith.constant 0 : index
    %160 = vector.load %arg32[%c0_97, %c0_98] : memref<288x32xf32, #tpu.memory_space<vmem>>, vector<288x32xf32>
    %cst_99 = arith.constant dense<0.000000e+00> : vector<16x32xf32>
    %161 = tpu.matmul %159, %160, %cst_99 {dimension_numbers = #tpu.dot_dimension_numbers<[1], [0], [0], [1], [0, 0, 1, 1], [], []>} : vector<16x288xf32>, vector<288x32xf32>, vector<16x32xf32> -> vector<16x32xf32>
    %c0_100 = arith.constant 0 : index
    %c0_101 = arith.constant 0 : index
    %162 = vector.load %arg33[%c0_100, %c0_101] : memref<1x32xf32, #tpu.memory_space<vmem>>, vector<1x32xf32>
    %163 = vector.broadcast %162 : vector<1x32xf32> to vector<16x32xf32>
    %164 = arith.addf %161, %163 : vector<16x32xf32>
    %cst_102 = arith.constant dense<0.000000e+00> : vector<16x32xf32>
    %165 = tpu.matmul %164, %6, %cst_102 {dimension_numbers = #tpu.dot_dimension_numbers<[1], [0], [0], [1], [0, 0, 1, 1], [], []>} : vector<16x32xf32>, vector<32x32xf32>, vector<16x32xf32> -> vector<16x32xf32>
    %cst_103 = arith.constant dense<0.000000e+00> : vector<16x32xf32>
    %166 = tpu.matmul %5, %165, %cst_103 {dimension_numbers = #tpu.dot_dimension_numbers<[1], [0], [0], [1], [0, 0, 1, 1], [], []>} : vector<16x16xf32>, vector<16x32xf32>, vector<16x32xf32> -> vector<16x32xf32>
    %167 = arith.subf %164, %166 : vector<16x32xf32>
    %168 = arith.mulf %167, %167 : vector<16x32xf32>
    %cst_104 = arith.constant dense<0.000000e+00> : vector<16x32xf32>
    %169 = tpu.matmul %168, %6, %cst_104 {dimension_numbers = #tpu.dot_dimension_numbers<[1], [0], [0], [1], [0, 0, 1, 1], [], []>} : vector<16x32xf32>, vector<32x32xf32>, vector<16x32xf32> -> vector<16x32xf32>
    %cst_105 = arith.constant dense<0.000000e+00> : vector<16x32xf32>
    %170 = tpu.matmul %5, %169, %cst_105 {dimension_numbers = #tpu.dot_dimension_numbers<[1], [0], [0], [1], [0, 0, 1, 1], [], []>} : vector<16x16xf32>, vector<16x32xf32>, vector<16x32xf32> -> vector<16x32xf32>
    %cst_106 = arith.constant 9.99999974E-6 : f32
    %171 = vector.broadcast %cst_106 : f32 to vector<16x32xf32>
    %172 = arith.addf %170, %171 : vector<16x32xf32>
    %173 = math.rsqrt %172 : vector<16x32xf32>
    %174 = arith.mulf %167, %173 : vector<16x32xf32>
    %c0_107 = arith.constant 0 : index
    %c0_108 = arith.constant 0 : index
    %175 = vector.load %arg34[%c0_107, %c0_108] : memref<1x32xf32, #tpu.memory_space<vmem>>, vector<1x32xf32>
    %176 = vector.broadcast %175 : vector<1x32xf32> to vector<16x32xf32>
    %177 = arith.mulf %174, %176 : vector<16x32xf32>
    %c0_109 = arith.constant 0 : index
    %c0_110 = arith.constant 0 : index
    %178 = vector.load %arg35[%c0_109, %c0_110] : memref<1x32xf32, #tpu.memory_space<vmem>>, vector<1x32xf32>
    %179 = vector.broadcast %178 : vector<1x32xf32> to vector<16x32xf32>
    %180 = arith.addf %177, %179 : vector<16x32xf32>
    %c0_111 = arith.constant 0 : index
    %c0_112 = arith.constant 0 : index
    %181 = vector.load %arg1[%c0_111, %c0_112] : memref<8x32xf32, #tpu.memory_space<vmem>>, vector<8x32xf32>
    %c0_113 = arith.constant 0 : index
    %c0_114 = arith.constant 0 : index
    %182 = vector.load %arg2[%c0_113, %c0_114] : memref<16x32xf32, #tpu.memory_space<vmem>>, vector<16x32xf32>
    %cst_115 = arith.constant dense<0.000000e+00> : vector<8x32xf32>
    %183 = tpu.matmul %0, %181, %cst_115 {dimension_numbers = #tpu.dot_dimension_numbers<[1], [0], [0], [1], [0, 0, 1, 1], [], []>} : vector<8x8xf32>, vector<8x32xf32>, vector<8x32xf32> -> vector<8x32xf32>
    %cst_116 = arith.constant dense<0.000000e+00> : vector<8x32xf32>
    %184 = tpu.matmul %1, %181, %cst_116 {dimension_numbers = #tpu.dot_dimension_numbers<[1], [0], [0], [1], [0, 0, 1, 1], [], []>} : vector<8x8xf32>, vector<8x32xf32>, vector<8x32xf32> -> vector<8x32xf32>
    %185 = tpu.concatenate %183, %181, %184 in 1 : vector<8x32xf32>, vector<8x32xf32>, vector<8x32xf32> -> vector<8x96xf32>
    %c0_117 = arith.constant 0 : index
    %c0_118 = arith.constant 0 : index
    %186 = vector.load %arg36[%c0_117, %c0_118] : memref<96x128xf32, #tpu.memory_space<vmem>>, vector<96x128xf32>
    %cst_119 = arith.constant dense<0.000000e+00> : vector<8x128xf32>
    %187 = tpu.matmul %185, %186, %cst_119 {dimension_numbers = #tpu.dot_dimension_numbers<[1], [0], [0], [1], [0, 0, 1, 1], [], []>} : vector<8x96xf32>, vector<96x128xf32>, vector<8x128xf32> -> vector<8x128xf32>
    %c0_120 = arith.constant 0 : index
    %c0_121 = arith.constant 0 : index
    %188 = vector.load %arg37[%c0_120, %c0_121] : memref<1x128xf32, #tpu.memory_space<vmem>>, vector<1x128xf32>
    %189 = vector.broadcast %188 : vector<1x128xf32> to vector<8x128xf32>
    %190 = arith.addf %187, %189 : vector<8x128xf32>
    %cst_122 = arith.constant 2.000000e+01 : f32
    %191 = vector.broadcast %cst_122 : f32 to vector<8x128xf32>
    %192 = arith.minimumf %190, %191 : vector<8x128xf32>
    %193 = math.exp %192 : vector<8x128xf32>
    %cst_123 = arith.constant 2.000000e+00 : f32
    %194 = vector.broadcast %cst_123 : f32 to vector<8x128xf32>
    %195 = arith.addf %193, %194 : vector<8x128xf32>
    %196 = arith.mulf %193, %195 : vector<8x128xf32>
    %cst_124 = arith.constant 2.000000e+00 : f32
    %197 = vector.broadcast %cst_124 : f32 to vector<8x128xf32>
    %198 = arith.addf %196, %197 : vector<8x128xf32>
    %199 = arith.divf %196, %198 : vector<8x128xf32>
    %200 = arith.mulf %190, %199 : vector<8x128xf32>
    %cst_125 = arith.constant dense<0.000000e+00> : vector<8x128xf32>
    %201 = tpu.matmul %200, %7, %cst_125 {dimension_numbers = #tpu.dot_dimension_numbers<[1], [0], [0], [1], [0, 0, 1, 1], [], []>} : vector<8x128xf32>, vector<128x128xf32>, vector<8x128xf32> -> vector<8x128xf32>
    %cst_126 = arith.constant dense<0.000000e+00> : vector<8x128xf32>
    %202 = tpu.matmul %2, %201, %cst_126 {dimension_numbers = #tpu.dot_dimension_numbers<[1], [0], [0], [1], [0, 0, 1, 1], [], []>} : vector<8x8xf32>, vector<8x128xf32>, vector<8x128xf32> -> vector<8x128xf32>
    %203 = arith.subf %200, %202 : vector<8x128xf32>
    %204 = arith.mulf %203, %203 : vector<8x128xf32>
    %cst_127 = arith.constant dense<0.000000e+00> : vector<8x128xf32>
    %205 = tpu.matmul %204, %7, %cst_127 {dimension_numbers = #tpu.dot_dimension_numbers<[1], [0], [0], [1], [0, 0, 1, 1], [], []>} : vector<8x128xf32>, vector<128x128xf32>, vector<8x128xf32> -> vector<8x128xf32>
    %cst_128 = arith.constant dense<0.000000e+00> : vector<8x128xf32>
    %206 = tpu.matmul %2, %205, %cst_128 {dimension_numbers = #tpu.dot_dimension_numbers<[1], [0], [0], [1], [0, 0, 1, 1], [], []>} : vector<8x8xf32>, vector<8x128xf32>, vector<8x128xf32> -> vector<8x128xf32>
    %cst_129 = arith.constant 9.99999974E-6 : f32
    %207 = vector.broadcast %cst_129 : f32 to vector<8x128xf32>
    %208 = arith.addf %206, %207 : vector<8x128xf32>
    %209 = math.rsqrt %208 : vector<8x128xf32>
    %210 = arith.mulf %203, %209 : vector<8x128xf32>
    %c0_130 = arith.constant 0 : index
    %c0_131 = arith.constant 0 : index
    %211 = vector.load %arg40[%c0_130, %c0_131] : memref<1x128xf32, #tpu.memory_space<vmem>>, vector<1x128xf32>
    %212 = vector.broadcast %211 : vector<1x128xf32> to vector<8x128xf32>
    %213 = arith.mulf %210, %212 : vector<8x128xf32>
    %c0_132 = arith.constant 0 : index
    %c0_133 = arith.constant 0 : index
    %214 = vector.load %arg41[%c0_132, %c0_133] : memref<1x128xf32, #tpu.memory_space<vmem>>, vector<1x128xf32>
    %215 = vector.broadcast %214 : vector<1x128xf32> to vector<8x128xf32>
    %216 = arith.addf %213, %215 : vector<8x128xf32>
    %cst_134 = arith.constant dense<0.000000e+00> : vector<8x128xf32>
    %217 = tpu.matmul %0, %216, %cst_134 {dimension_numbers = #tpu.dot_dimension_numbers<[1], [0], [0], [1], [0, 0, 1, 1], [], []>} : vector<8x8xf32>, vector<8x128xf32>, vector<8x128xf32> -> vector<8x128xf32>
    %cst_135 = arith.constant dense<0.000000e+00> : vector<8x128xf32>
    %218 = tpu.matmul %1, %216, %cst_135 {dimension_numbers = #tpu.dot_dimension_numbers<[1], [0], [0], [1], [0, 0, 1, 1], [], []>} : vector<8x8xf32>, vector<8x128xf32>, vector<8x128xf32> -> vector<8x128xf32>
    %219 = tpu.concatenate %217, %216, %218 in 1 : vector<8x128xf32>, vector<8x128xf32>, vector<8x128xf32> -> vector<8x384xf32>
    %c0_136 = arith.constant 0 : index
    %c0_137 = arith.constant 0 : index
    %220 = vector.load %arg38[%c0_136, %c0_137] : memref<384x32xf32, #tpu.memory_space<vmem>>, vector<384x32xf32>
    %cst_138 = arith.constant dense<0.000000e+00> : vector<8x32xf32>
    %221 = tpu.matmul %219, %220, %cst_138 {dimension_numbers = #tpu.dot_dimension_numbers<[1], [0], [0], [1], [0, 0, 1, 1], [], []>} : vector<8x384xf32>, vector<384x32xf32>, vector<8x32xf32> -> vector<8x32xf32>
    %c0_139 = arith.constant 0 : index
    %c0_140 = arith.constant 0 : index
    %222 = vector.load %arg39[%c0_139, %c0_140] : memref<1x32xf32, #tpu.memory_space<vmem>>, vector<1x32xf32>
    %223 = vector.broadcast %222 : vector<1x32xf32> to vector<8x32xf32>
    %224 = arith.addf %221, %223 : vector<8x32xf32>
    %225 = arith.addf %94, %224 : vector<8x32xf32>
    %cst_141 = arith.constant dense<0.000000e+00> : vector<8x32xf32>
    %226 = tpu.matmul %225, %6, %cst_141 {dimension_numbers = #tpu.dot_dimension_numbers<[1], [0], [0], [1], [0, 0, 1, 1], [], []>} : vector<8x32xf32>, vector<32x32xf32>, vector<8x32xf32> -> vector<8x32xf32>
    %cst_142 = arith.constant dense<0.000000e+00> : vector<8x32xf32>
    %227 = tpu.matmul %2, %226, %cst_142 {dimension_numbers = #tpu.dot_dimension_numbers<[1], [0], [0], [1], [0, 0, 1, 1], [], []>} : vector<8x8xf32>, vector<8x32xf32>, vector<8x32xf32> -> vector<8x32xf32>
    %228 = arith.subf %225, %227 : vector<8x32xf32>
    %229 = arith.mulf %228, %228 : vector<8x32xf32>
    %cst_143 = arith.constant dense<0.000000e+00> : vector<8x32xf32>
    %230 = tpu.matmul %229, %6, %cst_143 {dimension_numbers = #tpu.dot_dimension_numbers<[1], [0], [0], [1], [0, 0, 1, 1], [], []>} : vector<8x32xf32>, vector<32x32xf32>, vector<8x32xf32> -> vector<8x32xf32>
    %cst_144 = arith.constant dense<0.000000e+00> : vector<8x32xf32>
    %231 = tpu.matmul %2, %230, %cst_144 {dimension_numbers = #tpu.dot_dimension_numbers<[1], [0], [0], [1], [0, 0, 1, 1], [], []>} : vector<8x8xf32>, vector<8x32xf32>, vector<8x32xf32> -> vector<8x32xf32>
    %cst_145 = arith.constant 9.99999974E-6 : f32
    %232 = vector.broadcast %cst_145 : f32 to vector<8x32xf32>
    %233 = arith.addf %231, %232 : vector<8x32xf32>
    %234 = math.rsqrt %233 : vector<8x32xf32>
    %235 = arith.mulf %228, %234 : vector<8x32xf32>
    %c0_146 = arith.constant 0 : index
    %c0_147 = arith.constant 0 : index
    %236 = vector.load %arg42[%c0_146, %c0_147] : memref<1x32xf32, #tpu.memory_space<vmem>>, vector<1x32xf32>
    %237 = vector.broadcast %236 : vector<1x32xf32> to vector<8x32xf32>
    %238 = arith.mulf %235, %237 : vector<8x32xf32>
    %c0_148 = arith.constant 0 : index
    %c0_149 = arith.constant 0 : index
    %239 = vector.load %arg43[%c0_148, %c0_149] : memref<1x32xf32, #tpu.memory_space<vmem>>, vector<1x32xf32>
    %240 = vector.broadcast %239 : vector<1x32xf32> to vector<8x32xf32>
    %241 = arith.addf %238, %240 : vector<8x32xf32>
    %242 = arith.addf %181, %241 : vector<8x32xf32>
    %cst_150 = arith.constant 2.000000e+01 : f32
    %243 = vector.broadcast %cst_150 : f32 to vector<8x32xf32>
    %244 = arith.minimumf %242, %243 : vector<8x32xf32>
    %245 = math.exp %244 : vector<8x32xf32>
    %cst_151 = arith.constant 2.000000e+00 : f32
    %246 = vector.broadcast %cst_151 : f32 to vector<8x32xf32>
    %247 = arith.addf %245, %246 : vector<8x32xf32>
    %248 = arith.mulf %245, %247 : vector<8x32xf32>
    %cst_152 = arith.constant 2.000000e+00 : f32
    %249 = vector.broadcast %cst_152 : f32 to vector<8x32xf32>
    %250 = arith.addf %248, %249 : vector<8x32xf32>
    %251 = arith.divf %248, %250 : vector<8x32xf32>
    %252 = arith.mulf %242, %251 : vector<8x32xf32>
    %cst_153 = arith.constant dense<0.000000e+00> : vector<8x32xf32>
    %253 = tpu.matmul %252, %6, %cst_153 {dimension_numbers = #tpu.dot_dimension_numbers<[1], [0], [0], [1], [0, 0, 1, 1], [], []>} : vector<8x32xf32>, vector<32x32xf32>, vector<8x32xf32> -> vector<8x32xf32>
    %cst_154 = arith.constant dense<0.000000e+00> : vector<8x32xf32>
    %254 = tpu.matmul %2, %253, %cst_154 {dimension_numbers = #tpu.dot_dimension_numbers<[1], [0], [0], [1], [0, 0, 1, 1], [], []>} : vector<8x8xf32>, vector<8x32xf32>, vector<8x32xf32> -> vector<8x32xf32>
    %255 = arith.subf %252, %254 : vector<8x32xf32>
    %256 = arith.mulf %255, %255 : vector<8x32xf32>
    %cst_155 = arith.constant dense<0.000000e+00> : vector<8x32xf32>
    %257 = tpu.matmul %256, %6, %cst_155 {dimension_numbers = #tpu.dot_dimension_numbers<[1], [0], [0], [1], [0, 0, 1, 1], [], []>} : vector<8x32xf32>, vector<32x32xf32>, vector<8x32xf32> -> vector<8x32xf32>
    %cst_156 = arith.constant dense<0.000000e+00> : vector<8x32xf32>
    %258 = tpu.matmul %2, %257, %cst_156 {dimension_numbers = #tpu.dot_dimension_numbers<[1], [0], [0], [1], [0, 0, 1, 1], [], []>} : vector<8x8xf32>, vector<8x32xf32>, vector<8x32xf32> -> vector<8x32xf32>
    %cst_157 = arith.constant 9.99999974E-6 : f32
    %259 = vector.broadcast %cst_157 : f32 to vector<8x32xf32>
    %260 = arith.addf %258, %259 : vector<8x32xf32>
    %261 = math.rsqrt %260 : vector<8x32xf32>
    %262 = arith.mulf %255, %261 : vector<8x32xf32>
    %c0_158 = arith.constant 0 : index
    %c0_159 = arith.constant 0 : index
    %263 = vector.load %arg44[%c0_158, %c0_159] : memref<1x32xf32, #tpu.memory_space<vmem>>, vector<1x32xf32>
    %264 = vector.broadcast %263 : vector<1x32xf32> to vector<8x32xf32>
    %265 = arith.mulf %262, %264 : vector<8x32xf32>
    %c0_160 = arith.constant 0 : index
    %c0_161 = arith.constant 0 : index
    %266 = vector.load %arg45[%c0_160, %c0_161] : memref<1x32xf32, #tpu.memory_space<vmem>>, vector<1x32xf32>
    %267 = vector.broadcast %266 : vector<1x32xf32> to vector<8x32xf32>
    %268 = arith.addf %265, %267 : vector<8x32xf32>
    %c0_162 = arith.constant 0 : index
    %c0_163 = arith.constant 0 : index
    %269 = vector.load %arg14[%c0_162, %c0_163] : memref<2x8xf32, #tpu.memory_space<vmem>>, vector<2x8xf32>
    %cst_164 = arith.constant dense<0.000000e+00> : vector<2x32xf32>
    %270 = tpu.matmul %269, %268, %cst_164 {dimension_numbers = #tpu.dot_dimension_numbers<[1], [0], [0], [1], [0, 0, 1, 1], [], []>} : vector<2x8xf32>, vector<8x32xf32>, vector<2x32xf32> -> vector<2x32xf32>
    %c0_165 = arith.constant 0 : index
    %c0_166 = arith.constant 0 : index
    %271 = vector.load %arg56[%c0_165, %c0_166] : memref<32x32xf32, #tpu.memory_space<vmem>>, vector<32x32xf32>
    %cst_167 = arith.constant dense<0.000000e+00> : vector<2x32xf32>
    %272 = tpu.matmul %270, %271, %cst_167 {dimension_numbers = #tpu.dot_dimension_numbers<[1], [0], [0], [1], [0, 0, 1, 1], [], []>} : vector<2x32xf32>, vector<32x32xf32>, vector<2x32xf32> -> vector<2x32xf32>
    %c0_168 = arith.constant 0 : index
    %c0_169 = arith.constant 0 : index
    %273 = vector.load %arg57[%c0_168, %c0_169] : memref<1x32xf32, #tpu.memory_space<vmem>>, vector<1x32xf32>
    %274 = vector.broadcast %273 : vector<1x32xf32> to vector<2x32xf32>
    %275 = arith.addf %272, %274 : vector<2x32xf32>
    %c0_170 = arith.constant 0 : index
    %c0_171 = arith.constant 0 : index
    %276 = vector.load %arg15[%c0_170, %c0_171] : memref<16x2xf32, #tpu.memory_space<vmem>>, vector<16x2xf32>
    %cst_172 = arith.constant dense<0.000000e+00> : vector<16x32xf32>
    %277 = tpu.matmul %276, %275, %cst_172 {dimension_numbers = #tpu.dot_dimension_numbers<[1], [0], [0], [1], [0, 0, 1, 1], [], []>} : vector<16x2xf32>, vector<2x32xf32>, vector<16x32xf32> -> vector<16x32xf32>
    %cst_173 = arith.constant dense<0.000000e+00> : vector<16x32xf32>
    %278 = tpu.matmul %3, %182, %cst_173 {dimension_numbers = #tpu.dot_dimension_numbers<[1], [0], [0], [1], [0, 0, 1, 1], [], []>} : vector<16x16xf32>, vector<16x32xf32>, vector<16x32xf32> -> vector<16x32xf32>
    %cst_174 = arith.constant dense<0.000000e+00> : vector<16x32xf32>
    %279 = tpu.matmul %4, %182, %cst_174 {dimension_numbers = #tpu.dot_dimension_numbers<[1], [0], [0], [1], [0, 0, 1, 1], [], []>} : vector<16x16xf32>, vector<16x32xf32>, vector<16x32xf32> -> vector<16x32xf32>
    %280 = tpu.concatenate %278, %182, %279 in 1 : vector<16x32xf32>, vector<16x32xf32>, vector<16x32xf32> -> vector<16x96xf32>
    %c0_175 = arith.constant 0 : index
    %c0_176 = arith.constant 0 : index
    %281 = vector.load %arg46[%c0_175, %c0_176] : memref<96x128xf32, #tpu.memory_space<vmem>>, vector<96x128xf32>
    %cst_177 = arith.constant dense<0.000000e+00> : vector<16x128xf32>
    %282 = tpu.matmul %280, %281, %cst_177 {dimension_numbers = #tpu.dot_dimension_numbers<[1], [0], [0], [1], [0, 0, 1, 1], [], []>} : vector<16x96xf32>, vector<96x128xf32>, vector<16x128xf32> -> vector<16x128xf32>
    %c0_178 = arith.constant 0 : index
    %c0_179 = arith.constant 0 : index
    %283 = vector.load %arg47[%c0_178, %c0_179] : memref<1x128xf32, #tpu.memory_space<vmem>>, vector<1x128xf32>
    %284 = vector.broadcast %283 : vector<1x128xf32> to vector<16x128xf32>
    %285 = arith.addf %282, %284 : vector<16x128xf32>
    %cst_180 = arith.constant 2.000000e+01 : f32
    %286 = vector.broadcast %cst_180 : f32 to vector<16x128xf32>
    %287 = arith.minimumf %285, %286 : vector<16x128xf32>
    %288 = math.exp %287 : vector<16x128xf32>
    %cst_181 = arith.constant 2.000000e+00 : f32
    %289 = vector.broadcast %cst_181 : f32 to vector<16x128xf32>
    %290 = arith.addf %288, %289 : vector<16x128xf32>
    %291 = arith.mulf %288, %290 : vector<16x128xf32>
    %cst_182 = arith.constant 2.000000e+00 : f32
    %292 = vector.broadcast %cst_182 : f32 to vector<16x128xf32>
    %293 = arith.addf %291, %292 : vector<16x128xf32>
    %294 = arith.divf %291, %293 : vector<16x128xf32>
    %295 = arith.mulf %285, %294 : vector<16x128xf32>
    %cst_183 = arith.constant dense<0.000000e+00> : vector<16x128xf32>
    %296 = tpu.matmul %295, %7, %cst_183 {dimension_numbers = #tpu.dot_dimension_numbers<[1], [0], [0], [1], [0, 0, 1, 1], [], []>} : vector<16x128xf32>, vector<128x128xf32>, vector<16x128xf32> -> vector<16x128xf32>
    %cst_184 = arith.constant dense<0.000000e+00> : vector<16x128xf32>
    %297 = tpu.matmul %5, %296, %cst_184 {dimension_numbers = #tpu.dot_dimension_numbers<[1], [0], [0], [1], [0, 0, 1, 1], [], []>} : vector<16x16xf32>, vector<16x128xf32>, vector<16x128xf32> -> vector<16x128xf32>
    %298 = arith.subf %295, %297 : vector<16x128xf32>
    %299 = arith.mulf %298, %298 : vector<16x128xf32>
    %cst_185 = arith.constant dense<0.000000e+00> : vector<16x128xf32>
    %300 = tpu.matmul %299, %7, %cst_185 {dimension_numbers = #tpu.dot_dimension_numbers<[1], [0], [0], [1], [0, 0, 1, 1], [], []>} : vector<16x128xf32>, vector<128x128xf32>, vector<16x128xf32> -> vector<16x128xf32>
    %cst_186 = arith.constant dense<0.000000e+00> : vector<16x128xf32>
    %301 = tpu.matmul %5, %300, %cst_186 {dimension_numbers = #tpu.dot_dimension_numbers<[1], [0], [0], [1], [0, 0, 1, 1], [], []>} : vector<16x16xf32>, vector<16x128xf32>, vector<16x128xf32> -> vector<16x128xf32>
    %cst_187 = arith.constant 9.99999974E-6 : f32
    %302 = vector.broadcast %cst_187 : f32 to vector<16x128xf32>
    %303 = arith.addf %301, %302 : vector<16x128xf32>
    %304 = math.rsqrt %303 : vector<16x128xf32>
    %305 = arith.mulf %298, %304 : vector<16x128xf32>
    %c0_188 = arith.constant 0 : index
    %c0_189 = arith.constant 0 : index
    %306 = vector.load %arg50[%c0_188, %c0_189] : memref<1x128xf32, #tpu.memory_space<vmem>>, vector<1x128xf32>
    %307 = vector.broadcast %306 : vector<1x128xf32> to vector<16x128xf32>
    %308 = arith.mulf %305, %307 : vector<16x128xf32>
    %c0_190 = arith.constant 0 : index
    %c0_191 = arith.constant 0 : index
    %309 = vector.load %arg51[%c0_190, %c0_191] : memref<1x128xf32, #tpu.memory_space<vmem>>, vector<1x128xf32>
    %310 = vector.broadcast %309 : vector<1x128xf32> to vector<16x128xf32>
    %311 = arith.addf %308, %310 : vector<16x128xf32>
    %cst_192 = arith.constant dense<0.000000e+00> : vector<16x128xf32>
    %312 = tpu.matmul %3, %311, %cst_192 {dimension_numbers = #tpu.dot_dimension_numbers<[1], [0], [0], [1], [0, 0, 1, 1], [], []>} : vector<16x16xf32>, vector<16x128xf32>, vector<16x128xf32> -> vector<16x128xf32>
    %cst_193 = arith.constant dense<0.000000e+00> : vector<16x128xf32>
    %313 = tpu.matmul %4, %311, %cst_193 {dimension_numbers = #tpu.dot_dimension_numbers<[1], [0], [0], [1], [0, 0, 1, 1], [], []>} : vector<16x16xf32>, vector<16x128xf32>, vector<16x128xf32> -> vector<16x128xf32>
    %314 = tpu.concatenate %312, %311, %313 in 1 : vector<16x128xf32>, vector<16x128xf32>, vector<16x128xf32> -> vector<16x384xf32>
    %c0_194 = arith.constant 0 : index
    %c0_195 = arith.constant 0 : index
    %315 = vector.load %arg48[%c0_194, %c0_195] : memref<384x32xf32, #tpu.memory_space<vmem>>, vector<384x32xf32>
    %cst_196 = arith.constant dense<0.000000e+00> : vector<16x32xf32>
    %316 = tpu.matmul %314, %315, %cst_196 {dimension_numbers = #tpu.dot_dimension_numbers<[1], [0], [0], [1], [0, 0, 1, 1], [], []>} : vector<16x384xf32>, vector<384x32xf32>, vector<16x32xf32> -> vector<16x32xf32>
    %c0_197 = arith.constant 0 : index
    %c0_198 = arith.constant 0 : index
    %317 = vector.load %arg49[%c0_197, %c0_198] : memref<1x32xf32, #tpu.memory_space<vmem>>, vector<1x32xf32>
    %318 = vector.broadcast %317 : vector<1x32xf32> to vector<16x32xf32>
    %319 = arith.addf %316, %318 : vector<16x32xf32>
    %320 = arith.addf %180, %277 : vector<16x32xf32>
    %321 = arith.addf %320, %319 : vector<16x32xf32>
    %cst_199 = arith.constant dense<0.000000e+00> : vector<16x32xf32>
    %322 = tpu.matmul %321, %6, %cst_199 {dimension_numbers = #tpu.dot_dimension_numbers<[1], [0], [0], [1], [0, 0, 1, 1], [], []>} : vector<16x32xf32>, vector<32x32xf32>, vector<16x32xf32> -> vector<16x32xf32>
    %cst_200 = arith.constant dense<0.000000e+00> : vector<16x32xf32>
    %323 = tpu.matmul %5, %322, %cst_200 {dimension_numbers = #tpu.dot_dimension_numbers<[1], [0], [0], [1], [0, 0, 1, 1], [], []>} : vector<16x16xf32>, vector<16x32xf32>, vector<16x32xf32> -> vector<16x32xf32>
    %324 = arith.subf %321, %323 : vector<16x32xf32>
    %325 = arith.mulf %324, %324 : vector<16x32xf32>
    %cst_201 = arith.constant dense<0.000000e+00> : vector<16x32xf32>
    %326 = tpu.matmul %325, %6, %cst_201 {dimension_numbers = #tpu.dot_dimension_numbers<[1], [0], [0], [1], [0, 0, 1, 1], [], []>} : vector<16x32xf32>, vector<32x32xf32>, vector<16x32xf32> -> vector<16x32xf32>
    %cst_202 = arith.constant dense<0.000000e+00> : vector<16x32xf32>
    %327 = tpu.matmul %5, %326, %cst_202 {dimension_numbers = #tpu.dot_dimension_numbers<[1], [0], [0], [1], [0, 0, 1, 1], [], []>} : vector<16x16xf32>, vector<16x32xf32>, vector<16x32xf32> -> vector<16x32xf32>
    %cst_203 = arith.constant 9.99999974E-6 : f32
    %328 = vector.broadcast %cst_203 : f32 to vector<16x32xf32>
    %329 = arith.addf %327, %328 : vector<16x32xf32>
    %330 = math.rsqrt %329 : vector<16x32xf32>
    %331 = arith.mulf %324, %330 : vector<16x32xf32>
    %c0_204 = arith.constant 0 : index
    %c0_205 = arith.constant 0 : index
    %332 = vector.load %arg52[%c0_204, %c0_205] : memref<1x32xf32, #tpu.memory_space<vmem>>, vector<1x32xf32>
    %333 = vector.broadcast %332 : vector<1x32xf32> to vector<16x32xf32>
    %334 = arith.mulf %331, %333 : vector<16x32xf32>
    %c0_206 = arith.constant 0 : index
    %c0_207 = arith.constant 0 : index
    %335 = vector.load %arg53[%c0_206, %c0_207] : memref<1x32xf32, #tpu.memory_space<vmem>>, vector<1x32xf32>
    %336 = vector.broadcast %335 : vector<1x32xf32> to vector<16x32xf32>
    %337 = arith.addf %334, %336 : vector<16x32xf32>
    %338 = arith.addf %182, %337 : vector<16x32xf32>
    %cst_208 = arith.constant 2.000000e+01 : f32
    %339 = vector.broadcast %cst_208 : f32 to vector<16x32xf32>
    %340 = arith.minimumf %338, %339 : vector<16x32xf32>
    %341 = math.exp %340 : vector<16x32xf32>
    %cst_209 = arith.constant 2.000000e+00 : f32
    %342 = vector.broadcast %cst_209 : f32 to vector<16x32xf32>
    %343 = arith.addf %341, %342 : vector<16x32xf32>
    %344 = arith.mulf %341, %343 : vector<16x32xf32>
    %cst_210 = arith.constant 2.000000e+00 : f32
    %345 = vector.broadcast %cst_210 : f32 to vector<16x32xf32>
    %346 = arith.addf %344, %345 : vector<16x32xf32>
    %347 = arith.divf %344, %346 : vector<16x32xf32>
    %348 = arith.mulf %338, %347 : vector<16x32xf32>
    %cst_211 = arith.constant dense<0.000000e+00> : vector<16x32xf32>
    %349 = tpu.matmul %348, %6, %cst_211 {dimension_numbers = #tpu.dot_dimension_numbers<[1], [0], [0], [1], [0, 0, 1, 1], [], []>} : vector<16x32xf32>, vector<32x32xf32>, vector<16x32xf32> -> vector<16x32xf32>
    %cst_212 = arith.constant dense<0.000000e+00> : vector<16x32xf32>
    %350 = tpu.matmul %5, %349, %cst_212 {dimension_numbers = #tpu.dot_dimension_numbers<[1], [0], [0], [1], [0, 0, 1, 1], [], []>} : vector<16x16xf32>, vector<16x32xf32>, vector<16x32xf32> -> vector<16x32xf32>
    %351 = arith.subf %348, %350 : vector<16x32xf32>
    %352 = arith.mulf %351, %351 : vector<16x32xf32>
    %cst_213 = arith.constant dense<0.000000e+00> : vector<16x32xf32>
    %353 = tpu.matmul %352, %6, %cst_213 {dimension_numbers = #tpu.dot_dimension_numbers<[1], [0], [0], [1], [0, 0, 1, 1], [], []>} : vector<16x32xf32>, vector<32x32xf32>, vector<16x32xf32> -> vector<16x32xf32>
    %cst_214 = arith.constant dense<0.000000e+00> : vector<16x32xf32>
    %354 = tpu.matmul %5, %353, %cst_214 {dimension_numbers = #tpu.dot_dimension_numbers<[1], [0], [0], [1], [0, 0, 1, 1], [], []>} : vector<16x16xf32>, vector<16x32xf32>, vector<16x32xf32> -> vector<16x32xf32>
    %cst_215 = arith.constant 9.99999974E-6 : f32
    %355 = vector.broadcast %cst_215 : f32 to vector<16x32xf32>
    %356 = arith.addf %354, %355 : vector<16x32xf32>
    %357 = math.rsqrt %356 : vector<16x32xf32>
    %358 = arith.mulf %351, %357 : vector<16x32xf32>
    %c0_216 = arith.constant 0 : index
    %c0_217 = arith.constant 0 : index
    %359 = vector.load %arg54[%c0_216, %c0_217] : memref<1x32xf32, #tpu.memory_space<vmem>>, vector<1x32xf32>
    %360 = vector.broadcast %359 : vector<1x32xf32> to vector<16x32xf32>
    %361 = arith.mulf %358, %360 : vector<16x32xf32>
    %c0_218 = arith.constant 0 : index
    %c0_219 = arith.constant 0 : index
    %362 = vector.load %arg55[%c0_218, %c0_219] : memref<1x32xf32, #tpu.memory_space<vmem>>, vector<1x32xf32>
    %363 = vector.broadcast %362 : vector<1x32xf32> to vector<16x32xf32>
    %364 = arith.addf %361, %363 : vector<16x32xf32>
    %cst_220 = arith.constant dense<0.000000e+00> : vector<8x32xf32>
    %365 = tpu.matmul %0, %268, %cst_220 {dimension_numbers = #tpu.dot_dimension_numbers<[1], [0], [0], [1], [0, 0, 1, 1], [], []>} : vector<8x8xf32>, vector<8x32xf32>, vector<8x32xf32> -> vector<8x32xf32>
    %cst_221 = arith.constant dense<0.000000e+00> : vector<8x32xf32>
    %366 = tpu.matmul %1, %268, %cst_221 {dimension_numbers = #tpu.dot_dimension_numbers<[1], [0], [0], [1], [0, 0, 1, 1], [], []>} : vector<8x8xf32>, vector<8x32xf32>, vector<8x32xf32> -> vector<8x32xf32>
    %367 = tpu.concatenate %365, %268, %366 in 1 : vector<8x32xf32>, vector<8x32xf32>, vector<8x32xf32> -> vector<8x96xf32>
    %c0_222 = arith.constant 0 : index
    %c0_223 = arith.constant 0 : index
    %368 = vector.load %arg58[%c0_222, %c0_223] : memref<96x32xf32, #tpu.memory_space<vmem>>, vector<96x32xf32>
    %cst_224 = arith.constant dense<0.000000e+00> : vector<8x32xf32>
    %369 = tpu.matmul %367, %368, %cst_224 {dimension_numbers = #tpu.dot_dimension_numbers<[1], [0], [0], [1], [0, 0, 1, 1], [], []>} : vector<8x96xf32>, vector<96x32xf32>, vector<8x32xf32> -> vector<8x32xf32>
    %c0_225 = arith.constant 0 : index
    %c0_226 = arith.constant 0 : index
    %370 = vector.load %arg59[%c0_225, %c0_226] : memref<1x32xf32, #tpu.memory_space<vmem>>, vector<1x32xf32>
    %371 = vector.broadcast %370 : vector<1x32xf32> to vector<8x32xf32>
    %372 = arith.addf %369, %371 : vector<8x32xf32>
    %cst_227 = arith.constant dense<0.000000e+00> : vector<8x32xf32>
    %373 = tpu.matmul %372, %6, %cst_227 {dimension_numbers = #tpu.dot_dimension_numbers<[1], [0], [0], [1], [0, 0, 1, 1], [], []>} : vector<8x32xf32>, vector<32x32xf32>, vector<8x32xf32> -> vector<8x32xf32>
    %cst_228 = arith.constant dense<0.000000e+00> : vector<8x32xf32>
    %374 = tpu.matmul %2, %373, %cst_228 {dimension_numbers = #tpu.dot_dimension_numbers<[1], [0], [0], [1], [0, 0, 1, 1], [], []>} : vector<8x8xf32>, vector<8x32xf32>, vector<8x32xf32> -> vector<8x32xf32>
    %375 = arith.subf %372, %374 : vector<8x32xf32>
    %376 = arith.mulf %375, %375 : vector<8x32xf32>
    %cst_229 = arith.constant dense<0.000000e+00> : vector<8x32xf32>
    %377 = tpu.matmul %376, %6, %cst_229 {dimension_numbers = #tpu.dot_dimension_numbers<[1], [0], [0], [1], [0, 0, 1, 1], [], []>} : vector<8x32xf32>, vector<32x32xf32>, vector<8x32xf32> -> vector<8x32xf32>
    %cst_230 = arith.constant dense<0.000000e+00> : vector<8x32xf32>
    %378 = tpu.matmul %2, %377, %cst_230 {dimension_numbers = #tpu.dot_dimension_numbers<[1], [0], [0], [1], [0, 0, 1, 1], [], []>} : vector<8x8xf32>, vector<8x32xf32>, vector<8x32xf32> -> vector<8x32xf32>
    %cst_231 = arith.constant 9.99999974E-6 : f32
    %379 = vector.broadcast %cst_231 : f32 to vector<8x32xf32>
    %380 = arith.addf %378, %379 : vector<8x32xf32>
    %381 = math.rsqrt %380 : vector<8x32xf32>
    %382 = arith.mulf %375, %381 : vector<8x32xf32>
    %c0_232 = arith.constant 0 : index
    %c0_233 = arith.constant 0 : index
    %383 = vector.load %arg60[%c0_232, %c0_233] : memref<1x32xf32, #tpu.memory_space<vmem>>, vector<1x32xf32>
    %384 = vector.broadcast %383 : vector<1x32xf32> to vector<8x32xf32>
    %385 = arith.mulf %382, %384 : vector<8x32xf32>
    %c0_234 = arith.constant 0 : index
    %c0_235 = arith.constant 0 : index
    %386 = vector.load %arg61[%c0_234, %c0_235] : memref<1x32xf32, #tpu.memory_space<vmem>>, vector<1x32xf32>
    %387 = vector.broadcast %386 : vector<1x32xf32> to vector<8x32xf32>
    %388 = arith.addf %385, %387 : vector<8x32xf32>
    %cst_236 = arith.constant 2.000000e+01 : f32
    %389 = vector.broadcast %cst_236 : f32 to vector<8x32xf32>
    %390 = arith.minimumf %388, %389 : vector<8x32xf32>
    %391 = math.exp %390 : vector<8x32xf32>
    %cst_237 = arith.constant 2.000000e+00 : f32
    %392 = vector.broadcast %cst_237 : f32 to vector<8x32xf32>
    %393 = arith.addf %391, %392 : vector<8x32xf32>
    %394 = arith.mulf %391, %393 : vector<8x32xf32>
    %cst_238 = arith.constant 2.000000e+00 : f32
    %395 = vector.broadcast %cst_238 : f32 to vector<8x32xf32>
    %396 = arith.addf %394, %395 : vector<8x32xf32>
    %397 = arith.divf %394, %396 : vector<8x32xf32>
    %398 = arith.mulf %388, %397 : vector<8x32xf32>
    %c0_239 = arith.constant 0 : index
    %c0_240 = arith.constant 0 : index
    %399 = vector.load %arg62[%c0_239, %c0_240] : memref<32x4xf32, #tpu.memory_space<vmem>>, vector<32x4xf32>
    %cst_241 = arith.constant dense<0.000000e+00> : vector<8x4xf32>
    %400 = tpu.matmul %398, %399, %cst_241 {dimension_numbers = #tpu.dot_dimension_numbers<[1], [0], [0], [1], [0, 0, 1, 1], [], []>} : vector<8x32xf32>, vector<32x4xf32>, vector<8x4xf32> -> vector<8x4xf32>
    %c0_242 = arith.constant 0 : index
    %c0_243 = arith.constant 0 : index
    %401 = vector.load %arg63[%c0_242, %c0_243] : memref<1x4xf32, #tpu.memory_space<vmem>>, vector<1x4xf32>
    %402 = vector.broadcast %401 : vector<1x4xf32> to vector<8x4xf32>
    %403 = arith.addf %400, %402 : vector<8x4xf32>
    %cst_244 = arith.constant dense<0.000000e+00> : vector<16x32xf32>
    %404 = tpu.matmul %3, %364, %cst_244 {dimension_numbers = #tpu.dot_dimension_numbers<[1], [0], [0], [1], [0, 0, 1, 1], [], []>} : vector<16x16xf32>, vector<16x32xf32>, vector<16x32xf32> -> vector<16x32xf32>
    %cst_245 = arith.constant dense<0.000000e+00> : vector<16x32xf32>
    %405 = tpu.matmul %4, %364, %cst_245 {dimension_numbers = #tpu.dot_dimension_numbers<[1], [0], [0], [1], [0, 0, 1, 1], [], []>} : vector<16x16xf32>, vector<16x32xf32>, vector<16x32xf32> -> vector<16x32xf32>
    %406 = tpu.concatenate %404, %364, %405 in 1 : vector<16x32xf32>, vector<16x32xf32>, vector<16x32xf32> -> vector<16x96xf32>
    %c0_246 = arith.constant 0 : index
    %c0_247 = arith.constant 0 : index
    %407 = vector.load %arg64[%c0_246, %c0_247] : memref<96x32xf32, #tpu.memory_space<vmem>>, vector<96x32xf32>
    %cst_248 = arith.constant dense<0.000000e+00> : vector<16x32xf32>
    %408 = tpu.matmul %406, %407, %cst_248 {dimension_numbers = #tpu.dot_dimension_numbers<[1], [0], [0], [1], [0, 0, 1, 1], [], []>} : vector<16x96xf32>, vector<96x32xf32>, vector<16x32xf32> -> vector<16x32xf32>
    %c0_249 = arith.constant 0 : index
    %c0_250 = arith.constant 0 : index
    %409 = vector.load %arg65[%c0_249, %c0_250] : memref<1x32xf32, #tpu.memory_space<vmem>>, vector<1x32xf32>
    %410 = vector.broadcast %409 : vector<1x32xf32> to vector<16x32xf32>
    %411 = arith.addf %408, %410 : vector<16x32xf32>
    %cst_251 = arith.constant dense<0.000000e+00> : vector<16x32xf32>
    %412 = tpu.matmul %411, %6, %cst_251 {dimension_numbers = #tpu.dot_dimension_numbers<[1], [0], [0], [1], [0, 0, 1, 1], [], []>} : vector<16x32xf32>, vector<32x32xf32>, vector<16x32xf32> -> vector<16x32xf32>
    %cst_252 = arith.constant dense<0.000000e+00> : vector<16x32xf32>
    %413 = tpu.matmul %5, %412, %cst_252 {dimension_numbers = #tpu.dot_dimension_numbers<[1], [0], [0], [1], [0, 0, 1, 1], [], []>} : vector<16x16xf32>, vector<16x32xf32>, vector<16x32xf32> -> vector<16x32xf32>
    %414 = arith.subf %411, %413 : vector<16x32xf32>
    %415 = arith.mulf %414, %414 : vector<16x32xf32>
    %cst_253 = arith.constant dense<0.000000e+00> : vector<16x32xf32>
    %416 = tpu.matmul %415, %6, %cst_253 {dimension_numbers = #tpu.dot_dimension_numbers<[1], [0], [0], [1], [0, 0, 1, 1], [], []>} : vector<16x32xf32>, vector<32x32xf32>, vector<16x32xf32> -> vector<16x32xf32>
    %cst_254 = arith.constant dense<0.000000e+00> : vector<16x32xf32>
    %417 = tpu.matmul %5, %416, %cst_254 {dimension_numbers = #tpu.dot_dimension_numbers<[1], [0], [0], [1], [0, 0, 1, 1], [], []>} : vector<16x16xf32>, vector<16x32xf32>, vector<16x32xf32> -> vector<16x32xf32>
    %cst_255 = arith.constant 9.99999974E-6 : f32
    %418 = vector.broadcast %cst_255 : f32 to vector<16x32xf32>
    %419 = arith.addf %417, %418 : vector<16x32xf32>
    %420 = math.rsqrt %419 : vector<16x32xf32>
    %421 = arith.mulf %414, %420 : vector<16x32xf32>
    %c0_256 = arith.constant 0 : index
    %c0_257 = arith.constant 0 : index
    %422 = vector.load %arg66[%c0_256, %c0_257] : memref<1x32xf32, #tpu.memory_space<vmem>>, vector<1x32xf32>
    %423 = vector.broadcast %422 : vector<1x32xf32> to vector<16x32xf32>
    %424 = arith.mulf %421, %423 : vector<16x32xf32>
    %c0_258 = arith.constant 0 : index
    %c0_259 = arith.constant 0 : index
    %425 = vector.load %arg67[%c0_258, %c0_259] : memref<1x32xf32, #tpu.memory_space<vmem>>, vector<1x32xf32>
    %426 = vector.broadcast %425 : vector<1x32xf32> to vector<16x32xf32>
    %427 = arith.addf %424, %426 : vector<16x32xf32>
    %cst_260 = arith.constant 2.000000e+01 : f32
    %428 = vector.broadcast %cst_260 : f32 to vector<16x32xf32>
    %429 = arith.minimumf %427, %428 : vector<16x32xf32>
    %430 = math.exp %429 : vector<16x32xf32>
    %cst_261 = arith.constant 2.000000e+00 : f32
    %431 = vector.broadcast %cst_261 : f32 to vector<16x32xf32>
    %432 = arith.addf %430, %431 : vector<16x32xf32>
    %433 = arith.mulf %430, %432 : vector<16x32xf32>
    %cst_262 = arith.constant 2.000000e+00 : f32
    %434 = vector.broadcast %cst_262 : f32 to vector<16x32xf32>
    %435 = arith.addf %433, %434 : vector<16x32xf32>
    %436 = arith.divf %433, %435 : vector<16x32xf32>
    %437 = arith.mulf %427, %436 : vector<16x32xf32>
    %c0_263 = arith.constant 0 : index
    %c0_264 = arith.constant 0 : index
    %438 = vector.load %arg68[%c0_263, %c0_264] : memref<32x4xf32, #tpu.memory_space<vmem>>, vector<32x4xf32>
    %cst_265 = arith.constant dense<0.000000e+00> : vector<16x4xf32>
    %439 = tpu.matmul %437, %438, %cst_265 {dimension_numbers = #tpu.dot_dimension_numbers<[1], [0], [0], [1], [0, 0, 1, 1], [], []>} : vector<16x32xf32>, vector<32x4xf32>, vector<16x4xf32> -> vector<16x4xf32>
    %c0_266 = arith.constant 0 : index
    %c0_267 = arith.constant 0 : index
    %440 = vector.load %arg69[%c0_266, %c0_267] : memref<1x4xf32, #tpu.memory_space<vmem>>, vector<1x4xf32>
    %441 = vector.broadcast %440 : vector<1x4xf32> to vector<16x4xf32>
    %442 = arith.addf %439, %441 : vector<16x4xf32>
    %c0_268 = arith.constant 0 : index
    %c0_269 = arith.constant 0 : index
    %443 = vector.load %arg70[%c0_268, %c0_269] : memref<8x32xf32, #tpu.memory_space<vmem>>, vector<8x32xf32>
    tpu.vector_store %arg70[%c0_268, %c0_269], %268 {strides = array<i32>} : memref<8x32xf32, #tpu.memory_space<vmem>>, vector<8x32xf32>,
    %c0_270 = arith.constant 0 : index
    %c0_271 = arith.constant 0 : index
    %444 = vector.load %arg71[%c0_270, %c0_271] : memref<16x32xf32, #tpu.memory_space<vmem>>, vector<16x32xf32>
    tpu.vector_store %arg71[%c0_270, %c0_271], %364 {strides = array<i32>} : memref<16x32xf32, #tpu.memory_space<vmem>>, vector<16x32xf32>,
    %c0_272 = arith.constant 0 : index
    %c0_273 = arith.constant 0 : index
    %445 = vector.load %arg72[%c0_272, %c0_273] : memref<8x4xf32, #tpu.memory_space<vmem>>, vector<8x4xf32>
    tpu.vector_store %arg72[%c0_272, %c0_273], %403 {strides = array<i32>} : memref<8x4xf32, #tpu.memory_space<vmem>>, vector<8x4xf32>,
    %c0_274 = arith.constant 0 : index
    %c0_275 = arith.constant 0 : index
    %446 = vector.load %arg73[%c0_274, %c0_275] : memref<16x4xf32, #tpu.memory_space<vmem>>, vector<16x4xf32>
    tpu.vector_store %arg73[%c0_274, %c0_275], %442 {strides = array<i32>} : memref<16x4xf32, #tpu.memory_space<vmem>>, vector<16x4xf32>,
    return
  }
}

</mosaic_0001>

<llo_original>
// kernel: forward.1
$region0: #{forward.1}
  #allocation0 [shape = 'u32[]', space=smem, size = 0x4, offset = 0x4, fixed_abs, tag = 'smem constant byte address 0x4 - core index']
  #allocation1 [shape = 'u32[144,128]{1,0:T(1,128)}', space=vmem, size = 0x12000, scoped, tag = 'internal scratch']
  %s0 = inlined_call_operand.smem [shape: u32[74], index: -1, kind: input, shape index: {}]
  %s1 = sld [smem:[%s0]]
  %s2 = scalar_lea.smem %s0, 1
  %s3 = sld [smem:[%s2]]
  %s4 = scalar_lea.smem %s0, 2
  %s5 = sld [smem:[%s4]]
  %s6 = scalar_lea.smem %s0, 3
  %s7 = sld [smem:[%s6]]
  %s8 = scalar_lea.smem %s0, 4
  %s9 = sld [smem:[%s8]]
  %s10 = scalar_lea.smem %s0, 5
  %s11 = sld [smem:[%s10]]
  %s12 = scalar_lea.smem %s0, 6
  %s13 = sld [smem:[%s12]]
  %s14 = scalar_lea.smem %s0, 7
  %s15 = sld [smem:[%s14]]
  %s16 = scalar_lea.smem %s0, 8
  %s17 = sld [smem:[%s16]]
  %s18 = scalar_lea.smem %s0, 9
  %s19 = sld [smem:[%s18]]
  %s20 = scalar_lea.smem %s0, 10
  %s21 = sld [smem:[%s20]]
  %s22 = scalar_lea.smem %s0, 11
  %s23 = sld [smem:[%s22]]
  %s24 = scalar_lea.smem %s0, 12
  %s25 = sld [smem:[%s24]]
  %s26 = scalar_lea.smem %s0, 13
  %s27 = sld [smem:[%s26]]
  %s28 = scalar_lea.smem %s0, 14
  %s29 = sld [smem:[%s28]]
  %s30 = scalar_lea.smem %s0, 15
  %s31 = sld [smem:[%s30]]
  %s32 = scalar_lea.smem %s0, 16
  %s33 = sld [smem:[%s32]]
  %s34 = scalar_lea.smem %s0, 17
  %s35 = sld [smem:[%s34]]
  %s36 = scalar_lea.smem %s0, 18
  %s37 = sld [smem:[%s36]]
  %s38 = scalar_lea.smem %s0, 19
  %s39 = sld [smem:[%s38]]
  %s40 = scalar_lea.smem %s0, 20
  %s41 = sld [smem:[%s40]]
  %s42 = scalar_lea.smem %s0, 21
  %s43 = sld [smem:[%s42]]
  %s44 = scalar_lea.smem %s0, 22
  %s45 = sld [smem:[%s44]]
  %s46 = scalar_lea.smem %s0, 23
  %s47 = sld [smem:[%s46]]
  %s48 = scalar_lea.smem %s0, 24
  %s49 = sld [smem:[%s48]]
  %s50 = scalar_lea.smem %s0, 25
  %s51 = sld [smem:[%s50]]
  %s52 = scalar_lea.smem %s0, 26
  %s53 = sld [smem:[%s52]]
  %s54 = scalar_lea.smem %s0, 27
  %s55 = sld [smem:[%s54]]
  %s56 = scalar_lea.smem %s0, 28
  %s57 = sld [smem:[%s56]]
  %s58 = scalar_lea.smem %s0, 29
  %s59 = sld [smem:[%s58]]
  %s60 = scalar_lea.smem %s0, 30
  %s61 = sld [smem:[%s60]]
  %s62 = scalar_lea.smem %s0, 31
  %s63 = sld [smem:[%s62]]
  %s64 = scalar_lea.smem %s0, 32
  %s65 = sld [smem:[%s64]]
  %s66 = scalar_lea.smem %s0, 33
  %s67 = sld [smem:[%s66]]
  %s68 = scalar_lea.smem %s0, 34
  %s69 = sld [smem:[%s68]]
  %s70 = scalar_lea.smem %s0, 35
  %s71 = sld [smem:[%s70]]
  %s72 = scalar_lea.smem %s0, 36
  %s73 = sld [smem:[%s72]]
  %s74 = scalar_lea.smem %s0, 37
  %s75 = sld [smem:[%s74]]
  %s76 = scalar_lea.smem %s0, 38
  %s77 = sld [smem:[%s76]]
  %s78 = scalar_lea.smem %s0, 39
  %s79 = sld [smem:[%s78]]
  %s80 = scalar_lea.smem %s0, 40
  %s81 = sld [smem:[%s80]]
  %s82 = scalar_lea.smem %s0, 41
  %s83 = sld [smem:[%s82]]
  %s84 = scalar_lea.smem %s0, 42
  %s85 = sld [smem:[%s84]]
  %s86 = scalar_lea.smem %s0, 43
  %s87 = sld [smem:[%s86]]
  %s88 = scalar_lea.smem %s0, 44
  %s89 = sld [smem:[%s88]]
  %s90 = scalar_lea.smem %s0, 45
  %s91 = sld [smem:[%s90]]
  %s92 = scalar_lea.smem %s0, 46
  %s93 = sld [smem:[%s92]]
  %s94 = scalar_lea.smem %s0, 47
  %s95 = sld [smem:[%s94]]
  %s96 = scalar_lea.smem %s0, 48
  %s97 = sld [smem:[%s96]]
  %s98 = scalar_lea.smem %s0, 49
  %s99 = sld [smem:[%s98]]
  %s100 = scalar_lea.smem %s0, 50
  %s101 = sld [smem:[%s100]]
  %s102 = scalar_lea.smem %s0, 51
  %s103 = sld [smem:[%s102]]
  %s104 = scalar_lea.smem %s0, 52
  %s105 = sld [smem:[%s104]]
  %s106 = scalar_lea.smem %s0, 53
  %s107 = sld [smem:[%s106]]
  %s108 = scalar_lea.smem %s0, 54
  %s109 = sld [smem:[%s108]]
  %s110 = scalar_lea.smem %s0, 55
  %s111 = sld [smem:[%s110]]
  %s112 = scalar_lea.smem %s0, 56
  %s113 = sld [smem:[%s112]]
  %s114 = scalar_lea.smem %s0, 57
  %s115 = sld [smem:[%s114]]
  %s116 = scalar_lea.smem %s0, 58
  %s117 = sld [smem:[%s116]]
  %s118 = scalar_lea.smem %s0, 59
  %s119 = sld [smem:[%s118]]
  %s120 = scalar_lea.smem %s0, 60
  %s121 = sld [smem:[%s120]]
  %s122 = scalar_lea.smem %s0, 61
  %s123 = sld [smem:[%s122]]
  %s124 = scalar_lea.smem %s0, 62
  %s125 = sld [smem:[%s124]]
  %s126 = scalar_lea.smem %s0, 63
  %s127 = sld [smem:[%s126]]
  %s128 = scalar_lea.smem %s0, 64
  %s129 = sld [smem:[%s128]]
  %s130 = scalar_lea.smem %s0, 65
  %s131 = sld [smem:[%s130]]
  %s132 = scalar_lea.smem %s0, 66
  %s133 = sld [smem:[%s132]]
  %s134 = scalar_lea.smem %s0, 67
  %s135 = sld [smem:[%s134]]
  %s136 = scalar_lea.smem %s0, 68
  %s137 = sld [smem:[%s136]]
  %s138 = scalar_lea.smem %s0, 69
  %s139 = sld [smem:[%s138]]
  %s140 = scalar_lea.smem %s0, 70
  %s141 = sld [smem:[%s140]]
  %s142 = scalar_lea.smem %s0, 71
  %s143 = sld [smem:[%s142]]
  %s144 = scalar_lea.smem %s0, 72
  %s145 = sld [smem:[%s144]]
  %s146 = scalar_lea.smem %s0, 73
  %s147 = sld [smem:[%s146]]
  %148 = xla_tuple %s141, %s143, %s145, %s147
  %s149 = sld [smem:[#allocation0]]
  $region426: #{forward.1} parent=0
    _
  %s151 = ssub.s32 1, %s149
  %s152 = scalar_select 0, %s151, %s149
  $region1: #{forward.1} parent=0
    #allocation2 [shape = 'u8[512]{0}', space=vmem, size = 0x400, scoped, tag = 'input window, operand 33, single buffered']
    #allocation3 [shape = 's32[1]{0}', space=sflag, size = 0x4, scoped, tag = 'scoped memory for forward.1']
    #allocation4 [shape = 's32[1]{0}', space=sflag, size = 0x4, scoped, tag = 'scoped memory for forward.1']
    #allocation5 [shape = 'u8[512]{0}', space=vmem, size = 0x400, scoped, tag = 'input window, operand 34, single buffered']
    #allocation6 [shape = 's32[1]{0}', space=sflag, size = 0x4, scoped, tag = 'scoped memory for forward.1']
    #allocation7 [shape = 'u8[512]{0}', space=vmem, size = 0x400, scoped, tag = 'input window, operand 35, single buffered']
    #allocation8 [shape = 'u8[512]{0}', space=vmem, size = 0x400, scoped, tag = 'input window, operand 37, single buffered']
    #allocation9 [shape = 's32[1]{0}', space=sflag, size = 0x4, scoped, tag = 'scoped memory for forward.1']
    #allocation10 [shape = 'u8[512]{0}', space=vmem, size = 0x400, scoped, tag = 'input window, operand 39, single buffered']
    #allocation11 [shape = 'u8[512]{0}', space=vmem, size = 0x400, scoped, tag = 'input window, operand 40, single buffered']
    #allocation12 [shape = 's32[1]{0}', space=sflag, size = 0x4, scoped, tag = 'scoped memory for forward.1']
    #allocation13 [shape = 'u8[512]{0}', space=vmem, size = 0x400, scoped, tag = 'input window, operand 41, single buffered']
    #allocation14 [shape = 'u8[512]{0}', space=vmem, size = 0x400, scoped, tag = 'input window, operand 42, single buffered']
    #allocation15 [shape = 's32[1]{0}', space=sflag, size = 0x4, scoped, tag = 'scoped memory for forward.1']
    #allocation16 [shape = 'u8[512]{0}', space=vmem, size = 0x400, scoped, tag = 'input window, operand 43, single buffered']
    #allocation17 [shape = 'u8[512]{0}', space=vmem, size = 0x400, scoped, tag = 'input window, operand 44, single buffered']
    #allocation18 [shape = 's32[1]{0}', space=sflag, size = 0x4, scoped, tag = 'scoped memory for forward.1']
    #allocation19 [shape = 'u8[512]{0}', space=vmem, size = 0x400, scoped, tag = 'input window, operand 45, single buffered']
    #allocation20 [shape = 'u8[512]{0}', space=vmem, size = 0x400, scoped, tag = 'input window, operand 47, single buffered']
    #allocation21 [shape = 's32[1]{0}', space=sflag, size = 0x4, scoped, tag = 'scoped memory for forward.1']
    #allocation22 [shape = 'u8[512]{0}', space=vmem, size = 0x400, scoped, tag = 'input window, operand 49, single buffered']
    #allocation23 [shape = 'u8[512]{0}', space=vmem, size = 0x400, scoped, tag = 'input window, operand 50, single buffered']
    #allocation24 [shape = 's32[1]{0}', space=sflag, size = 0x4, scoped, tag = 'scoped memory for forward.1']
    #allocation25 [shape = 'u8[512]{0}', space=vmem, size = 0x400, scoped, tag = 'input window, operand 51, single buffered']
    #allocation26 [shape = 'u8[512]{0}', space=vmem, size = 0x400, scoped, tag = 'input window, operand 52, single buffered']
    #allocation27 [shape = 's32[1]{0}', space=sflag, size = 0x4, scoped, tag = 'scoped memory for forward.1']
    #allocation28 [shape = 'u8[512]{0}', space=vmem, size = 0x400, scoped, tag = 'input window, operand 53, single buffered']
    #allocation29 [shape = 'u8[512]{0}', space=vmem, size = 0x400, scoped, tag = 'input window, operand 54, single buffered']
    #allocation30 [shape = 's32[1]{0}', space=sflag, size = 0x4, scoped, tag = 'scoped memory for forward.1']
    #allocation31 [shape = 'u8[512]{0}', space=vmem, size = 0x400, scoped, tag = 'input window, operand 55, single buffered']
    #allocation32 [shape = 'u8[512]{0}', space=vmem, size = 0x400, scoped, tag = 'input window, operand 57, single buffered']
    #allocation33 [shape = 's32[1]{0}', space=sflag, size = 0x4, scoped, tag = 'scoped memory for forward.1']
    #allocation34 [shape = 'u8[512]{0}', space=vmem, size = 0x400, scoped, tag = 'input window, operand 59, single buffered']
    #allocation35 [shape = 'u8[512]{0}', space=vmem, size = 0x400, scoped, tag = 'input window, operand 60, single buffered']
    #allocation36 [shape = 's32[1]{0}', space=sflag, size = 0x4, scoped, tag = 'scoped memory for forward.1']
    #allocation37 [shape = 'u8[512]{0}', space=vmem, size = 0x400, scoped, tag = 'input window, operand 61, single buffered']
    #allocation38 [shape = 'u8[512]{0}', space=vmem, size = 0x400, scoped, tag = 'input window, operand 63, single buffered']
    #allocation39 [shape = 's32[1]{0}', space=sflag, size = 0x4, scoped, tag = 'scoped memory for forward.1']
    #allocation40 [shape = 'u8[512]{0}', space=vmem, size = 0x400, scoped, tag = 'input window, operand 65, single buffered']
    #allocation41 [shape = 'u8[512]{0}', space=vmem, size = 0x400, scoped, tag = 'input window, operand 66, single buffered']
    #allocation42 [shape = 's32[1]{0}', space=sflag, size = 0x4, scoped, tag = 'scoped memory for forward.1']
    #allocation43 [shape = 'u8[512]{0}', space=vmem, size = 0x400, scoped, tag = 'input window, operand 67, single buffered']
    #allocation44 [shape = 'u8[512]{0}', space=vmem, size = 0x400, scoped, tag = 'input window, operand 69, single buffered']
    #allocation45 [shape = 's32[1]{0}', space=sflag, size = 0x4, scoped, tag = 'scoped memory for forward.1']
    #allocation46 [shape = 'u8[4096]{0}', space=vmem, size = 0x1000, scoped, tag = 'output window, operand 0, single buffered']
    #allocation47 [shape = 'u8[8192]{0}', space=vmem, size = 0x2000, scoped, tag = 'output window, operand 1, single buffered']
    #allocation48 [shape = 's32[1]{0}', space=sflag, size = 0x4, scoped, tag = 'scoped memory for forward.1']
    %153 = vsyncpa [#allocation3], 0
    %154 = vsyncpa [#allocation6], 0
    %155 = vsyncpa [#allocation9], 0
    %156 = vsyncpa [#allocation12], 0
    %157 = vsyncpa [#allocation15], 0
    %158 = vsyncpa [#allocation18], 0
    %159 = vsyncpa [#allocation21], 0
    %160 = vsyncpa [#allocation24], 0
    %161 = vsyncpa [#allocation27], 0
    %162 = vsyncpa [#allocation30], 0
    %163 = vsyncpa [#allocation33], 0
    %164 = vsyncpa [#allocation36], 0
    %165 = vsyncpa [#allocation39], 0
    %166 = vsyncpa [#allocation42], 0
    %167 = vsyncpa [#allocation45], 0
    %168 = vsyncpa [#allocation4], 0
    %169 = vsyncpa [#allocation48], 0
    // Predicated region
    $region2: #{forward.1} parent=1 // pred_check
      _
    $region3: #{forward.1} parent=1 // pred_check_branch
      %171 = sbr.rel (0) target = $region5
    $region4: #{forward.1} parent=1 // pred_region
      _
    $region5: #{forward.1} parent=1 // pred_fallthru
      _
    // Predicated region
    $region6: #{forward.1} parent=1 // pred_check
      _
    $region7: #{forward.1} parent=1 // pred_check_branch
      %173 = sbr.rel (0) target = $region9
    $region8: #{forward.1} parent=1 // pred_region
      _
    $region9: #{forward.1} parent=1 // pred_fallthru
      _
    // Predicated region
    $region10: #{forward.1} parent=1 // pred_check
      _
    $region11: #{forward.1} parent=1 // pred_check_branch
      %175 = sbr.rel (0) target = $region13
    $region12: #{forward.1} parent=1 // pred_region
      _
    $region13: #{forward.1} parent=1 // pred_fallthru
      _
    // Predicated region
    $region14: #{forward.1} parent=1 // pred_check
      _
    $region15: #{forward.1} parent=1 // pred_check_branch
      %177 = sbr.rel (0) target = $region17
    $region16: #{forward.1} parent=1 // pred_region
      _
    $region17: #{forward.1} parent=1 // pred_fallthru
      _
    // Predicated region
    $region18: #{forward.1} parent=1 // pred_check
      _
    $region19: #{forward.1} parent=1 // pred_check_branch
      %179 = sbr.rel (0) target = $region21
    $region20: #{forward.1} parent=1 // pred_region
      _
    $region21: #{forward.1} parent=1 // pred_fallthru
      _
    // Predicated region
    $region22: #{forward.1} parent=1 // pred_check
      _
    $region23: #{forward.1} parent=1 // pred_check_branch
      %181 = sbr.rel (0) target = $region25
    $region24: #{forward.1} parent=1 // pred_region
      _
    $region25: #{forward.1} parent=1 // pred_fallthru
      _
    // Predicated region
    $region26: #{forward.1} parent=1 // pred_check
      _
    $region27: #{forward.1} parent=1 // pred_check_branch
      %183 = sbr.rel (0) target = $region29
    $region28: #{forward.1} parent=1 // pred_region
      _
    $region29: #{forward.1} parent=1 // pred_fallthru
      _
    // Predicated region
    $region30: #{forward.1} parent=1 // pred_check
      _
    $region31: #{forward.1} parent=1 // pred_check_branch
      %185 = sbr.rel (0) target = $region33
    $region32: #{forward.1} parent=1 // pred_region
      _
    $region33: #{forward.1} parent=1 // pred_fallthru
      _
    // Predicated region
    $region34: #{forward.1} parent=1 // pred_check
      _
    $region35: #{forward.1} parent=1 // pred_check_branch
      %187 = sbr.rel (0) target = $region37
    $region36: #{forward.1} parent=1 // pred_region
      _
    $region37: #{forward.1} parent=1 // pred_fallthru
      _
    // Predicated region
    $region38: #{forward.1} parent=1 // pred_check
      _
    $region39: #{forward.1} parent=1 // pred_check_branch
      %189 = sbr.rel (0) target = $region41
    $region40: #{forward.1} parent=1 // pred_region
      _
    $region41: #{forward.1} parent=1 // pred_fallthru
      _
    // Predicated region
    $region42: #{forward.1} parent=1 // pred_check
      _
    $region43: #{forward.1} parent=1 // pred_check_branch
      %191 = sbr.rel (0) target = $region45
    $region44: #{forward.1} parent=1 // pred_region
      _
    $region45: #{forward.1} parent=1 // pred_fallthru
      _
    // Predicated region
    $region46: #{forward.1} parent=1 // pred_check
      _
    $region47: #{forward.1} parent=1 // pred_check_branch
      %193 = sbr.rel (0) target = $region49
    $region48: #{forward.1} parent=1 // pred_region
      _
    $region49: #{forward.1} parent=1 // pred_fallthru
      _
    // Predicated region
    $region50: #{forward.1} parent=1 // pred_check
      _
    $region51: #{forward.1} parent=1 // pred_check_branch
      %195 = sbr.rel (0) target = $region53
    $region52: #{forward.1} parent=1 // pred_region
      _
    $region53: #{forward.1} parent=1 // pred_fallthru
      _
    // Predicated region
    $region54: #{forward.1} parent=1 // pred_check
      _
    $region55: #{forward.1} parent=1 // pred_check_branch
      %197 = sbr.rel (0) target = $region57
    $region56: #{forward.1} parent=1 // pred_region
      _
    $region57: #{forward.1} parent=1 // pred_fallthru
      _
    // Predicated region
    $region58: #{forward.1} parent=1 // pred_check
      _
    $region59: #{forward.1} parent=1 // pred_check_branch
      %199 = sbr.rel (0) target = $region61
    $region60: #{forward.1} parent=1 // pred_region
      _
    $region61: #{forward.1} parent=1 // pred_fallthru
      _
    // Predicated region
    $region62: #{forward.1} parent=1 // pred_check
      _
    $region63: #{forward.1} parent=1 // pred_check_branch
      %201 = sbr.rel (0) target = $region65
    $region64: #{forward.1} parent=1 // pred_region
      _
    $region65: #{forward.1} parent=1 // pred_fallthru
      _
    // Predicated region
    $region66: #{forward.1} parent=1 // pred_check
      _
    $region67: #{forward.1} parent=1 // pred_check_branch
      %203 = sbr.rel (0) target = $region69
    $region68: #{forward.1} parent=1 // pred_region
      _
    $region69: #{forward.1} parent=1 // pred_fallthru
      _
    // Predicated region
    $region70: #{forward.1} parent=1 // pred_check
      _
    $region71: #{forward.1} parent=1 // pred_check_branch
      %205 = sbr.rel (0) target = $region73
    $region72: #{forward.1} parent=1 // pred_region
      _
    $region73: #{forward.1} parent=1 // pred_fallthru
      _
    // Predicated region
    $region74: #{forward.1} parent=1 // pred_check
      _
    $region75: #{forward.1} parent=1 // pred_check_branch
      %207 = sbr.rel (0) target = $region77
    $region76: #{forward.1} parent=1 // pred_region
      _
    $region77: #{forward.1} parent=1 // pred_fallthru
      _
    // Predicated region
    $region78: #{forward.1} parent=1 // pred_check
      _
    $region79: #{forward.1} parent=1 // pred_check_branch
      %209 = sbr.rel (0) target = $region81
    $region80: #{forward.1} parent=1 // pred_region
      _
    $region81: #{forward.1} parent=1 // pred_fallthru
      _
    // Predicated region
    $region82: #{forward.1} parent=1 // pred_check
      _
    $region83: #{forward.1} parent=1 // pred_check_branch
      %211 = sbr.rel (0) target = $region85
    $region84: #{forward.1} parent=1 // pred_region
      _
    $region85: #{forward.1} parent=1 // pred_fallthru
      _
    // Predicated region
    $region86: #{forward.1} parent=1 // pred_check
      _
    $region87: #{forward.1} parent=1 // pred_check_branch
      %213 = sbr.rel (0) target = $region89
    $region88: #{forward.1} parent=1 // pred_region
      _
    $region89: #{forward.1} parent=1 // pred_fallthru
      _
    // Predicated region
    $region90: #{forward.1} parent=1 // pred_check
      _
    $region91: #{forward.1} parent=1 // pred_check_branch
      %215 = sbr.rel (0) target = $region93
    $region92: #{forward.1} parent=1 // pred_region
      _
    $region93: #{forward.1} parent=1 // pred_fallthru
      _
    // Predicated region
    $region94: #{forward.1} parent=1 // pred_check
      _
    $region95: #{forward.1} parent=1 // pred_check_branch
      %217 = sbr.rel (0) target = $region97
    $region96: #{forward.1} parent=1 // pred_region
      _
    $region97: #{forward.1} parent=1 // pred_fallthru
      _
    // Predicated region
    $region98: #{forward.1} parent=1 // pred_check
      _
    $region99: #{forward.1} parent=1 // pred_check_branch
      %219 = sbr.rel (0) target = $region101
    $region100: #{forward.1} parent=1 // pred_region
      _
    $region101: #{forward.1} parent=1 // pred_fallthru
      _
    // Predicated region
    $region102: #{forward.1} parent=1 // pred_check
      _
    $region103: #{forward.1} parent=1 // pred_check_branch
      %221 = sbr.rel (0) target = $region105
    $region104: #{forward.1} parent=1 // pred_region
      _
    $region105: #{forward.1} parent=1 // pred_fallthru
      _
    // Predicated region
    $region106: #{forward.1} parent=1 // pred_check
      _
    $region107: #{forward.1} parent=1 // pred_check_branch
      %223 = sbr.rel (0) target = $region109
    $region108: #{forward.1} parent=1 // pred_region
      _
    $region109: #{forward.1} parent=1 // pred_fallthru
      _
    // Predicated region
    $region110: #{forward.1} parent=1 // pred_check
      _
    $region111: #{forward.1} parent=1 // pred_check_branch
      %225 = sbr.rel (0) target = $region113
    $region112: #{forward.1} parent=1 // pred_region
      _
    $region113: #{forward.1} parent=1 // pred_fallthru
      _
    // Predicated region
    $region114: #{forward.1} parent=1 // pred_check
      _
    $region115: #{forward.1} parent=1 // pred_check_branch
      %227 = sbr.rel (0) target = $region117
    $region116: #{forward.1} parent=1 // pred_region
      _
    $region117: #{forward.1} parent=1 // pred_fallthru
      _
    // Predicated region
    $region118: #{forward.1} parent=1 // pred_check
      _
    $region119: #{forward.1} parent=1 // pred_check_branch
      %229 = sbr.rel (0) target = $region121
    $region120: #{forward.1} parent=1 // pred_region
      _
    $region121: #{forward.1} parent=1 // pred_fallthru
      _
    // Predicated region
    $region122: #{forward.1} parent=1 // pred_check
      _
    $region123: #{forward.1} parent=1 // pred_check_branch
      %231 = sbr.rel (0) target = $region125
    $region124: #{forward.1} parent=1 // pred_region
      _
    $region125: #{forward.1} parent=1 // pred_fallthru
      _
    // Predicated region
    $region126: #{forward.1} parent=1 // pred_check
      _
    $region127: #{forward.1} parent=1 // pred_check_branch
      %233 = sbr.rel (0) target = $region129
    $region128: #{forward.1} parent=1 // pred_region
      _
    $region129: #{forward.1} parent=1 // pred_fallthru
      _
    // Predicated region
    $region130: #{forward.1} parent=1 // pred_check
      _
    $region131: #{forward.1} parent=1 // pred_check_branch
      %235 = sbr.rel (0) target = $region133
    $region132: #{forward.1} parent=1 // pred_region
      _
    $region133: #{forward.1} parent=1 // pred_fallthru
      _
    // Predicated region
    $region134: #{forward.1} parent=1 // pred_check
      _
    $region135: #{forward.1} parent=1 // pred_check_branch
      %237 = sbr.rel (0) target = $region137
    $region136: #{forward.1} parent=1 // pred_region
      %s239 = ssub.s32 16, 16
      %240 = vsyncadd [#allocation3], %s239
      %s242 = sshll.u32 [#allocation2], 4
      %s243 = int_to_ptr.vmem [resolvable:$true] %s242
      %245 = dma.hbm_to_vmem [thread:$0]  %s67, 16, %s243, [#allocation3]
    $region137: #{forward.1} parent=1 // pred_fallthru
      _
    // Predicated region
    $region138: #{forward.1} parent=1 // pred_check
      _
    $region139: #{forward.1} parent=1 // pred_check_branch
      %247 = sbr.rel (0) target = $region141
    $region140: #{forward.1} parent=1 // pred_region
      %s249 = ssub.s32 16, 16
      %250 = vsyncadd [#allocation6], %s249
      %s252 = sshll.u32 [#allocation5], 4
      %s253 = int_to_ptr.vmem [resolvable:$true] %s252
      %255 = dma.hbm_to_vmem [thread:$0]  %s69, 16, %s253, [#allocation6]
    $region141: #{forward.1} parent=1 // pred_fallthru
      _
    // Predicated region
    $region142: #{forward.1} parent=1 // pred_check
      _
    $region143: #{forward.1} parent=1 // pred_check_branch
      %257 = sbr.rel (0) target = $region145
    $region144: #{forward.1} parent=1 // pred_region
      %s259 = ssub.s32 16, 16
      %260 = vsyncadd [#allocation6], %s259
      %s262 = sshll.u32 [#allocation7], 4
      %s263 = int_to_ptr.vmem [resolvable:$true] %s262
      %265 = dma.hbm_to_vmem [thread:$0]  %s71, 16, %s263, [#allocation6]
    $region145: #{forward.1} parent=1 // pred_fallthru
      _
    // Predicated region
    $region146: #{forward.1} parent=1 // pred_check
      _
    $region147: #{forward.1} parent=1 // pred_check_branch
      %267 = sbr.rel (0) target = $region149
    $region148: #{forward.1} parent=1 // pred_region
      _
    $region149: #{forward.1} parent=1 // pred_fallthru
      _
    // Predicated region
    $region150: #{forward.1} parent=1 // pred_check
      _
    $region151: #{forward.1} parent=1 // pred_check_branch
      %269 = sbr.rel (0) target = $region153
    $region152: #{forward.1} parent=1 // pred_region
      %s271 = ssub.s32 16, 16
      %272 = vsyncadd [#allocation9], %s271
      %s274 = sshll.u32 [#allocation8], 4
      %s275 = int_to_ptr.vmem [resolvable:$true] %s274
      %277 = dma.hbm_to_vmem [thread:$0]  %s75, 16, %s275, [#allocation9]
    $region153: #{forward.1} parent=1 // pred_fallthru
      _
    // Predicated region
    $region154: #{forward.1} parent=1 // pred_check
      _
    $region155: #{forward.1} parent=1 // pred_check_branch
      %279 = sbr.rel (0) target = $region157
    $region156: #{forward.1} parent=1 // pred_region
      _
    $region157: #{forward.1} parent=1 // pred_fallthru
      _
    // Predicated region
    $region158: #{forward.1} parent=1 // pred_check
      _
    $region159: #{forward.1} parent=1 // pred_check_branch
      %281 = sbr.rel (0) target = $region161
    $region160: #{forward.1} parent=1 // pred_region
      %s283 = ssub.s32 16, 16
      %284 = vsyncadd [#allocation9], %s283
      %s286 = sshll.u32 [#allocation10], 4
      %s287 = int_to_ptr.vmem [resolvable:$true] %s286
      %289 = dma.hbm_to_vmem [thread:$0]  %s79, 16, %s287, [#allocation9]
    $region161: #{forward.1} parent=1 // pred_fallthru
      _
    // Predicated region
    $region162: #{forward.1} parent=1 // pred_check
      _
    $region163: #{forward.1} parent=1 // pred_check_branch
      %291 = sbr.rel (0) target = $region165
    $region164: #{forward.1} parent=1 // pred_region
      %s293 = ssub.s32 16, 16
      %294 = vsyncadd [#allocation12], %s293
      %s296 = sshll.u32 [#allocation11], 4
      %s297 = int_to_ptr.vmem [resolvable:$true] %s296
      %299 = dma.hbm_to_vmem [thread:$0]  %s81, 16, %s297, [#allocation12]
    $region165: #{forward.1} parent=1 // pred_fallthru
      _
    // Predicated region
    $region166: #{forward.1} parent=1 // pred_check
      _
    $region167: #{forward.1} parent=1 // pred_check_branch
      %301 = sbr.rel (0) target = $region169
    $region168: #{forward.1} parent=1 // pred_region
      %s303 = ssub.s32 16, 16
      %304 = vsyncadd [#allocation12], %s303
      %s306 = sshll.u32 [#allocation13], 4
      %s307 = int_to_ptr.vmem [resolvable:$true] %s306
      %309 = dma.hbm_to_vmem [thread:$0]  %s83, 16, %s307, [#allocation12]
    $region169: #{forward.1} parent=1 // pred_fallthru
      _
    // Predicated region
    $region170: #{forward.1} parent=1 // pred_check
      _
    $region171: #{forward.1} parent=1 // pred_check_branch
      %311 = sbr.rel (0) target = $region173
    $region172: #{forward.1} parent=1 // pred_region
      %s313 = ssub.s32 16, 16
      %314 = vsyncadd [#allocation15], %s313
      %s316 = sshll.u32 [#allocation14], 4
      %s317 = int_to_ptr.vmem [resolvable:$true] %s316
      %319 = dma.hbm_to_vmem [thread:$0]  %s85, 16, %s317, [#allocation15]
    $region173: #{forward.1} parent=1 // pred_fallthru
      _
    // Predicated region
    $region174: #{forward.1} parent=1 // pred_check
      _
    $region175: #{forward.1} parent=1 // pred_check_branch
      %321 = sbr.rel (0) target = $region177
    $region176: #{forward.1} parent=1 // pred_region
      %s323 = ssub.s32 16, 16
      %324 = vsyncadd [#allocation15], %s323
      %s326 = sshll.u32 [#allocation16], 4
      %s327 = int_to_ptr.vmem [resolvable:$true] %s326
      %329 = dma.hbm_to_vmem [thread:$0]  %s87, 16, %s327, [#allocation15]
    $region177: #{forward.1} parent=1 // pred_fallthru
      _
    // Predicated region
    $region178: #{forward.1} parent=1 // pred_check
      _
    $region179: #{forward.1} parent=1 // pred_check_branch
      %331 = sbr.rel (0) target = $region181
    $region180: #{forward.1} parent=1 // pred_region
      %s333 = ssub.s32 16, 16
      %334 = vsyncadd [#allocation18], %s333
      %s336 = sshll.u32 [#allocation17], 4
      %s337 = int_to_ptr.vmem [resolvable:$true] %s336
      %339 = dma.hbm_to_vmem [thread:$0]  %s89, 16, %s337, [#allocation18]
    $region181: #{forward.1} parent=1 // pred_fallthru
      _
    // Predicated region
    $region182: #{forward.1} parent=1 // pred_check
      _
    $region183: #{forward.1} parent=1 // pred_check_branch
      %341 = sbr.rel (0) target = $region185
    $region184: #{forward.1} parent=1 // pred_region
      %s343 = ssub.s32 16, 16
      %344 = vsyncadd [#allocation18], %s343
      %s346 = sshll.u32 [#allocation19], 4
      %s347 = int_to_ptr.vmem [resolvable:$true] %s346
      %349 = dma.hbm_to_vmem [thread:$0]  %s91, 16, %s347, [#allocation18]
    $region185: #{forward.1} parent=1 // pred_fallthru
      _
    // Predicated region
    $region186: #{forward.1} parent=1 // pred_check
      _
    $region187: #{forward.1} parent=1 // pred_check_branch
      %351 = sbr.rel (0) target = $region189
    $region188: #{forward.1} parent=1 // pred_region
      _
    $region189: #{forward.1} parent=1 // pred_fallthru
      _
    // Predicated region
    $region190: #{forward.1} parent=1 // pred_check
      _
    $region191: #{forward.1} parent=1 // pred_check_branch
      %353 = sbr.rel (0) target = $region193
    $region192: #{forward.1} parent=1 // pred_region
      %s355 = ssub.s32 16, 16
      %356 = vsyncadd [#allocation21], %s355
      %s358 = sshll.u32 [#allocation20], 4
      %s359 = int_to_ptr.vmem [resolvable:$true] %s358
      %361 = dma.hbm_to_vmem [thread:$0]  %s95, 16, %s359, [#allocation21]
    $region193: #{forward.1} parent=1 // pred_fallthru
      _
    // Predicated region
    $region194: #{forward.1} parent=1 // pred_check
      _
    $region195: #{forward.1} parent=1 // pred_check_branch
      %363 = sbr.rel (0) target = $region197
    $region196: #{forward.1} parent=1 // pred_region
      _
    $region197: #{forward.1} parent=1 // pred_fallthru
      _
    // Predicated region
    $region198: #{forward.1} parent=1 // pred_check
      _
    $region199: #{forward.1} parent=1 // pred_check_branch
      %365 = sbr.rel (0) target = $region201
    $region200: #{forward.1} parent=1 // pred_region
      %s367 = ssub.s32 16, 16
      %368 = vsyncadd [#allocation21], %s367
      %s370 = sshll.u32 [#allocation22], 4
      %s371 = int_to_ptr.vmem [resolvable:$true] %s370
      %373 = dma.hbm_to_vmem [thread:$0]  %s99, 16, %s371, [#allocation21]
    $region201: #{forward.1} parent=1 // pred_fallthru
      _
    // Predicated region
    $region202: #{forward.1} parent=1 // pred_check
      _
    $region203: #{forward.1} parent=1 // pred_check_branch
      %375 = sbr.rel (0) target = $region205
    $region204: #{forward.1} parent=1 // pred_region
      %s377 = ssub.s32 16, 16
      %378 = vsyncadd [#allocation24], %s377
      %s380 = sshll.u32 [#allocation23], 4
      %s381 = int_to_ptr.vmem [resolvable:$true] %s380
      %383 = dma.hbm_to_vmem [thread:$0]  %s101, 16, %s381, [#allocation24]
    $region205: #{forward.1} parent=1 // pred_fallthru
      _
    // Predicated region
    $region206: #{forward.1} parent=1 // pred_check
      _
    $region207: #{forward.1} parent=1 // pred_check_branch
      %385 = sbr.rel (0) target = $region209
    $region208: #{forward.1} parent=1 // pred_region
      %s387 = ssub.s32 16, 16
      %388 = vsyncadd [#allocation24], %s387
      %s390 = sshll.u32 [#allocation25], 4
      %s391 = int_to_ptr.vmem [resolvable:$true] %s390
      %393 = dma.hbm_to_vmem [thread:$0]  %s103, 16, %s391, [#allocation24]
    $region209: #{forward.1} parent=1 // pred_fallthru
      _
    // Predicated region
    $region210: #{forward.1} parent=1 // pred_check
      _
    $region211: #{forward.1} parent=1 // pred_check_branch
      %395 = sbr.rel (0) target = $region213
    $region212: #{forward.1} parent=1 // pred_region
      %s397 = ssub.s32 16, 16
      %398 = vsyncadd [#allocation27], %s397
      %s400 = sshll.u32 [#allocation26], 4
      %s401 = int_to_ptr.vmem [resolvable:$true] %s400
      %403 = dma.hbm_to_vmem [thread:$0]  %s105, 16, %s401, [#allocation27]
    $region213: #{forward.1} parent=1 // pred_fallthru
      _
    // Predicated region
    $region214: #{forward.1} parent=1 // pred_check
      _
    $region215: #{forward.1} parent=1 // pred_check_branch
      %405 = sbr.rel (0) target = $region217
    $region216: #{forward.1} parent=1 // pred_region
      %s407 = ssub.s32 16, 16
      %408 = vsyncadd [#allocation27], %s407
      %s410 = sshll.u32 [#allocation28], 4
      %s411 = int_to_ptr.vmem [resolvable:$true] %s410
      %413 = dma.hbm_to_vmem [thread:$0]  %s107, 16, %s411, [#allocation27]
    $region217: #{forward.1} parent=1 // pred_fallthru
      _
    // Predicated region
    $region218: #{forward.1} parent=1 // pred_check
      _
    $region219: #{forward.1} parent=1 // pred_check_branch
      %415 = sbr.rel (0) target = $region221
    $region220: #{forward.1} parent=1 // pred_region
      %s417 = ssub.s32 16, 16
      %418 = vsyncadd [#allocation30], %s417
      %s420 = sshll.u32 [#allocation29], 4
      %s421 = int_to_ptr.vmem [resolvable:$true] %s420
      %423 = dma.hbm_to_vmem [thread:$0]  %s109, 16, %s421, [#allocation30]
    $region221: #{forward.1} parent=1 // pred_fallthru
      _
    // Predicated region
    $region222: #{forward.1} parent=1 // pred_check
      _
    $region223: #{forward.1} parent=1 // pred_check_branch
      %425 = sbr.rel (0) target = $region225
    $region224: #{forward.1} parent=1 // pred_region
      %s427 = ssub.s32 16, 16
      %428 = vsyncadd [#allocation30], %s427
      %s430 = sshll.u32 [#allocation31], 4
      %s431 = int_to_ptr.vmem [resolvable:$true] %s430
      %433 = dma.hbm_to_vmem [thread:$0]  %s111, 16, %s431, [#allocation30]
    $region225: #{forward.1} parent=1 // pred_fallthru
      _
    // Predicated region
    $region226: #{forward.1} parent=1 // pred_check
      _
    $region227: #{forward.1} parent=1 // pred_check_branch
      %435 = sbr.rel (0) target = $region229
    $region228: #{forward.1} parent=1 // pred_region
      _
    $region229: #{forward.1} parent=1 // pred_fallthru
      _
    // Predicated region
    $region230: #{forward.1} parent=1 // pred_check
      _
    $region231: #{forward.1} parent=1 // pred_check_branch
      %437 = sbr.rel (0) target = $region233
    $region232: #{forward.1} parent=1 // pred_region
      %s439 = ssub.s32 16, 16
      %440 = vsyncadd [#allocation33], %s439
      %s442 = sshll.u32 [#allocation32], 4
      %s443 = int_to_ptr.vmem [resolvable:$true] %s442
      %445 = dma.hbm_to_vmem [thread:$0]  %s115, 16, %s443, [#allocation33]
    $region233: #{forward.1} parent=1 // pred_fallthru
      _
    // Predicated region
    $region234: #{forward.1} parent=1 // pred_check
      _
    $region235: #{forward.1} parent=1 // pred_check_branch
      %447 = sbr.rel (0) target = $region237
    $region236: #{forward.1} parent=1 // pred_region
      _
    $region237: #{forward.1} parent=1 // pred_fallthru
      _
    // Predicated region
    $region238: #{forward.1} parent=1 // pred_check
      _
    $region239: #{forward.1} parent=1 // pred_check_branch
      %449 = sbr.rel (0) target = $region241
    $region240: #{forward.1} parent=1 // pred_region
      %s451 = ssub.s32 16, 16
      %452 = vsyncadd [#allocation33], %s451
      %s454 = sshll.u32 [#allocation34], 4
      %s455 = int_to_ptr.vmem [resolvable:$true] %s454
      %457 = dma.hbm_to_vmem [thread:$0]  %s119, 16, %s455, [#allocation33]
    $region241: #{forward.1} parent=1 // pred_fallthru
      _
    // Predicated region
    $region242: #{forward.1} parent=1 // pred_check
      _
    $region243: #{forward.1} parent=1 // pred_check_branch
      %459 = sbr.rel (0) target = $region245
    $region244: #{forward.1} parent=1 // pred_region
      %s461 = ssub.s32 16, 16
      %462 = vsyncadd [#allocation36], %s461
      %s464 = sshll.u32 [#allocation35], 4
      %s465 = int_to_ptr.vmem [resolvable:$true] %s464
      %467 = dma.hbm_to_vmem [thread:$0]  %s121, 16, %s465, [#allocation36]
    $region245: #{forward.1} parent=1 // pred_fallthru
      _
    // Predicated region
    $region246: #{forward.1} parent=1 // pred_check
      _
    $region247: #{forward.1} parent=1 // pred_check_branch
      %469 = sbr.rel (0) target = $region249
    $region248: #{forward.1} parent=1 // pred_region
      %s471 = ssub.s32 16, 16
      %472 = vsyncadd [#allocation36], %s471
      %s474 = sshll.u32 [#allocation37], 4
      %s475 = int_to_ptr.vmem [resolvable:$true] %s474
      %477 = dma.hbm_to_vmem [thread:$0]  %s123, 16, %s475, [#allocation36]
    $region249: #{forward.1} parent=1 // pred_fallthru
      _
    // Predicated region
    $region250: #{forward.1} parent=1 // pred_check
      _
    $region251: #{forward.1} parent=1 // pred_check_branch
      %479 = sbr.rel (0) target = $region253
    $region252: #{forward.1} parent=1 // pred_region
      _
    $region253: #{forward.1} parent=1 // pred_fallthru
      _
    // Predicated region
    $region254: #{forward.1} parent=1 // pred_check
      _
    $region255: #{forward.1} parent=1 // pred_check_branch
      %481 = sbr.rel (0) target = $region257
    $region256: #{forward.1} parent=1 // pred_region
      %s483 = ssub.s32 16, 16
      %484 = vsyncadd [#allocation39], %s483
      %s486 = sshll.u32 [#allocation38], 4
      %s487 = int_to_ptr.vmem [resolvable:$true] %s486
      %489 = dma.hbm_to_vmem [thread:$0]  %s127, 16, %s487, [#allocation39]
    $region257: #{forward.1} parent=1 // pred_fallthru
      _
    // Predicated region
    $region258: #{forward.1} parent=1 // pred_check
      _
    $region259: #{forward.1} parent=1 // pred_check_branch
      %491 = sbr.rel (0) target = $region261
    $region260: #{forward.1} parent=1 // pred_region
      _
    $region261: #{forward.1} parent=1 // pred_fallthru
      _
    // Predicated region
    $region262: #{forward.1} parent=1 // pred_check
      _
    $region263: #{forward.1} parent=1 // pred_check_branch
      %493 = sbr.rel (0) target = $region265
    $region264: #{forward.1} parent=1 // pred_region
      %s495 = ssub.s32 16, 16
      %496 = vsyncadd [#allocation39], %s495
      %s498 = sshll.u32 [#allocation40], 4
      %s499 = int_to_ptr.vmem [resolvable:$true] %s498
      %501 = dma.hbm_to_vmem [thread:$0]  %s131, 16, %s499, [#allocation39]
    $region265: #{forward.1} parent=1 // pred_fallthru
      _
    // Predicated region
    $region266: #{forward.1} parent=1 // pred_check
      _
    $region267: #{forward.1} parent=1 // pred_check_branch
      %503 = sbr.rel (0) target = $region269
    $region268: #{forward.1} parent=1 // pred_region
      %s505 = ssub.s32 16, 16
      %506 = vsyncadd [#allocation42], %s505
      %s508 = sshll.u32 [#allocation41], 4
      %s509 = int_to_ptr.vmem [resolvable:$true] %s508
      %511 = dma.hbm_to_vmem [thread:$0]  %s133, 16, %s509, [#allocation42]
    $region269: #{forward.1} parent=1 // pred_fallthru
      _
    // Predicated region
    $region270: #{forward.1} parent=1 // pred_check
      _
    $region271: #{forward.1} parent=1 // pred_check_branch
      %513 = sbr.rel (0) target = $region273
    $region272: #{forward.1} parent=1 // pred_region
      %s515 = ssub.s32 16, 16
      %516 = vsyncadd [#allocation42], %s515
      %s518 = sshll.u32 [#allocation43], 4
      %s519 = int_to_ptr.vmem [resolvable:$true] %s518
      %521 = dma.hbm_to_vmem [thread:$0]  %s135, 16, %s519, [#allocation42]
    $region273: #{forward.1} parent=1 // pred_fallthru
      _
    // Predicated region
    $region274: #{forward.1} parent=1 // pred_check
      _
    $region275: #{forward.1} parent=1 // pred_check_branch
      %523 = sbr.rel (0) target = $region277
    $region276: #{forward.1} parent=1 // pred_region
      _
    $region277: #{forward.1} parent=1 // pred_fallthru
      _
    // Predicated region
    $region278: #{forward.1} parent=1 // pred_check
      _
    $region279: #{forward.1} parent=1 // pred_check_branch
      %525 = sbr.rel (0) target = $region281
    $region280: #{forward.1} parent=1 // pred_region
      %s527 = ssub.s32 16, 16
      %528 = vsyncadd [#allocation45], %s527
      %s530 = sshll.u32 [#allocation44], 4
      %s531 = int_to_ptr.vmem [resolvable:$true] %s530
      %533 = dma.hbm_to_vmem [thread:$0]  %s139, 16, %s531, [#allocation45]
    $region281: #{forward.1} parent=1 // pred_fallthru
      _
    // Predicated region
    $region282: #{forward.1} parent=1 // pred_check
      _
    $region283: #{forward.1} parent=1 // pred_check_branch
      %535 = sbr.rel (0) target = $region285
    $region284: #{forward.1} parent=1 // pred_region
      %536 = dma.done [#allocation3], 16
    $region285: #{forward.1} parent=1 // pred_fallthru
      _
    // Predicated region
    $region286: #{forward.1} parent=1 // pred_check
      _
    $region287: #{forward.1} parent=1 // pred_check_branch
      %538 = sbr.rel (0) target = $region289
    $region288: #{forward.1} parent=1 // pred_region
      %539 = dma.done [#allocation6], 16
    $region289: #{forward.1} parent=1 // pred_fallthru
      _
    // Predicated region
    $region290: #{forward.1} parent=1 // pred_check
      _
    $region291: #{forward.1} parent=1 // pred_check_branch
      %541 = sbr.rel (0) target = $region293
    $region292: #{forward.1} parent=1 // pred_region
      %542 = dma.done [#allocation6], 16
    $region293: #{forward.1} parent=1 // pred_fallthru
      _
    // Predicated region
    $region294: #{forward.1} parent=1 // pred_check
      _
    $region295: #{forward.1} parent=1 // pred_check_branch
      %544 = sbr.rel (0) target = $region297
    $region296: #{forward.1} parent=1 // pred_region
      %545 = dma.done [#allocation9], 16
    $region297: #{forward.1} parent=1 // pred_fallthru
      _
    // Predicated region
    $region298: #{forward.1} parent=1 // pred_check
      _
    $region299: #{forward.1} parent=1 // pred_check_branch
      %547 = sbr.rel (0) target = $region301
    $region300: #{forward.1} parent=1 // pred_region
      %548 = dma.done [#allocation9], 16
    $region301: #{forward.1} parent=1 // pred_fallthru
      _
    // Predicated region
    $region302: #{forward.1} parent=1 // pred_check
      _
    $region303: #{forward.1} parent=1 // pred_check_branch
      %550 = sbr.rel (0) target = $region305
    $region304: #{forward.1} parent=1 // pred_region
      %551 = dma.done [#allocation12], 16
    $region305: #{forward.1} parent=1 // pred_fallthru
      _
    // Predicated region
    $region306: #{forward.1} parent=1 // pred_check
      _
    $region307: #{forward.1} parent=1 // pred_check_branch
      %553 = sbr.rel (0) target = $region309
    $region308: #{forward.1} parent=1 // pred_region
      %554 = dma.done [#allocation12], 16
    $region309: #{forward.1} parent=1 // pred_fallthru
      _
    // Predicated region
    $region310: #{forward.1} parent=1 // pred_check
      _
    $region311: #{forward.1} parent=1 // pred_check_branch
      %556 = sbr.rel (0) target = $region313
    $region312: #{forward.1} parent=1 // pred_region
      %557 = dma.done [#allocation15], 16
    $region313: #{forward.1} parent=1 // pred_fallthru
      _
    // Predicated region
    $region314: #{forward.1} parent=1 // pred_check
      _
    $region315: #{forward.1} parent=1 // pred_check_branch
      %559 = sbr.rel (0) target = $region317
    $region316: #{forward.1} parent=1 // pred_region
      %560 = dma.done [#allocation15], 16
    $region317: #{forward.1} parent=1 // pred_fallthru
      _
    // Predicated region
    $region318: #{forward.1} parent=1 // pred_check
      _
    $region319: #{forward.1} parent=1 // pred_check_branch
      %562 = sbr.rel (0) target = $region321
    $region320: #{forward.1} parent=1 // pred_region
      %563 = dma.done [#allocation18], 16
    $region321: #{forward.1} parent=1 // pred_fallthru
      _
    // Predicated region
    $region322: #{forward.1} parent=1 // pred_check
      _
    $region323: #{forward.1} parent=1 // pred_check_branch
      %565 = sbr.rel (0) target = $region325
    $region324: #{forward.1} parent=1 // pred_region
      %566 = dma.done [#allocation18], 16
    $region325: #{forward.1} parent=1 // pred_fallthru
      _
    // Predicated region
    $region326: #{forward.1} parent=1 // pred_check
      _
    $region327: #{forward.1} parent=1 // pred_check_branch
      %568 = sbr.rel (0) target = $region329
    $region328: #{forward.1} parent=1 // pred_region
      %569 = dma.done [#allocation21], 16
    $region329: #{forward.1} parent=1 // pred_fallthru
      _
    // Predicated region
    $region330: #{forward.1} parent=1 // pred_check
      _
    $region331: #{forward.1} parent=1 // pred_check_branch
      %571 = sbr.rel (0) target = $region333
    $region332: #{forward.1} parent=1 // pred_region
      %572 = dma.done [#allocation21], 16
    $region333: #{forward.1} parent=1 // pred_fallthru
      _
    // Predicated region
    $region334: #{forward.1} parent=1 // pred_check
      _
    $region335: #{forward.1} parent=1 // pred_check_branch
      %574 = sbr.rel (0) target = $region337
    $region336: #{forward.1} parent=1 // pred_region
      %575 = dma.done [#allocation24], 16
    $region337: #{forward.1} parent=1 // pred_fallthru
      _
    // Predicated region
    $region338: #{forward.1} parent=1 // pred_check
      _
    $region339: #{forward.1} parent=1 // pred_check_branch
      %577 = sbr.rel (0) target = $region341
    $region340: #{forward.1} parent=1 // pred_region
      %578 = dma.done [#allocation24], 16
    $region341: #{forward.1} parent=1 // pred_fallthru
      _
    // Predicated region
    $region342: #{forward.1} parent=1 // pred_check
      _
    $region343: #{forward.1} parent=1 // pred_check_branch
      %580 = sbr.rel (0) target = $region345
    $region344: #{forward.1} parent=1 // pred_region
      %581 = dma.done [#allocation27], 16
    $region345: #{forward.1} parent=1 // pred_fallthru
      _
    // Predicated region
    $region346: #{forward.1} parent=1 // pred_check
      _
    $region347: #{forward.1} parent=1 // pred_check_branch
      %583 = sbr.rel (0) target = $region349
    $region348: #{forward.1} parent=1 // pred_region
      %584 = dma.done [#allocation27], 16
    $region349: #{forward.1} parent=1 // pred_fallthru
      _
    // Predicated region
    $region350: #{forward.1} parent=1 // pred_check
      _
    $region351: #{forward.1} parent=1 // pred_check_branch
      %586 = sbr.rel (0) target = $region353
    $region352: #{forward.1} parent=1 // pred_region
      %587 = dma.done [#allocation30], 16
    $region353: #{forward.1} parent=1 // pred_fallthru
      _
    // Predicated region
    $region354: #{forward.1} parent=1 // pred_check
      _
    $region355: #{forward.1} parent=1 // pred_check_branch
      %589 = sbr.rel (0) target = $region357
    $region356: #{forward.1} parent=1 // pred_region
      %590 = dma.done [#allocation30], 16
    $region357: #{forward.1} parent=1 // pred_fallthru
      _
    // Predicated region
    $region358: #{forward.1} parent=1 // pred_check
      _
    $region359: #{forward.1} parent=1 // pred_check_branch
      %592 = sbr.rel (0) target = $region361
    $region360: #{forward.1} parent=1 // pred_region
      %593 = dma.done [#allocation33], 16
    $region361: #{forward.1} parent=1 // pred_fallthru
      _
    // Predicated region
    $region362: #{forward.1} parent=1 // pred_check
      _
    $region363: #{forward.1} parent=1 // pred_check_branch
      %595 = sbr.rel (0) target = $region365
    $region364: #{forward.1} parent=1 // pred_region
      %596 = dma.done [#allocation33], 16
    $region365: #{forward.1} parent=1 // pred_fallthru
      _
    // Predicated region
    $region366: #{forward.1} parent=1 // pred_check
      _
    $region367: #{forward.1} parent=1 // pred_check_branch
      %598 = sbr.rel (0) target = $region369
    $region368: #{forward.1} parent=1 // pred_region
      %599 = dma.done [#allocation36], 16
    $region369: #{forward.1} parent=1 // pred_fallthru
      _
    // Predicated region
    $region370: #{forward.1} parent=1 // pred_check
      _
    $region371: #{forward.1} parent=1 // pred_check_branch
      %601 = sbr.rel (0) target = $region373
    $region372: #{forward.1} parent=1 // pred_region
      %602 = dma.done [#allocation36], 16
    $region373: #{forward.1} parent=1 // pred_fallthru
      _
    // Predicated region
    $region374: #{forward.1} parent=1 // pred_check
      _
    $region375: #{forward.1} parent=1 // pred_check_branch
      %604 = sbr.rel (0) target = $region377
    $region376: #{forward.1} parent=1 // pred_region
      %605 = dma.done [#allocation39], 16
    $region377: #{forward.1} parent=1 // pred_fallthru
      _
    // Predicated region
    $region378: #{forward.1} parent=1 // pred_check
      _
    $region379: #{forward.1} parent=1 // pred_check_branch
      %607 = sbr.rel (0) target = $region381
    $region380: #{forward.1} parent=1 // pred_region
      %608 = dma.done [#allocation39], 16
    $region381: #{forward.1} parent=1 // pred_fallthru
      _
    // Predicated region
    $region382: #{forward.1} parent=1 // pred_check
      _
    $region383: #{forward.1} parent=1 // pred_check_branch
      %610 = sbr.rel (0) target = $region385
    $region384: #{forward.1} parent=1 // pred_region
      %611 = dma.done [#allocation42], 16
    $region385: #{forward.1} parent=1 // pred_fallthru
      _
    // Predicated region
    $region386: #{forward.1} parent=1 // pred_check
      _
    $region387: #{forward.1} parent=1 // pred_check_branch
      %613 = sbr.rel (0) target = $region389
    $region388: #{forward.1} parent=1 // pred_region
      %614 = dma.done [#allocation42], 16
    $region389: #{forward.1} parent=1 // pred_fallthru
      _
    // Predicated region
    $region390: #{forward.1} parent=1 // pred_check
      _
    $region391: #{forward.1} parent=1 // pred_check_branch
      %616 = sbr.rel (0) target = $region393
    $region392: #{forward.1} parent=1 // pred_region
      %617 = dma.done [#allocation45], 16
    $region393: #{forward.1} parent=1 // pred_fallthru
      _
    %v618 = vld [vmem:[%s13] sm:$0xff]
    %v619 = vld [vmem:[%s15] sm:$0xff]
    %v620 = vld [vmem:[%s21] sm:$0xff]
    %v621 = vld [vmem:[%s17] sm:$0xff]
    %v622 = vld [vmem:[%s17 + $0x8] sm:$0xff]
    %v623 = vld [vmem:[%s19] sm:$0xff]
    %v624 = vld [vmem:[%s19 + $0x8] sm:$0xff]
    %v625 = vld [vmem:[%s23] sm:$0xff]
    %v626 = vld [vmem:[%s23 + $0x8] sm:$0xff]
    %v627 = vld [vmem:[%s25] sm:$0xff]
    %v628 = vld [vmem:[%s25 + $0x8] sm:$0xff]
    %v629 = vld [vmem:[%s25 + $0x10] sm:$0xff]
    %v630 = vld [vmem:[%s25 + $0x18] sm:$0xff]
    %v631 = vld [vmem:[%s27] sm:$0xff]
    %v632 = vld [vmem:[%s27 + $0x8] sm:$0xff]
    %v633 = vld [vmem:[%s27 + $0x10] sm:$0xff]
    %v634 = vld [vmem:[%s27 + $0x18] sm:$0xff]
    %v635 = vld [vmem:[%s27 + $0x20] sm:$0xff]
    %v636 = vld [vmem:[%s27 + $0x28] sm:$0xff]
    %v637 = vld [vmem:[%s27 + $0x30] sm:$0xff]
    %v638 = vld [vmem:[%s27 + $0x38] sm:$0xff]
    %v639 = vld [vmem:[%s27 + $0x40] sm:$0xff]
    %v640 = vld [vmem:[%s27 + $0x48] sm:$0xff]
    %v641 = vld [vmem:[%s27 + $0x50] sm:$0xff]
    %v642 = vld [vmem:[%s27 + $0x58] sm:$0xff]
    %v643 = vld [vmem:[%s27 + $0x60] sm:$0xff]
    %v644 = vld [vmem:[%s27 + $0x68] sm:$0xff]
    %v645 = vld [vmem:[%s27 + $0x70] sm:$0xff]
    %v646 = vld [vmem:[%s27 + $0x78] sm:$0xff]
    %v647 = vld [vmem:[%s1] sm:$0xff]
    %v648 = vld [vmem:[%s1 + $0x8] sm:$0xff]
    %v649 = vld [vmem:[%s1 + $0x10] sm:$0xff]
    %v650 = vld [vmem:[%s1 + $0x18] sm:$0xff]
    %v651 = vld [vmem:[%s33] sm:$0xf]
    %v652 = vld [vmem:[%s35] sm:$0x1]
    %v654 = vlaneseq
    %v655 = vshrl.u32 %v654, 7
    %v656 = vsub.s32 0, %v655
    %v657 = vrot.slane %v652, %v656
    %vm659 = vcmask 31744
    %v661 = vsel %vm659, %v647, 0
    %v664 = vsel %vm659, %v648, 0
    %v667 = vsel %vm659, %v649, 0
    %v670 = vsel %vm659, %v650, 0
    %vm672 = vcmask 1043456
    %v674 = vsel %vm672, %v651, 0
    %676 = vmatprep.subr.mxu0 0.0
    %677 = vmatpush1.msra.mxu0 %v674
    %678 = vmatprep.subr.mxu0 0.0
    %679 = vmatpush1.msra.mxu0 0.0
    %680 = vmatprep.subr.mxu0 0.0
    %681 = vmatpush1.msra.mxu0 0.0
    %682 = vmatprep.subr.mxu0 0.0
    %683 = vmatpush1.msra.mxu0 0.0
    %684 = vmatprep.subr.mxu0 0.0
    %685 = vmatpush1.msra.mxu0 0.0
    %686 = vmatprep.subr.mxu0 0.0
    %687 = vmatpush1.msra.mxu0 0.0
    %688 = vmatprep.subr.mxu0 0.0
    %689 = vmatpush1.msra.mxu0 0.0
    %690 = vmatprep.subr.mxu0 0.0
    %691 = vmatpush1.msra.mxu0 0.0
    %692 = vmatprep.subr.mxu0 0.0
    %693 = vmatpush1.msra.mxu0 0.0
    %694 = vmatprep.subr.mxu0 0.0
    %695 = vmatpush1.msra.mxu0 0.0
    %696 = vmatprep.subr.mxu0 0.0
    %697 = vmatpush1.msra.mxu0 0.0
    %698 = vmatprep.subr.mxu0 0.0
    %699 = vmatpush1.msra.mxu0 0.0
    %700 = vmatprep.subr.mxu0 0.0
    %701 = vmatpush1.msra.mxu0 0.0
    %702 = vmatprep.subr.mxu0 0.0
    %703 = vmatpush1.msra.mxu0 0.0
    %704 = vmatprep.subr.mxu0 0.0
    %705 = vmatpush1.msra.mxu0 0.0
    %706 = vmatprep.subr.mxu0 0.0
    %707 = vmatpush1.msra.mxu0 0.0
    %708 = vmatprep.subr.mxu0 0.0
    %709 = vmatpush1.msra.mxu0 0.0
    %710 = vmatprep.subr.mxu0 0.0
    %711 = vmatpush1.msra.mxu0 0.0
    %712 = vmatprep.subr.mxu0 0.0
    %713 = vmatpush1.msra.mxu0 0.0
    %714 = vmatprep.subr.mxu0 0.0
    %715 = vmatpush1.msra.mxu0 0.0
    %716 = vmatprep.subr.mxu0 0.0
    %717 = vmatpush1.msra.mxu0 0.0
    %718 = vmatprep.subr.mxu0 0.0
    %719 = vmatpush1.msra.mxu0 0.0
    %720 = vmatprep.subr.mxu0 0.0
    %721 = vmatpush1.msra.mxu0 0.0
    %722 = vmatprep.subr.mxu0 0.0
    %723 = vmatpush1.msra.mxu0 0.0
    %724 = vmatprep.subr.mxu0 0.0
    %725 = vmatpush1.msra.mxu0 0.0
    %726 = vmatprep.subr.mxu0 0.0
    %727 = vmatpush1.msra.mxu0 0.0
    %728 = vmatprep.subr.mxu0 0.0
    %729 = vmatpush1.msra.mxu0 0.0
    %730 = vmatprep.subr.mxu0 0.0
    %731 = vmatpush1.msra.mxu0 0.0
    %732 = vmatprep.subr.mxu0 0.0
    %733 = vmatpush1.msra.mxu0 0.0
    %734 = vmatprep.subr.mxu0 0.0
    %735 = vmatpush1.msra.mxu0 0.0
    %736 = vmatprep.subr.mxu0 0.0
    %737 = vmatpush1.msra.mxu0 0.0
    %738 = vmatprep.subr.mxu0 0.0
    %739 = vmatpush1.msra.mxu0 0.0
    %740 = vmatprep.mubr.f32.mxu0 0.0
    %741 = vmatmul.mubr.f32.gmra.mrb[0].mxu0 %v661
    %v742 = vpop.f32.mrb[0].mxu0
    %v743 = vadd.f32 %v657, %v742
    %v744 = vpop.f32.mrb[0].mxu0
    %745 = vmatprep.mubr.f32.mxu0 0.0
    %746 = vmatmul.mubr.f32.gmra.mrb[0].mxu0 %v664
    %v747 = vpop.f32.mrb[0].mxu0
    %v748 = vadd.f32 %v657, %v747
    %v749 = vpop.f32.mrb[0].mxu0
    %750 = vmatprep.mubr.f32.mxu0 0.0
    %751 = vmatmul.mubr.f32.gmra.mrb[0].mxu0 %v667
    %v752 = vpop.f32.mrb[0].mxu0
    %v753 = vadd.f32 %v657, %v752
    %v754 = vpop.f32.mrb[0].mxu0
    %755 = vmatprep.mubr.f32.mxu0 0.0
    %756 = vmatmul.mubr.f32.gmra.mrb[0].mxu0 %v670
    %v757 = vpop.f32.mrb[0].mxu0
    %v758 = vadd.f32 %v657, %v757
    %v759 = vpop.f32.mrb[0].mxu0
    %760 = vdwg.mxu0
    %vm761 = vcmask 261120
    %v762 = vsel %vm761, %v743, 0.0
    %763 = vadd.xlane.f32.xlu0 %v762
    %v764 = vpop.xlane.xlu0 %763
    %v765 = vsel %vm761, %v748, 0.0
    %766 = vadd.xlane.f32.xlu0 %v765
    %v767 = vpop.xlane.xlu0 %766
    %v768 = vsel %vm761, %v753, 0.0
    %769 = vadd.xlane.f32.xlu0 %v768
    %v770 = vpop.xlane.xlu0 %769
    %v771 = vsel %vm761, %v758, 0.0
    %772 = vadd.xlane.f32.xlu0 %v771
    %v773 = vpop.xlane.xlu0 %772
    %v774 = vrcp.pop 32.0
    %v775 = vmul.f32 %v764, %v774
    %v776 = vmul.f32 %v767, %v774
    %v777 = vmul.f32 %v770, %v774
    %v778 = vmul.f32 %v773, %v774
    %v779 = vsub.f32 %v743, %v775
    %v780 = vsub.f32 %v748, %v776
    %v781 = vsub.f32 %v753, %v777
    %v782 = vsub.f32 %v758, %v778
    %v783 = vmul.f32 %v779, %v779
    %v784 = vmul.f32 %v780, %v780
    %v785 = vmul.f32 %v781, %v781
    %v786 = vmul.f32 %v782, %v782
    %v787 = vsel %vm761, %v783, 0.0
    %788 = vadd.xlane.f32.xlu0 %v787
    %v789 = vpop.xlane.xlu0 %788
    %v790 = vsel %vm761, %v784, 0.0
    %791 = vadd.xlane.f32.xlu0 %v790
    %v792 = vpop.xlane.xlu0 %791
    %v793 = vsel %vm761, %v785, 0.0
    %794 = vadd.xlane.f32.xlu0 %v793
    %v795 = vpop.xlane.xlu0 %794
    %v796 = vsel %vm761, %v786, 0.0
    %797 = vadd.xlane.f32.xlu0 %v796
    %v798 = vpop.xlane.xlu0 %797
    %v799 = vmul.f32 %v789, %v774
    %v800 = vmul.f32 %v792, %v774
    %v801 = vmul.f32 %v795, %v774
    %v802 = vmul.f32 %v798, %v774
    %v803 = vadd.f32 %v799, 1e-05
    %v804 = vadd.f32 %v800, 1e-05
    %v805 = vadd.f32 %v801, 1e-05
    %v806 = vadd.f32 %v802, 1e-05
    %v807 = vrsqrt.pop %v803
    %v808 = vrsqrt.pop %v804
    %v809 = vrsqrt.pop %v805
    %v810 = vrsqrt.pop %v806
    %v811 = vmul.f32 %v779, %v807
    %v812 = vmul.f32 %v780, %v808
    %v813 = vmul.f32 %v781, %v809
    %v814 = vmul.f32 %v782, %v810
    %v815 = vld [vmem:[%s37] sm:$0x1]
    %v817 = vlaneseq
    %v818 = vshrl.u32 %v817, 7
    %v819 = vsub.s32 0, %v818
    %v820 = vrot.slane %v815, %v819
    %v822 = vmul.f32 %v811, %v820
    %v823 = vmul.f32 %v812, %v820
    %v824 = vmul.f32 %v813, %v820
    %v825 = vmul.f32 %v814, %v820
    %v826 = vld [vmem:[%s39] sm:$0x1]
    %v828 = vlaneseq
    %v829 = vshrl.u32 %v828, 7
    %v830 = vsub.s32 0, %v829
    %v831 = vrot.slane %v826, %v830
    %v833 = vadd.f32 %v822, %v831
    %v834 = vadd.f32 %v823, %v831
    %v835 = vadd.f32 %v824, %v831
    %v836 = vadd.f32 %v825, %v831
    %v837 = vmin.f32 %v833, 20.0
    %v838 = vmin.f32 %v834, 20.0
    %v839 = vmin.f32 %v835, 20.0
    %v840 = vmin.f32 %v836, 20.0
    %v841 = vmul.f32 %v837, 1.442695
    %v842 = vpow.pop %v841
    %v843 = vmul.f32 %v838, 1.442695
    %v844 = vpow.pop %v843
    %v845 = vmul.f32 %v839, 1.442695
    %v846 = vpow.pop %v845
    %v847 = vmul.f32 %v840, 1.442695
    %v848 = vpow.pop %v847
    %v849 = vadd.f32 %v842, 2.0
    %v850 = vadd.f32 %v844, 2.0
    %v851 = vadd.f32 %v846, 2.0
    %v852 = vadd.f32 %v848, 2.0
    %v853 = vmul.f32 %v842, %v849
    %v854 = vmul.f32 %v844, %v850
    %v855 = vmul.f32 %v846, %v851
    %v856 = vmul.f32 %v848, %v852
    %v857 = vadd.f32 %v853, 2.0
    %v858 = vadd.f32 %v854, 2.0
    %v859 = vadd.f32 %v855, 2.0
    %v860 = vadd.f32 %v856, 2.0
    %v861 = vrcp.pop %v857
    %v862 = vmul.f32 %v853, %v861
    %v863 = vrcp.pop %v858
    %v864 = vmul.f32 %v854, %v863
    %v865 = vrcp.pop %v859
    %v866 = vmul.f32 %v855, %v865
    %v867 = vrcp.pop %v860
    %v868 = vmul.f32 %v856, %v867
    %v869 = vmul.f32 %v833, %v862
    %v870 = vmul.f32 %v834, %v864
    %v871 = vmul.f32 %v835, %v866
    %v872 = vmul.f32 %v836, %v868
    %v873 = vld [vmem:[%s9] sm:$0xff]
    %875 = vrot.lane.b32.xlu0 %v870, 32
    %v876 = vpop.permute.xlu0 %875
    %879 = vrot.lane.b32.xlu0 %v873, 64
    %v880 = vpop.permute.xlu0 %879
    %v882 = vsel %vm761, %v869, %v876
    %vm883 = vcmask 523264
    %v884 = vsel %vm883, %v882, %v880
    %vm885 = vcmask 64512
    %v887 = vsel %vm885, %v618, 0
    %889 = vmatprep.subr.mxu0 0.0
    %890 = vmatpush1.msra.mxu0 %v884
    %891 = vmatprep.subr.mxu0 0.0
    %892 = vmatpush1.msra.mxu0 0.0
    %893 = vmatprep.subr.mxu0 0.0
    %894 = vmatpush1.msra.mxu0 0.0
    %895 = vmatprep.subr.mxu0 0.0
    %896 = vmatpush1.msra.mxu0 0.0
    %897 = vmatprep.subr.mxu0 0.0
    %898 = vmatpush1.msra.mxu0 0.0
    %899 = vmatprep.subr.mxu0 0.0
    %900 = vmatpush1.msra.mxu0 0.0
    %901 = vmatprep.subr.mxu0 0.0
    %902 = vmatpush1.msra.mxu0 0.0
    %903 = vmatprep.subr.mxu0 0.0
    %904 = vmatpush1.msra.mxu0 0.0
    %905 = vmatprep.subr.mxu0 0.0
    %906 = vmatpush1.msra.mxu0 0.0
    %907 = vmatprep.subr.mxu0 0.0
    %908 = vmatpush1.msra.mxu0 0.0
    %909 = vmatprep.subr.mxu0 0.0
    %910 = vmatpush1.msra.mxu0 0.0
    %911 = vmatprep.subr.mxu0 0.0
    %912 = vmatpush1.msra.mxu0 0.0
    %913 = vmatprep.subr.mxu0 0.0
    %914 = vmatpush1.msra.mxu0 0.0
    %915 = vmatprep.subr.mxu0 0.0
    %916 = vmatpush1.msra.mxu0 0.0
    %917 = vmatprep.subr.mxu0 0.0
    %918 = vmatpush1.msra.mxu0 0.0
    %919 = vmatprep.subr.mxu0 0.0
    %920 = vmatpush1.msra.mxu0 0.0
    %921 = vmatprep.subr.mxu0 0.0
    %922 = vmatpush1.msra.mxu0 0.0
    %923 = vmatprep.subr.mxu0 0.0
    %924 = vmatpush1.msra.mxu0 0.0
    %925 = vmatprep.subr.mxu0 0.0
    %926 = vmatpush1.msra.mxu0 0.0
    %927 = vmatprep.subr.mxu0 0.0
    %928 = vmatpush1.msra.mxu0 0.0
    %929 = vmatprep.subr.mxu0 0.0
    %930 = vmatpush1.msra.mxu0 0.0
    %931 = vmatprep.subr.mxu0 0.0
    %932 = vmatpush1.msra.mxu0 0.0
    %933 = vmatprep.subr.mxu0 0.0
    %934 = vmatpush1.msra.mxu0 0.0
    %935 = vmatprep.subr.mxu0 0.0
    %936 = vmatpush1.msra.mxu0 0.0
    %937 = vmatprep.subr.mxu0 0.0
    %938 = vmatpush1.msra.mxu0 0.0
    %939 = vmatprep.subr.mxu0 0.0
    %940 = vmatpush1.msra.mxu0 0.0
    %941 = vmatprep.subr.mxu0 0.0
    %942 = vmatpush1.msra.mxu0 0.0
    %943 = vmatprep.subr.mxu0 0.0
    %944 = vmatpush1.msra.mxu0 0.0
    %945 = vmatprep.subr.mxu0 0.0
    %946 = vmatpush1.msra.mxu0 0.0
    %947 = vmatprep.subr.mxu0 0.0
    %948 = vmatpush1.msra.mxu0 0.0
    %949 = vmatprep.subr.mxu0 0.0
    %950 = vmatpush1.msra.mxu0 0.0
    %951 = vmatprep.subr.mxu0 0.0
    %952 = vmatpush1.msra.mxu0 0.0
    %953 = vmatprep.mubr.f32.mxu0 0.0
    %954 = vmatmul.mubr.f32.gmra.mrb[0].mxu0 %v887
    %v955 = vpop.f32.mrb[0].mxu0
    %v956 = vadd.f32 0.0, %v955
    %v957 = vpop.f32.mrb[0].mxu0
    %958 = vdwg.mxu0
    %v960 = vsel %vm885, %v619, 0
    %962 = vmatprep.subr.mxu0 0.0
    %963 = vmatpush1.msra.mxu0 %v884
    %964 = vmatprep.subr.mxu0 0.0
    %965 = vmatpush1.msra.mxu0 0.0
    %966 = vmatprep.subr.mxu0 0.0
    %967 = vmatpush1.msra.mxu0 0.0
    %968 = vmatprep.subr.mxu0 0.0
    %969 = vmatpush1.msra.mxu0 0.0
    %970 = vmatprep.subr.mxu0 0.0
    %971 = vmatpush1.msra.mxu0 0.0
    %972 = vmatprep.subr.mxu0 0.0
    %973 = vmatpush1.msra.mxu0 0.0
    %974 = vmatprep.subr.mxu0 0.0
    %975 = vmatpush1.msra.mxu0 0.0
    %976 = vmatprep.subr.mxu0 0.0
    %977 = vmatpush1.msra.mxu0 0.0
    %978 = vmatprep.subr.mxu0 0.0
    %979 = vmatpush1.msra.mxu0 0.0
    %980 = vmatprep.subr.mxu0 0.0
    %981 = vmatpush1.msra.mxu0 0.0
    %982 = vmatprep.subr.mxu0 0.0
    %983 = vmatpush1.msra.mxu0 0.0
    %984 = vmatprep.subr.mxu0 0.0
    %985 = vmatpush1.msra.mxu0 0.0
    %986 = vmatprep.subr.mxu0 0.0
    %987 = vmatpush1.msra.mxu0 0.0
    %988 = vmatprep.subr.mxu0 0.0
    %989 = vmatpush1.msra.mxu0 0.0
    %990 = vmatprep.subr.mxu0 0.0
    %991 = vmatpush1.msra.mxu0 0.0
    %992 = vmatprep.subr.mxu0 0.0
    %993 = vmatpush1.msra.mxu0 0.0
    %994 = vmatprep.subr.mxu0 0.0
    %995 = vmatpush1.msra.mxu0 0.0
    %996 = vmatprep.subr.mxu0 0.0
    %997 = vmatpush1.msra.mxu0 0.0
    %998 = vmatprep.subr.mxu0 0.0
    %999 = vmatpush1.msra.mxu0 0.0
    %1000 = vmatprep.subr.mxu0 0.0
    %1001 = vmatpush1.msra.mxu0 0.0
    %1002 = vmatprep.subr.mxu0 0.0
    %1003 = vmatpush1.msra.mxu0 0.0
    %1004 = vmatprep.subr.mxu0 0.0
    %1005 = vmatpush1.msra.mxu0 0.0
    %1006 = vmatprep.subr.mxu0 0.0
    %1007 = vmatpush1.msra.mxu0 0.0
    %1008 = vmatprep.subr.mxu0 0.0
    %1009 = vmatpush1.msra.mxu0 0.0
    %1010 = vmatprep.subr.mxu0 0.0
    %1011 = vmatpush1.msra.mxu0 0.0
    %1012 = vmatprep.subr.mxu0 0.0
    %1013 = vmatpush1.msra.mxu0 0.0
    %1014 = vmatprep.subr.mxu0 0.0
    %1015 = vmatpush1.msra.mxu0 0.0
    %1016 = vmatprep.subr.mxu0 0.0
    %1017 = vmatpush1.msra.mxu0 0.0
    %1018 = vmatprep.subr.mxu0 0.0
    %1019 = vmatpush1.msra.mxu0 0.0
    %1020 = vmatprep.subr.mxu0 0.0
    %1021 = vmatpush1.msra.mxu0 0.0
    %1022 = vmatprep.subr.mxu0 0.0
    %1023 = vmatpush1.msra.mxu0 0.0
    %1024 = vmatprep.subr.mxu0 0.0
    %1025 = vmatpush1.msra.mxu0 0.0
    %1026 = vmatprep.mubr.f32.mxu0 0.0
    %1027 = vmatmul.mubr.f32.gmra.mrb[0].mxu0 %v960
    %v1028 = vpop.f32.mrb[0].mxu0
    %v1029 = vadd.f32 0.0, %v1028
    %v1030 = vpop.f32.mrb[0].mxu0
    %1031 = vdwg.mxu0
    %1033 = vrot.lane.b32.xlu0 %v884, 96
    %v1034 = vpop.permute.xlu0 %1033
    %1037 = vrot.lane.b32.xlu0 %v1029, 64
    %v1038 = vpop.permute.xlu0 %1037
    %vm1040 = vcmask 785408
    %v1041 = vsel %vm1040, %v956, %v1034
    %v1042 = vsel %vm883, %v1034, %v1038
    %v1043 = vld [vmem:[%s49] sm:$0xff]
    %v1044 = vld [vmem:[%s49 + $0x8] sm:$0xff]
    %v1045 = vld [vmem:[%s49 + $0x10] sm:$0xff]
    %v1046 = vld [vmem:[%s49 + $0x18] sm:$0xff]
    %v1047 = vld [vmem:[%s49 + $0x20] sm:$0xff]
    %v1048 = vld [vmem:[%s49 + $0x28] sm:$0xff]
    %v1049 = vld [vmem:[%s49 + $0x30] sm:$0xff]
    %v1050 = vld [vmem:[%s49 + $0x38] sm:$0xff]
    %v1051 = vld [vmem:[%s49 + $0x40] sm:$0xff]
    %v1052 = vld [vmem:[%s49 + $0x48] sm:$0xff]
    %v1053 = vld [vmem:[%s49 + $0x50] sm:$0xff]
    %v1054 = vld [vmem:[%s49 + $0x58] sm:$0xff]
    %v1055 = vld [vmem:[%s49 + $0x60] sm:$0xff]
    %v1056 = vld [vmem:[%s49 + $0x68] sm:$0xff]
    %v1057 = vld [vmem:[%s49 + $0x70] sm:$0xff]
    %v1058 = vld [vmem:[%s49 + $0x78] sm:$0xff]
    %v1059 = vld [vmem:[%s49 + $0x80] sm:$0xff]
    %v1060 = vld [vmem:[%s49 + $0x88] sm:$0xff]
    %v1061 = vld [vmem:[%s49 + $0x90] sm:$0xff]
    %v1062 = vld [vmem:[%s49 + $0x98] sm:$0xff]
    %v1063 = vld [vmem:[%s49 + $0xa0] sm:$0xff]
    %v1064 = vld [vmem:[%s49 + $0xa8] sm:$0xff]
    %v1065 = vld [vmem:[%s49 + $0xb0] sm:$0xff]
    %v1066 = vld [vmem:[%s49 + $0xb8] sm:$0xff]
    %v1067 = vld [vmem:[%s49 + $0xc0] sm:$0xff]
    %v1068 = vld [vmem:[%s49 + $0xc8] sm:$0xff]
    %v1069 = vld [vmem:[%s49 + $0xd0] sm:$0xff]
    %v1070 = vld [vmem:[%s49 + $0xd8] sm:$0xff]
    %v1071 = vld [vmem:[%s49 + $0xe0] sm:$0xff]
    %v1072 = vld [vmem:[%s49 + $0xe8] sm:$0xff]
    %v1073 = vld [vmem:[%s49 + $0xf0] sm:$0xff]
    %v1074 = vld [vmem:[%s49 + $0xf8] sm:$0xff]
    %v1075 = vld [vmem:[%s49 + $0x100] sm:$0xff]
    %v1076 = vld [vmem:[%s49 + $0x108] sm:$0xff]
    %v1077 = vld [vmem:[%s49 + $0x110] sm:$0xff]
    %v1078 = vld [vmem:[%s49 + $0x118] sm:$0xff]
    %v1079 = vld [vmem:[%s51] sm:$0x1]
    %v1081 = vlaneseq
    %v1082 = vshrl.u32 %v1081, 7
    %v1083 = vsub.s32 0, %v1082
    %v1084 = vrot.slane %v1079, %v1083
    %v1086 = vsel %vm761, %v1038, 0
    %1088 = vmatprep.subr.mxu0 0.0
    %1089 = vmatpush1.msra.mxu0 %v1043
    %1090 = vmatprep.subr.mxu0 0.0
    %1091 = vmatpush1.msra.mxu0 %v1044
    %1092 = vmatprep.subr.mxu0 0.0
    %1093 = vmatpush1.msra.mxu0 %v1045
    %1094 = vmatprep.subr.mxu0 0.0
    %1095 = vmatpush1.msra.mxu0 %v1046
    %1096 = vmatprep.subr.mxu0 0.0
    %1097 = vmatpush1.msra.mxu0 %v1047
    %1098 = vmatprep.subr.mxu0 0.0
    %1099 = vmatpush1.msra.mxu0 %v1048
    %1100 = vmatprep.subr.mxu0 0.0
    %1101 = vmatpush1.msra.mxu0 %v1049
    %1102 = vmatprep.subr.mxu0 0.0
    %1103 = vmatpush1.msra.mxu0 %v1050
    %1104 = vmatprep.subr.mxu0 0.0
    %1105 = vmatpush1.msra.mxu0 %v1051
    %1106 = vmatprep.subr.mxu0 0.0
    %1107 = vmatpush1.msra.mxu0 %v1052
    %1108 = vmatprep.subr.mxu0 0.0
    %1109 = vmatpush1.msra.mxu0 %v1053
    %1110 = vmatprep.subr.mxu0 0.0
    %1111 = vmatpush1.msra.mxu0 %v1054
    %1112 = vmatprep.subr.mxu0 0.0
    %1113 = vmatpush1.msra.mxu0 %v1055
    %1114 = vmatprep.subr.mxu0 0.0
    %1115 = vmatpush1.msra.mxu0 %v1056
    %1116 = vmatprep.subr.mxu0 0.0
    %1117 = vmatpush1.msra.mxu0 %v1057
    %1118 = vmatprep.subr.mxu0 0.0
    %1119 = vmatpush1.msra.mxu0 %v1058
    %1120 = vmatprep.subr.mxu0 0.0
    %1121 = vmatpush1.msra.mxu0 %v1059
    %1122 = vmatprep.subr.mxu0 0.0
    %1123 = vmatpush1.msra.mxu0 %v1060
    %1124 = vmatprep.subr.mxu0 0.0
    %1125 = vmatpush1.msra.mxu0 %v1061
    %1126 = vmatprep.subr.mxu0 0.0
    %1127 = vmatpush1.msra.mxu0 %v1062
    %1128 = vmatprep.subr.mxu0 0.0
    %1129 = vmatpush1.msra.mxu0 %v1063
    %1130 = vmatprep.subr.mxu0 0.0
    %1131 = vmatpush1.msra.mxu0 %v1064
    %1132 = vmatprep.subr.mxu0 0.0
    %1133 = vmatpush1.msra.mxu0 %v1065
    %1134 = vmatprep.subr.mxu0 0.0
    %1135 = vmatpush1.msra.mxu0 %v1066
    %1136 = vmatprep.subr.mxu0 0.0
    %1137 = vmatpush1.msra.mxu0 %v1067
    %1138 = vmatprep.subr.mxu0 0.0
    %1139 = vmatpush1.msra.mxu0 %v1068
    %1140 = vmatprep.subr.mxu0 0.0
    %1141 = vmatpush1.msra.mxu0 %v1069
    %1142 = vmatprep.subr.mxu0 0.0
    %1143 = vmatpush1.msra.mxu0 %v1070
    %1144 = vmatprep.subr.mxu0 0.0
    %1145 = vmatpush1.msra.mxu0 %v1071
    %1146 = vmatprep.subr.mxu0 0.0
    %1147 = vmatpush1.msra.mxu0 %v1072
    %1148 = vmatprep.subr.mxu0 0.0
    %1149 = vmatpush1.msra.mxu0 %v1073
    %1150 = vmatprep.subr.mxu0 0.0
    %1151 = vmatpush1.msra.mxu0 %v1074
    %1152 = vmatprep.mubr.f32.mxu0 %v1042
    %1153 = vmatmul.mubr.f32.gmra.mrb[0].mxu0 %v1041
    %v1154 = vpop.f32.mrb[0].mxu0
    %v1155 = vadd.f32 %v1084, %v1154
    %v1156 = vpop.f32.mrb[0].mxu0
    %1157 = vdwg.mxu0
    %1158 = vmatprep.subr.mxu0 0.0
    %1159 = vmatpush1.msra.mxu0 %v1075
    %1160 = vmatprep.subr.mxu0 0.0
    %1161 = vmatpush1.msra.mxu0 %v1076
    %1162 = vmatprep.subr.mxu0 0.0
    %1163 = vmatpush1.msra.mxu0 %v1077
    %1164 = vmatprep.subr.mxu0 0.0
    %1165 = vmatpush1.msra.mxu0 %v1078
    %1166 = vmatprep.subr.mxu0 0.0
    %1167 = vmatpush1.msra.mxu0 0.0
    %1168 = vmatprep.subr.mxu0 0.0
    %1169 = vmatpush1.msra.mxu0 0.0
    %1170 = vmatprep.subr.mxu0 0.0
    %1171 = vmatpush1.msra.mxu0 0.0
    %1172 = vmatprep.subr.mxu0 0.0
    %1173 = vmatpush1.msra.mxu0 0.0
    %1174 = vmatprep.subr.mxu0 0.0
    %1175 = vmatpush1.msra.mxu0 0.0
    %1176 = vmatprep.subr.mxu0 0.0
    %1177 = vmatpush1.msra.mxu0 0.0
    %1178 = vmatprep.subr.mxu0 0.0
    %1179 = vmatpush1.msra.mxu0 0.0
    %1180 = vmatprep.subr.mxu0 0.0
    %1181 = vmatpush1.msra.mxu0 0.0
    %1182 = vmatprep.subr.mxu0 0.0
    %1183 = vmatpush1.msra.mxu0 0.0
    %1184 = vmatprep.subr.mxu0 0.0
    %1185 = vmatpush1.msra.mxu0 0.0
    %1186 = vmatprep.subr.mxu0 0.0
    %1187 = vmatpush1.msra.mxu0 0.0
    %1188 = vmatprep.subr.mxu0 0.0
    %1189 = vmatpush1.msra.mxu0 0.0
    %1190 = vmatprep.subr.mxu0 0.0
    %1191 = vmatpush1.msra.mxu0 0.0
    %1192 = vmatprep.subr.mxu0 0.0
    %1193 = vmatpush1.msra.mxu0 0.0
    %1194 = vmatprep.subr.mxu0 0.0
    %1195 = vmatpush1.msra.mxu0 0.0
    %1196 = vmatprep.subr.mxu0 0.0
    %1197 = vmatpush1.msra.mxu0 0.0
    %1198 = vmatprep.subr.mxu0 0.0
    %1199 = vmatpush1.msra.mxu0 0.0
    %1200 = vmatprep.subr.mxu0 0.0
    %1201 = vmatpush1.msra.mxu0 0.0
    %1202 = vmatprep.subr.mxu0 0.0
    %1203 = vmatpush1.msra.mxu0 0.0
    %1204 = vmatprep.subr.mxu0 0.0
    %1205 = vmatpush1.msra.mxu0 0.0
    %1206 = vmatprep.subr.mxu0 0.0
    %1207 = vmatpush1.msra.mxu0 0.0
    %1208 = vmatprep.subr.mxu0 0.0
    %1209 = vmatpush1.msra.mxu0 0.0
    %1210 = vmatprep.subr.mxu0 0.0
    %1211 = vmatpush1.msra.mxu0 0.0
    %1212 = vmatprep.subr.mxu0 0.0
    %1213 = vmatpush1.msra.mxu0 0.0
    %1214 = vmatprep.subr.mxu0 0.0
    %1215 = vmatpush1.msra.mxu0 0.0
    %1216 = vmatprep.subr.mxu0 0.0
    %1217 = vmatpush1.msra.mxu0 0.0
    %1218 = vmatprep.subr.mxu0 0.0
    %1219 = vmatpush1.msra.mxu0 0.0
    %1220 = vmatprep.subr.mxu0 0.0
    %1221 = vmatpush1.msra.mxu0 0.0
    %1222 = vmatprep.mubr.f32.mxu0 0.0
    %1223 = vmatmul.mubr.f32.gmra.mrb[0].mxu0 %v1086
    %v1224 = vpop.f32.mrb[0].mxu0
    %v1225 = vadd.f32 %v1155, %v1224
    %v1226 = vpop.f32.mrb[0].mxu0
    %1227 = vdwg.mxu0
    %v1228 = vmin.f32 %v1225, 20.0
    %v1229 = vmul.f32 %v1228, 1.442695
    %v1230 = vpow.pop %v1229
    %v1231 = vadd.f32 %v1230, 2.0
    %v1232 = vmul.f32 %v1230, %v1231
    %v1233 = vadd.f32 %v1232, 2.0
    %v1234 = vrcp.pop %v1233
    %v1235 = vmul.f32 %v1232, %v1234
    %v1236 = vmul.f32 %v1225, %v1235
    %1237 = vmatprep.subr.mxu0 0.0
    %1238 = vmatpush1.msra.mxu0 %v1236
    %1239 = vmatprep.subr.mxu0 0.0
    %1240 = vmatpush1.msra.mxu0 0.0
    %1241 = vmatprep.subr.mxu0 0.0
    %1242 = vmatpush1.msra.mxu0 0.0
    %1243 = vmatprep.subr.mxu0 0.0
    %1244 = vmatpush1.msra.mxu0 0.0
    %1245 = vmatprep.subr.mxu0 0.0
    %1246 = vmatpush1.msra.mxu0 0.0
    %1247 = vmatprep.subr.mxu0 0.0
    %1248 = vmatpush1.msra.mxu0 0.0
    %1249 = vmatprep.subr.mxu0 0.0
    %1250 = vmatpush1.msra.mxu0 0.0
    %1251 = vmatprep.subr.mxu0 0.0
    %1252 = vmatpush1.msra.mxu0 0.0
    %1253 = vmatprep.subr.mxu0 0.0
    %1254 = vmatpush1.msra.mxu0 0.0
    %1255 = vmatprep.subr.mxu0 0.0
    %1256 = vmatpush1.msra.mxu0 0.0
    %1257 = vmatprep.subr.mxu0 0.0
    %1258 = vmatpush1.msra.mxu0 0.0
    %1259 = vmatprep.subr.mxu0 0.0
    %1260 = vmatpush1.msra.mxu0 0.0
    %1261 = vmatprep.subr.mxu0 0.0
    %1262 = vmatpush1.msra.mxu0 0.0
    %1263 = vmatprep.subr.mxu0 0.0
    %1264 = vmatpush1.msra.mxu0 0.0
    %1265 = vmatprep.subr.mxu0 0.0
    %1266 = vmatpush1.msra.mxu0 0.0
    %1267 = vmatprep.subr.mxu0 0.0
    %1268 = vmatpush1.msra.mxu0 0.0
    %1269 = vmatprep.subr.mxu0 0.0
    %1270 = vmatpush1.msra.mxu0 0.0
    %1271 = vmatprep.subr.mxu0 0.0
    %1272 = vmatpush1.msra.mxu0 0.0
    %1273 = vmatprep.subr.mxu0 0.0
    %1274 = vmatpush1.msra.mxu0 0.0
    %1275 = vmatprep.subr.mxu0 0.0
    %1276 = vmatpush1.msra.mxu0 0.0
    %1277 = vmatprep.subr.mxu0 0.0
    %1278 = vmatpush1.msra.mxu0 0.0
    %1279 = vmatprep.subr.mxu0 0.0
    %1280 = vmatpush1.msra.mxu0 0.0
    %1281 = vmatprep.subr.mxu0 0.0
    %1282 = vmatpush1.msra.mxu0 0.0
    %1283 = vmatprep.subr.mxu0 0.0
    %1284 = vmatpush1.msra.mxu0 0.0
    %1285 = vmatprep.subr.mxu0 0.0
    %1286 = vmatpush1.msra.mxu0 0.0
    %1287 = vmatprep.subr.mxu0 0.0
    %1288 = vmatpush1.msra.mxu0 0.0
    %1289 = vmatprep.subr.mxu0 0.0
    %1290 = vmatpush1.msra.mxu0 0.0
    %1291 = vmatprep.subr.mxu0 0.0
    %1292 = vmatpush1.msra.mxu0 0.0
    %1293 = vmatprep.subr.mxu0 0.0
    %1294 = vmatpush1.msra.mxu0 0.0
    %1295 = vmatprep.subr.mxu0 0.0
    %1296 = vmatpush1.msra.mxu0 0.0
    %1297 = vmatprep.subr.mxu0 0.0
    %1298 = vmatpush1.msra.mxu0 0.0
    %1299 = vmatprep.subr.mxu0 0.0
    %1300 = vmatpush1.msra.mxu0 0.0
    %1301 = vmatprep.mubr.f32.mxu0 0.0
    %1302 = vmatmul.mubr.f32.gmra.mrb[0].mxu0 %v887
    %v1303 = vpop.f32.mrb[0].mxu0
    %v1304 = vadd.f32 0.0, %v1303
    %v1305 = vpop.f32.mrb[0].mxu0
    %1306 = vdwg.mxu0
    %1307 = vmatprep.subr.mxu0 0.0
    %1308 = vmatpush1.msra.mxu0 %v1236
    %1309 = vmatprep.subr.mxu0 0.0
    %1310 = vmatpush1.msra.mxu0 0.0
    %1311 = vmatprep.subr.mxu0 0.0
    %1312 = vmatpush1.msra.mxu0 0.0
    %1313 = vmatprep.subr.mxu0 0.0
    %1314 = vmatpush1.msra.mxu0 0.0
    %1315 = vmatprep.subr.mxu0 0.0
    %1316 = vmatpush1.msra.mxu0 0.0
    %1317 = vmatprep.subr.mxu0 0.0
    %1318 = vmatpush1.msra.mxu0 0.0
    %1319 = vmatprep.subr.mxu0 0.0
    %1320 = vmatpush1.msra.mxu0 0.0
    %1321 = vmatprep.subr.mxu0 0.0
    %1322 = vmatpush1.msra.mxu0 0.0
    %1323 = vmatprep.subr.mxu0 0.0
    %1324 = vmatpush1.msra.mxu0 0.0
    %1325 = vmatprep.subr.mxu0 0.0
    %1326 = vmatpush1.msra.mxu0 0.0
    %1327 = vmatprep.subr.mxu0 0.0
    %1328 = vmatpush1.msra.mxu0 0.0
    %1329 = vmatprep.subr.mxu0 0.0
    %1330 = vmatpush1.msra.mxu0 0.0
    %1331 = vmatprep.subr.mxu0 0.0
    %1332 = vmatpush1.msra.mxu0 0.0
    %1333 = vmatprep.subr.mxu0 0.0
    %1334 = vmatpush1.msra.mxu0 0.0
    %1335 = vmatprep.subr.mxu0 0.0
    %1336 = vmatpush1.msra.mxu0 0.0
    %1337 = vmatprep.subr.mxu0 0.0
    %1338 = vmatpush1.msra.mxu0 0.0
    %1339 = vmatprep.subr.mxu0 0.0
    %1340 = vmatpush1.msra.mxu0 0.0
    %1341 = vmatprep.subr.mxu0 0.0
    %1342 = vmatpush1.msra.mxu0 0.0
    %1343 = vmatprep.subr.mxu0 0.0
    %1344 = vmatpush1.msra.mxu0 0.0
    %1345 = vmatprep.subr.mxu0 0.0
    %1346 = vmatpush1.msra.mxu0 0.0
    %1347 = vmatprep.subr.mxu0 0.0
    %1348 = vmatpush1.msra.mxu0 0.0
    %1349 = vmatprep.subr.mxu0 0.0
    %1350 = vmatpush1.msra.mxu0 0.0
    %1351 = vmatprep.subr.mxu0 0.0
    %1352 = vmatpush1.msra.mxu0 0.0
    %1353 = vmatprep.subr.mxu0 0.0
    %1354 = vmatpush1.msra.mxu0 0.0
    %1355 = vmatprep.subr.mxu0 0.0
    %1356 = vmatpush1.msra.mxu0 0.0
    %1357 = vmatprep.subr.mxu0 0.0
    %1358 = vmatpush1.msra.mxu0 0.0
    %1359 = vmatprep.subr.mxu0 0.0
    %1360 = vmatpush1.msra.mxu0 0.0
    %1361 = vmatprep.subr.mxu0 0.0
    %1362 = vmatpush1.msra.mxu0 0.0
    %1363 = vmatprep.subr.mxu0 0.0
    %1364 = vmatpush1.msra.mxu0 0.0
    %1365 = vmatprep.subr.mxu0 0.0
    %1366 = vmatpush1.msra.mxu0 0.0
    %1367 = vmatprep.subr.mxu0 0.0
    %1368 = vmatpush1.msra.mxu0 0.0
    %1369 = vmatprep.subr.mxu0 0.0
    %1370 = vmatpush1.msra.mxu0 0.0
    %1371 = vmatprep.mubr.f32.mxu0 0.0
    %1372 = vmatmul.mubr.f32.gmra.mrb[0].mxu0 %v960
    %v1373 = vpop.f32.mrb[0].mxu0
    %v1374 = vadd.f32 0.0, %v1373
    %v1375 = vpop.f32.mrb[0].mxu0
    %1376 = vdwg.mxu0
    %1378 = vrot.lane.b32.xlu0 %v1236, 96
    %v1379 = vpop.permute.xlu0 %1378
    %1382 = vrot.lane.b32.xlu0 %v1374, 64
    %v1383 = vpop.permute.xlu0 %1382
    %v1385 = vsel %vm1040, %v1304, %v1379
    %v1386 = vsel %vm883, %v1379, %v1383
    %v1387 = vld [vmem:[%s53] sm:$0xff]
    %v1388 = vld [vmem:[%s53 + $0x8] sm:$0xff]
    %v1389 = vld [vmem:[%s53 + $0x10] sm:$0xff]
    %v1390 = vld [vmem:[%s53 + $0x18] sm:$0xff]
    %v1391 = vld [vmem:[%s53 + $0x20] sm:$0xff]
    %v1392 = vld [vmem:[%s53 + $0x28] sm:$0xff]
    %v1393 = vld [vmem:[%s53 + $0x30] sm:$0xff]
    %v1394 = vld [vmem:[%s53 + $0x38] sm:$0xff]
    %v1395 = vld [vmem:[%s53 + $0x40] sm:$0xff]
    %v1396 = vld [vmem:[%s53 + $0x48] sm:$0xff]
    %v1397 = vld [vmem:[%s53 + $0x50] sm:$0xff]
    %v1398 = vld [vmem:[%s53 + $0x58] sm:$0xff]
    %v1399 = vld [vmem:[%s53 + $0x60] sm:$0xff]
    %v1400 = vld [vmem:[%s53 + $0x68] sm:$0xff]
    %v1401 = vld [vmem:[%s53 + $0x70] sm:$0xff]
    %v1402 = vld [vmem:[%s53 + $0x78] sm:$0xff]
    %v1403 = vld [vmem:[%s53 + $0x80] sm:$0xff]
    %v1404 = vld [vmem:[%s53 + $0x88] sm:$0xff]
    %v1405 = vld [vmem:[%s53 + $0x90] sm:$0xff]
    %v1406 = vld [vmem:[%s53 + $0x98] sm:$0xff]
    %v1407 = vld [vmem:[%s53 + $0xa0] sm:$0xff]
    %v1408 = vld [vmem:[%s53 + $0xa8] sm:$0xff]
    %v1409 = vld [vmem:[%s53 + $0xb0] sm:$0xff]
    %v1410 = vld [vmem:[%s53 + $0xb8] sm:$0xff]
    %v1411 = vld [vmem:[%s53 + $0xc0] sm:$0xff]
    %v1412 = vld [vmem:[%s53 + $0xc8] sm:$0xff]
    %v1413 = vld [vmem:[%s53 + $0xd0] sm:$0xff]
    %v1414 = vld [vmem:[%s53 + $0xd8] sm:$0xff]
    %v1415 = vld [vmem:[%s53 + $0xe0] sm:$0xff]
    %v1416 = vld [vmem:[%s53 + $0xe8] sm:$0xff]
    %v1417 = vld [vmem:[%s53 + $0xf0] sm:$0xff]
    %v1418 = vld [vmem:[%s53 + $0xf8] sm:$0xff]
    %v1419 = vld [vmem:[%s53 + $0x100] sm:$0xff]
    %v1420 = vld [vmem:[%s53 + $0x108] sm:$0xff]
    %v1421 = vld [vmem:[%s53 + $0x110] sm:$0xff]
    %v1422 = vld [vmem:[%s53 + $0x118] sm:$0xff]
    %v1423 = vld [vmem:[%s55] sm:$0x1]
    %v1425 = vlaneseq
    %v1426 = vshrl.u32 %v1425, 7
    %v1427 = vsub.s32 0, %v1426
    %v1428 = vrot.slane %v1423, %v1427
    %v1430 = vsel %vm761, %v1383, 0
    %1432 = vmatprep.subr.mxu0 0.0
    %1433 = vmatpush1.msra.mxu0 %v1387
    %1434 = vmatprep.subr.mxu0 0.0
    %1435 = vmatpush1.msra.mxu0 %v1388
    %1436 = vmatprep.subr.mxu0 0.0
    %1437 = vmatpush1.msra.mxu0 %v1389
    %1438 = vmatprep.subr.mxu0 0.0
    %1439 = vmatpush1.msra.mxu0 %v1390
    %1440 = vmatprep.subr.mxu0 0.0
    %1441 = vmatpush1.msra.mxu0 %v1391
    %1442 = vmatprep.subr.mxu0 0.0
    %1443 = vmatpush1.msra.mxu0 %v1392
    %1444 = vmatprep.subr.mxu0 0.0
    %1445 = vmatpush1.msra.mxu0 %v1393
    %1446 = vmatprep.subr.mxu0 0.0
    %1447 = vmatpush1.msra.mxu0 %v1394
    %1448 = vmatprep.subr.mxu0 0.0
    %1449 = vmatpush1.msra.mxu0 %v1395
    %1450 = vmatprep.subr.mxu0 0.0
    %1451 = vmatpush1.msra.mxu0 %v1396
    %1452 = vmatprep.subr.mxu0 0.0
    %1453 = vmatpush1.msra.mxu0 %v1397
    %1454 = vmatprep.subr.mxu0 0.0
    %1455 = vmatpush1.msra.mxu0 %v1398
    %1456 = vmatprep.subr.mxu0 0.0
    %1457 = vmatpush1.msra.mxu0 %v1399
    %1458 = vmatprep.subr.mxu0 0.0
    %1459 = vmatpush1.msra.mxu0 %v1400
    %1460 = vmatprep.subr.mxu0 0.0
    %1461 = vmatpush1.msra.mxu0 %v1401
    %1462 = vmatprep.subr.mxu0 0.0
    %1463 = vmatpush1.msra.mxu0 %v1402
    %1464 = vmatprep.subr.mxu0 0.0
    %1465 = vmatpush1.msra.mxu0 %v1403
    %1466 = vmatprep.subr.mxu0 0.0
    %1467 = vmatpush1.msra.mxu0 %v1404
    %1468 = vmatprep.subr.mxu0 0.0
    %1469 = vmatpush1.msra.mxu0 %v1405
    %1470 = vmatprep.subr.mxu0 0.0
    %1471 = vmatpush1.msra.mxu0 %v1406
    %1472 = vmatprep.subr.mxu0 0.0
    %1473 = vmatpush1.msra.mxu0 %v1407
    %1474 = vmatprep.subr.mxu0 0.0
    %1475 = vmatpush1.msra.mxu0 %v1408
    %1476 = vmatprep.subr.mxu0 0.0
    %1477 = vmatpush1.msra.mxu0 %v1409
    %1478 = vmatprep.subr.mxu0 0.0
    %1479 = vmatpush1.msra.mxu0 %v1410
    %1480 = vmatprep.subr.mxu0 0.0
    %1481 = vmatpush1.msra.mxu0 %v1411
    %1482 = vmatprep.subr.mxu0 0.0
    %1483 = vmatpush1.msra.mxu0 %v1412
    %1484 = vmatprep.subr.mxu0 0.0
    %1485 = vmatpush1.msra.mxu0 %v1413
    %1486 = vmatprep.subr.mxu0 0.0
    %1487 = vmatpush1.msra.mxu0 %v1414
    %1488 = vmatprep.subr.mxu0 0.0
    %1489 = vmatpush1.msra.mxu0 %v1415
    %1490 = vmatprep.subr.mxu0 0.0
    %1491 = vmatpush1.msra.mxu0 %v1416
    %1492 = vmatprep.subr.mxu0 0.0
    %1493 = vmatpush1.msra.mxu0 %v1417
    %1494 = vmatprep.subr.mxu0 0.0
    %1495 = vmatpush1.msra.mxu0 %v1418
    %1496 = vmatprep.mubr.f32.mxu0 %v1386
    %1497 = vmatmul.mubr.f32.gmra.mrb[0].mxu0 %v1385
    %v1498 = vpop.f32.mrb[0].mxu0
    %v1499 = vadd.f32 %v1428, %v1498
    %v1500 = vpop.f32.mrb[0].mxu0
    %1501 = vdwg.mxu0
    %1502 = vmatprep.subr.mxu0 0.0
    %1503 = vmatpush1.msra.mxu0 %v1419
    %1504 = vmatprep.subr.mxu0 0.0
    %1505 = vmatpush1.msra.mxu0 %v1420
    %1506 = vmatprep.subr.mxu0 0.0
    %1507 = vmatpush1.msra.mxu0 %v1421
    %1508 = vmatprep.subr.mxu0 0.0
    %1509 = vmatpush1.msra.mxu0 %v1422
    %1510 = vmatprep.subr.mxu0 0.0
    %1511 = vmatpush1.msra.mxu0 0.0
    %1512 = vmatprep.subr.mxu0 0.0
    %1513 = vmatpush1.msra.mxu0 0.0
    %1514 = vmatprep.subr.mxu0 0.0
    %1515 = vmatpush1.msra.mxu0 0.0
    %1516 = vmatprep.subr.mxu0 0.0
    %1517 = vmatpush1.msra.mxu0 0.0
    %1518 = vmatprep.subr.mxu0 0.0
    %1519 = vmatpush1.msra.mxu0 0.0
    %1520 = vmatprep.subr.mxu0 0.0
    %1521 = vmatpush1.msra.mxu0 0.0
    %1522 = vmatprep.subr.mxu0 0.0
    %1523 = vmatpush1.msra.mxu0 0.0
    %1524 = vmatprep.subr.mxu0 0.0
    %1525 = vmatpush1.msra.mxu0 0.0
    %1526 = vmatprep.subr.mxu0 0.0
    %1527 = vmatpush1.msra.mxu0 0.0
    %1528 = vmatprep.subr.mxu0 0.0
    %1529 = vmatpush1.msra.mxu0 0.0
    %1530 = vmatprep.subr.mxu0 0.0
    %1531 = vmatpush1.msra.mxu0 0.0
    %1532 = vmatprep.subr.mxu0 0.0
    %1533 = vmatpush1.msra.mxu0 0.0
    %1534 = vmatprep.subr.mxu0 0.0
    %1535 = vmatpush1.msra.mxu0 0.0
    %1536 = vmatprep.subr.mxu0 0.0
    %1537 = vmatpush1.msra.mxu0 0.0
    %1538 = vmatprep.subr.mxu0 0.0
    %1539 = vmatpush1.msra.mxu0 0.0
    %1540 = vmatprep.subr.mxu0 0.0
    %1541 = vmatpush1.msra.mxu0 0.0
    %1542 = vmatprep.subr.mxu0 0.0
    %1543 = vmatpush1.msra.mxu0 0.0
    %1544 = vmatprep.subr.mxu0 0.0
    %1545 = vmatpush1.msra.mxu0 0.0
    %1546 = vmatprep.subr.mxu0 0.0
    %1547 = vmatpush1.msra.mxu0 0.0
    %1548 = vmatprep.subr.mxu0 0.0
    %1549 = vmatpush1.msra.mxu0 0.0
    %1550 = vmatprep.subr.mxu0 0.0
    %1551 = vmatpush1.msra.mxu0 0.0
    %1552 = vmatprep.subr.mxu0 0.0
    %1553 = vmatpush1.msra.mxu0 0.0
    %1554 = vmatprep.subr.mxu0 0.0
    %1555 = vmatpush1.msra.mxu0 0.0
    %1556 = vmatprep.subr.mxu0 0.0
    %1557 = vmatpush1.msra.mxu0 0.0
    %1558 = vmatprep.subr.mxu0 0.0
    %1559 = vmatpush1.msra.mxu0 0.0
    %1560 = vmatprep.subr.mxu0 0.0
    %1561 = vmatpush1.msra.mxu0 0.0
    %1562 = vmatprep.subr.mxu0 0.0
    %1563 = vmatpush1.msra.mxu0 0.0
    %1564 = vmatprep.subr.mxu0 0.0
    %1565 = vmatpush1.msra.mxu0 0.0
    %1566 = vmatprep.mubr.f32.mxu0 0.0
    %1567 = vmatmul.mubr.f32.gmra.mrb[0].mxu0 %v1430
    %v1568 = vpop.f32.mrb[0].mxu0
    %v1569 = vadd.f32 %v1499, %v1568
    %v1570 = vpop.f32.mrb[0].mxu0
    %1571 = vdwg.mxu0
    %v1573 = vsel %vm761, %v1569, 0
    %1575 = vmatprep.subr.mxu0 0.0
    %1576 = vmatpush1.msra.mxu0 %v627
    %1577 = vmatprep.subr.mxu0 0.0
    %1578 = vmatpush1.msra.mxu0 %v628
    %1579 = vmatprep.subr.mxu0 0.0
    %1580 = vmatpush1.msra.mxu0 %v629
    %1581 = vmatprep.subr.mxu0 0.0
    %1582 = vmatpush1.msra.mxu0 %v630
    %1583 = vmatprep.subr.mxu0 0.0
    %1584 = vmatpush1.msra.mxu0 0.0
    %1585 = vmatprep.subr.mxu0 0.0
    %1586 = vmatpush1.msra.mxu0 0.0
    %1587 = vmatprep.subr.mxu0 0.0
    %1588 = vmatpush1.msra.mxu0 0.0
    %1589 = vmatprep.subr.mxu0 0.0
    %1590 = vmatpush1.msra.mxu0 0.0
    %1591 = vmatprep.subr.mxu0 0.0
    %1592 = vmatpush1.msra.mxu0 0.0
    %1593 = vmatprep.subr.mxu0 0.0
    %1594 = vmatpush1.msra.mxu0 0.0
    %1595 = vmatprep.subr.mxu0 0.0
    %1596 = vmatpush1.msra.mxu0 0.0
    %1597 = vmatprep.subr.mxu0 0.0
    %1598 = vmatpush1.msra.mxu0 0.0
    %1599 = vmatprep.subr.mxu0 0.0
    %1600 = vmatpush1.msra.mxu0 0.0
    %1601 = vmatprep.subr.mxu0 0.0
    %1602 = vmatpush1.msra.mxu0 0.0
    %1603 = vmatprep.subr.mxu0 0.0
    %1604 = vmatpush1.msra.mxu0 0.0
    %1605 = vmatprep.subr.mxu0 0.0
    %1606 = vmatpush1.msra.mxu0 0.0
    %1607 = vmatprep.subr.mxu0 0.0
    %1608 = vmatpush1.msra.mxu0 0.0
    %1609 = vmatprep.subr.mxu0 0.0
    %1610 = vmatpush1.msra.mxu0 0.0
    %1611 = vmatprep.subr.mxu0 0.0
    %1612 = vmatpush1.msra.mxu0 0.0
    %1613 = vmatprep.subr.mxu0 0.0
    %1614 = vmatpush1.msra.mxu0 0.0
    %1615 = vmatprep.subr.mxu0 0.0
    %1616 = vmatpush1.msra.mxu0 0.0
    %1617 = vmatprep.subr.mxu0 0.0
    %1618 = vmatpush1.msra.mxu0 0.0
    %1619 = vmatprep.subr.mxu0 0.0
    %1620 = vmatpush1.msra.mxu0 0.0
    %1621 = vmatprep.subr.mxu0 0.0
    %1622 = vmatpush1.msra.mxu0 0.0
    %1623 = vmatprep.subr.mxu0 0.0
    %1624 = vmatpush1.msra.mxu0 0.0
    %1625 = vmatprep.subr.mxu0 0.0
    %1626 = vmatpush1.msra.mxu0 0.0
    %1627 = vmatprep.subr.mxu0 0.0
    %1628 = vmatpush1.msra.mxu0 0.0
    %1629 = vmatprep.subr.mxu0 0.0
    %1630 = vmatpush1.msra.mxu0 0.0
    %1631 = vmatprep.subr.mxu0 0.0
    %1632 = vmatpush1.msra.mxu0 0.0
    %1633 = vmatprep.subr.mxu0 0.0
    %1634 = vmatpush1.msra.mxu0 0.0
    %1635 = vmatprep.subr.mxu0 0.0
    %1636 = vmatpush1.msra.mxu0 0.0
    %1637 = vmatprep.subr.mxu0 0.0
    %1638 = vmatpush1.msra.mxu0 0.0
    %1639 = vmatprep.mubr.f32.mxu0 0.0
    %1640 = vmatmul.mubr.f32.gmra.mrb[0].mxu0 %v1573
    %v1641 = vpop.f32.mrb[0].mxu0
    %v1642 = vadd.f32 0.0, %v1641
    %v1643 = vpop.f32.mrb[0].mxu0
    %1644 = vdwg.mxu0
    %v1646 = vsel %vm885, %v620, 0
    %1648 = vmatprep.subr.mxu0 0.0
    %1649 = vmatpush1.msra.mxu0 %v1642
    %1650 = vmatprep.subr.mxu0 0.0
    %1651 = vmatpush1.msra.mxu0 0.0
    %1652 = vmatprep.subr.mxu0 0.0
    %1653 = vmatpush1.msra.mxu0 0.0
    %1654 = vmatprep.subr.mxu0 0.0
    %1655 = vmatpush1.msra.mxu0 0.0
    %1656 = vmatprep.subr.mxu0 0.0
    %1657 = vmatpush1.msra.mxu0 0.0
    %1658 = vmatprep.subr.mxu0 0.0
    %1659 = vmatpush1.msra.mxu0 0.0
    %1660 = vmatprep.subr.mxu0 0.0
    %1661 = vmatpush1.msra.mxu0 0.0
    %1662 = vmatprep.subr.mxu0 0.0
    %1663 = vmatpush1.msra.mxu0 0.0
    %1664 = vmatprep.subr.mxu0 0.0
    %1665 = vmatpush1.msra.mxu0 0.0
    %1666 = vmatprep.subr.mxu0 0.0
    %1667 = vmatpush1.msra.mxu0 0.0
    %1668 = vmatprep.subr.mxu0 0.0
    %1669 = vmatpush1.msra.mxu0 0.0
    %1670 = vmatprep.subr.mxu0 0.0
    %1671 = vmatpush1.msra.mxu0 0.0
    %1672 = vmatprep.subr.mxu0 0.0
    %1673 = vmatpush1.msra.mxu0 0.0
    %1674 = vmatprep.subr.mxu0 0.0
    %1675 = vmatpush1.msra.mxu0 0.0
    %1676 = vmatprep.subr.mxu0 0.0
    %1677 = vmatpush1.msra.mxu0 0.0
    %1678 = vmatprep.subr.mxu0 0.0
    %1679 = vmatpush1.msra.mxu0 0.0
    %1680 = vmatprep.subr.mxu0 0.0
    %1681 = vmatpush1.msra.mxu0 0.0
    %1682 = vmatprep.subr.mxu0 0.0
    %1683 = vmatpush1.msra.mxu0 0.0
    %1684 = vmatprep.subr.mxu0 0.0
    %1685 = vmatpush1.msra.mxu0 0.0
    %1686 = vmatprep.subr.mxu0 0.0
    %1687 = vmatpush1.msra.mxu0 0.0
    %1688 = vmatprep.subr.mxu0 0.0
    %1689 = vmatpush1.msra.mxu0 0.0
    %1690 = vmatprep.subr.mxu0 0.0
    %1691 = vmatpush1.msra.mxu0 0.0
    %1692 = vmatprep.subr.mxu0 0.0
    %1693 = vmatpush1.msra.mxu0 0.0
    %1694 = vmatprep.subr.mxu0 0.0
    %1695 = vmatpush1.msra.mxu0 0.0
    %1696 = vmatprep.subr.mxu0 0.0
    %1697 = vmatpush1.msra.mxu0 0.0
    %1698 = vmatprep.subr.mxu0 0.0
    %1699 = vmatpush1.msra.mxu0 0.0
    %1700 = vmatprep.subr.mxu0 0.0
    %1701 = vmatpush1.msra.mxu0 0.0
    %1702 = vmatprep.subr.mxu0 0.0
    %1703 = vmatpush1.msra.mxu0 0.0
    %1704 = vmatprep.subr.mxu0 0.0
    %1705 = vmatpush1.msra.mxu0 0.0
    %1706 = vmatprep.subr.mxu0 0.0
    %1707 = vmatpush1.msra.mxu0 0.0
    %1708 = vmatprep.subr.mxu0 0.0
    %1709 = vmatpush1.msra.mxu0 0.0
    %1710 = vmatprep.subr.mxu0 0.0
    %1711 = vmatpush1.msra.mxu0 0.0
    %1712 = vmatprep.mubr.f32.mxu0 0.0
    %1713 = vmatmul.mubr.f32.gmra.mrb[0].mxu0 %v1646
    %v1714 = vpop.f32.mrb[0].mxu0
    %v1715 = vadd.f32 0.0, %v1714
    %v1716 = vpop.f32.mrb[0].mxu0
    %1717 = vdwg.mxu0
    %v1718 = vsub.f32 %v1569, %v1715
    %v1719 = vmul.f32 %v1718, %v1718
    %v1721 = vsel %vm761, %v1719, 0
    %1723 = vmatprep.subr.mxu0 0.0
    %1724 = vmatpush1.msra.mxu0 %v627
    %1725 = vmatprep.subr.mxu0 0.0
    %1726 = vmatpush1.msra.mxu0 %v628
    %1727 = vmatprep.subr.mxu0 0.0
    %1728 = vmatpush1.msra.mxu0 %v629
    %1729 = vmatprep.subr.mxu0 0.0
    %1730 = vmatpush1.msra.mxu0 %v630
    %1731 = vmatprep.subr.mxu0 0.0
    %1732 = vmatpush1.msra.mxu0 0.0
    %1733 = vmatprep.subr.mxu0 0.0
    %1734 = vmatpush1.msra.mxu0 0.0
    %1735 = vmatprep.subr.mxu0 0.0
    %1736 = vmatpush1.msra.mxu0 0.0
    %1737 = vmatprep.subr.mxu0 0.0
    %1738 = vmatpush1.msra.mxu0 0.0
    %1739 = vmatprep.subr.mxu0 0.0
    %1740 = vmatpush1.msra.mxu0 0.0
    %1741 = vmatprep.subr.mxu0 0.0
    %1742 = vmatpush1.msra.mxu0 0.0
    %1743 = vmatprep.subr.mxu0 0.0
    %1744 = vmatpush1.msra.mxu0 0.0
    %1745 = vmatprep.subr.mxu0 0.0
    %1746 = vmatpush1.msra.mxu0 0.0
    %1747 = vmatprep.subr.mxu0 0.0
    %1748 = vmatpush1.msra.mxu0 0.0
    %1749 = vmatprep.subr.mxu0 0.0
    %1750 = vmatpush1.msra.mxu0 0.0
    %1751 = vmatprep.subr.mxu0 0.0
    %1752 = vmatpush1.msra.mxu0 0.0
    %1753 = vmatprep.subr.mxu0 0.0
    %1754 = vmatpush1.msra.mxu0 0.0
    %1755 = vmatprep.subr.mxu0 0.0
    %1756 = vmatpush1.msra.mxu0 0.0
    %1757 = vmatprep.subr.mxu0 0.0
    %1758 = vmatpush1.msra.mxu0 0.0
    %1759 = vmatprep.subr.mxu0 0.0
    %1760 = vmatpush1.msra.mxu0 0.0
    %1761 = vmatprep.subr.mxu0 0.0
    %1762 = vmatpush1.msra.mxu0 0.0
    %1763 = vmatprep.subr.mxu0 0.0
    %1764 = vmatpush1.msra.mxu0 0.0
    %1765 = vmatprep.subr.mxu0 0.0
    %1766 = vmatpush1.msra.mxu0 0.0
    %1767 = vmatprep.subr.mxu0 0.0
    %1768 = vmatpush1.msra.mxu0 0.0
    %1769 = vmatprep.subr.mxu0 0.0
    %1770 = vmatpush1.msra.mxu0 0.0
    %1771 = vmatprep.subr.mxu0 0.0
    %1772 = vmatpush1.msra.mxu0 0.0
    %1773 = vmatprep.subr.mxu0 0.0
    %1774 = vmatpush1.msra.mxu0 0.0
    %1775 = vmatprep.subr.mxu0 0.0
    %1776 = vmatpush1.msra.mxu0 0.0
    %1777 = vmatprep.subr.mxu0 0.0
    %1778 = vmatpush1.msra.mxu0 0.0
    %1779 = vmatprep.subr.mxu0 0.0
    %1780 = vmatpush1.msra.mxu0 0.0
    %1781 = vmatprep.subr.mxu0 0.0
    %1782 = vmatpush1.msra.mxu0 0.0
    %1783 = vmatprep.subr.mxu0 0.0
    %1784 = vmatpush1.msra.mxu0 0.0
    %1785 = vmatprep.subr.mxu0 0.0
    %1786 = vmatpush1.msra.mxu0 0.0
    %1787 = vmatprep.mubr.f32.mxu0 0.0
    %1788 = vmatmul.mubr.f32.gmra.mrb[0].mxu0 %v1721
    %v1789 = vpop.f32.mrb[0].mxu0
    %v1790 = vadd.f32 0.0, %v1789
    %v1791 = vpop.f32.mrb[0].mxu0
    %1792 = vdwg.mxu0
    %1793 = vmatprep.subr.mxu0 0.0
    %1794 = vmatpush1.msra.mxu0 %v1790
    %1795 = vmatprep.subr.mxu0 0.0
    %1796 = vmatpush1.msra.mxu0 0.0
    %1797 = vmatprep.subr.mxu0 0.0
    %1798 = vmatpush1.msra.mxu0 0.0
    %1799 = vmatprep.subr.mxu0 0.0
    %1800 = vmatpush1.msra.mxu0 0.0
    %1801 = vmatprep.subr.mxu0 0.0
    %1802 = vmatpush1.msra.mxu0 0.0
    %1803 = vmatprep.subr.mxu0 0.0
    %1804 = vmatpush1.msra.mxu0 0.0
    %1805 = vmatprep.subr.mxu0 0.0
    %1806 = vmatpush1.msra.mxu0 0.0
    %1807 = vmatprep.subr.mxu0 0.0
    %1808 = vmatpush1.msra.mxu0 0.0
    %1809 = vmatprep.subr.mxu0 0.0
    %1810 = vmatpush1.msra.mxu0 0.0
    %1811 = vmatprep.subr.mxu0 0.0
    %1812 = vmatpush1.msra.mxu0 0.0
    %1813 = vmatprep.subr.mxu0 0.0
    %1814 = vmatpush1.msra.mxu0 0.0
    %1815 = vmatprep.subr.mxu0 0.0
    %1816 = vmatpush1.msra.mxu0 0.0
    %1817 = vmatprep.subr.mxu0 0.0
    %1818 = vmatpush1.msra.mxu0 0.0
    %1819 = vmatprep.subr.mxu0 0.0
    %1820 = vmatpush1.msra.mxu0 0.0
    %1821 = vmatprep.subr.mxu0 0.0
    %1822 = vmatpush1.msra.mxu0 0.0
    %1823 = vmatprep.subr.mxu0 0.0
    %1824 = vmatpush1.msra.mxu0 0.0
    %1825 = vmatprep.subr.mxu0 0.0
    %1826 = vmatpush1.msra.mxu0 0.0
    %1827 = vmatprep.subr.mxu0 0.0
    %1828 = vmatpush1.msra.mxu0 0.0
    %1829 = vmatprep.subr.mxu0 0.0
    %1830 = vmatpush1.msra.mxu0 0.0
    %1831 = vmatprep.subr.mxu0 0.0
    %1832 = vmatpush1.msra.mxu0 0.0
    %1833 = vmatprep.subr.mxu0 0.0
    %1834 = vmatpush1.msra.mxu0 0.0
    %1835 = vmatprep.subr.mxu0 0.0
    %1836 = vmatpush1.msra.mxu0 0.0
    %1837 = vmatprep.subr.mxu0 0.0
    %1838 = vmatpush1.msra.mxu0 0.0
    %1839 = vmatprep.subr.mxu0 0.0
    %1840 = vmatpush1.msra.mxu0 0.0
    %1841 = vmatprep.subr.mxu0 0.0
    %1842 = vmatpush1.msra.mxu0 0.0
    %1843 = vmatprep.subr.mxu0 0.0
    %1844 = vmatpush1.msra.mxu0 0.0
    %1845 = vmatprep.subr.mxu0 0.0
    %1846 = vmatpush1.msra.mxu0 0.0
    %1847 = vmatprep.subr.mxu0 0.0
    %1848 = vmatpush1.msra.mxu0 0.0
    %1849 = vmatprep.subr.mxu0 0.0
    %1850 = vmatpush1.msra.mxu0 0.0
    %1851 = vmatprep.subr.mxu0 0.0
    %1852 = vmatpush1.msra.mxu0 0.0
    %1853 = vmatprep.subr.mxu0 0.0
    %1854 = vmatpush1.msra.mxu0 0.0
    %1855 = vmatprep.subr.mxu0 0.0
    %1856 = vmatpush1.msra.mxu0 0.0
    %1857 = vmatprep.mubr.f32.mxu0 0.0
    %1858 = vmatmul.mubr.f32.gmra.mrb[0].mxu0 %v1646
    %v1859 = vpop.f32.mrb[0].mxu0
    %v1860 = vadd.f32 1e-05, %v1859
    %v1861 = vpop.f32.mrb[0].mxu0
    %1862 = vdwg.mxu0
    %v1863 = vrsqrt.pop %v1860
    %v1864 = vmul.f32 %v1718, %v1863
    %v1865 = vld [vmem:[%s57] sm:$0x1]
    %v1867 = vlaneseq
    %v1868 = vshrl.u32 %v1867, 7
    %v1869 = vsub.s32 0, %v1868
    %v1870 = vrot.slane %v1865, %v1869
    %v1872 = vmul.f32 %v1864, %v1870
    %v1873 = vld [vmem:[%s59] sm:$0x1]
    %v1875 = vlaneseq
    %v1876 = vshrl.u32 %v1875, 7
    %v1877 = vsub.s32 0, %v1876
    %v1878 = vrot.slane %v1873, %v1877
    %v1880 = vadd.f32 %v1872, %v1878
    %v1881 = vld [vmem:[%s7] sm:$0x3]
    %v1882 = vld [vmem:[%s41] sm:$0xff]
    %v1883 = vld [vmem:[%s41 + $0x8] sm:$0xff]
    %v1884 = vld [vmem:[%s41 + $0x10] sm:$0xff]
    %v1885 = vld [vmem:[%s41 + $0x18] sm:$0xff]
    %v1886 = vld [vmem:[%s43] sm:$0x1]
    %v1888 = vlaneseq
    %v1889 = vshrl.u32 %v1888, 7
    %v1890 = vsub.s32 0, %v1889
    %v1891 = vrot.slane %v1886, %v1890
    %v1894 = vsel %vm761, %v1881, 0
    %1896 = vmatprep.subr.mxu0 0.0
    %1897 = vmatpush1.msra.mxu0 %v1882
    %1898 = vmatprep.subr.mxu0 0.0
    %1899 = vmatpush1.msra.mxu0 %v1883
    %1900 = vmatprep.subr.mxu0 0.0
    %1901 = vmatpush1.msra.mxu0 %v1884
    %1902 = vmatprep.subr.mxu0 0.0
    %1903 = vmatpush1.msra.mxu0 %v1885
    %1904 = vmatprep.subr.mxu0 0.0
    %1905 = vmatpush1.msra.mxu0 0.0
    %1906 = vmatprep.subr.mxu0 0.0
    %1907 = vmatpush1.msra.mxu0 0.0
    %1908 = vmatprep.subr.mxu0 0.0
    %1909 = vmatpush1.msra.mxu0 0.0
    %1910 = vmatprep.subr.mxu0 0.0
    %1911 = vmatpush1.msra.mxu0 0.0
    %1912 = vmatprep.subr.mxu0 0.0
    %1913 = vmatpush1.msra.mxu0 0.0
    %1914 = vmatprep.subr.mxu0 0.0
    %1915 = vmatpush1.msra.mxu0 0.0
    %1916 = vmatprep.subr.mxu0 0.0
    %1917 = vmatpush1.msra.mxu0 0.0
    %1918 = vmatprep.subr.mxu0 0.0
    %1919 = vmatpush1.msra.mxu0 0.0
    %1920 = vmatprep.subr.mxu0 0.0
    %1921 = vmatpush1.msra.mxu0 0.0
    %1922 = vmatprep.subr.mxu0 0.0
    %1923 = vmatpush1.msra.mxu0 0.0
    %1924 = vmatprep.subr.mxu0 0.0
    %1925 = vmatpush1.msra.mxu0 0.0
    %1926 = vmatprep.subr.mxu0 0.0
    %1927 = vmatpush1.msra.mxu0 0.0
    %1928 = vmatprep.subr.mxu0 0.0
    %1929 = vmatpush1.msra.mxu0 0.0
    %1930 = vmatprep.subr.mxu0 0.0
    %1931 = vmatpush1.msra.mxu0 0.0
    %1932 = vmatprep.subr.mxu0 0.0
    %1933 = vmatpush1.msra.mxu0 0.0
    %1934 = vmatprep.subr.mxu0 0.0
    %1935 = vmatpush1.msra.mxu0 0.0
    %1936 = vmatprep.subr.mxu0 0.0
    %1937 = vmatpush1.msra.mxu0 0.0
    %1938 = vmatprep.subr.mxu0 0.0
    %1939 = vmatpush1.msra.mxu0 0.0
    %1940 = vmatprep.subr.mxu0 0.0
    %1941 = vmatpush1.msra.mxu0 0.0
    %1942 = vmatprep.subr.mxu0 0.0
    %1943 = vmatpush1.msra.mxu0 0.0
    %1944 = vmatprep.subr.mxu0 0.0
    %1945 = vmatpush1.msra.mxu0 0.0
    %1946 = vmatprep.subr.mxu0 0.0
    %1947 = vmatpush1.msra.mxu0 0.0
    %1948 = vmatprep.subr.mxu0 0.0
    %1949 = vmatpush1.msra.mxu0 0.0
    %1950 = vmatprep.subr.mxu0 0.0
    %1951 = vmatpush1.msra.mxu0 0.0
    %1952 = vmatprep.subr.mxu0 0.0
    %1953 = vmatpush1.msra.mxu0 0.0
    %1954 = vmatprep.subr.mxu0 0.0
    %1955 = vmatpush1.msra.mxu0 0.0
    %1956 = vmatprep.subr.mxu0 0.0
    %1957 = vmatpush1.msra.mxu0 0.0
    %1958 = vmatprep.subr.mxu0 0.0
    %1959 = vmatpush1.msra.mxu0 0.0
    %1960 = vmatprep.mubr.f32.mxu0 0.0
    %1961 = vmatmul.mubr.f32.gmra.mrb[0].mxu0 %v1894
    %v1962 = vpop.f32.mrb[0].mxu0
    %v1963 = vadd.f32 %v1891, %v1962
    %v1964 = vpop.f32.mrb[0].mxu0
    %1965 = vdwg.mxu0
    %vm1966 = vcmask 254976
    %v1967 = vsel %vm1966, %v1963, 0.0
    %1968 = vadd.xlane.f32.xlu0 %v1967
    %v1969 = vpop.xlane.xlu0 %1968
    %v1970 = vmul.f32 %v1969, %v774
    %v1971 = vsub.f32 %v1963, %v1970
    %v1972 = vmul.f32 %v1971, %v1971
    %v1973 = vsel %vm1966, %v1972, 0.0
    %1974 = vadd.xlane.f32.xlu0 %v1973
    %v1975 = vpop.xlane.xlu0 %1974
    %v1976 = vmul.f32 %v1975, %v774
    %v1977 = vadd.f32 %v1976, 1e-05
    %v1978 = vrsqrt.pop %v1977
    %v1979 = vmul.f32 %v1971, %v1978
    %v1980 = vld [vmem:[%s45] sm:$0x1]
    %v1982 = vlaneseq
    %v1983 = vshrl.u32 %v1982, 7
    %v1984 = vsub.s32 0, %v1983
    %v1985 = vrot.slane %v1980, %v1984
    %v1987 = vmul.f32 %v1979, %v1985
    %v1988 = vld [vmem:[%s47] sm:$0x1]
    %v1990 = vlaneseq
    %v1991 = vshrl.u32 %v1990, 7
    %v1992 = vsub.s32 0, %v1991
    %v1993 = vrot.slane %v1988, %v1992
    %v1995 = vadd.f32 %v1987, %v1993
    %v1996 = vmin.f32 %v1995, 20.0
    %v1997 = vmul.f32 %v1996, 1.442695
    %v1998 = vpow.pop %v1997
    %v1999 = vadd.f32 %v1998, 2.0
    %v2000 = vmul.f32 %v1998, %v1999
    %v2001 = vadd.f32 %v2000, 2.0
    %v2002 = vrcp.pop %v2001
    %v2003 = vmul.f32 %v2000, %v2002
    %v2004 = vmul.f32 %v1995, %v2003
    %v2005 = vld [vmem:[%s31] sm:$0xff]
    %v2006 = vld [vmem:[%s31 + $0x8] sm:$0xff]
    %vm2007 = vcmask 15360
    %v2009 = vsel %vm2007, %v2005, 0
    %v2012 = vsel %vm2007, %v2006, 0
    %vm2014 = vcmask 1041408
    %v2016 = vsel %vm2014, %v2004, 0
    %2018 = vmatprep.subr.mxu0 0.0
    %2019 = vmatpush1.msra.mxu0 %v2016
    %2020 = vmatprep.subr.mxu0 0.0
    %2021 = vmatpush1.msra.mxu0 0.0
    %2022 = vmatprep.subr.mxu0 0.0
    %2023 = vmatpush1.msra.mxu0 0.0
    %2024 = vmatprep.subr.mxu0 0.0
    %2025 = vmatpush1.msra.mxu0 0.0
    %2026 = vmatprep.subr.mxu0 0.0
    %2027 = vmatpush1.msra.mxu0 0.0
    %2028 = vmatprep.subr.mxu0 0.0
    %2029 = vmatpush1.msra.mxu0 0.0
    %2030 = vmatprep.subr.mxu0 0.0
    %2031 = vmatpush1.msra.mxu0 0.0
    %2032 = vmatprep.subr.mxu0 0.0
    %2033 = vmatpush1.msra.mxu0 0.0
    %2034 = vmatprep.subr.mxu0 0.0
    %2035 = vmatpush1.msra.mxu0 0.0
    %2036 = vmatprep.subr.mxu0 0.0
    %2037 = vmatpush1.msra.mxu0 0.0
    %2038 = vmatprep.subr.mxu0 0.0
    %2039 = vmatpush1.msra.mxu0 0.0
    %2040 = vmatprep.subr.mxu0 0.0
    %2041 = vmatpush1.msra.mxu0 0.0
    %2042 = vmatprep.subr.mxu0 0.0
    %2043 = vmatpush1.msra.mxu0 0.0
    %2044 = vmatprep.subr.mxu0 0.0
    %2045 = vmatpush1.msra.mxu0 0.0
    %2046 = vmatprep.subr.mxu0 0.0
    %2047 = vmatpush1.msra.mxu0 0.0
    %2048 = vmatprep.subr.mxu0 0.0
    %2049 = vmatpush1.msra.mxu0 0.0
    %2050 = vmatprep.subr.mxu0 0.0
    %2051 = vmatpush1.msra.mxu0 0.0
    %2052 = vmatprep.subr.mxu0 0.0
    %2053 = vmatpush1.msra.mxu0 0.0
    %2054 = vmatprep.subr.mxu0 0.0
    %2055 = vmatpush1.msra.mxu0 0.0
    %2056 = vmatprep.subr.mxu0 0.0
    %2057 = vmatpush1.msra.mxu0 0.0
    %2058 = vmatprep.subr.mxu0 0.0
    %2059 = vmatpush1.msra.mxu0 0.0
    %2060 = vmatprep.subr.mxu0 0.0
    %2061 = vmatpush1.msra.mxu0 0.0
    %2062 = vmatprep.subr.mxu0 0.0
    %2063 = vmatpush1.msra.mxu0 0.0
    %2064 = vmatprep.subr.mxu0 0.0
    %2065 = vmatpush1.msra.mxu0 0.0
    %2066 = vmatprep.subr.mxu0 0.0
    %2067 = vmatpush1.msra.mxu0 0.0
    %2068 = vmatprep.subr.mxu0 0.0
    %2069 = vmatpush1.msra.mxu0 0.0
    %2070 = vmatprep.subr.mxu0 0.0
    %2071 = vmatpush1.msra.mxu0 0.0
    %2072 = vmatprep.subr.mxu0 0.0
    %2073 = vmatpush1.msra.mxu0 0.0
    %2074 = vmatprep.subr.mxu0 0.0
    %2075 = vmatpush1.msra.mxu0 0.0
    %2076 = vmatprep.subr.mxu0 0.0
    %2077 = vmatpush1.msra.mxu0 0.0
    %2078 = vmatprep.subr.mxu0 0.0
    %2079 = vmatpush1.msra.mxu0 0.0
    %2080 = vmatprep.subr.mxu0 0.0
    %2081 = vmatpush1.msra.mxu0 0.0
    %2082 = vmatprep.mubr.f32.mxu0 0.0
    %2083 = vmatmul.mubr.f32.gmra.mrb[0].mxu0 %v2009
    %v2084 = vpop.f32.mrb[0].mxu0
    %v2085 = vadd.f32 0.0, %v2084
    %v2086 = vpop.f32.mrb[0].mxu0
    %2087 = vmatprep.mubr.f32.mxu0 0.0
    %2088 = vmatmul.mubr.f32.gmra.mrb[0].mxu0 %v2012
    %v2089 = vpop.f32.mrb[0].mxu0
    %v2090 = vadd.f32 0.0, %v2089
    %v2091 = vpop.f32.mrb[0].mxu0
    %2092 = vdwg.mxu0
    %v2093 = vld [vmem:[%s11] sm:$0xff]
    %v2094 = vld [vmem:[%s11 + $0x8] sm:$0xff]
    %2097 = vrot.lane.b32.xlu0 %v2085, 32
    %v2098 = vpop.permute.xlu0 %2097
    %2099 = vrot.lane.b32.xlu0 %v2090, 32
    %v2100 = vpop.permute.xlu0 %2099
    %2105 = vrot.lane.b32.xlu0 %v2093, 64
    %v2106 = vpop.permute.xlu0 %2105
    %2107 = vrot.lane.b32.xlu0 %v2094, 64
    %v2108 = vpop.permute.xlu0 %2107
    %v2111 = vsel %vm761, %v871, %v2098
    %v2112 = vsel %vm761, %v872, %v2100
    %v2113 = vsel %vm883, %v2111, %v2106
    %v2114 = vsel %vm883, %v2112, %v2108
    %vm2115 = vcmask 130048
    %v2117 = vsel %vm2115, %v621, 0
    %v2120 = vsel %vm2115, %v622, 0
    %2122 = vmatprep.subr.mxu0 0.0
    %2123 = vmatpush1.msra.mxu0 %v2113
    %2124 = vmatprep.subr.mxu0 0.0
    %2125 = vmatpush1.msra.mxu0 %v2114
    %2126 = vmatprep.subr.mxu0 0.0
    %2127 = vmatpush1.msra.mxu0 0.0
    %2128 = vmatprep.subr.mxu0 0.0
    %2129 = vmatpush1.msra.mxu0 0.0
    %2130 = vmatprep.subr.mxu0 0.0
    %2131 = vmatpush1.msra.mxu0 0.0
    %2132 = vmatprep.subr.mxu0 0.0
    %2133 = vmatpush1.msra.mxu0 0.0
    %2134 = vmatprep.subr.mxu0 0.0
    %2135 = vmatpush1.msra.mxu0 0.0
    %2136 = vmatprep.subr.mxu0 0.0
    %2137 = vmatpush1.msra.mxu0 0.0
    %2138 = vmatprep.subr.mxu0 0.0
    %2139 = vmatpush1.msra.mxu0 0.0
    %2140 = vmatprep.subr.mxu0 0.0
    %2141 = vmatpush1.msra.mxu0 0.0
    %2142 = vmatprep.subr.mxu0 0.0
    %2143 = vmatpush1.msra.mxu0 0.0
    %2144 = vmatprep.subr.mxu0 0.0
    %2145 = vmatpush1.msra.mxu0 0.0
    %2146 = vmatprep.subr.mxu0 0.0
    %2147 = vmatpush1.msra.mxu0 0.0
    %2148 = vmatprep.subr.mxu0 0.0
    %2149 = vmatpush1.msra.mxu0 0.0
    %2150 = vmatprep.subr.mxu0 0.0
    %2151 = vmatpush1.msra.mxu0 0.0
    %2152 = vmatprep.subr.mxu0 0.0
    %2153 = vmatpush1.msra.mxu0 0.0
    %2154 = vmatprep.subr.mxu0 0.0
    %2155 = vmatpush1.msra.mxu0 0.0
    %2156 = vmatprep.subr.mxu0 0.0
    %2157 = vmatpush1.msra.mxu0 0.0
    %2158 = vmatprep.subr.mxu0 0.0
    %2159 = vmatpush1.msra.mxu0 0.0
    %2160 = vmatprep.subr.mxu0 0.0
    %2161 = vmatpush1.msra.mxu0 0.0
    %2162 = vmatprep.subr.mxu0 0.0
    %2163 = vmatpush1.msra.mxu0 0.0
    %2164 = vmatprep.subr.mxu0 0.0
    %2165 = vmatpush1.msra.mxu0 0.0
    %2166 = vmatprep.subr.mxu0 0.0
    %2167 = vmatpush1.msra.mxu0 0.0
    %2168 = vmatprep.subr.mxu0 0.0
    %2169 = vmatpush1.msra.mxu0 0.0
    %2170 = vmatprep.subr.mxu0 0.0
    %2171 = vmatpush1.msra.mxu0 0.0
    %2172 = vmatprep.subr.mxu0 0.0
    %2173 = vmatpush1.msra.mxu0 0.0
    %2174 = vmatprep.subr.mxu0 0.0
    %2175 = vmatpush1.msra.mxu0 0.0
    %2176 = vmatprep.subr.mxu0 0.0
    %2177 = vmatpush1.msra.mxu0 0.0
    %2178 = vmatprep.subr.mxu0 0.0
    %2179 = vmatpush1.msra.mxu0 0.0
    %2180 = vmatprep.subr.mxu0 0.0
    %2181 = vmatpush1.msra.mxu0 0.0
    %2182 = vmatprep.subr.mxu0 0.0
    %2183 = vmatpush1.msra.mxu0 0.0
    %2184 = vmatprep.subr.mxu0 0.0
    %2185 = vmatpush1.msra.mxu0 0.0
    %2186 = vmatprep.mubr.f32.mxu0 0.0
    %2187 = vmatmul.mubr.f32.gmra.mrb[0].mxu0 %v2117
    %v2188 = vpop.f32.mrb[0].mxu0
    %v2189 = vadd.f32 0.0, %v2188
    %v2190 = vpop.f32.mrb[0].mxu0
    %2191 = vmatprep.mubr.f32.mxu0 0.0
    %2192 = vmatmul.mubr.f32.gmra.mrb[0].mxu0 %v2120
    %v2193 = vpop.f32.mrb[0].mxu0
    %v2194 = vadd.f32 0.0, %v2193
    %v2195 = vpop.f32.mrb[0].mxu0
    %2196 = vdwg.mxu0
    %v2198 = vsel %vm2115, %v623, 0
    %v2201 = vsel %vm2115, %v624, 0
    %2203 = vmatprep.subr.mxu0 0.0
    %2204 = vmatpush1.msra.mxu0 %v2113
    %2205 = vmatprep.subr.mxu0 0.0
    %2206 = vmatpush1.msra.mxu0 %v2114
    %2207 = vmatprep.subr.mxu0 0.0
    %2208 = vmatpush1.msra.mxu0 0.0
    %2209 = vmatprep.subr.mxu0 0.0
    %2210 = vmatpush1.msra.mxu0 0.0
    %2211 = vmatprep.subr.mxu0 0.0
    %2212 = vmatpush1.msra.mxu0 0.0
    %2213 = vmatprep.subr.mxu0 0.0
    %2214 = vmatpush1.msra.mxu0 0.0
    %2215 = vmatprep.subr.mxu0 0.0
    %2216 = vmatpush1.msra.mxu0 0.0
    %2217 = vmatprep.subr.mxu0 0.0
    %2218 = vmatpush1.msra.mxu0 0.0
    %2219 = vmatprep.subr.mxu0 0.0
    %2220 = vmatpush1.msra.mxu0 0.0
    %2221 = vmatprep.subr.mxu0 0.0
    %2222 = vmatpush1.msra.mxu0 0.0
    %2223 = vmatprep.subr.mxu0 0.0
    %2224 = vmatpush1.msra.mxu0 0.0
    %2225 = vmatprep.subr.mxu0 0.0
    %2226 = vmatpush1.msra.mxu0 0.0
    %2227 = vmatprep.subr.mxu0 0.0
    %2228 = vmatpush1.msra.mxu0 0.0
    %2229 = vmatprep.subr.mxu0 0.0
    %2230 = vmatpush1.msra.mxu0 0.0
    %2231 = vmatprep.subr.mxu0 0.0
    %2232 = vmatpush1.msra.mxu0 0.0
    %2233 = vmatprep.subr.mxu0 0.0
    %2234 = vmatpush1.msra.mxu0 0.0
    %2235 = vmatprep.subr.mxu0 0.0
    %2236 = vmatpush1.msra.mxu0 0.0
    %2237 = vmatprep.subr.mxu0 0.0
    %2238 = vmatpush1.msra.mxu0 0.0
    %2239 = vmatprep.subr.mxu0 0.0
    %2240 = vmatpush1.msra.mxu0 0.0
    %2241 = vmatprep.subr.mxu0 0.0
    %2242 = vmatpush1.msra.mxu0 0.0
    %2243 = vmatprep.subr.mxu0 0.0
    %2244 = vmatpush1.msra.mxu0 0.0
    %2245 = vmatprep.subr.mxu0 0.0
    %2246 = vmatpush1.msra.mxu0 0.0
    %2247 = vmatprep.subr.mxu0 0.0
    %2248 = vmatpush1.msra.mxu0 0.0
    %2249 = vmatprep.subr.mxu0 0.0
    %2250 = vmatpush1.msra.mxu0 0.0
    %2251 = vmatprep.subr.mxu0 0.0
    %2252 = vmatpush1.msra.mxu0 0.0
    %2253 = vmatprep.subr.mxu0 0.0
    %2254 = vmatpush1.msra.mxu0 0.0
    %2255 = vmatprep.subr.mxu0 0.0
    %2256 = vmatpush1.msra.mxu0 0.0
    %2257 = vmatprep.subr.mxu0 0.0
    %2258 = vmatpush1.msra.mxu0 0.0
    %2259 = vmatprep.subr.mxu0 0.0
    %2260 = vmatpush1.msra.mxu0 0.0
    %2261 = vmatprep.subr.mxu0 0.0
    %2262 = vmatpush1.msra.mxu0 0.0
    %2263 = vmatprep.subr.mxu0 0.0
    %2264 = vmatpush1.msra.mxu0 0.0
    %2265 = vmatprep.subr.mxu0 0.0
    %2266 = vmatpush1.msra.mxu0 0.0
    %2267 = vmatprep.mubr.f32.mxu0 0.0
    %2268 = vmatmul.mubr.f32.gmra.mrb[0].mxu0 %v2198
    %v2269 = vpop.f32.mrb[0].mxu0
    %v2270 = vadd.f32 0.0, %v2269
    %v2271 = vpop.f32.mrb[0].mxu0
    %2272 = vmatprep.mubr.f32.mxu0 0.0
    %2273 = vmatmul.mubr.f32.gmra.mrb[0].mxu0 %v2201
    %v2274 = vpop.f32.mrb[0].mxu0
    %v2275 = vadd.f32 0.0, %v2274
    %v2276 = vpop.f32.mrb[0].mxu0
    %2277 = vdwg.mxu0
    %2280 = vrot.lane.b32.xlu0 %v2113, 96
    %v2281 = vpop.permute.xlu0 %2280
    %2282 = vrot.lane.b32.xlu0 %v2114, 96
    %v2283 = vpop.permute.xlu0 %2282
    %2288 = vrot.lane.b32.xlu0 %v2270, 64
    %v2289 = vpop.permute.xlu0 %2288
    %2290 = vrot.lane.b32.xlu0 %v2275, 64
    %v2291 = vpop.permute.xlu0 %2290
    %v2294 = vsel %vm1040, %v2189, %v2281
    %v2295 = vsel %vm1040, %v2194, %v2283
    %v2296 = vsel %vm883, %v2281, %v2289
    %v2297 = vsel %vm883, %v2283, %v2291
    %v2298 = vld [vmem:[%s61] sm:$0xff]
    %v2299 = vld [vmem:[%s61 + $0x8] sm:$0xff]
    %v2300 = vld [vmem:[%s61 + $0x10] sm:$0xff]
    %v2301 = vld [vmem:[%s61 + $0x18] sm:$0xff]
    %v2302 = vld [vmem:[%s61 + $0x20] sm:$0xff]
    %v2303 = vld [vmem:[%s61 + $0x28] sm:$0xff]
    %v2304 = vld [vmem:[%s61 + $0x30] sm:$0xff]
    %v2305 = vld [vmem:[%s61 + $0x38] sm:$0xff]
    %v2306 = vld [vmem:[%s61 + $0x40] sm:$0xff]
    %v2307 = vld [vmem:[%s61 + $0x48] sm:$0xff]
    %v2308 = vld [vmem:[%s61 + $0x50] sm:$0xff]
    %v2309 = vld [vmem:[%s61 + $0x58] sm:$0xff]
    %v2310 = vld [vmem:[%s61 + $0x60] sm:$0xff]
    %v2311 = vld [vmem:[%s61 + $0x68] sm:$0xff]
    %v2312 = vld [vmem:[%s61 + $0x70] sm:$0xff]
    %v2313 = vld [vmem:[%s61 + $0x78] sm:$0xff]
    %v2314 = vld [vmem:[%s61 + $0x80] sm:$0xff]
    %v2315 = vld [vmem:[%s61 + $0x88] sm:$0xff]
    %v2316 = vld [vmem:[%s61 + $0x90] sm:$0xff]
    %v2317 = vld [vmem:[%s61 + $0x98] sm:$0xff]
    %v2318 = vld [vmem:[%s61 + $0xa0] sm:$0xff]
    %v2319 = vld [vmem:[%s61 + $0xa8] sm:$0xff]
    %v2320 = vld [vmem:[%s61 + $0xb0] sm:$0xff]
    %v2321 = vld [vmem:[%s61 + $0xb8] sm:$0xff]
    %v2322 = vld [vmem:[%s61 + $0xc0] sm:$0xff]
    %v2323 = vld [vmem:[%s61 + $0xc8] sm:$0xff]
    %v2324 = vld [vmem:[%s61 + $0xd0] sm:$0xff]
    %v2325 = vld [vmem:[%s61 + $0xd8] sm:$0xff]
    %v2326 = vld [vmem:[%s61 + $0xe0] sm:$0xff]
    %v2327 = vld [vmem:[%s61 + $0xe8] sm:$0xff]
    %v2328 = vld [vmem:[%s61 + $0xf0] sm:$0xff]
    %v2329 = vld [vmem:[%s61 + $0xf8] sm:$0xff]
    %v2330 = vld [vmem:[%s61 + $0x100] sm:$0xff]
    %v2331 = vld [vmem:[%s61 + $0x108] sm:$0xff]
    %v2332 = vld [vmem:[%s61 + $0x110] sm:$0xff]
    %v2333 = vld [vmem:[%s61 + $0x118] sm:$0xff]
    %v2334 = vld [vmem:[%s63] sm:$0x1]
    %v2336 = vlaneseq
    %v2337 = vshrl.u32 %v2336, 7
    %v2338 = vsub.s32 0, %v2337
    %v2339 = vrot.slane %v2334, %v2338
    %v2341 = vsel %vm761, %v2289, 0
    %v2343 = vsel %vm761, %v2291, 0
    %2345 = vmatprep.subr.mxu0 0.0
    %2346 = vmatpush1.msra.mxu0 %v2298
    %2347 = vmatprep.subr.mxu0 0.0
    %2348 = vmatpush1.msra.mxu0 %v2299
    %2349 = vmatprep.subr.mxu0 0.0
    %2350 = vmatpush1.msra.mxu0 %v2300
    %2351 = vmatprep.subr.mxu0 0.0
    %2352 = vmatpush1.msra.mxu0 %v2301
    %2353 = vmatprep.subr.mxu0 0.0
    %2354 = vmatpush1.msra.mxu0 %v2302
    %2355 = vmatprep.subr.mxu0 0.0
    %2356 = vmatpush1.msra.mxu0 %v2303
    %2357 = vmatprep.subr.mxu0 0.0
    %2358 = vmatpush1.msra.mxu0 %v2304
    %2359 = vmatprep.subr.mxu0 0.0
    %2360 = vmatpush1.msra.mxu0 %v2305
    %2361 = vmatprep.subr.mxu0 0.0
    %2362 = vmatpush1.msra.mxu0 %v2306
    %2363 = vmatprep.subr.mxu0 0.0
    %2364 = vmatpush1.msra.mxu0 %v2307
    %2365 = vmatprep.subr.mxu0 0.0
    %2366 = vmatpush1.msra.mxu0 %v2308
    %2367 = vmatprep.subr.mxu0 0.0
    %2368 = vmatpush1.msra.mxu0 %v2309
    %2369 = vmatprep.subr.mxu0 0.0
    %2370 = vmatpush1.msra.mxu0 %v2310
    %2371 = vmatprep.subr.mxu0 0.0
    %2372 = vmatpush1.msra.mxu0 %v2311
    %2373 = vmatprep.subr.mxu0 0.0
    %2374 = vmatpush1.msra.mxu0 %v2312
    %2375 = vmatprep.subr.mxu0 0.0
    %2376 = vmatpush1.msra.mxu0 %v2313
    %2377 = vmatprep.subr.mxu0 0.0
    %2378 = vmatpush1.msra.mxu0 %v2314
    %2379 = vmatprep.subr.mxu0 0.0
    %2380 = vmatpush1.msra.mxu0 %v2315
    %2381 = vmatprep.subr.mxu0 0.0
    %2382 = vmatpush1.msra.mxu0 %v2316
    %2383 = vmatprep.subr.mxu0 0.0
    %2384 = vmatpush1.msra.mxu0 %v2317
    %2385 = vmatprep.subr.mxu0 0.0
    %2386 = vmatpush1.msra.mxu0 %v2318
    %2387 = vmatprep.subr.mxu0 0.0
    %2388 = vmatpush1.msra.mxu0 %v2319
    %2389 = vmatprep.subr.mxu0 0.0
    %2390 = vmatpush1.msra.mxu0 %v2320
    %2391 = vmatprep.subr.mxu0 0.0
    %2392 = vmatpush1.msra.mxu0 %v2321
    %2393 = vmatprep.subr.mxu0 0.0
    %2394 = vmatpush1.msra.mxu0 %v2322
    %2395 = vmatprep.subr.mxu0 0.0
    %2396 = vmatpush1.msra.mxu0 %v2323
    %2397 = vmatprep.subr.mxu0 0.0
    %2398 = vmatpush1.msra.mxu0 %v2324
    %2399 = vmatprep.subr.mxu0 0.0
    %2400 = vmatpush1.msra.mxu0 %v2325
    %2401 = vmatprep.subr.mxu0 0.0
    %2402 = vmatpush1.msra.mxu0 %v2326
    %2403 = vmatprep.subr.mxu0 0.0
    %2404 = vmatpush1.msra.mxu0 %v2327
    %2405 = vmatprep.subr.mxu0 0.0
    %2406 = vmatpush1.msra.mxu0 %v2328
    %2407 = vmatprep.subr.mxu0 0.0
    %2408 = vmatpush1.msra.mxu0 %v2329
    %2409 = vmatprep.mubr.f32.mxu0 %v2296
    %2410 = vmatmul.mubr.f32.gmra.mrb[0].mxu0 %v2294
    %v2411 = vpop.f32.mrb[0].mxu0
    %v2412 = vadd.f32 %v2339, %v2411
    %v2413 = vpop.f32.mrb[0].mxu0
    %2414 = vmatprep.mubr.f32.mxu0 %v2297
    %2415 = vmatmul.mubr.f32.gmra.mrb[0].mxu0 %v2295
    %v2416 = vpop.f32.mrb[0].mxu0
    %v2417 = vadd.f32 %v2339, %v2416
    %v2418 = vpop.f32.mrb[0].mxu0
    %2419 = vdwg.mxu0
    %2420 = vmatprep.subr.mxu0 0.0
    %2421 = vmatpush1.msra.mxu0 %v2330
    %2422 = vmatprep.subr.mxu0 0.0
    %2423 = vmatpush1.msra.mxu0 %v2331
    %2424 = vmatprep.subr.mxu0 0.0
    %2425 = vmatpush1.msra.mxu0 %v2332
    %2426 = vmatprep.subr.mxu0 0.0
    %2427 = vmatpush1.msra.mxu0 %v2333
    %2428 = vmatprep.subr.mxu0 0.0
    %2429 = vmatpush1.msra.mxu0 0.0
    %2430 = vmatprep.subr.mxu0 0.0
    %2431 = vmatpush1.msra.mxu0 0.0
    %2432 = vmatprep.subr.mxu0 0.0
    %2433 = vmatpush1.msra.mxu0 0.0
    %2434 = vmatprep.subr.mxu0 0.0
    %2435 = vmatpush1.msra.mxu0 0.0
    %2436 = vmatprep.subr.mxu0 0.0
    %2437 = vmatpush1.msra.mxu0 0.0
    %2438 = vmatprep.subr.mxu0 0.0
    %2439 = vmatpush1.msra.mxu0 0.0
    %2440 = vmatprep.subr.mxu0 0.0
    %2441 = vmatpush1.msra.mxu0 0.0
    %2442 = vmatprep.subr.mxu0 0.0
    %2443 = vmatpush1.msra.mxu0 0.0
    %2444 = vmatprep.subr.mxu0 0.0
    %2445 = vmatpush1.msra.mxu0 0.0
    %2446 = vmatprep.subr.mxu0 0.0
    %2447 = vmatpush1.msra.mxu0 0.0
    %2448 = vmatprep.subr.mxu0 0.0
    %2449 = vmatpush1.msra.mxu0 0.0
    %2450 = vmatprep.subr.mxu0 0.0
    %2451 = vmatpush1.msra.mxu0 0.0
    %2452 = vmatprep.subr.mxu0 0.0
    %2453 = vmatpush1.msra.mxu0 0.0
    %2454 = vmatprep.subr.mxu0 0.0
    %2455 = vmatpush1.msra.mxu0 0.0
    %2456 = vmatprep.subr.mxu0 0.0
    %2457 = vmatpush1.msra.mxu0 0.0
    %2458 = vmatprep.subr.mxu0 0.0
    %2459 = vmatpush1.msra.mxu0 0.0
    %2460 = vmatprep.subr.mxu0 0.0
    %2461 = vmatpush1.msra.mxu0 0.0
    %2462 = vmatprep.subr.mxu0 0.0
    %2463 = vmatpush1.msra.mxu0 0.0
    %2464 = vmatprep.subr.mxu0 0.0
    %2465 = vmatpush1.msra.mxu0 0.0
    %2466 = vmatprep.subr.mxu0 0.0
    %2467 = vmatpush1.msra.mxu0 0.0
    %2468 = vmatprep.subr.mxu0 0.0
    %2469 = vmatpush1.msra.mxu0 0.0
    %2470 = vmatprep.subr.mxu0 0.0
    %2471 = vmatpush1.msra.mxu0 0.0
    %2472 = vmatprep.subr.mxu0 0.0
    %2473 = vmatpush1.msra.mxu0 0.0
    %2474 = vmatprep.subr.mxu0 0.0
    %2475 = vmatpush1.msra.mxu0 0.0
    %2476 = vmatprep.subr.mxu0 0.0
    %2477 = vmatpush1.msra.mxu0 0.0
    %2478 = vmatprep.subr.mxu0 0.0
    %2479 = vmatpush1.msra.mxu0 0.0
    %2480 = vmatprep.subr.mxu0 0.0
    %2481 = vmatpush1.msra.mxu0 0.0
    %2482 = vmatprep.subr.mxu0 0.0
    %2483 = vmatpush1.msra.mxu0 0.0
    %2484 = vmatprep.mubr.f32.mxu0 0.0
    %2485 = vmatmul.mubr.f32.gmra.mrb[0].mxu0 %v2341
    %v2486 = vpop.f32.mrb[0].mxu0
    %v2487 = vadd.f32 %v2412, %v2486
    %v2488 = vpop.f32.mrb[0].mxu0
    %2489 = vmatprep.mubr.f32.mxu0 0.0
    %2490 = vmatmul.mubr.f32.gmra.mrb[0].mxu0 %v2343
    %v2491 = vpop.f32.mrb[0].mxu0
    %v2492 = vadd.f32 %v2417, %v2491
    %v2493 = vpop.f32.mrb[0].mxu0
    %2494 = vdwg.mxu0
    %v2495 = vmin.f32 %v2487, 20.0
    %v2496 = vmin.f32 %v2492, 20.0
    %v2497 = vmul.f32 %v2495, 1.442695
    %v2498 = vpow.pop %v2497
    %v2499 = vmul.f32 %v2496, 1.442695
    %v2500 = vpow.pop %v2499
    %v2501 = vadd.f32 %v2498, 2.0
    %v2502 = vadd.f32 %v2500, 2.0
    %v2503 = vmul.f32 %v2498, %v2501
    %v2504 = vmul.f32 %v2500, %v2502
    %v2505 = vadd.f32 %v2503, 2.0
    %v2506 = vadd.f32 %v2504, 2.0
    %v2507 = vrcp.pop %v2505
    %v2508 = vmul.f32 %v2503, %v2507
    %v2509 = vrcp.pop %v2506
    %v2510 = vmul.f32 %v2504, %v2509
    %v2511 = vmul.f32 %v2487, %v2508
    %v2512 = vmul.f32 %v2492, %v2510
    %2513 = vmatprep.subr.mxu0 0.0
    %2514 = vmatpush1.msra.mxu0 %v2511
    %2515 = vmatprep.subr.mxu0 0.0
    %2516 = vmatpush1.msra.mxu0 %v2512
    %2517 = vmatprep.subr.mxu0 0.0
    %2518 = vmatpush1.msra.mxu0 0.0
    %2519 = vmatprep.subr.mxu0 0.0
    %2520 = vmatpush1.msra.mxu0 0.0
    %2521 = vmatprep.subr.mxu0 0.0
    %2522 = vmatpush1.msra.mxu0 0.0
    %2523 = vmatprep.subr.mxu0 0.0
    %2524 = vmatpush1.msra.mxu0 0.0
    %2525 = vmatprep.subr.mxu0 0.0
    %2526 = vmatpush1.msra.mxu0 0.0
    %2527 = vmatprep.subr.mxu0 0.0
    %2528 = vmatpush1.msra.mxu0 0.0
    %2529 = vmatprep.subr.mxu0 0.0
    %2530 = vmatpush1.msra.mxu0 0.0
    %2531 = vmatprep.subr.mxu0 0.0
    %2532 = vmatpush1.msra.mxu0 0.0
    %2533 = vmatprep.subr.mxu0 0.0
    %2534 = vmatpush1.msra.mxu0 0.0
    %2535 = vmatprep.subr.mxu0 0.0
    %2536 = vmatpush1.msra.mxu0 0.0
    %2537 = vmatprep.subr.mxu0 0.0
    %2538 = vmatpush1.msra.mxu0 0.0
    %2539 = vmatprep.subr.mxu0 0.0
    %2540 = vmatpush1.msra.mxu0 0.0
    %2541 = vmatprep.subr.mxu0 0.0
    %2542 = vmatpush1.msra.mxu0 0.0
    %2543 = vmatprep.subr.mxu0 0.0
    %2544 = vmatpush1.msra.mxu0 0.0
    %2545 = vmatprep.subr.mxu0 0.0
    %2546 = vmatpush1.msra.mxu0 0.0
    %2547 = vmatprep.subr.mxu0 0.0
    %2548 = vmatpush1.msra.mxu0 0.0
    %2549 = vmatprep.subr.mxu0 0.0
    %2550 = vmatpush1.msra.mxu0 0.0
    %2551 = vmatprep.subr.mxu0 0.0
    %2552 = vmatpush1.msra.mxu0 0.0
    %2553 = vmatprep.subr.mxu0 0.0
    %2554 = vmatpush1.msra.mxu0 0.0
    %2555 = vmatprep.subr.mxu0 0.0
    %2556 = vmatpush1.msra.mxu0 0.0
    %2557 = vmatprep.subr.mxu0 0.0
    %2558 = vmatpush1.msra.mxu0 0.0
    %2559 = vmatprep.subr.mxu0 0.0
    %2560 = vmatpush1.msra.mxu0 0.0
    %2561 = vmatprep.subr.mxu0 0.0
    %2562 = vmatpush1.msra.mxu0 0.0
    %2563 = vmatprep.subr.mxu0 0.0
    %2564 = vmatpush1.msra.mxu0 0.0
    %2565 = vmatprep.subr.mxu0 0.0
    %2566 = vmatpush1.msra.mxu0 0.0
    %2567 = vmatprep.subr.mxu0 0.0
    %2568 = vmatpush1.msra.mxu0 0.0
    %2569 = vmatprep.subr.mxu0 0.0
    %2570 = vmatpush1.msra.mxu0 0.0
    %2571 = vmatprep.subr.mxu0 0.0
    %2572 = vmatpush1.msra.mxu0 0.0
    %2573 = vmatprep.subr.mxu0 0.0
    %2574 = vmatpush1.msra.mxu0 0.0
    %2575 = vmatprep.subr.mxu0 0.0
    %2576 = vmatpush1.msra.mxu0 0.0
    %2577 = vmatprep.mubr.f32.mxu0 0.0
    %2578 = vmatmul.mubr.f32.gmra.mrb[0].mxu0 %v2117
    %v2579 = vpop.f32.mrb[0].mxu0
    %v2580 = vadd.f32 0.0, %v2579
    %v2581 = vpop.f32.mrb[0].mxu0
    %2582 = vmatprep.mubr.f32.mxu0 0.0
    %2583 = vmatmul.mubr.f32.gmra.mrb[0].mxu0 %v2120
    %v2584 = vpop.f32.mrb[0].mxu0
    %v2585 = vadd.f32 0.0, %v2584
    %v2586 = vpop.f32.mrb[0].mxu0
    %2587 = vdwg.mxu0
    %2588 = vmatprep.subr.mxu0 0.0
    %2589 = vmatpush1.msra.mxu0 %v2511
    %2590 = vmatprep.subr.mxu0 0.0
    %2591 = vmatpush1.msra.mxu0 %v2512
    %2592 = vmatprep.subr.mxu0 0.0
    %2593 = vmatpush1.msra.mxu0 0.0
    %2594 = vmatprep.subr.mxu0 0.0
    %2595 = vmatpush1.msra.mxu0 0.0
    %2596 = vmatprep.subr.mxu0 0.0
    %2597 = vmatpush1.msra.mxu0 0.0
    %2598 = vmatprep.subr.mxu0 0.0
    %2599 = vmatpush1.msra.mxu0 0.0
    %2600 = vmatprep.subr.mxu0 0.0
    %2601 = vmatpush1.msra.mxu0 0.0
    %2602 = vmatprep.subr.mxu0 0.0
    %2603 = vmatpush1.msra.mxu0 0.0
    %2604 = vmatprep.subr.mxu0 0.0
    %2605 = vmatpush1.msra.mxu0 0.0
    %2606 = vmatprep.subr.mxu0 0.0
    %2607 = vmatpush1.msra.mxu0 0.0
    %2608 = vmatprep.subr.mxu0 0.0
    %2609 = vmatpush1.msra.mxu0 0.0
    %2610 = vmatprep.subr.mxu0 0.0
    %2611 = vmatpush1.msra.mxu0 0.0
    %2612 = vmatprep.subr.mxu0 0.0
    %2613 = vmatpush1.msra.mxu0 0.0
    %2614 = vmatprep.subr.mxu0 0.0
    %2615 = vmatpush1.msra.mxu0 0.0
    %2616 = vmatprep.subr.mxu0 0.0
    %2617 = vmatpush1.msra.mxu0 0.0
    %2618 = vmatprep.subr.mxu0 0.0
    %2619 = vmatpush1.msra.mxu0 0.0
    %2620 = vmatprep.subr.mxu0 0.0
    %2621 = vmatpush1.msra.mxu0 0.0
    %2622 = vmatprep.subr.mxu0 0.0
    %2623 = vmatpush1.msra.mxu0 0.0
    %2624 = vmatprep.subr.mxu0 0.0
    %2625 = vmatpush1.msra.mxu0 0.0
    %2626 = vmatprep.subr.mxu0 0.0
    %2627 = vmatpush1.msra.mxu0 0.0
    %2628 = vmatprep.subr.mxu0 0.0
    %2629 = vmatpush1.msra.mxu0 0.0
    %2630 = vmatprep.subr.mxu0 0.0
    %2631 = vmatpush1.msra.mxu0 0.0
    %2632 = vmatprep.subr.mxu0 0.0
    %2633 = vmatpush1.msra.mxu0 0.0
    %2634 = vmatprep.subr.mxu0 0.0
    %2635 = vmatpush1.msra.mxu0 0.0
    %2636 = vmatprep.subr.mxu0 0.0
    %2637 = vmatpush1.msra.mxu0 0.0
    %2638 = vmatprep.subr.mxu0 0.0
    %2639 = vmatpush1.msra.mxu0 0.0
    %2640 = vmatprep.subr.mxu0 0.0
    %2641 = vmatpush1.msra.mxu0 0.0
    %2642 = vmatprep.subr.mxu0 0.0
    %2643 = vmatpush1.msra.mxu0 0.0
    %2644 = vmatprep.subr.mxu0 0.0
    %2645 = vmatpush1.msra.mxu0 0.0
    %2646 = vmatprep.subr.mxu0 0.0
    %2647 = vmatpush1.msra.mxu0 0.0
    %2648 = vmatprep.subr.mxu0 0.0
    %2649 = vmatpush1.msra.mxu0 0.0
    %2650 = vmatprep.subr.mxu0 0.0
    %2651 = vmatpush1.msra.mxu0 0.0
    %2652 = vmatprep.mubr.f32.mxu0 0.0
    %2653 = vmatmul.mubr.f32.gmra.mrb[0].mxu0 %v2198
    %v2654 = vpop.f32.mrb[0].mxu0
    %v2655 = vadd.f32 0.0, %v2654
    %v2656 = vpop.f32.mrb[0].mxu0
    %2657 = vmatprep.mubr.f32.mxu0 0.0
    %2658 = vmatmul.mubr.f32.gmra.mrb[0].mxu0 %v2201
    %v2659 = vpop.f32.mrb[0].mxu0
    %v2660 = vadd.f32 0.0, %v2659
    %v2661 = vpop.f32.mrb[0].mxu0
    %2662 = vdwg.mxu0
    %2665 = vrot.lane.b32.xlu0 %v2511, 96
    %v2666 = vpop.permute.xlu0 %2665
    %2667 = vrot.lane.b32.xlu0 %v2512, 96
    %v2668 = vpop.permute.xlu0 %2667
    %2673 = vrot.lane.b32.xlu0 %v2655, 64
    %v2674 = vpop.permute.xlu0 %2673
    %2675 = vrot.lane.b32.xlu0 %v2660, 64
    %v2676 = vpop.permute.xlu0 %2675
    %v2679 = vsel %vm1040, %v2580, %v2666
    %v2680 = vsel %vm1040, %v2585, %v2668
    %v2681 = vsel %vm883, %v2666, %v2674
    %v2682 = vsel %vm883, %v2668, %v2676
    %v2683 = vld [vmem:[%s65] sm:$0xff]
    %v2684 = vld [vmem:[%s65 + $0x8] sm:$0xff]
    %v2685 = vld [vmem:[%s65 + $0x10] sm:$0xff]
    %v2686 = vld [vmem:[%s65 + $0x18] sm:$0xff]
    %v2687 = vld [vmem:[%s65 + $0x20] sm:$0xff]
    %v2688 = vld [vmem:[%s65 + $0x28] sm:$0xff]
    %v2689 = vld [vmem:[%s65 + $0x30] sm:$0xff]
    %v2690 = vld [vmem:[%s65 + $0x38] sm:$0xff]
    %v2691 = vld [vmem:[%s65 + $0x40] sm:$0xff]
    %v2692 = vld [vmem:[%s65 + $0x48] sm:$0xff]
    %v2693 = vld [vmem:[%s65 + $0x50] sm:$0xff]
    %v2694 = vld [vmem:[%s65 + $0x58] sm:$0xff]
    %v2695 = vld [vmem:[%s65 + $0x60] sm:$0xff]
    %v2696 = vld [vmem:[%s65 + $0x68] sm:$0xff]
    %v2697 = vld [vmem:[%s65 + $0x70] sm:$0xff]
    %v2698 = vld [vmem:[%s65 + $0x78] sm:$0xff]
    %v2699 = vld [vmem:[%s65 + $0x80] sm:$0xff]
    %v2700 = vld [vmem:[%s65 + $0x88] sm:$0xff]
    %v2701 = vld [vmem:[%s65 + $0x90] sm:$0xff]
    %v2702 = vld [vmem:[%s65 + $0x98] sm:$0xff]
    %v2703 = vld [vmem:[%s65 + $0xa0] sm:$0xff]
    %v2704 = vld [vmem:[%s65 + $0xa8] sm:$0xff]
    %v2705 = vld [vmem:[%s65 + $0xb0] sm:$0xff]
    %v2706 = vld [vmem:[%s65 + $0xb8] sm:$0xff]
    %v2707 = vld [vmem:[%s65 + $0xc0] sm:$0xff]
    %v2708 = vld [vmem:[%s65 + $0xc8] sm:$0xff]
    %v2709 = vld [vmem:[%s65 + $0xd0] sm:$0xff]
    %v2710 = vld [vmem:[%s65 + $0xd8] sm:$0xff]
    %v2711 = vld [vmem:[%s65 + $0xe0] sm:$0xff]
    %v2712 = vld [vmem:[%s65 + $0xe8] sm:$0xff]
    %v2713 = vld [vmem:[%s65 + $0xf0] sm:$0xff]
    %v2714 = vld [vmem:[%s65 + $0xf8] sm:$0xff]
    %v2715 = vld [vmem:[%s65 + $0x100] sm:$0xff]
    %v2716 = vld [vmem:[%s65 + $0x108] sm:$0xff]
    %v2717 = vld [vmem:[%s65 + $0x110] sm:$0xff]
    %v2718 = vld [vmem:[%s65 + $0x118] sm:$0xff]
    %v2719 = vld [vmem:[#allocation2] sm:$0x1]
    %v2721 = vlaneseq
    %v2722 = vshrl.u32 %v2721, 7
    %v2723 = vsub.s32 0, %v2722
    %v2724 = vrot.slane %v2719, %v2723
    %v2726 = vsel %vm761, %v2674, 0
    %v2728 = vsel %vm761, %v2676, 0
    %2730 = vmatprep.subr.mxu0 0.0
    %2731 = vmatpush1.msra.mxu0 %v2683
    %2732 = vmatprep.subr.mxu0 0.0
    %2733 = vmatpush1.msra.mxu0 %v2684
    %2734 = vmatprep.subr.mxu0 0.0
    %2735 = vmatpush1.msra.mxu0 %v2685
    %2736 = vmatprep.subr.mxu0 0.0
    %2737 = vmatpush1.msra.mxu0 %v2686
    %2738 = vmatprep.subr.mxu0 0.0
    %2739 = vmatpush1.msra.mxu0 %v2687
    %2740 = vmatprep.subr.mxu0 0.0
    %2741 = vmatpush1.msra.mxu0 %v2688
    %2742 = vmatprep.subr.mxu0 0.0
    %2743 = vmatpush1.msra.mxu0 %v2689
    %2744 = vmatprep.subr.mxu0 0.0
    %2745 = vmatpush1.msra.mxu0 %v2690
    %2746 = vmatprep.subr.mxu0 0.0
    %2747 = vmatpush1.msra.mxu0 %v2691
    %2748 = vmatprep.subr.mxu0 0.0
    %2749 = vmatpush1.msra.mxu0 %v2692
    %2750 = vmatprep.subr.mxu0 0.0
    %2751 = vmatpush1.msra.mxu0 %v2693
    %2752 = vmatprep.subr.mxu0 0.0
    %2753 = vmatpush1.msra.mxu0 %v2694
    %2754 = vmatprep.subr.mxu0 0.0
    %2755 = vmatpush1.msra.mxu0 %v2695
    %2756 = vmatprep.subr.mxu0 0.0
    %2757 = vmatpush1.msra.mxu0 %v2696
    %2758 = vmatprep.subr.mxu0 0.0
    %2759 = vmatpush1.msra.mxu0 %v2697
    %2760 = vmatprep.subr.mxu0 0.0
    %2761 = vmatpush1.msra.mxu0 %v2698
    %2762 = vmatprep.subr.mxu0 0.0
    %2763 = vmatpush1.msra.mxu0 %v2699
    %2764 = vmatprep.subr.mxu0 0.0
    %2765 = vmatpush1.msra.mxu0 %v2700
    %2766 = vmatprep.subr.mxu0 0.0
    %2767 = vmatpush1.msra.mxu0 %v2701
    %2768 = vmatprep.subr.mxu0 0.0
    %2769 = vmatpush1.msra.mxu0 %v2702
    %2770 = vmatprep.subr.mxu0 0.0
    %2771 = vmatpush1.msra.mxu0 %v2703
    %2772 = vmatprep.subr.mxu0 0.0
    %2773 = vmatpush1.msra.mxu0 %v2704
    %2774 = vmatprep.subr.mxu0 0.0
    %2775 = vmatpush1.msra.mxu0 %v2705
    %2776 = vmatprep.subr.mxu0 0.0
    %2777 = vmatpush1.msra.mxu0 %v2706
    %2778 = vmatprep.subr.mxu0 0.0
    %2779 = vmatpush1.msra.mxu0 %v2707
    %2780 = vmatprep.subr.mxu0 0.0
    %2781 = vmatpush1.msra.mxu0 %v2708
    %2782 = vmatprep.subr.mxu0 0.0
    %2783 = vmatpush1.msra.mxu0 %v2709
    %2784 = vmatprep.subr.mxu0 0.0
    %2785 = vmatpush1.msra.mxu0 %v2710
    %2786 = vmatprep.subr.mxu0 0.0
    %2787 = vmatpush1.msra.mxu0 %v2711
    %2788 = vmatprep.subr.mxu0 0.0
    %2789 = vmatpush1.msra.mxu0 %v2712
    %2790 = vmatprep.subr.mxu0 0.0
    %2791 = vmatpush1.msra.mxu0 %v2713
    %2792 = vmatprep.subr.mxu0 0.0
    %2793 = vmatpush1.msra.mxu0 %v2714
    %2794 = vmatprep.mubr.f32.mxu0 %v2681
    %2795 = vmatmul.mubr.f32.gmra.mrb[0].mxu0 %v2679
    %v2796 = vpop.f32.mrb[0].mxu0
    %v2797 = vadd.f32 %v2724, %v2796
    %v2798 = vpop.f32.mrb[0].mxu0
    %2799 = vmatprep.mubr.f32.mxu0 %v2682
    %2800 = vmatmul.mubr.f32.gmra.mrb[0].mxu0 %v2680
    %v2801 = vpop.f32.mrb[0].mxu0
    %v2802 = vadd.f32 %v2724, %v2801
    %v2803 = vpop.f32.mrb[0].mxu0
    %2804 = vdwg.mxu0
    %2805 = vmatprep.subr.mxu0 0.0
    %2806 = vmatpush1.msra.mxu0 %v2715
    %2807 = vmatprep.subr.mxu0 0.0
    %2808 = vmatpush1.msra.mxu0 %v2716
    %2809 = vmatprep.subr.mxu0 0.0
    %2810 = vmatpush1.msra.mxu0 %v2717
    %2811 = vmatprep.subr.mxu0 0.0
    %2812 = vmatpush1.msra.mxu0 %v2718
    %2813 = vmatprep.subr.mxu0 0.0
    %2814 = vmatpush1.msra.mxu0 0.0
    %2815 = vmatprep.subr.mxu0 0.0
    %2816 = vmatpush1.msra.mxu0 0.0
    %2817 = vmatprep.subr.mxu0 0.0
    %2818 = vmatpush1.msra.mxu0 0.0
    %2819 = vmatprep.subr.mxu0 0.0
    %2820 = vmatpush1.msra.mxu0 0.0
    %2821 = vmatprep.subr.mxu0 0.0
    %2822 = vmatpush1.msra.mxu0 0.0
    %2823 = vmatprep.subr.mxu0 0.0
    %2824 = vmatpush1.msra.mxu0 0.0
    %2825 = vmatprep.subr.mxu0 0.0
    %2826 = vmatpush1.msra.mxu0 0.0
    %2827 = vmatprep.subr.mxu0 0.0
    %2828 = vmatpush1.msra.mxu0 0.0
    %2829 = vmatprep.subr.mxu0 0.0
    %2830 = vmatpush1.msra.mxu0 0.0
    %2831 = vmatprep.subr.mxu0 0.0
    %2832 = vmatpush1.msra.mxu0 0.0
    %2833 = vmatprep.subr.mxu0 0.0
    %2834 = vmatpush1.msra.mxu0 0.0
    %2835 = vmatprep.subr.mxu0 0.0
    %2836 = vmatpush1.msra.mxu0 0.0
    %2837 = vmatprep.subr.mxu0 0.0
    %2838 = vmatpush1.msra.mxu0 0.0
    %2839 = vmatprep.subr.mxu0 0.0
    %2840 = vmatpush1.msra.mxu0 0.0
    %2841 = vmatprep.subr.mxu0 0.0
    %2842 = vmatpush1.msra.mxu0 0.0
    %2843 = vmatprep.subr.mxu0 0.0
    %2844 = vmatpush1.msra.mxu0 0.0
    %2845 = vmatprep.subr.mxu0 0.0
    %2846 = vmatpush1.msra.mxu0 0.0
    %2847 = vmatprep.subr.mxu0 0.0
    %2848 = vmatpush1.msra.mxu0 0.0
    %2849 = vmatprep.subr.mxu0 0.0
    %2850 = vmatpush1.msra.mxu0 0.0
    %2851 = vmatprep.subr.mxu0 0.0
    %2852 = vmatpush1.msra.mxu0 0.0
    %2853 = vmatprep.subr.mxu0 0.0
    %2854 = vmatpush1.msra.mxu0 0.0
    %2855 = vmatprep.subr.mxu0 0.0
    %2856 = vmatpush1.msra.mxu0 0.0
    %2857 = vmatprep.subr.mxu0 0.0
    %2858 = vmatpush1.msra.mxu0 0.0
    %2859 = vmatprep.subr.mxu0 0.0
    %2860 = vmatpush1.msra.mxu0 0.0
    %2861 = vmatprep.subr.mxu0 0.0
    %2862 = vmatpush1.msra.mxu0 0.0
    %2863 = vmatprep.subr.mxu0 0.0
    %2864 = vmatpush1.msra.mxu0 0.0
    %2865 = vmatprep.subr.mxu0 0.0
    %2866 = vmatpush1.msra.mxu0 0.0
    %2867 = vmatprep.subr.mxu0 0.0
    %2868 = vmatpush1.msra.mxu0 0.0
    %2869 = vmatprep.mubr.f32.mxu0 0.0
    %2870 = vmatmul.mubr.f32.gmra.mrb[0].mxu0 %v2726
    %v2871 = vpop.f32.mrb[0].mxu0
    %v2872 = vadd.f32 %v2797, %v2871
    %v2873 = vpop.f32.mrb[0].mxu0
    %2874 = vmatprep.mubr.f32.mxu0 0.0
    %2875 = vmatmul.mubr.f32.gmra.mrb[0].mxu0 %v2728
    %v2876 = vpop.f32.mrb[0].mxu0
    %v2877 = vadd.f32 %v2802, %v2876
    %v2878 = vpop.f32.mrb[0].mxu0
    %2879 = vdwg.mxu0
    %v2881 = vsel %vm761, %v2872, 0
    %v2884 = vsel %vm761, %v2877, 0
    %2886 = vmatprep.subr.mxu0 0.0
    %2887 = vmatpush1.msra.mxu0 %v627
    %2888 = vmatprep.subr.mxu0 0.0
    %2889 = vmatpush1.msra.mxu0 %v628
    %2890 = vmatprep.subr.mxu0 0.0
    %2891 = vmatpush1.msra.mxu0 %v629
    %2892 = vmatprep.subr.mxu0 0.0
    %2893 = vmatpush1.msra.mxu0 %v630
    %2894 = vmatprep.subr.mxu0 0.0
    %2895 = vmatpush1.msra.mxu0 0.0
    %2896 = vmatprep.subr.mxu0 0.0
    %2897 = vmatpush1.msra.mxu0 0.0
    %2898 = vmatprep.subr.mxu0 0.0
    %2899 = vmatpush1.msra.mxu0 0.0
    %2900 = vmatprep.subr.mxu0 0.0
    %2901 = vmatpush1.msra.mxu0 0.0
    %2902 = vmatprep.subr.mxu0 0.0
    %2903 = vmatpush1.msra.mxu0 0.0
    %2904 = vmatprep.subr.mxu0 0.0
    %2905 = vmatpush1.msra.mxu0 0.0
    %2906 = vmatprep.subr.mxu0 0.0
    %2907 = vmatpush1.msra.mxu0 0.0
    %2908 = vmatprep.subr.mxu0 0.0
    %2909 = vmatpush1.msra.mxu0 0.0
    %2910 = vmatprep.subr.mxu0 0.0
    %2911 = vmatpush1.msra.mxu0 0.0
    %2912 = vmatprep.subr.mxu0 0.0
    %2913 = vmatpush1.msra.mxu0 0.0
    %2914 = vmatprep.subr.mxu0 0.0
    %2915 = vmatpush1.msra.mxu0 0.0
    %2916 = vmatprep.subr.mxu0 0.0
    %2917 = vmatpush1.msra.mxu0 0.0
    %2918 = vmatprep.subr.mxu0 0.0
    %2919 = vmatpush1.msra.mxu0 0.0
    %2920 = vmatprep.subr.mxu0 0.0
    %2921 = vmatpush1.msra.mxu0 0.0
    %2922 = vmatprep.subr.mxu0 0.0
    %2923 = vmatpush1.msra.mxu0 0.0
    %2924 = vmatprep.subr.mxu0 0.0
    %2925 = vmatpush1.msra.mxu0 0.0
    %2926 = vmatprep.subr.mxu0 0.0
    %2927 = vmatpush1.msra.mxu0 0.0
    %2928 = vmatprep.subr.mxu0 0.0
    %2929 = vmatpush1.msra.mxu0 0.0
    %2930 = vmatprep.subr.mxu0 0.0
    %2931 = vmatpush1.msra.mxu0 0.0
    %2932 = vmatprep.subr.mxu0 0.0
    %2933 = vmatpush1.msra.mxu0 0.0
    %2934 = vmatprep.subr.mxu0 0.0
    %2935 = vmatpush1.msra.mxu0 0.0
    %2936 = vmatprep.subr.mxu0 0.0
    %2937 = vmatpush1.msra.mxu0 0.0
    %2938 = vmatprep.subr.mxu0 0.0
    %2939 = vmatpush1.msra.mxu0 0.0
    %2940 = vmatprep.subr.mxu0 0.0
    %2941 = vmatpush1.msra.mxu0 0.0
    %2942 = vmatprep.subr.mxu0 0.0
    %2943 = vmatpush1.msra.mxu0 0.0
    %2944 = vmatprep.subr.mxu0 0.0
    %2945 = vmatpush1.msra.mxu0 0.0
    %2946 = vmatprep.subr.mxu0 0.0
    %2947 = vmatpush1.msra.mxu0 0.0
    %2948 = vmatprep.subr.mxu0 0.0
    %2949 = vmatpush1.msra.mxu0 0.0
    %2950 = vmatprep.mubr.f32.mxu0 0.0
    %2951 = vmatmul.mubr.f32.gmra.mrb[0].mxu0 %v2881
    %v2952 = vpop.f32.mrb[0].mxu0
    %v2953 = vadd.f32 0.0, %v2952
    %v2954 = vpop.f32.mrb[0].mxu0
    %2955 = vmatprep.mubr.f32.mxu0 0.0
    %2956 = vmatmul.mubr.f32.gmra.mrb[0].mxu0 %v2884
    %v2957 = vpop.f32.mrb[0].mxu0
    %v2958 = vadd.f32 0.0, %v2957
    %v2959 = vpop.f32.mrb[0].mxu0
    %2960 = vdwg.mxu0
    %v2962 = vsel %vm2115, %v625, 0
    %v2965 = vsel %vm2115, %v626, 0
    %2967 = vmatprep.subr.mxu0 0.0
    %2968 = vmatpush1.msra.mxu0 %v2953
    %2969 = vmatprep.subr.mxu0 0.0
    %2970 = vmatpush1.msra.mxu0 %v2958
    %2971 = vmatprep.subr.mxu0 0.0
    %2972 = vmatpush1.msra.mxu0 0.0
    %2973 = vmatprep.subr.mxu0 0.0
    %2974 = vmatpush1.msra.mxu0 0.0
    %2975 = vmatprep.subr.mxu0 0.0
    %2976 = vmatpush1.msra.mxu0 0.0
    %2977 = vmatprep.subr.mxu0 0.0
    %2978 = vmatpush1.msra.mxu0 0.0
    %2979 = vmatprep.subr.mxu0 0.0
    %2980 = vmatpush1.msra.mxu0 0.0
    %2981 = vmatprep.subr.mxu0 0.0
    %2982 = vmatpush1.msra.mxu0 0.0
    %2983 = vmatprep.subr.mxu0 0.0
    %2984 = vmatpush1.msra.mxu0 0.0
    %2985 = vmatprep.subr.mxu0 0.0
    %2986 = vmatpush1.msra.mxu0 0.0
    %2987 = vmatprep.subr.mxu0 0.0
    %2988 = vmatpush1.msra.mxu0 0.0
    %2989 = vmatprep.subr.mxu0 0.0
    %2990 = vmatpush1.msra.mxu0 0.0
    %2991 = vmatprep.subr.mxu0 0.0
    %2992 = vmatpush1.msra.mxu0 0.0
    %2993 = vmatprep.subr.mxu0 0.0
    %2994 = vmatpush1.msra.mxu0 0.0
    %2995 = vmatprep.subr.mxu0 0.0
    %2996 = vmatpush1.msra.mxu0 0.0
    %2997 = vmatprep.subr.mxu0 0.0
    %2998 = vmatpush1.msra.mxu0 0.0
    %2999 = vmatprep.subr.mxu0 0.0
    %3000 = vmatpush1.msra.mxu0 0.0
    %3001 = vmatprep.subr.mxu0 0.0
    %3002 = vmatpush1.msra.mxu0 0.0
    %3003 = vmatprep.subr.mxu0 0.0
    %3004 = vmatpush1.msra.mxu0 0.0
    %3005 = vmatprep.subr.mxu0 0.0
    %3006 = vmatpush1.msra.mxu0 0.0
    %3007 = vmatprep.subr.mxu0 0.0
    %3008 = vmatpush1.msra.mxu0 0.0
    %3009 = vmatprep.subr.mxu0 0.0
    %3010 = vmatpush1.msra.mxu0 0.0
    %3011 = vmatprep.subr.mxu0 0.0
    %3012 = vmatpush1.msra.mxu0 0.0
    %3013 = vmatprep.subr.mxu0 0.0
    %3014 = vmatpush1.msra.mxu0 0.0
    %3015 = vmatprep.subr.mxu0 0.0
    %3016 = vmatpush1.msra.mxu0 0.0
    %3017 = vmatprep.subr.mxu0 0.0
    %3018 = vmatpush1.msra.mxu0 0.0
    %3019 = vmatprep.subr.mxu0 0.0
    %3020 = vmatpush1.msra.mxu0 0.0
    %3021 = vmatprep.subr.mxu0 0.0
    %3022 = vmatpush1.msra.mxu0 0.0
    %3023 = vmatprep.subr.mxu0 0.0
    %3024 = vmatpush1.msra.mxu0 0.0
    %3025 = vmatprep.subr.mxu0 0.0
    %3026 = vmatpush1.msra.mxu0 0.0
    %3027 = vmatprep.subr.mxu0 0.0
    %3028 = vmatpush1.msra.mxu0 0.0
    %3029 = vmatprep.subr.mxu0 0.0
    %3030 = vmatpush1.msra.mxu0 0.0
    %3031 = vmatprep.mubr.f32.mxu0 0.0
    %3032 = vmatmul.mubr.f32.gmra.mrb[0].mxu0 %v2962
    %v3033 = vpop.f32.mrb[0].mxu0
    %v3034 = vadd.f32 0.0, %v3033
    %v3035 = vpop.f32.mrb[0].mxu0
    %3036 = vmatprep.mubr.f32.mxu0 0.0
    %3037 = vmatmul.mubr.f32.gmra.mrb[0].mxu0 %v2965
    %v3038 = vpop.f32.mrb[0].mxu0
    %v3039 = vadd.f32 0.0, %v3038
    %v3040 = vpop.f32.mrb[0].mxu0
    %3041 = vdwg.mxu0
    %v3042 = vsub.f32 %v2872, %v3034
    %v3043 = vsub.f32 %v2877, %v3039
    %v3044 = vmul.f32 %v3042, %v3042
    %v3045 = vmul.f32 %v3043, %v3043
    %v3047 = vsel %vm761, %v3044, 0
    %v3050 = vsel %vm761, %v3045, 0
    %3052 = vmatprep.subr.mxu0 0.0
    %3053 = vmatpush1.msra.mxu0 %v627
    %3054 = vmatprep.subr.mxu0 0.0
    %3055 = vmatpush1.msra.mxu0 %v628
    %3056 = vmatprep.subr.mxu0 0.0
    %3057 = vmatpush1.msra.mxu0 %v629
    %3058 = vmatprep.subr.mxu0 0.0
    %3059 = vmatpush1.msra.mxu0 %v630
    %3060 = vmatprep.subr.mxu0 0.0
    %3061 = vmatpush1.msra.mxu0 0.0
    %3062 = vmatprep.subr.mxu0 0.0
    %3063 = vmatpush1.msra.mxu0 0.0
    %3064 = vmatprep.subr.mxu0 0.0
    %3065 = vmatpush1.msra.mxu0 0.0
    %3066 = vmatprep.subr.mxu0 0.0
    %3067 = vmatpush1.msra.mxu0 0.0
    %3068 = vmatprep.subr.mxu0 0.0
    %3069 = vmatpush1.msra.mxu0 0.0
    %3070 = vmatprep.subr.mxu0 0.0
    %3071 = vmatpush1.msra.mxu0 0.0
    %3072 = vmatprep.subr.mxu0 0.0
    %3073 = vmatpush1.msra.mxu0 0.0
    %3074 = vmatprep.subr.mxu0 0.0
    %3075 = vmatpush1.msra.mxu0 0.0
    %3076 = vmatprep.subr.mxu0 0.0
    %3077 = vmatpush1.msra.mxu0 0.0
    %3078 = vmatprep.subr.mxu0 0.0
    %3079 = vmatpush1.msra.mxu0 0.0
    %3080 = vmatprep.subr.mxu0 0.0
    %3081 = vmatpush1.msra.mxu0 0.0
    %3082 = vmatprep.subr.mxu0 0.0
    %3083 = vmatpush1.msra.mxu0 0.0
    %3084 = vmatprep.subr.mxu0 0.0
    %3085 = vmatpush1.msra.mxu0 0.0
    %3086 = vmatprep.subr.mxu0 0.0
    %3087 = vmatpush1.msra.mxu0 0.0
    %3088 = vmatprep.subr.mxu0 0.0
    %3089 = vmatpush1.msra.mxu0 0.0
    %3090 = vmatprep.subr.mxu0 0.0
    %3091 = vmatpush1.msra.mxu0 0.0
    %3092 = vmatprep.subr.mxu0 0.0
    %3093 = vmatpush1.msra.mxu0 0.0
    %3094 = vmatprep.subr.mxu0 0.0
    %3095 = vmatpush1.msra.mxu0 0.0
    %3096 = vmatprep.subr.mxu0 0.0
    %3097 = vmatpush1.msra.mxu0 0.0
    %3098 = vmatprep.subr.mxu0 0.0
    %3099 = vmatpush1.msra.mxu0 0.0
    %3100 = vmatprep.subr.mxu0 0.0
    %3101 = vmatpush1.msra.mxu0 0.0
    %3102 = vmatprep.subr.mxu0 0.0
    %3103 = vmatpush1.msra.mxu0 0.0
    %3104 = vmatprep.subr.mxu0 0.0
    %3105 = vmatpush1.msra.mxu0 0.0
    %3106 = vmatprep.subr.mxu0 0.0
    %3107 = vmatpush1.msra.mxu0 0.0
    %3108 = vmatprep.subr.mxu0 0.0
    %3109 = vmatpush1.msra.mxu0 0.0
    %3110 = vmatprep.subr.mxu0 0.0
    %3111 = vmatpush1.msra.mxu0 0.0
    %3112 = vmatprep.subr.mxu0 0.0
    %3113 = vmatpush1.msra.mxu0 0.0
    %3114 = vmatprep.subr.mxu0 0.0
    %3115 = vmatpush1.msra.mxu0 0.0
    %3116 = vmatprep.mubr.f32.mxu0 0.0
    %3117 = vmatmul.mubr.f32.gmra.mrb[0].mxu0 %v3047
    %v3118 = vpop.f32.mrb[0].mxu0
    %v3119 = vadd.f32 0.0, %v3118
    %v3120 = vpop.f32.mrb[0].mxu0
    %3121 = vmatprep.mubr.f32.mxu0 0.0
    %3122 = vmatmul.mubr.f32.gmra.mrb[0].mxu0 %v3050
    %v3123 = vpop.f32.mrb[0].mxu0
    %v3124 = vadd.f32 0.0, %v3123
    %v3125 = vpop.f32.mrb[0].mxu0
    %3126 = vdwg.mxu0
    %3127 = vmatprep.subr.mxu0 0.0
    %3128 = vmatpush1.msra.mxu0 %v3119
    %3129 = vmatprep.subr.mxu0 0.0
    %3130 = vmatpush1.msra.mxu0 %v3124
    %3131 = vmatprep.subr.mxu0 0.0
    %3132 = vmatpush1.msra.mxu0 0.0
    %3133 = vmatprep.subr.mxu0 0.0
    %3134 = vmatpush1.msra.mxu0 0.0
    %3135 = vmatprep.subr.mxu0 0.0
    %3136 = vmatpush1.msra.mxu0 0.0
    %3137 = vmatprep.subr.mxu0 0.0
    %3138 = vmatpush1.msra.mxu0 0.0
    %3139 = vmatprep.subr.mxu0 0.0
    %3140 = vmatpush1.msra.mxu0 0.0
    %3141 = vmatprep.subr.mxu0 0.0
    %3142 = vmatpush1.msra.mxu0 0.0
    %3143 = vmatprep.subr.mxu0 0.0
    %3144 = vmatpush1.msra.mxu0 0.0
    %3145 = vmatprep.subr.mxu0 0.0
    %3146 = vmatpush1.msra.mxu0 0.0
    %3147 = vmatprep.subr.mxu0 0.0
    %3148 = vmatpush1.msra.mxu0 0.0
    %3149 = vmatprep.subr.mxu0 0.0
    %3150 = vmatpush1.msra.mxu0 0.0
    %3151 = vmatprep.subr.mxu0 0.0
    %3152 = vmatpush1.msra.mxu0 0.0
    %3153 = vmatprep.subr.mxu0 0.0
    %3154 = vmatpush1.msra.mxu0 0.0
    %3155 = vmatprep.subr.mxu0 0.0
    %3156 = vmatpush1.msra.mxu0 0.0
    %3157 = vmatprep.subr.mxu0 0.0
    %3158 = vmatpush1.msra.mxu0 0.0
    %3159 = vmatprep.subr.mxu0 0.0
    %3160 = vmatpush1.msra.mxu0 0.0
    %3161 = vmatprep.subr.mxu0 0.0
    %3162 = vmatpush1.msra.mxu0 0.0
    %3163 = vmatprep.subr.mxu0 0.0
    %3164 = vmatpush1.msra.mxu0 0.0
    %3165 = vmatprep.subr.mxu0 0.0
    %3166 = vmatpush1.msra.mxu0 0.0
    %3167 = vmatprep.subr.mxu0 0.0
    %3168 = vmatpush1.msra.mxu0 0.0
    %3169 = vmatprep.subr.mxu0 0.0
    %3170 = vmatpush1.msra.mxu0 0.0
    %3171 = vmatprep.subr.mxu0 0.0
    %3172 = vmatpush1.msra.mxu0 0.0
    %3173 = vmatprep.subr.mxu0 0.0
    %3174 = vmatpush1.msra.mxu0 0.0
    %3175 = vmatprep.subr.mxu0 0.0
    %3176 = vmatpush1.msra.mxu0 0.0
    %3177 = vmatprep.subr.mxu0 0.0
    %3178 = vmatpush1.msra.mxu0 0.0
    %3179 = vmatprep.subr.mxu0 0.0
    %3180 = vmatpush1.msra.mxu0 0.0
    %3181 = vmatprep.subr.mxu0 0.0
    %3182 = vmatpush1.msra.mxu0 0.0
    %3183 = vmatprep.subr.mxu0 0.0
    %3184 = vmatpush1.msra.mxu0 0.0
    %3185 = vmatprep.subr.mxu0 0.0
    %3186 = vmatpush1.msra.mxu0 0.0
    %3187 = vmatprep.subr.mxu0 0.0
    %3188 = vmatpush1.msra.mxu0 0.0
    %3189 = vmatprep.subr.mxu0 0.0
    %3190 = vmatpush1.msra.mxu0 0.0
    %3191 = vmatprep.mubr.f32.mxu0 0.0
    %3192 = vmatmul.mubr.f32.gmra.mrb[0].mxu0 %v2962
    %v3193 = vpop.f32.mrb[0].mxu0
    %v3194 = vadd.f32 1e-05, %v3193
    %v3195 = vpop.f32.mrb[0].mxu0
    %3196 = vmatprep.mubr.f32.mxu0 0.0
    %3197 = vmatmul.mubr.f32.gmra.mrb[0].mxu0 %v2965
    %v3198 = vpop.f32.mrb[0].mxu0
    %v3199 = vadd.f32 1e-05, %v3198
    %v3200 = vpop.f32.mrb[0].mxu0
    %3201 = vdwg.mxu0
    %v3202 = vrsqrt.pop %v3194
    %v3203 = vrsqrt.pop %v3199
    %v3204 = vmul.f32 %v3042, %v3202
    %v3205 = vmul.f32 %v3043, %v3203
    %v3206 = vld [vmem:[#allocation5] sm:$0x1]
    %v3208 = vlaneseq
    %v3209 = vshrl.u32 %v3208, 7
    %v3210 = vsub.s32 0, %v3209
    %v3211 = vrot.slane %v3206, %v3210
    %v3213 = vmul.f32 %v3204, %v3211
    %v3214 = vmul.f32 %v3205, %v3211
    %v3215 = vld [vmem:[#allocation7] sm:$0x1]
    %v3217 = vlaneseq
    %v3218 = vshrl.u32 %v3217, 7
    %v3219 = vsub.s32 0, %v3218
    %v3220 = vrot.slane %v3215, %v3219
    %v3222 = vadd.f32 %v3213, %v3220
    %v3223 = vadd.f32 %v3214, %v3220
    %v3224 = vld [vmem:[%s3] sm:$0xff]
    %v3225 = vld [vmem:[%s5] sm:$0xff]
    %v3226 = vld [vmem:[%s5 + $0x8] sm:$0xff]
    %3227 = vmatprep.subr.mxu0 0.0
    %3228 = vmatpush1.msra.mxu0 %v3224
    %3229 = vmatprep.subr.mxu0 0.0
    %3230 = vmatpush1.msra.mxu0 0.0
    %3231 = vmatprep.subr.mxu0 0.0
    %3232 = vmatpush1.msra.mxu0 0.0
    %3233 = vmatprep.subr.mxu0 0.0
    %3234 = vmatpush1.msra.mxu0 0.0
    %3235 = vmatprep.subr.mxu0 0.0
    %3236 = vmatpush1.msra.mxu0 0.0
    %3237 = vmatprep.subr.mxu0 0.0
    %3238 = vmatpush1.msra.mxu0 0.0
    %3239 = vmatprep.subr.mxu0 0.0
    %3240 = vmatpush1.msra.mxu0 0.0
    %3241 = vmatprep.subr.mxu0 0.0
    %3242 = vmatpush1.msra.mxu0 0.0
    %3243 = vmatprep.subr.mxu0 0.0
    %3244 = vmatpush1.msra.mxu0 0.0
    %3245 = vmatprep.subr.mxu0 0.0
    %3246 = vmatpush1.msra.mxu0 0.0
    %3247 = vmatprep.subr.mxu0 0.0
    %3248 = vmatpush1.msra.mxu0 0.0
    %3249 = vmatprep.subr.mxu0 0.0
    %3250 = vmatpush1.msra.mxu0 0.0
    %3251 = vmatprep.subr.mxu0 0.0
    %3252 = vmatpush1.msra.mxu0 0.0
    %3253 = vmatprep.subr.mxu0 0.0
    %3254 = vmatpush1.msra.mxu0 0.0
    %3255 = vmatprep.subr.mxu0 0.0
    %3256 = vmatpush1.msra.mxu0 0.0
    %3257 = vmatprep.subr.mxu0 0.0
    %3258 = vmatpush1.msra.mxu0 0.0
    %3259 = vmatprep.subr.mxu0 0.0
    %3260 = vmatpush1.msra.mxu0 0.0
    %3261 = vmatprep.subr.mxu0 0.0
    %3262 = vmatpush1.msra.mxu0 0.0
    %3263 = vmatprep.subr.mxu0 0.0
    %3264 = vmatpush1.msra.mxu0 0.0
    %3265 = vmatprep.subr.mxu0 0.0
    %3266 = vmatpush1.msra.mxu0 0.0
    %3267 = vmatprep.subr.mxu0 0.0
    %3268 = vmatpush1.msra.mxu0 0.0
    %3269 = vmatprep.subr.mxu0 0.0
    %3270 = vmatpush1.msra.mxu0 0.0
    %3271 = vmatprep.subr.mxu0 0.0
    %3272 = vmatpush1.msra.mxu0 0.0
    %3273 = vmatprep.subr.mxu0 0.0
    %3274 = vmatpush1.msra.mxu0 0.0
    %3275 = vmatprep.subr.mxu0 0.0
    %3276 = vmatpush1.msra.mxu0 0.0
    %3277 = vmatprep.subr.mxu0 0.0
    %3278 = vmatpush1.msra.mxu0 0.0
    %3279 = vmatprep.subr.mxu0 0.0
    %3280 = vmatpush1.msra.mxu0 0.0
    %3281 = vmatprep.subr.mxu0 0.0
    %3282 = vmatpush1.msra.mxu0 0.0
    %3283 = vmatprep.subr.mxu0 0.0
    %3284 = vmatpush1.msra.mxu0 0.0
    %3285 = vmatprep.subr.mxu0 0.0
    %3286 = vmatpush1.msra.mxu0 0.0
    %3287 = vmatprep.subr.mxu0 0.0
    %3288 = vmatpush1.msra.mxu0 0.0
    %3289 = vmatprep.subr.mxu0 0.0
    %3290 = vmatpush1.msra.mxu0 0.0
    %3291 = vmatprep.mubr.f32.mxu0 0.0
    %3292 = vmatmul.mubr.f32.gmra.mrb[0].mxu0 %v887
    %v3293 = vpop.f32.mrb[0].mxu0
    %v3294 = vadd.f32 0.0, %v3293
    %v3295 = vpop.f32.mrb[0].mxu0
    %3296 = vdwg.mxu0
    %3297 = vmatprep.subr.mxu0 0.0
    %3298 = vmatpush1.msra.mxu0 %v3224
    %3299 = vmatprep.subr.mxu0 0.0
    %3300 = vmatpush1.msra.mxu0 0.0
    %3301 = vmatprep.subr.mxu0 0.0
    %3302 = vmatpush1.msra.mxu0 0.0
    %3303 = vmatprep.subr.mxu0 0.0
    %3304 = vmatpush1.msra.mxu0 0.0
    %3305 = vmatprep.subr.mxu0 0.0
    %3306 = vmatpush1.msra.mxu0 0.0
    %3307 = vmatprep.subr.mxu0 0.0
    %3308 = vmatpush1.msra.mxu0 0.0
    %3309 = vmatprep.subr.mxu0 0.0
    %3310 = vmatpush1.msra.mxu0 0.0
    %3311 = vmatprep.subr.mxu0 0.0
    %3312 = vmatpush1.msra.mxu0 0.0
    %3313 = vmatprep.subr.mxu0 0.0
    %3314 = vmatpush1.msra.mxu0 0.0
    %3315 = vmatprep.subr.mxu0 0.0
    %3316 = vmatpush1.msra.mxu0 0.0
    %3317 = vmatprep.subr.mxu0 0.0
    %3318 = vmatpush1.msra.mxu0 0.0
    %3319 = vmatprep.subr.mxu0 0.0
    %3320 = vmatpush1.msra.mxu0 0.0
    %3321 = vmatprep.subr.mxu0 0.0
    %3322 = vmatpush1.msra.mxu0 0.0
    %3323 = vmatprep.subr.mxu0 0.0
    %3324 = vmatpush1.msra.mxu0 0.0
    %3325 = vmatprep.subr.mxu0 0.0
    %3326 = vmatpush1.msra.mxu0 0.0
    %3327 = vmatprep.subr.mxu0 0.0
    %3328 = vmatpush1.msra.mxu0 0.0
    %3329 = vmatprep.subr.mxu0 0.0
    %3330 = vmatpush1.msra.mxu0 0.0
    %3331 = vmatprep.subr.mxu0 0.0
    %3332 = vmatpush1.msra.mxu0 0.0
    %3333 = vmatprep.subr.mxu0 0.0
    %3334 = vmatpush1.msra.mxu0 0.0
    %3335 = vmatprep.subr.mxu0 0.0
    %3336 = vmatpush1.msra.mxu0 0.0
    %3337 = vmatprep.subr.mxu0 0.0
    %3338 = vmatpush1.msra.mxu0 0.0
    %3339 = vmatprep.subr.mxu0 0.0
    %3340 = vmatpush1.msra.mxu0 0.0
    %3341 = vmatprep.subr.mxu0 0.0
    %3342 = vmatpush1.msra.mxu0 0.0
    %3343 = vmatprep.subr.mxu0 0.0
    %3344 = vmatpush1.msra.mxu0 0.0
    %3345 = vmatprep.subr.mxu0 0.0
    %3346 = vmatpush1.msra.mxu0 0.0
    %3347 = vmatprep.subr.mxu0 0.0
    %3348 = vmatpush1.msra.mxu0 0.0
    %3349 = vmatprep.subr.mxu0 0.0
    %3350 = vmatpush1.msra.mxu0 0.0
    %3351 = vmatprep.subr.mxu0 0.0
    %3352 = vmatpush1.msra.mxu0 0.0
    %3353 = vmatprep.subr.mxu0 0.0
    %3354 = vmatpush1.msra.mxu0 0.0
    %3355 = vmatprep.subr.mxu0 0.0
    %3356 = vmatpush1.msra.mxu0 0.0
    %3357 = vmatprep.subr.mxu0 0.0
    %3358 = vmatpush1.msra.mxu0 0.0
    %3359 = vmatprep.subr.mxu0 0.0
    %3360 = vmatpush1.msra.mxu0 0.0
    %3361 = vmatprep.mubr.f32.mxu0 0.0
    %3362 = vmatmul.mubr.f32.gmra.mrb[0].mxu0 %v960
    %v3363 = vpop.f32.mrb[0].mxu0
    %v3364 = vadd.f32 0.0, %v3363
    %v3365 = vpop.f32.mrb[0].mxu0
    %3366 = vdwg.mxu0
    %3368 = vrot.lane.b32.xlu0 %v3224, 32
    %v3369 = vpop.permute.xlu0 %3368
    %3372 = vrot.lane.b32.xlu0 %v3364, 64
    %v3373 = vpop.permute.xlu0 %3372
    %v3375 = vsel %vm761, %v3294, %v3369
    %v3376 = vsel %vm883, %v3375, %v3373
    %v3377 = vld [vmem:[%s73] sm:$0xff]
    %v3378 = vld [vmem:[%s73 + $0x8] sm:$0xff]
    %v3379 = vld [vmem:[%s73 + $0x10] sm:$0xff]
    %v3380 = vld [vmem:[%s73 + $0x18] sm:$0xff]
    %v3381 = vld [vmem:[%s73 + $0x20] sm:$0xff]
    %v3382 = vld [vmem:[%s73 + $0x28] sm:$0xff]
    %v3383 = vld [vmem:[%s73 + $0x30] sm:$0xff]
    %v3384 = vld [vmem:[%s73 + $0x38] sm:$0xff]
    %v3385 = vld [vmem:[%s73 + $0x40] sm:$0xff]
    %v3386 = vld [vmem:[%s73 + $0x48] sm:$0xff]
    %v3387 = vld [vmem:[%s73 + $0x50] sm:$0xff]
    %v3388 = vld [vmem:[%s73 + $0x58] sm:$0xff]
    %v3389 = vld [vmem:[#allocation8] sm:$0x1]
    %v3391 = vlaneseq
    %v3392 = vshrl.u32 %v3391, 7
    %v3393 = vsub.s32 0, %v3392
    %v3394 = vrot.slane %v3389, %v3393
    %v3397 = vsel %vm1040, %v3376, 0
    %3399 = vmatprep.subr.mxu0 0.0
    %3400 = vmatpush1.msra.mxu0 %v3377
    %3401 = vmatprep.subr.mxu0 0.0
    %3402 = vmatpush1.msra.mxu0 %v3378
    %3403 = vmatprep.subr.mxu0 0.0
    %3404 = vmatpush1.msra.mxu0 %v3379
    %3405 = vmatprep.subr.mxu0 0.0
    %3406 = vmatpush1.msra.mxu0 %v3380
    %3407 = vmatprep.subr.mxu0 0.0
    %3408 = vmatpush1.msra.mxu0 %v3381
    %3409 = vmatprep.subr.mxu0 0.0
    %3410 = vmatpush1.msra.mxu0 %v3382
    %3411 = vmatprep.subr.mxu0 0.0
    %3412 = vmatpush1.msra.mxu0 %v3383
    %3413 = vmatprep.subr.mxu0 0.0
    %3414 = vmatpush1.msra.mxu0 %v3384
    %3415 = vmatprep.subr.mxu0 0.0
    %3416 = vmatpush1.msra.mxu0 %v3385
    %3417 = vmatprep.subr.mxu0 0.0
    %3418 = vmatpush1.msra.mxu0 %v3386
    %3419 = vmatprep.subr.mxu0 0.0
    %3420 = vmatpush1.msra.mxu0 %v3387
    %3421 = vmatprep.subr.mxu0 0.0
    %3422 = vmatpush1.msra.mxu0 %v3388
    %3423 = vmatprep.subr.mxu0 0.0
    %3424 = vmatpush1.msra.mxu0 0.0
    %3425 = vmatprep.subr.mxu0 0.0
    %3426 = vmatpush1.msra.mxu0 0.0
    %3427 = vmatprep.subr.mxu0 0.0
    %3428 = vmatpush1.msra.mxu0 0.0
    %3429 = vmatprep.subr.mxu0 0.0
    %3430 = vmatpush1.msra.mxu0 0.0
    %3431 = vmatprep.subr.mxu0 0.0
    %3432 = vmatpush1.msra.mxu0 0.0
    %3433 = vmatprep.subr.mxu0 0.0
    %3434 = vmatpush1.msra.mxu0 0.0
    %3435 = vmatprep.subr.mxu0 0.0
    %3436 = vmatpush1.msra.mxu0 0.0
    %3437 = vmatprep.subr.mxu0 0.0
    %3438 = vmatpush1.msra.mxu0 0.0
    %3439 = vmatprep.subr.mxu0 0.0
    %3440 = vmatpush1.msra.mxu0 0.0
    %3441 = vmatprep.subr.mxu0 0.0
    %3442 = vmatpush1.msra.mxu0 0.0
    %3443 = vmatprep.subr.mxu0 0.0
    %3444 = vmatpush1.msra.mxu0 0.0
    %3445 = vmatprep.subr.mxu0 0.0
    %3446 = vmatpush1.msra.mxu0 0.0
    %3447 = vmatprep.subr.mxu0 0.0
    %3448 = vmatpush1.msra.mxu0 0.0
    %3449 = vmatprep.subr.mxu0 0.0
    %3450 = vmatpush1.msra.mxu0 0.0
    %3451 = vmatprep.subr.mxu0 0.0
    %3452 = vmatpush1.msra.mxu0 0.0
    %3453 = vmatprep.subr.mxu0 0.0
    %3454 = vmatpush1.msra.mxu0 0.0
    %3455 = vmatprep.subr.mxu0 0.0
    %3456 = vmatpush1.msra.mxu0 0.0
    %3457 = vmatprep.subr.mxu0 0.0
    %3458 = vmatpush1.msra.mxu0 0.0
    %3459 = vmatprep.subr.mxu0 0.0
    %3460 = vmatpush1.msra.mxu0 0.0
    %3461 = vmatprep.subr.mxu0 0.0
    %3462 = vmatpush1.msra.mxu0 0.0
    %3463 = vmatprep.mubr.f32.mxu0 0.0
    %3464 = vmatmul.mubr.f32.gmra.mrb[0].mxu0 %v3397
    %v3465 = vpop.f32.mrb[0].mxu0
    %v3466 = vadd.f32 %v3394, %v3465
    %v3467 = vpop.f32.mrb[0].mxu0
    %3468 = vdwg.mxu0
    %v3469 = vmin.f32 %v3466, 20.0
    %v3470 = vmul.f32 %v3469, 1.442695
    %v3471 = vpow.pop %v3470
    %v3472 = vadd.f32 %v3471, 2.0
    %v3473 = vmul.f32 %v3471, %v3472
    %v3474 = vadd.f32 %v3473, 2.0
    %v3475 = vrcp.pop %v3474
    %v3476 = vmul.f32 %v3473, %v3475
    %v3477 = vmul.f32 %v3466, %v3476
    %3478 = vmatprep.subr.mxu0 0.0
    %3479 = vmatpush1.msra.mxu0 %v631
    %3480 = vmatprep.subr.mxu0 0.0
    %3481 = vmatpush1.msra.mxu0 %v632
    %3482 = vmatprep.subr.mxu0 0.0
    %3483 = vmatpush1.msra.mxu0 %v633
    %3484 = vmatprep.subr.mxu0 0.0
    %3485 = vmatpush1.msra.mxu0 %v634
    %3486 = vmatprep.subr.mxu0 0.0
    %3487 = vmatpush1.msra.mxu0 %v635
    %3488 = vmatprep.subr.mxu0 0.0
    %3489 = vmatpush1.msra.mxu0 %v636
    %3490 = vmatprep.subr.mxu0 0.0
    %3491 = vmatpush1.msra.mxu0 %v637
    %3492 = vmatprep.subr.mxu0 0.0
    %3493 = vmatpush1.msra.mxu0 %v638
    %3494 = vmatprep.subr.mxu0 0.0
    %3495 = vmatpush1.msra.mxu0 %v639
    %3496 = vmatprep.subr.mxu0 0.0
    %3497 = vmatpush1.msra.mxu0 %v640
    %3498 = vmatprep.subr.mxu0 0.0
    %3499 = vmatpush1.msra.mxu0 %v641
    %3500 = vmatprep.subr.mxu0 0.0
    %3501 = vmatpush1.msra.mxu0 %v642
    %3502 = vmatprep.subr.mxu0 0.0
    %3503 = vmatpush1.msra.mxu0 %v643
    %3504 = vmatprep.subr.mxu0 0.0
    %3505 = vmatpush1.msra.mxu0 %v644
    %3506 = vmatprep.subr.mxu0 0.0
    %3507 = vmatpush1.msra.mxu0 %v645
    %3508 = vmatprep.subr.mxu0 0.0
    %3509 = vmatpush1.msra.mxu0 %v646
    %3510 = vmatprep.subr.mxu0 0.0
    %3511 = vmatpush1.msra.mxu0 0.0
    %3512 = vmatprep.subr.mxu0 0.0
    %3513 = vmatpush1.msra.mxu0 0.0
    %3514 = vmatprep.subr.mxu0 0.0
    %3515 = vmatpush1.msra.mxu0 0.0
    %3516 = vmatprep.subr.mxu0 0.0
    %3517 = vmatpush1.msra.mxu0 0.0
    %3518 = vmatprep.subr.mxu0 0.0
    %3519 = vmatpush1.msra.mxu0 0.0
    %3520 = vmatprep.subr.mxu0 0.0
    %3521 = vmatpush1.msra.mxu0 0.0
    %3522 = vmatprep.subr.mxu0 0.0
    %3523 = vmatpush1.msra.mxu0 0.0
    %3524 = vmatprep.subr.mxu0 0.0
    %3525 = vmatpush1.msra.mxu0 0.0
    %3526 = vmatprep.subr.mxu0 0.0
    %3527 = vmatpush1.msra.mxu0 0.0
    %3528 = vmatprep.subr.mxu0 0.0
    %3529 = vmatpush1.msra.mxu0 0.0
    %3530 = vmatprep.subr.mxu0 0.0
    %3531 = vmatpush1.msra.mxu0 0.0
    %3532 = vmatprep.subr.mxu0 0.0
    %3533 = vmatpush1.msra.mxu0 0.0
    %3534 = vmatprep.subr.mxu0 0.0
    %3535 = vmatpush1.msra.mxu0 0.0
    %3536 = vmatprep.subr.mxu0 0.0
    %3537 = vmatpush1.msra.mxu0 0.0
    %3538 = vmatprep.subr.mxu0 0.0
    %3539 = vmatpush1.msra.mxu0 0.0
    %3540 = vmatprep.subr.mxu0 0.0
    %3541 = vmatpush1.msra.mxu0 0.0
    %3542 = vmatprep.mubr.f32.mxu0 0.0
    %3543 = vmatmul.mubr.f32.gmra.mrb[0].mxu0 %v3477
    %v3544 = vpop.f32.mrb[0].mxu0
    %v3545 = vadd.f32 0.0, %v3544
    %v3546 = vpop.f32.mrb[0].mxu0
    %3547 = vdwg.mxu0
    %3548 = vmatprep.subr.mxu0 0.0
    %3549 = vmatpush1.msra.mxu0 %v3545
    %3550 = vmatprep.subr.mxu0 0.0
    %3551 = vmatpush1.msra.mxu0 0.0
    %3552 = vmatprep.subr.mxu0 0.0
    %3553 = vmatpush1.msra.mxu0 0.0
    %3554 = vmatprep.subr.mxu0 0.0
    %3555 = vmatpush1.msra.mxu0 0.0
    %3556 = vmatprep.subr.mxu0 0.0
    %3557 = vmatpush1.msra.mxu0 0.0
    %3558 = vmatprep.subr.mxu0 0.0
    %3559 = vmatpush1.msra.mxu0 0.0
    %3560 = vmatprep.subr.mxu0 0.0
    %3561 = vmatpush1.msra.mxu0 0.0
    %3562 = vmatprep.subr.mxu0 0.0
    %3563 = vmatpush1.msra.mxu0 0.0
    %3564 = vmatprep.subr.mxu0 0.0
    %3565 = vmatpush1.msra.mxu0 0.0
    %3566 = vmatprep.subr.mxu0 0.0
    %3567 = vmatpush1.msra.mxu0 0.0
    %3568 = vmatprep.subr.mxu0 0.0
    %3569 = vmatpush1.msra.mxu0 0.0
    %3570 = vmatprep.subr.mxu0 0.0
    %3571 = vmatpush1.msra.mxu0 0.0
    %3572 = vmatprep.subr.mxu0 0.0
    %3573 = vmatpush1.msra.mxu0 0.0
    %3574 = vmatprep.subr.mxu0 0.0
    %3575 = vmatpush1.msra.mxu0 0.0
    %3576 = vmatprep.subr.mxu0 0.0
    %3577 = vmatpush1.msra.mxu0 0.0
    %3578 = vmatprep.subr.mxu0 0.0
    %3579 = vmatpush1.msra.mxu0 0.0
    %3580 = vmatprep.subr.mxu0 0.0
    %3581 = vmatpush1.msra.mxu0 0.0
    %3582 = vmatprep.subr.mxu0 0.0
    %3583 = vmatpush1.msra.mxu0 0.0
    %3584 = vmatprep.subr.mxu0 0.0
    %3585 = vmatpush1.msra.mxu0 0.0
    %3586 = vmatprep.subr.mxu0 0.0
    %3587 = vmatpush1.msra.mxu0 0.0
    %3588 = vmatprep.subr.mxu0 0.0
    %3589 = vmatpush1.msra.mxu0 0.0
    %3590 = vmatprep.subr.mxu0 0.0
    %3591 = vmatpush1.msra.mxu0 0.0
    %3592 = vmatprep.subr.mxu0 0.0
    %3593 = vmatpush1.msra.mxu0 0.0
    %3594 = vmatprep.subr.mxu0 0.0
    %3595 = vmatpush1.msra.mxu0 0.0
    %3596 = vmatprep.subr.mxu0 0.0
    %3597 = vmatpush1.msra.mxu0 0.0
    %3598 = vmatprep.subr.mxu0 0.0
    %3599 = vmatpush1.msra.mxu0 0.0
    %3600 = vmatprep.subr.mxu0 0.0
    %3601 = vmatpush1.msra.mxu0 0.0
    %3602 = vmatprep.subr.mxu0 0.0
    %3603 = vmatpush1.msra.mxu0 0.0
    %3604 = vmatprep.subr.mxu0 0.0
    %3605 = vmatpush1.msra.mxu0 0.0
    %3606 = vmatprep.subr.mxu0 0.0
    %3607 = vmatpush1.msra.mxu0 0.0
    %3608 = vmatprep.subr.mxu0 0.0
    %3609 = vmatpush1.msra.mxu0 0.0
    %3610 = vmatprep.subr.mxu0 0.0
    %3611 = vmatpush1.msra.mxu0 0.0
    %3612 = vmatprep.mubr.f32.mxu0 0.0
    %3613 = vmatmul.mubr.f32.gmra.mrb[0].mxu0 %v1646
    %v3614 = vpop.f32.mrb[0].mxu0
    %v3615 = vadd.f32 0.0, %v3614
    %v3616 = vpop.f32.mrb[0].mxu0
    %3617 = vdwg.mxu0
    %v3618 = vsub.f32 %v3477, %v3615
    %v3619 = vmul.f32 %v3618, %v3618
    %3620 = vmatprep.subr.mxu0 0.0
    %3621 = vmatpush1.msra.mxu0 %v631
    %3622 = vmatprep.subr.mxu0 0.0
    %3623 = vmatpush1.msra.mxu0 %v632
    %3624 = vmatprep.subr.mxu0 0.0
    %3625 = vmatpush1.msra.mxu0 %v633
    %3626 = vmatprep.subr.mxu0 0.0
    %3627 = vmatpush1.msra.mxu0 %v634
    %3628 = vmatprep.subr.mxu0 0.0
    %3629 = vmatpush1.msra.mxu0 %v635
    %3630 = vmatprep.subr.mxu0 0.0
    %3631 = vmatpush1.msra.mxu0 %v636
    %3632 = vmatprep.subr.mxu0 0.0
    %3633 = vmatpush1.msra.mxu0 %v637
    %3634 = vmatprep.subr.mxu0 0.0
    %3635 = vmatpush1.msra.mxu0 %v638
    %3636 = vmatprep.subr.mxu0 0.0
    %3637 = vmatpush1.msra.mxu0 %v639
    %3638 = vmatprep.subr.mxu0 0.0
    %3639 = vmatpush1.msra.mxu0 %v640
    %3640 = vmatprep.subr.mxu0 0.0
    %3641 = vmatpush1.msra.mxu0 %v641
    %3642 = vmatprep.subr.mxu0 0.0
    %3643 = vmatpush1.msra.mxu0 %v642
    %3644 = vmatprep.subr.mxu0 0.0
    %3645 = vmatpush1.msra.mxu0 %v643
    %3646 = vmatprep.subr.mxu0 0.0
    %3647 = vmatpush1.msra.mxu0 %v644
    %3648 = vmatprep.subr.mxu0 0.0
    %3649 = vmatpush1.msra.mxu0 %v645
    %3650 = vmatprep.subr.mxu0 0.0
    %3651 = vmatpush1.msra.mxu0 %v646
    %3652 = vmatprep.subr.mxu0 0.0
    %3653 = vmatpush1.msra.mxu0 0.0
    %3654 = vmatprep.subr.mxu0 0.0
    %3655 = vmatpush1.msra.mxu0 0.0
    %3656 = vmatprep.subr.mxu0 0.0
    %3657 = vmatpush1.msra.mxu0 0.0
    %3658 = vmatprep.subr.mxu0 0.0
    %3659 = vmatpush1.msra.mxu0 0.0
    %3660 = vmatprep.subr.mxu0 0.0
    %3661 = vmatpush1.msra.mxu0 0.0
    %3662 = vmatprep.subr.mxu0 0.0
    %3663 = vmatpush1.msra.mxu0 0.0
    %3664 = vmatprep.subr.mxu0 0.0
    %3665 = vmatpush1.msra.mxu0 0.0
    %3666 = vmatprep.subr.mxu0 0.0
    %3667 = vmatpush1.msra.mxu0 0.0
    %3668 = vmatprep.subr.mxu0 0.0
    %3669 = vmatpush1.msra.mxu0 0.0
    %3670 = vmatprep.subr.mxu0 0.0
    %3671 = vmatpush1.msra.mxu0 0.0
    %3672 = vmatprep.subr.mxu0 0.0
    %3673 = vmatpush1.msra.mxu0 0.0
    %3674 = vmatprep.subr.mxu0 0.0
    %3675 = vmatpush1.msra.mxu0 0.0
    %3676 = vmatprep.subr.mxu0 0.0
    %3677 = vmatpush1.msra.mxu0 0.0
    %3678 = vmatprep.subr.mxu0 0.0
    %3679 = vmatpush1.msra.mxu0 0.0
    %3680 = vmatprep.subr.mxu0 0.0
    %3681 = vmatpush1.msra.mxu0 0.0
    %3682 = vmatprep.subr.mxu0 0.0
    %3683 = vmatpush1.msra.mxu0 0.0
    %3684 = vmatprep.mubr.f32.mxu0 0.0
    %3685 = vmatmul.mubr.f32.gmra.mrb[0].mxu0 %v3619
    %v3686 = vpop.f32.mrb[0].mxu0
    %v3687 = vadd.f32 0.0, %v3686
    %v3688 = vpop.f32.mrb[0].mxu0
    %3689 = vdwg.mxu0
    %3690 = vmatprep.subr.mxu0 0.0
    %3691 = vmatpush1.msra.mxu0 %v3687
    %3692 = vmatprep.subr.mxu0 0.0
    %3693 = vmatpush1.msra.mxu0 0.0
    %3694 = vmatprep.subr.mxu0 0.0
    %3695 = vmatpush1.msra.mxu0 0.0
    %3696 = vmatprep.subr.mxu0 0.0
    %3697 = vmatpush1.msra.mxu0 0.0
    %3698 = vmatprep.subr.mxu0 0.0
    %3699 = vmatpush1.msra.mxu0 0.0
    %3700 = vmatprep.subr.mxu0 0.0
    %3701 = vmatpush1.msra.mxu0 0.0
    %3702 = vmatprep.subr.mxu0 0.0
    %3703 = vmatpush1.msra.mxu0 0.0
    %3704 = vmatprep.subr.mxu0 0.0
    %3705 = vmatpush1.msra.mxu0 0.0
    %3706 = vmatprep.subr.mxu0 0.0
    %3707 = vmatpush1.msra.mxu0 0.0
    %3708 = vmatprep.subr.mxu0 0.0
    %3709 = vmatpush1.msra.mxu0 0.0
    %3710 = vmatprep.subr.mxu0 0.0
    %3711 = vmatpush1.msra.mxu0 0.0
    %3712 = vmatprep.subr.mxu0 0.0
    %3713 = vmatpush1.msra.mxu0 0.0
    %3714 = vmatprep.subr.mxu0 0.0
    %3715 = vmatpush1.msra.mxu0 0.0
    %3716 = vmatprep.subr.mxu0 0.0
    %3717 = vmatpush1.msra.mxu0 0.0
    %3718 = vmatprep.subr.mxu0 0.0
    %3719 = vmatpush1.msra.mxu0 0.0
    %3720 = vmatprep.subr.mxu0 0.0
    %3721 = vmatpush1.msra.mxu0 0.0
    %3722 = vmatprep.subr.mxu0 0.0
    %3723 = vmatpush1.msra.mxu0 0.0
    %3724 = vmatprep.subr.mxu0 0.0
    %3725 = vmatpush1.msra.mxu0 0.0
    %3726 = vmatprep.subr.mxu0 0.0
    %3727 = vmatpush1.msra.mxu0 0.0
    %3728 = vmatprep.subr.mxu0 0.0
    %3729 = vmatpush1.msra.mxu0 0.0
    %3730 = vmatprep.subr.mxu0 0.0
    %3731 = vmatpush1.msra.mxu0 0.0
    %3732 = vmatprep.subr.mxu0 0.0
    %3733 = vmatpush1.msra.mxu0 0.0
    %3734 = vmatprep.subr.mxu0 0.0
    %3735 = vmatpush1.msra.mxu0 0.0
    %3736 = vmatprep.subr.mxu0 0.0
    %3737 = vmatpush1.msra.mxu0 0.0
    %3738 = vmatprep.subr.mxu0 0.0
    %3739 = vmatpush1.msra.mxu0 0.0
    %3740 = vmatprep.subr.mxu0 0.0
    %3741 = vmatpush1.msra.mxu0 0.0
    %3742 = vmatprep.subr.mxu0 0.0
    %3743 = vmatpush1.msra.mxu0 0.0
    %3744 = vmatprep.subr.mxu0 0.0
    %3745 = vmatpush1.msra.mxu0 0.0
    %3746 = vmatprep.subr.mxu0 0.0
    %3747 = vmatpush1.msra.mxu0 0.0
    %3748 = vmatprep.subr.mxu0 0.0
    %3749 = vmatpush1.msra.mxu0 0.0
    %3750 = vmatprep.subr.mxu0 0.0
    %3751 = vmatpush1.msra.mxu0 0.0
    %3752 = vmatprep.subr.mxu0 0.0
    %3753 = vmatpush1.msra.mxu0 0.0
    %3754 = vmatprep.mubr.f32.mxu0 0.0
    %3755 = vmatmul.mubr.f32.gmra.mrb[0].mxu0 %v1646
    %v3756 = vpop.f32.mrb[0].mxu0
    %v3757 = vadd.f32 1e-05, %v3756
    %v3758 = vpop.f32.mrb[0].mxu0
    %3759 = vdwg.mxu0
    %v3760 = vrsqrt.pop %v3757
    %v3761 = vmul.f32 %v3618, %v3760
    %v3762 = vld [vmem:[#allocation11] sm:$0x1]
    %v3764 = vlaneseq
    %v3765 = vshrl.u32 %v3764, 7
    %v3766 = vsub.s32 0, %v3765
    %v3767 = vrot.slane %v3762, %v3766
    %v3769 = vmul.f32 %v3761, %v3767
    %v3770 = vld [vmem:[#allocation13] sm:$0x1]
    %v3772 = vlaneseq
    %v3773 = vshrl.u32 %v3772, 7
    %v3774 = vsub.s32 0, %v3773
    %v3775 = vrot.slane %v3770, %v3774
    %v3777 = vadd.f32 %v3769, %v3775
    %3778 = vmatprep.subr.mxu0 0.0
    %3779 = vmatpush1.msra.mxu0 %v3777
    %3780 = vmatprep.subr.mxu0 0.0
    %3781 = vmatpush1.msra.mxu0 0.0
    %3782 = vmatprep.subr.mxu0 0.0
    %3783 = vmatpush1.msra.mxu0 0.0
    %3784 = vmatprep.subr.mxu0 0.0
    %3785 = vmatpush1.msra.mxu0 0.0
    %3786 = vmatprep.subr.mxu0 0.0
    %3787 = vmatpush1.msra.mxu0 0.0
    %3788 = vmatprep.subr.mxu0 0.0
    %3789 = vmatpush1.msra.mxu0 0.0
    %3790 = vmatprep.subr.mxu0 0.0
    %3791 = vmatpush1.msra.mxu0 0.0
    %3792 = vmatprep.subr.mxu0 0.0
    %3793 = vmatpush1.msra.mxu0 0.0
    %3794 = vmatprep.subr.mxu0 0.0
    %3795 = vmatpush1.msra.mxu0 0.0
    %3796 = vmatprep.subr.mxu0 0.0
    %3797 = vmatpush1.msra.mxu0 0.0
    %3798 = vmatprep.subr.mxu0 0.0
    %3799 = vmatpush1.msra.mxu0 0.0
    %3800 = vmatprep.subr.mxu0 0.0
    %3801 = vmatpush1.msra.mxu0 0.0
    %3802 = vmatprep.subr.mxu0 0.0
    %3803 = vmatpush1.msra.mxu0 0.0
    %3804 = vmatprep.subr.mxu0 0.0
    %3805 = vmatpush1.msra.mxu0 0.0
    %3806 = vmatprep.subr.mxu0 0.0
    %3807 = vmatpush1.msra.mxu0 0.0
    %3808 = vmatprep.subr.mxu0 0.0
    %3809 = vmatpush1.msra.mxu0 0.0
    %3810 = vmatprep.subr.mxu0 0.0
    %3811 = vmatpush1.msra.mxu0 0.0
    %3812 = vmatprep.subr.mxu0 0.0
    %3813 = vmatpush1.msra.mxu0 0.0
    %3814 = vmatprep.subr.mxu0 0.0
    %3815 = vmatpush1.msra.mxu0 0.0
    %3816 = vmatprep.subr.mxu0 0.0
    %3817 = vmatpush1.msra.mxu0 0.0
    %3818 = vmatprep.subr.mxu0 0.0
    %3819 = vmatpush1.msra.mxu0 0.0
    %3820 = vmatprep.subr.mxu0 0.0
    %3821 = vmatpush1.msra.mxu0 0.0
    %3822 = vmatprep.subr.mxu0 0.0
    %3823 = vmatpush1.msra.mxu0 0.0
    %3824 = vmatprep.subr.mxu0 0.0
    %3825 = vmatpush1.msra.mxu0 0.0
    %3826 = vmatprep.subr.mxu0 0.0
    %3827 = vmatpush1.msra.mxu0 0.0
    %3828 = vmatprep.subr.mxu0 0.0
    %3829 = vmatpush1.msra.mxu0 0.0
    %3830 = vmatprep.subr.mxu0 0.0
    %3831 = vmatpush1.msra.mxu0 0.0
    %3832 = vmatprep.subr.mxu0 0.0
    %3833 = vmatpush1.msra.mxu0 0.0
    %3834 = vmatprep.subr.mxu0 0.0
    %3835 = vmatpush1.msra.mxu0 0.0
    %3836 = vmatprep.subr.mxu0 0.0
    %3837 = vmatpush1.msra.mxu0 0.0
    %3838 = vmatprep.subr.mxu0 0.0
    %3839 = vmatpush1.msra.mxu0 0.0
    %3840 = vmatprep.subr.mxu0 0.0
    %3841 = vmatpush1.msra.mxu0 0.0
    %3842 = vmatprep.mubr.f32.mxu0 0.0
    %3843 = vmatmul.mubr.f32.gmra.mrb[0].mxu0 %v887
    %v3844 = vpop.f32.mrb[0].mxu0
    %v3845 = vadd.f32 0.0, %v3844
    %v3846 = vpop.f32.mrb[0].mxu0
    %3847 = vdwg.mxu0
    %3848 = vmatprep.subr.mxu0 0.0
    %3849 = vmatpush1.msra.mxu0 %v3777
    %3850 = vmatprep.subr.mxu0 0.0
    %3851 = vmatpush1.msra.mxu0 0.0
    %3852 = vmatprep.subr.mxu0 0.0
    %3853 = vmatpush1.msra.mxu0 0.0
    %3854 = vmatprep.subr.mxu0 0.0
    %3855 = vmatpush1.msra.mxu0 0.0
    %3856 = vmatprep.subr.mxu0 0.0
    %3857 = vmatpush1.msra.mxu0 0.0
    %3858 = vmatprep.subr.mxu0 0.0
    %3859 = vmatpush1.msra.mxu0 0.0
    %3860 = vmatprep.subr.mxu0 0.0
    %3861 = vmatpush1.msra.mxu0 0.0
    %3862 = vmatprep.subr.mxu0 0.0
    %3863 = vmatpush1.msra.mxu0 0.0
    %3864 = vmatprep.subr.mxu0 0.0
    %3865 = vmatpush1.msra.mxu0 0.0
    %3866 = vmatprep.subr.mxu0 0.0
    %3867 = vmatpush1.msra.mxu0 0.0
    %3868 = vmatprep.subr.mxu0 0.0
    %3869 = vmatpush1.msra.mxu0 0.0
    %3870 = vmatprep.subr.mxu0 0.0
    %3871 = vmatpush1.msra.mxu0 0.0
    %3872 = vmatprep.subr.mxu0 0.0
    %3873 = vmatpush1.msra.mxu0 0.0
    %3874 = vmatprep.subr.mxu0 0.0
    %3875 = vmatpush1.msra.mxu0 0.0
    %3876 = vmatprep.subr.mxu0 0.0
    %3877 = vmatpush1.msra.mxu0 0.0
    %3878 = vmatprep.subr.mxu0 0.0
    %3879 = vmatpush1.msra.mxu0 0.0
    %3880 = vmatprep.subr.mxu0 0.0
    %3881 = vmatpush1.msra.mxu0 0.0
    %3882 = vmatprep.subr.mxu0 0.0
    %3883 = vmatpush1.msra.mxu0 0.0
    %3884 = vmatprep.subr.mxu0 0.0
    %3885 = vmatpush1.msra.mxu0 0.0
    %3886 = vmatprep.subr.mxu0 0.0
    %3887 = vmatpush1.msra.mxu0 0.0
    %3888 = vmatprep.subr.mxu0 0.0
    %3889 = vmatpush1.msra.mxu0 0.0
    %3890 = vmatprep.subr.mxu0 0.0
    %3891 = vmatpush1.msra.mxu0 0.0
    %3892 = vmatprep.subr.mxu0 0.0
    %3893 = vmatpush1.msra.mxu0 0.0
    %3894 = vmatprep.subr.mxu0 0.0
    %3895 = vmatpush1.msra.mxu0 0.0
    %3896 = vmatprep.subr.mxu0 0.0
    %3897 = vmatpush1.msra.mxu0 0.0
    %3898 = vmatprep.subr.mxu0 0.0
    %3899 = vmatpush1.msra.mxu0 0.0
    %3900 = vmatprep.subr.mxu0 0.0
    %3901 = vmatpush1.msra.mxu0 0.0
    %3902 = vmatprep.subr.mxu0 0.0
    %3903 = vmatpush1.msra.mxu0 0.0
    %3904 = vmatprep.subr.mxu0 0.0
    %3905 = vmatpush1.msra.mxu0 0.0
    %3906 = vmatprep.subr.mxu0 0.0
    %3907 = vmatpush1.msra.mxu0 0.0
    %3908 = vmatprep.subr.mxu0 0.0
    %3909 = vmatpush1.msra.mxu0 0.0
    %3910 = vmatprep.subr.mxu0 0.0
    %3911 = vmatpush1.msra.mxu0 0.0
    %3912 = vmatprep.mubr.f32.mxu0 0.0
    %3913 = vmatmul.mubr.f32.gmra.mrb[0].mxu0 %v960
    %v3914 = vpop.f32.mrb[0].mxu0
    %v3915 = vadd.f32 0.0, %v3914
    %v3916 = vpop.f32.mrb[0].mxu0
    %3917 = vdwg.mxu0
    %v3918 = vld [vmem:[%s77] sm:$0xff]
    %v3919 = vld [vmem:[%s77 + $0x8] sm:$0xff]
    %v3920 = vld [vmem:[%s77 + $0x10] sm:$0xff]
    %v3921 = vld [vmem:[%s77 + $0x18] sm:$0xff]
    %v3922 = vld [vmem:[%s77 + $0x20] sm:$0xff]
    %v3923 = vld [vmem:[%s77 + $0x28] sm:$0xff]
    %v3924 = vld [vmem:[%s77 + $0x30] sm:$0xff]
    %v3925 = vld [vmem:[%s77 + $0x38] sm:$0xff]
    %v3926 = vld [vmem:[%s77 + $0x40] sm:$0xff]
    %v3927 = vld [vmem:[%s77 + $0x48] sm:$0xff]
    %v3928 = vld [vmem:[%s77 + $0x50] sm:$0xff]
    %v3929 = vld [vmem:[%s77 + $0x58] sm:$0xff]
    %v3930 = vld [vmem:[%s77 + $0x60] sm:$0xff]
    %v3931 = vld [vmem:[%s77 + $0x68] sm:$0xff]
    %v3932 = vld [vmem:[%s77 + $0x70] sm:$0xff]
    %v3933 = vld [vmem:[%s77 + $0x78] sm:$0xff]
    %v3934 = vld [vmem:[%s77 + $0x80] sm:$0xff]
    %v3935 = vld [vmem:[%s77 + $0x88] sm:$0xff]
    %v3936 = vld [vmem:[%s77 + $0x90] sm:$0xff]
    %v3937 = vld [vmem:[%s77 + $0x98] sm:$0xff]
    %v3938 = vld [vmem:[%s77 + $0xa0] sm:$0xff]
    %v3939 = vld [vmem:[%s77 + $0xa8] sm:$0xff]
    %v3940 = vld [vmem:[%s77 + $0xb0] sm:$0xff]
    %v3941 = vld [vmem:[%s77 + $0xb8] sm:$0xff]
    %v3942 = vld [vmem:[%s77 + $0xc0] sm:$0xff]
    %v3943 = vld [vmem:[%s77 + $0xc8] sm:$0xff]
    %v3944 = vld [vmem:[%s77 + $0xd0] sm:$0xff]
    %v3945 = vld [vmem:[%s77 + $0xd8] sm:$0xff]
    %v3946 = vld [vmem:[%s77 + $0xe0] sm:$0xff]
    %v3947 = vld [vmem:[%s77 + $0xe8] sm:$0xff]
    %v3948 = vld [vmem:[%s77 + $0xf0] sm:$0xff]
    %v3949 = vld [vmem:[%s77 + $0xf8] sm:$0xff]
    %v3950 = vld [vmem:[%s77 + $0x100] sm:$0xff]
    %v3951 = vld [vmem:[%s77 + $0x108] sm:$0xff]
    %v3952 = vld [vmem:[%s77 + $0x110] sm:$0xff]
    %v3953 = vld [vmem:[%s77 + $0x118] sm:$0xff]
    %v3954 = vld [vmem:[%s77 + $0x120] sm:$0xff]
    %v3955 = vld [vmem:[%s77 + $0x128] sm:$0xff]
    %v3956 = vld [vmem:[%s77 + $0x130] sm:$0xff]
    %v3957 = vld [vmem:[%s77 + $0x138] sm:$0xff]
    %v3958 = vld [vmem:[%s77 + $0x140] sm:$0xff]
    %v3959 = vld [vmem:[%s77 + $0x148] sm:$0xff]
    %v3960 = vld [vmem:[%s77 + $0x150] sm:$0xff]
    %v3961 = vld [vmem:[%s77 + $0x158] sm:$0xff]
    %v3962 = vld [vmem:[%s77 + $0x160] sm:$0xff]
    %v3963 = vld [vmem:[%s77 + $0x168] sm:$0xff]
    %v3964 = vld [vmem:[%s77 + $0x170] sm:$0xff]
    %v3965 = vld [vmem:[%s77 + $0x178] sm:$0xff]
    %v3966 = vld [vmem:[#allocation10] sm:$0x1]
    %v3968 = vlaneseq
    %v3969 = vshrl.u32 %v3968, 7
    %v3970 = vsub.s32 0, %v3969
    %v3971 = vrot.slane %v3966, %v3970
    %3973 = vmatprep.subr.mxu0 0.0
    %3974 = vmatpush1.msra.mxu0 %v3918
    %3975 = vmatprep.subr.mxu0 0.0
    %3976 = vmatpush1.msra.mxu0 %v3919
    %3977 = vmatprep.subr.mxu0 0.0
    %3978 = vmatpush1.msra.mxu0 %v3920
    %3979 = vmatprep.subr.mxu0 0.0
    %3980 = vmatpush1.msra.mxu0 %v3921
    %3981 = vmatprep.subr.mxu0 0.0
    %3982 = vmatpush1.msra.mxu0 %v3922
    %3983 = vmatprep.subr.mxu0 0.0
    %3984 = vmatpush1.msra.mxu0 %v3923
    %3985 = vmatprep.subr.mxu0 0.0
    %3986 = vmatpush1.msra.mxu0 %v3924
    %3987 = vmatprep.subr.mxu0 0.0
    %3988 = vmatpush1.msra.mxu0 %v3925
    %3989 = vmatprep.subr.mxu0 0.0
    %3990 = vmatpush1.msra.mxu0 %v3926
    %3991 = vmatprep.subr.mxu0 0.0
    %3992 = vmatpush1.msra.mxu0 %v3927
    %3993 = vmatprep.subr.mxu0 0.0
    %3994 = vmatpush1.msra.mxu0 %v3928
    %3995 = vmatprep.subr.mxu0 0.0
    %3996 = vmatpush1.msra.mxu0 %v3929
    %3997 = vmatprep.subr.mxu0 0.0
    %3998 = vmatpush1.msra.mxu0 %v3930
    %3999 = vmatprep.subr.mxu0 0.0
    %4000 = vmatpush1.msra.mxu0 %v3931
    %4001 = vmatprep.subr.mxu0 0.0
    %4002 = vmatpush1.msra.mxu0 %v3932
    %4003 = vmatprep.subr.mxu0 0.0
    %4004 = vmatpush1.msra.mxu0 %v3933
    %4005 = vmatprep.subr.mxu0 0.0
    %4006 = vmatpush1.msra.mxu0 %v3934
    %4007 = vmatprep.subr.mxu0 0.0
    %4008 = vmatpush1.msra.mxu0 %v3935
    %4009 = vmatprep.subr.mxu0 0.0
    %4010 = vmatpush1.msra.mxu0 %v3936
    %4011 = vmatprep.subr.mxu0 0.0
    %4012 = vmatpush1.msra.mxu0 %v3937
    %4013 = vmatprep.subr.mxu0 0.0
    %4014 = vmatpush1.msra.mxu0 %v3938
    %4015 = vmatprep.subr.mxu0 0.0
    %4016 = vmatpush1.msra.mxu0 %v3939
    %4017 = vmatprep.subr.mxu0 0.0
    %4018 = vmatpush1.msra.mxu0 %v3940
    %4019 = vmatprep.subr.mxu0 0.0
    %4020 = vmatpush1.msra.mxu0 %v3941
    %4021 = vmatprep.subr.mxu0 0.0
    %4022 = vmatpush1.msra.mxu0 %v3942
    %4023 = vmatprep.subr.mxu0 0.0
    %4024 = vmatpush1.msra.mxu0 %v3943
    %4025 = vmatprep.subr.mxu0 0.0
    %4026 = vmatpush1.msra.mxu0 %v3944
    %4027 = vmatprep.subr.mxu0 0.0
    %4028 = vmatpush1.msra.mxu0 %v3945
    %4029 = vmatprep.subr.mxu0 0.0
    %4030 = vmatpush1.msra.mxu0 %v3946
    %4031 = vmatprep.subr.mxu0 0.0
    %4032 = vmatpush1.msra.mxu0 %v3947
    %4033 = vmatprep.subr.mxu0 0.0
    %4034 = vmatpush1.msra.mxu0 %v3948
    %4035 = vmatprep.subr.mxu0 0.0
    %4036 = vmatpush1.msra.mxu0 %v3949
    %4037 = vmatprep.mubr.f32.mxu0 %v3777
    %4038 = vmatmul.mubr.f32.gmra.mrb[0].mxu0 %v3845
    %v4039 = vpop.f32.mrb[0].mxu0
    %v4040 = vadd.f32 %v3971, %v4039
    %v4041 = vpop.f32.mrb[0].mxu0
    %4042 = vdwg.mxu0
    %4043 = vmatprep.subr.mxu0 0.0
    %4044 = vmatpush1.msra.mxu0 %v3950
    %4045 = vmatprep.subr.mxu0 0.0
    %4046 = vmatpush1.msra.mxu0 %v3951
    %4047 = vmatprep.subr.mxu0 0.0
    %4048 = vmatpush1.msra.mxu0 %v3952
    %4049 = vmatprep.subr.mxu0 0.0
    %4050 = vmatpush1.msra.mxu0 %v3953
    %4051 = vmatprep.subr.mxu0 0.0
    %4052 = vmatpush1.msra.mxu0 %v3954
    %4053 = vmatprep.subr.mxu0 0.0
    %4054 = vmatpush1.msra.mxu0 %v3955
    %4055 = vmatprep.subr.mxu0 0.0
    %4056 = vmatpush1.msra.mxu0 %v3956
    %4057 = vmatprep.subr.mxu0 0.0
    %4058 = vmatpush1.msra.mxu0 %v3957
    %4059 = vmatprep.subr.mxu0 0.0
    %4060 = vmatpush1.msra.mxu0 %v3958
    %4061 = vmatprep.subr.mxu0 0.0
    %4062 = vmatpush1.msra.mxu0 %v3959
    %4063 = vmatprep.subr.mxu0 0.0
    %4064 = vmatpush1.msra.mxu0 %v3960
    %4065 = vmatprep.subr.mxu0 0.0
    %4066 = vmatpush1.msra.mxu0 %v3961
    %4067 = vmatprep.subr.mxu0 0.0
    %4068 = vmatpush1.msra.mxu0 %v3962
    %4069 = vmatprep.subr.mxu0 0.0
    %4070 = vmatpush1.msra.mxu0 %v3963
    %4071 = vmatprep.subr.mxu0 0.0
    %4072 = vmatpush1.msra.mxu0 %v3964
    %4073 = vmatprep.subr.mxu0 0.0
    %4074 = vmatpush1.msra.mxu0 %v3965
    %4075 = vmatprep.subr.mxu0 0.0
    %4076 = vmatpush1.msra.mxu0 0.0
    %4077 = vmatprep.subr.mxu0 0.0
    %4078 = vmatpush1.msra.mxu0 0.0
    %4079 = vmatprep.subr.mxu0 0.0
    %4080 = vmatpush1.msra.mxu0 0.0
    %4081 = vmatprep.subr.mxu0 0.0
    %4082 = vmatpush1.msra.mxu0 0.0
    %4083 = vmatprep.subr.mxu0 0.0
    %4084 = vmatpush1.msra.mxu0 0.0
    %4085 = vmatprep.subr.mxu0 0.0
    %4086 = vmatpush1.msra.mxu0 0.0
    %4087 = vmatprep.subr.mxu0 0.0
    %4088 = vmatpush1.msra.mxu0 0.0
    %4089 = vmatprep.subr.mxu0 0.0
    %4090 = vmatpush1.msra.mxu0 0.0
    %4091 = vmatprep.subr.mxu0 0.0
    %4092 = vmatpush1.msra.mxu0 0.0
    %4093 = vmatprep.subr.mxu0 0.0
    %4094 = vmatpush1.msra.mxu0 0.0
    %4095 = vmatprep.subr.mxu0 0.0
    %4096 = vmatpush1.msra.mxu0 0.0
    %4097 = vmatprep.subr.mxu0 0.0
    %4098 = vmatpush1.msra.mxu0 0.0
    %4099 = vmatprep.subr.mxu0 0.0
    %4100 = vmatpush1.msra.mxu0 0.0
    %4101 = vmatprep.subr.mxu0 0.0
    %4102 = vmatpush1.msra.mxu0 0.0
    %4103 = vmatprep.subr.mxu0 0.0
    %4104 = vmatpush1.msra.mxu0 0.0
    %4105 = vmatprep.subr.mxu0 0.0
    %4106 = vmatpush1.msra.mxu0 0.0
    %4107 = vmatprep.mubr.f32.mxu0 0.0
    %4108 = vmatmul.mubr.f32.gmra.mrb[0].mxu0 %v3915
    %v4109 = vpop.f32.mrb[0].mxu0
    %v4110 = vadd.f32 %v4040, %v4109
    %v4111 = vpop.f32.mrb[0].mxu0
    %4112 = vdwg.mxu0
    %v4113 = vadd.f32 %v1880, %v4110
    %v4115 = vsel %vm761, %v4113, 0
    %4117 = vmatprep.subr.mxu0 0.0
    %4118 = vmatpush1.msra.mxu0 %v627
    %4119 = vmatprep.subr.mxu0 0.0
    %4120 = vmatpush1.msra.mxu0 %v628
    %4121 = vmatprep.subr.mxu0 0.0
    %4122 = vmatpush1.msra.mxu0 %v629
    %4123 = vmatprep.subr.mxu0 0.0
    %4124 = vmatpush1.msra.mxu0 %v630
    %4125 = vmatprep.subr.mxu0 0.0
    %4126 = vmatpush1.msra.mxu0 0.0
    %4127 = vmatprep.subr.mxu0 0.0
    %4128 = vmatpush1.msra.mxu0 0.0
    %4129 = vmatprep.subr.mxu0 0.0
    %4130 = vmatpush1.msra.mxu0 0.0
    %4131 = vmatprep.subr.mxu0 0.0
    %4132 = vmatpush1.msra.mxu0 0.0
    %4133 = vmatprep.subr.mxu0 0.0
    %4134 = vmatpush1.msra.mxu0 0.0
    %4135 = vmatprep.subr.mxu0 0.0
    %4136 = vmatpush1.msra.mxu0 0.0
    %4137 = vmatprep.subr.mxu0 0.0
    %4138 = vmatpush1.msra.mxu0 0.0
    %4139 = vmatprep.subr.mxu0 0.0
    %4140 = vmatpush1.msra.mxu0 0.0
    %4141 = vmatprep.subr.mxu0 0.0
    %4142 = vmatpush1.msra.mxu0 0.0
    %4143 = vmatprep.subr.mxu0 0.0
    %4144 = vmatpush1.msra.mxu0 0.0
    %4145 = vmatprep.subr.mxu0 0.0
    %4146 = vmatpush1.msra.mxu0 0.0
    %4147 = vmatprep.subr.mxu0 0.0
    %4148 = vmatpush1.msra.mxu0 0.0
    %4149 = vmatprep.subr.mxu0 0.0
    %4150 = vmatpush1.msra.mxu0 0.0
    %4151 = vmatprep.subr.mxu0 0.0
    %4152 = vmatpush1.msra.mxu0 0.0
    %4153 = vmatprep.subr.mxu0 0.0
    %4154 = vmatpush1.msra.mxu0 0.0
    %4155 = vmatprep.subr.mxu0 0.0
    %4156 = vmatpush1.msra.mxu0 0.0
    %4157 = vmatprep.subr.mxu0 0.0
    %4158 = vmatpush1.msra.mxu0 0.0
    %4159 = vmatprep.subr.mxu0 0.0
    %4160 = vmatpush1.msra.mxu0 0.0
    %4161 = vmatprep.subr.mxu0 0.0
    %4162 = vmatpush1.msra.mxu0 0.0
    %4163 = vmatprep.subr.mxu0 0.0
    %4164 = vmatpush1.msra.mxu0 0.0
    %4165 = vmatprep.subr.mxu0 0.0
    %4166 = vmatpush1.msra.mxu0 0.0
    %4167 = vmatprep.subr.mxu0 0.0
    %4168 = vmatpush1.msra.mxu0 0.0
    %4169 = vmatprep.subr.mxu0 0.0
    %4170 = vmatpush1.msra.mxu0 0.0
    %4171 = vmatprep.subr.mxu0 0.0
    %4172 = vmatpush1.msra.mxu0 0.0
    %4173 = vmatprep.subr.mxu0 0.0
    %4174 = vmatpush1.msra.mxu0 0.0
    %4175 = vmatprep.subr.mxu0 0.0
    %4176 = vmatpush1.msra.mxu0 0.0
    %4177 = vmatprep.subr.mxu0 0.0
    %4178 = vmatpush1.msra.mxu0 0.0
    %4179 = vmatprep.subr.mxu0 0.0
    %4180 = vmatpush1.msra.mxu0 0.0
    %4181 = vmatprep.mubr.f32.mxu0 0.0
    %4182 = vmatmul.mubr.f32.gmra.mrb[0].mxu0 %v4115
    %v4183 = vpop.f32.mrb[0].mxu0
    %v4184 = vadd.f32 0.0, %v4183
    %v4185 = vpop.f32.mrb[0].mxu0
    %4186 = vdwg.mxu0
    %4187 = vmatprep.subr.mxu0 0.0
    %4188 = vmatpush1.msra.mxu0 %v4184
    %4189 = vmatprep.subr.mxu0 0.0
    %4190 = vmatpush1.msra.mxu0 0.0
    %4191 = vmatprep.subr.mxu0 0.0
    %4192 = vmatpush1.msra.mxu0 0.0
    %4193 = vmatprep.subr.mxu0 0.0
    %4194 = vmatpush1.msra.mxu0 0.0
    %4195 = vmatprep.subr.mxu0 0.0
    %4196 = vmatpush1.msra.mxu0 0.0
    %4197 = vmatprep.subr.mxu0 0.0
    %4198 = vmatpush1.msra.mxu0 0.0
    %4199 = vmatprep.subr.mxu0 0.0
    %4200 = vmatpush1.msra.mxu0 0.0
    %4201 = vmatprep.subr.mxu0 0.0
    %4202 = vmatpush1.msra.mxu0 0.0
    %4203 = vmatprep.subr.mxu0 0.0
    %4204 = vmatpush1.msra.mxu0 0.0
    %4205 = vmatprep.subr.mxu0 0.0
    %4206 = vmatpush1.msra.mxu0 0.0
    %4207 = vmatprep.subr.mxu0 0.0
    %4208 = vmatpush1.msra.mxu0 0.0
    %4209 = vmatprep.subr.mxu0 0.0
    %4210 = vmatpush1.msra.mxu0 0.0
    %4211 = vmatprep.subr.mxu0 0.0
    %4212 = vmatpush1.msra.mxu0 0.0
    %4213 = vmatprep.subr.mxu0 0.0
    %4214 = vmatpush1.msra.mxu0 0.0
    %4215 = vmatprep.subr.mxu0 0.0
    %4216 = vmatpush1.msra.mxu0 0.0
    %4217 = vmatprep.subr.mxu0 0.0
    %4218 = vmatpush1.msra.mxu0 0.0
    %4219 = vmatprep.subr.mxu0 0.0
    %4220 = vmatpush1.msra.mxu0 0.0
    %4221 = vmatprep.subr.mxu0 0.0
    %4222 = vmatpush1.msra.mxu0 0.0
    %4223 = vmatprep.subr.mxu0 0.0
    %4224 = vmatpush1.msra.mxu0 0.0
    %4225 = vmatprep.subr.mxu0 0.0
    %4226 = vmatpush1.msra.mxu0 0.0
    %4227 = vmatprep.subr.mxu0 0.0
    %4228 = vmatpush1.msra.mxu0 0.0
    %4229 = vmatprep.subr.mxu0 0.0
    %4230 = vmatpush1.msra.mxu0 0.0
    %4231 = vmatprep.subr.mxu0 0.0
    %4232 = vmatpush1.msra.mxu0 0.0
    %4233 = vmatprep.subr.mxu0 0.0
    %4234 = vmatpush1.msra.mxu0 0.0
    %4235 = vmatprep.subr.mxu0 0.0
    %4236 = vmatpush1.msra.mxu0 0.0
    %4237 = vmatprep.subr.mxu0 0.0
    %4238 = vmatpush1.msra.mxu0 0.0
    %4239 = vmatprep.subr.mxu0 0.0
    %4240 = vmatpush1.msra.mxu0 0.0
    %4241 = vmatprep.subr.mxu0 0.0
    %4242 = vmatpush1.msra.mxu0 0.0
    %4243 = vmatprep.subr.mxu0 0.0
    %4244 = vmatpush1.msra.mxu0 0.0
    %4245 = vmatprep.subr.mxu0 0.0
    %4246 = vmatpush1.msra.mxu0 0.0
    %4247 = vmatprep.subr.mxu0 0.0
    %4248 = vmatpush1.msra.mxu0 0.0
    %4249 = vmatprep.subr.mxu0 0.0
    %4250 = vmatpush1.msra.mxu0 0.0
    %4251 = vmatprep.mubr.f32.mxu0 0.0
    %4252 = vmatmul.mubr.f32.gmra.mrb[0].mxu0 %v1646
    %v4253 = vpop.f32.mrb[0].mxu0
    %v4254 = vadd.f32 0.0, %v4253
    %v4255 = vpop.f32.mrb[0].mxu0
    %4256 = vdwg.mxu0
    %v4257 = vsub.f32 %v4113, %v4254
    %v4258 = vmul.f32 %v4257, %v4257
    %v4260 = vsel %vm761, %v4258, 0
    %4262 = vmatprep.subr.mxu0 0.0
    %4263 = vmatpush1.msra.mxu0 %v627
    %4264 = vmatprep.subr.mxu0 0.0
    %4265 = vmatpush1.msra.mxu0 %v628
    %4266 = vmatprep.subr.mxu0 0.0
    %4267 = vmatpush1.msra.mxu0 %v629
    %4268 = vmatprep.subr.mxu0 0.0
    %4269 = vmatpush1.msra.mxu0 %v630
    %4270 = vmatprep.subr.mxu0 0.0
    %4271 = vmatpush1.msra.mxu0 0.0
    %4272 = vmatprep.subr.mxu0 0.0
    %4273 = vmatpush1.msra.mxu0 0.0
    %4274 = vmatprep.subr.mxu0 0.0
    %4275 = vmatpush1.msra.mxu0 0.0
    %4276 = vmatprep.subr.mxu0 0.0
    %4277 = vmatpush1.msra.mxu0 0.0
    %4278 = vmatprep.subr.mxu0 0.0
    %4279 = vmatpush1.msra.mxu0 0.0
    %4280 = vmatprep.subr.mxu0 0.0
    %4281 = vmatpush1.msra.mxu0 0.0
    %4282 = vmatprep.subr.mxu0 0.0
    %4283 = vmatpush1.msra.mxu0 0.0
    %4284 = vmatprep.subr.mxu0 0.0
    %4285 = vmatpush1.msra.mxu0 0.0
    %4286 = vmatprep.subr.mxu0 0.0
    %4287 = vmatpush1.msra.mxu0 0.0
    %4288 = vmatprep.subr.mxu0 0.0
    %4289 = vmatpush1.msra.mxu0 0.0
    %4290 = vmatprep.subr.mxu0 0.0
    %4291 = vmatpush1.msra.mxu0 0.0
    %4292 = vmatprep.subr.mxu0 0.0
    %4293 = vmatpush1.msra.mxu0 0.0
    %4294 = vmatprep.subr.mxu0 0.0
    %4295 = vmatpush1.msra.mxu0 0.0
    %4296 = vmatprep.subr.mxu0 0.0
    %4297 = vmatpush1.msra.mxu0 0.0
    %4298 = vmatprep.subr.mxu0 0.0
    %4299 = vmatpush1.msra.mxu0 0.0
    %4300 = vmatprep.subr.mxu0 0.0
    %4301 = vmatpush1.msra.mxu0 0.0
    %4302 = vmatprep.subr.mxu0 0.0
    %4303 = vmatpush1.msra.mxu0 0.0
    %4304 = vmatprep.subr.mxu0 0.0
    %4305 = vmatpush1.msra.mxu0 0.0
    %4306 = vmatprep.subr.mxu0 0.0
    %4307 = vmatpush1.msra.mxu0 0.0
    %4308 = vmatprep.subr.mxu0 0.0
    %4309 = vmatpush1.msra.mxu0 0.0
    %4310 = vmatprep.subr.mxu0 0.0
    %4311 = vmatpush1.msra.mxu0 0.0
    %4312 = vmatprep.subr.mxu0 0.0
    %4313 = vmatpush1.msra.mxu0 0.0
    %4314 = vmatprep.subr.mxu0 0.0
    %4315 = vmatpush1.msra.mxu0 0.0
    %4316 = vmatprep.subr.mxu0 0.0
    %4317 = vmatpush1.msra.mxu0 0.0
    %4318 = vmatprep.subr.mxu0 0.0
    %4319 = vmatpush1.msra.mxu0 0.0
    %4320 = vmatprep.subr.mxu0 0.0
    %4321 = vmatpush1.msra.mxu0 0.0
    %4322 = vmatprep.subr.mxu0 0.0
    %4323 = vmatpush1.msra.mxu0 0.0
    %4324 = vmatprep.subr.mxu0 0.0
    %4325 = vmatpush1.msra.mxu0 0.0
    %4326 = vmatprep.mubr.f32.mxu0 0.0
    %4327 = vmatmul.mubr.f32.gmra.mrb[0].mxu0 %v4260
    %v4328 = vpop.f32.mrb[0].mxu0
    %v4329 = vadd.f32 0.0, %v4328
    %v4330 = vpop.f32.mrb[0].mxu0
    %4331 = vdwg.mxu0
    %4332 = vmatprep.subr.mxu0 0.0
    %4333 = vmatpush1.msra.mxu0 %v4329
    %4334 = vmatprep.subr.mxu0 0.0
    %4335 = vmatpush1.msra.mxu0 0.0
    %4336 = vmatprep.subr.mxu0 0.0
    %4337 = vmatpush1.msra.mxu0 0.0
    %4338 = vmatprep.subr.mxu0 0.0
    %4339 = vmatpush1.msra.mxu0 0.0
    %4340 = vmatprep.subr.mxu0 0.0
    %4341 = vmatpush1.msra.mxu0 0.0
    %4342 = vmatprep.subr.mxu0 0.0
    %4343 = vmatpush1.msra.mxu0 0.0
    %4344 = vmatprep.subr.mxu0 0.0
    %4345 = vmatpush1.msra.mxu0 0.0
    %4346 = vmatprep.subr.mxu0 0.0
    %4347 = vmatpush1.msra.mxu0 0.0
    %4348 = vmatprep.subr.mxu0 0.0
    %4349 = vmatpush1.msra.mxu0 0.0
    %4350 = vmatprep.subr.mxu0 0.0
    %4351 = vmatpush1.msra.mxu0 0.0
    %4352 = vmatprep.subr.mxu0 0.0
    %4353 = vmatpush1.msra.mxu0 0.0
    %4354 = vmatprep.subr.mxu0 0.0
    %4355 = vmatpush1.msra.mxu0 0.0
    %4356 = vmatprep.subr.mxu0 0.0
    %4357 = vmatpush1.msra.mxu0 0.0
    %4358 = vmatprep.subr.mxu0 0.0
    %4359 = vmatpush1.msra.mxu0 0.0
    %4360 = vmatprep.subr.mxu0 0.0
    %4361 = vmatpush1.msra.mxu0 0.0
    %4362 = vmatprep.subr.mxu0 0.0
    %4363 = vmatpush1.msra.mxu0 0.0
    %4364 = vmatprep.subr.mxu0 0.0
    %4365 = vmatpush1.msra.mxu0 0.0
    %4366 = vmatprep.subr.mxu0 0.0
    %4367 = vmatpush1.msra.mxu0 0.0
    %4368 = vmatprep.subr.mxu0 0.0
    %4369 = vmatpush1.msra.mxu0 0.0
    %4370 = vmatprep.subr.mxu0 0.0
    %4371 = vmatpush1.msra.mxu0 0.0
    %4372 = vmatprep.subr.mxu0 0.0
    %4373 = vmatpush1.msra.mxu0 0.0
    %4374 = vmatprep.subr.mxu0 0.0
    %4375 = vmatpush1.msra.mxu0 0.0
    %4376 = vmatprep.subr.mxu0 0.0
    %4377 = vmatpush1.msra.mxu0 0.0
    %4378 = vmatprep.subr.mxu0 0.0
    %4379 = vmatpush1.msra.mxu0 0.0
    %4380 = vmatprep.subr.mxu0 0.0
    %4381 = vmatpush1.msra.mxu0 0.0
    %4382 = vmatprep.subr.mxu0 0.0
    %4383 = vmatpush1.msra.mxu0 0.0
    %4384 = vmatprep.subr.mxu0 0.0
    %4385 = vmatpush1.msra.mxu0 0.0
    %4386 = vmatprep.subr.mxu0 0.0
    %4387 = vmatpush1.msra.mxu0 0.0
    %4388 = vmatprep.subr.mxu0 0.0
    %4389 = vmatpush1.msra.mxu0 0.0
    %4390 = vmatprep.subr.mxu0 0.0
    %4391 = vmatpush1.msra.mxu0 0.0
    %4392 = vmatprep.subr.mxu0 0.0
    %4393 = vmatpush1.msra.mxu0 0.0
    %4394 = vmatprep.subr.mxu0 0.0
    %4395 = vmatpush1.msra.mxu0 0.0
    %4396 = vmatprep.mubr.f32.mxu0 0.0
    %4397 = vmatmul.mubr.f32.gmra.mrb[0].mxu0 %v1646
    %v4398 = vpop.f32.mrb[0].mxu0
    %v4399 = vadd.f32 1e-05, %v4398
    %v4400 = vpop.f32.mrb[0].mxu0
    %4401 = vdwg.mxu0
    %v4402 = vrsqrt.pop %v4399
    %v4403 = vmul.f32 %v4257, %v4402
    %v4404 = vld [vmem:[#allocation14] sm:$0x1]
    %v4406 = vlaneseq
    %v4407 = vshrl.u32 %v4406, 7
    %v4408 = vsub.s32 0, %v4407
    %v4409 = vrot.slane %v4404, %v4408
    %v4411 = vmul.f32 %v4403, %v4409
    %v4412 = vld [vmem:[#allocation16] sm:$0x1]
    %v4414 = vlaneseq
    %v4415 = vshrl.u32 %v4414, 7
    %v4416 = vsub.s32 0, %v4415
    %v4417 = vrot.slane %v4412, %v4416
    %v4419 = vadd.f32 %v4411, %v4417
    %v4420 = vadd.f32 %v3224, %v4419
    %v4421 = vmin.f32 %v4420, 20.0
    %v4422 = vmul.f32 %v4421, 1.442695
    %v4423 = vpow.pop %v4422
    %v4424 = vadd.f32 %v4423, 2.0
    %v4425 = vmul.f32 %v4423, %v4424
    %v4426 = vadd.f32 %v4425, 2.0
    %v4427 = vrcp.pop %v4426
    %v4428 = vmul.f32 %v4425, %v4427
    %v4429 = vmul.f32 %v4420, %v4428
    %v4431 = vsel %vm761, %v4429, 0
    %4433 = vmatprep.subr.mxu0 0.0
    %4434 = vmatpush1.msra.mxu0 %v627
    %4435 = vmatprep.subr.mxu0 0.0
    %4436 = vmatpush1.msra.mxu0 %v628
    %4437 = vmatprep.subr.mxu0 0.0
    %4438 = vmatpush1.msra.mxu0 %v629
    %4439 = vmatprep.subr.mxu0 0.0
    %4440 = vmatpush1.msra.mxu0 %v630
    %4441 = vmatprep.subr.mxu0 0.0
    %4442 = vmatpush1.msra.mxu0 0.0
    %4443 = vmatprep.subr.mxu0 0.0
    %4444 = vmatpush1.msra.mxu0 0.0
    %4445 = vmatprep.subr.mxu0 0.0
    %4446 = vmatpush1.msra.mxu0 0.0
    %4447 = vmatprep.subr.mxu0 0.0
    %4448 = vmatpush1.msra.mxu0 0.0
    %4449 = vmatprep.subr.mxu0 0.0
    %4450 = vmatpush1.msra.mxu0 0.0
    %4451 = vmatprep.subr.mxu0 0.0
    %4452 = vmatpush1.msra.mxu0 0.0
    %4453 = vmatprep.subr.mxu0 0.0
    %4454 = vmatpush1.msra.mxu0 0.0
    %4455 = vmatprep.subr.mxu0 0.0
    %4456 = vmatpush1.msra.mxu0 0.0
    %4457 = vmatprep.subr.mxu0 0.0
    %4458 = vmatpush1.msra.mxu0 0.0
    %4459 = vmatprep.subr.mxu0 0.0
    %4460 = vmatpush1.msra.mxu0 0.0
    %4461 = vmatprep.subr.mxu0 0.0
    %4462 = vmatpush1.msra.mxu0 0.0
    %4463 = vmatprep.subr.mxu0 0.0
    %4464 = vmatpush1.msra.mxu0 0.0
    %4465 = vmatprep.subr.mxu0 0.0
    %4466 = vmatpush1.msra.mxu0 0.0
    %4467 = vmatprep.subr.mxu0 0.0
    %4468 = vmatpush1.msra.mxu0 0.0
    %4469 = vmatprep.subr.mxu0 0.0
    %4470 = vmatpush1.msra.mxu0 0.0
    %4471 = vmatprep.subr.mxu0 0.0
    %4472 = vmatpush1.msra.mxu0 0.0
    %4473 = vmatprep.subr.mxu0 0.0
    %4474 = vmatpush1.msra.mxu0 0.0
    %4475 = vmatprep.subr.mxu0 0.0
    %4476 = vmatpush1.msra.mxu0 0.0
    %4477 = vmatprep.subr.mxu0 0.0
    %4478 = vmatpush1.msra.mxu0 0.0
    %4479 = vmatprep.subr.mxu0 0.0
    %4480 = vmatpush1.msra.mxu0 0.0
    %4481 = vmatprep.subr.mxu0 0.0
    %4482 = vmatpush1.msra.mxu0 0.0
    %4483 = vmatprep.subr.mxu0 0.0
    %4484 = vmatpush1.msra.mxu0 0.0
    %4485 = vmatprep.subr.mxu0 0.0
    %4486 = vmatpush1.msra.mxu0 0.0
    %4487 = vmatprep.subr.mxu0 0.0
    %4488 = vmatpush1.msra.mxu0 0.0
    %4489 = vmatprep.subr.mxu0 0.0
    %4490 = vmatpush1.msra.mxu0 0.0
    %4491 = vmatprep.subr.mxu0 0.0
    %4492 = vmatpush1.msra.mxu0 0.0
    %4493 = vmatprep.subr.mxu0 0.0
    %4494 = vmatpush1.msra.mxu0 0.0
    %4495 = vmatprep.subr.mxu0 0.0
    %4496 = vmatpush1.msra.mxu0 0.0
    %4497 = vmatprep.mubr.f32.mxu0 0.0
    %4498 = vmatmul.mubr.f32.gmra.mrb[0].mxu0 %v4431
    %v4499 = vpop.f32.mrb[0].mxu0
    %v4500 = vadd.f32 0.0, %v4499
    %v4501 = vpop.f32.mrb[0].mxu0
    %4502 = vdwg.mxu0
    %4503 = vmatprep.subr.mxu0 0.0
    %4504 = vmatpush1.msra.mxu0 %v4500
    %4505 = vmatprep.subr.mxu0 0.0
    %4506 = vmatpush1.msra.mxu0 0.0
    %4507 = vmatprep.subr.mxu0 0.0
    %4508 = vmatpush1.msra.mxu0 0.0
    %4509 = vmatprep.subr.mxu0 0.0
    %4510 = vmatpush1.msra.mxu0 0.0
    %4511 = vmatprep.subr.mxu0 0.0
    %4512 = vmatpush1.msra.mxu0 0.0
    %4513 = vmatprep.subr.mxu0 0.0
    %4514 = vmatpush1.msra.mxu0 0.0
    %4515 = vmatprep.subr.mxu0 0.0
    %4516 = vmatpush1.msra.mxu0 0.0
    %4517 = vmatprep.subr.mxu0 0.0
    %4518 = vmatpush1.msra.mxu0 0.0
    %4519 = vmatprep.subr.mxu0 0.0
    %4520 = vmatpush1.msra.mxu0 0.0
    %4521 = vmatprep.subr.mxu0 0.0
    %4522 = vmatpush1.msra.mxu0 0.0
    %4523 = vmatprep.subr.mxu0 0.0
    %4524 = vmatpush1.msra.mxu0 0.0
    %4525 = vmatprep.subr.mxu0 0.0
    %4526 = vmatpush1.msra.mxu0 0.0
    %4527 = vmatprep.subr.mxu0 0.0
    %4528 = vmatpush1.msra.mxu0 0.0
    %4529 = vmatprep.subr.mxu0 0.0
    %4530 = vmatpush1.msra.mxu0 0.0
    %4531 = vmatprep.subr.mxu0 0.0
    %4532 = vmatpush1.msra.mxu0 0.0
    %4533 = vmatprep.subr.mxu0 0.0
    %4534 = vmatpush1.msra.mxu0 0.0
    %4535 = vmatprep.subr.mxu0 0.0
    %4536 = vmatpush1.msra.mxu0 0.0
    %4537 = vmatprep.subr.mxu0 0.0
    %4538 = vmatpush1.msra.mxu0 0.0
    %4539 = vmatprep.subr.mxu0 0.0
    %4540 = vmatpush1.msra.mxu0 0.0
    %4541 = vmatprep.subr.mxu0 0.0
    %4542 = vmatpush1.msra.mxu0 0.0
    %4543 = vmatprep.subr.mxu0 0.0
    %4544 = vmatpush1.msra.mxu0 0.0
    %4545 = vmatprep.subr.mxu0 0.0
    %4546 = vmatpush1.msra.mxu0 0.0
    %4547 = vmatprep.subr.mxu0 0.0
    %4548 = vmatpush1.msra.mxu0 0.0
    %4549 = vmatprep.subr.mxu0 0.0
    %4550 = vmatpush1.msra.mxu0 0.0
    %4551 = vmatprep.subr.mxu0 0.0
    %4552 = vmatpush1.msra.mxu0 0.0
    %4553 = vmatprep.subr.mxu0 0.0
    %4554 = vmatpush1.msra.mxu0 0.0
    %4555 = vmatprep.subr.mxu0 0.0
    %4556 = vmatpush1.msra.mxu0 0.0
    %4557 = vmatprep.subr.mxu0 0.0
    %4558 = vmatpush1.msra.mxu0 0.0
    %4559 = vmatprep.subr.mxu0 0.0
    %4560 = vmatpush1.msra.mxu0 0.0
    %4561 = vmatprep.subr.mxu0 0.0
    %4562 = vmatpush1.msra.mxu0 0.0
    %4563 = vmatprep.subr.mxu0 0.0
    %4564 = vmatpush1.msra.mxu0 0.0
    %4565 = vmatprep.subr.mxu0 0.0
    %4566 = vmatpush1.msra.mxu0 0.0
    %4567 = vmatprep.mubr.f32.mxu0 0.0
    %4568 = vmatmul.mubr.f32.gmra.mrb[0].mxu0 %v1646
    %v4569 = vpop.f32.mrb[0].mxu0
    %v4570 = vadd.f32 0.0, %v4569
    %v4571 = vpop.f32.mrb[0].mxu0
    %4572 = vdwg.mxu0
    %v4573 = vsub.f32 %v4429, %v4570
    %v4574 = vmul.f32 %v4573, %v4573
    %v4576 = vsel %vm761, %v4574, 0
    %4578 = vmatprep.subr.mxu0 0.0
    %4579 = vmatpush1.msra.mxu0 %v627
    %4580 = vmatprep.subr.mxu0 0.0
    %4581 = vmatpush1.msra.mxu0 %v628
    %4582 = vmatprep.subr.mxu0 0.0
    %4583 = vmatpush1.msra.mxu0 %v629
    %4584 = vmatprep.subr.mxu0 0.0
    %4585 = vmatpush1.msra.mxu0 %v630
    %4586 = vmatprep.subr.mxu0 0.0
    %4587 = vmatpush1.msra.mxu0 0.0
    %4588 = vmatprep.subr.mxu0 0.0
    %4589 = vmatpush1.msra.mxu0 0.0
    %4590 = vmatprep.subr.mxu0 0.0
    %4591 = vmatpush1.msra.mxu0 0.0
    %4592 = vmatprep.subr.mxu0 0.0
    %4593 = vmatpush1.msra.mxu0 0.0
    %4594 = vmatprep.subr.mxu0 0.0
    %4595 = vmatpush1.msra.mxu0 0.0
    %4596 = vmatprep.subr.mxu0 0.0
    %4597 = vmatpush1.msra.mxu0 0.0
    %4598 = vmatprep.subr.mxu0 0.0
    %4599 = vmatpush1.msra.mxu0 0.0
    %4600 = vmatprep.subr.mxu0 0.0
    %4601 = vmatpush1.msra.mxu0 0.0
    %4602 = vmatprep.subr.mxu0 0.0
    %4603 = vmatpush1.msra.mxu0 0.0
    %4604 = vmatprep.subr.mxu0 0.0
    %4605 = vmatpush1.msra.mxu0 0.0
    %4606 = vmatprep.subr.mxu0 0.0
    %4607 = vmatpush1.msra.mxu0 0.0
    %4608 = vmatprep.subr.mxu0 0.0
    %4609 = vmatpush1.msra.mxu0 0.0
    %4610 = vmatprep.subr.mxu0 0.0
    %4611 = vmatpush1.msra.mxu0 0.0
    %4612 = vmatprep.subr.mxu0 0.0
    %4613 = vmatpush1.msra.mxu0 0.0
    %4614 = vmatprep.subr.mxu0 0.0
    %4615 = vmatpush1.msra.mxu0 0.0
    %4616 = vmatprep.subr.mxu0 0.0
    %4617 = vmatpush1.msra.mxu0 0.0
    %4618 = vmatprep.subr.mxu0 0.0
    %4619 = vmatpush1.msra.mxu0 0.0
    %4620 = vmatprep.subr.mxu0 0.0
    %4621 = vmatpush1.msra.mxu0 0.0
    %4622 = vmatprep.subr.mxu0 0.0
    %4623 = vmatpush1.msra.mxu0 0.0
    %4624 = vmatprep.subr.mxu0 0.0
    %4625 = vmatpush1.msra.mxu0 0.0
    %4626 = vmatprep.subr.mxu0 0.0
    %4627 = vmatpush1.msra.mxu0 0.0
    %4628 = vmatprep.subr.mxu0 0.0
    %4629 = vmatpush1.msra.mxu0 0.0
    %4630 = vmatprep.subr.mxu0 0.0
    %4631 = vmatpush1.msra.mxu0 0.0
    %4632 = vmatprep.subr.mxu0 0.0
    %4633 = vmatpush1.msra.mxu0 0.0
    %4634 = vmatprep.subr.mxu0 0.0
    %4635 = vmatpush1.msra.mxu0 0.0
    %4636 = vmatprep.subr.mxu0 0.0
    %4637 = vmatpush1.msra.mxu0 0.0
    %4638 = vmatprep.subr.mxu0 0.0
    %4639 = vmatpush1.msra.mxu0 0.0
    %4640 = vmatprep.subr.mxu0 0.0
    %4641 = vmatpush1.msra.mxu0 0.0
    %4642 = vmatprep.mubr.f32.mxu0 0.0
    %4643 = vmatmul.mubr.f32.gmra.mrb[0].mxu0 %v4576
    %v4644 = vpop.f32.mrb[0].mxu0
    %v4645 = vadd.f32 0.0, %v4644
    %v4646 = vpop.f32.mrb[0].mxu0
    %4647 = vdwg.mxu0
    %4648 = vmatprep.subr.mxu0 0.0
    %4649 = vmatpush1.msra.mxu0 %v4645
    %4650 = vmatprep.subr.mxu0 0.0
    %4651 = vmatpush1.msra.mxu0 0.0
    %4652 = vmatprep.subr.mxu0 0.0
    %4653 = vmatpush1.msra.mxu0 0.0
    %4654 = vmatprep.subr.mxu0 0.0
    %4655 = vmatpush1.msra.mxu0 0.0
    %4656 = vmatprep.subr.mxu0 0.0
    %4657 = vmatpush1.msra.mxu0 0.0
    %4658 = vmatprep.subr.mxu0 0.0
    %4659 = vmatpush1.msra.mxu0 0.0
    %4660 = vmatprep.subr.mxu0 0.0
    %4661 = vmatpush1.msra.mxu0 0.0
    %4662 = vmatprep.subr.mxu0 0.0
    %4663 = vmatpush1.msra.mxu0 0.0
    %4664 = vmatprep.subr.mxu0 0.0
    %4665 = vmatpush1.msra.mxu0 0.0
    %4666 = vmatprep.subr.mxu0 0.0
    %4667 = vmatpush1.msra.mxu0 0.0
    %4668 = vmatprep.subr.mxu0 0.0
    %4669 = vmatpush1.msra.mxu0 0.0
    %4670 = vmatprep.subr.mxu0 0.0
    %4671 = vmatpush1.msra.mxu0 0.0
    %4672 = vmatprep.subr.mxu0 0.0
    %4673 = vmatpush1.msra.mxu0 0.0
    %4674 = vmatprep.subr.mxu0 0.0
    %4675 = vmatpush1.msra.mxu0 0.0
    %4676 = vmatprep.subr.mxu0 0.0
    %4677 = vmatpush1.msra.mxu0 0.0
    %4678 = vmatprep.subr.mxu0 0.0
    %4679 = vmatpush1.msra.mxu0 0.0
    %4680 = vmatprep.subr.mxu0 0.0
    %4681 = vmatpush1.msra.mxu0 0.0
    %4682 = vmatprep.subr.mxu0 0.0
    %4683 = vmatpush1.msra.mxu0 0.0
    %4684 = vmatprep.subr.mxu0 0.0
    %4685 = vmatpush1.msra.mxu0 0.0
    %4686 = vmatprep.subr.mxu0 0.0
    %4687 = vmatpush1.msra.mxu0 0.0
    %4688 = vmatprep.subr.mxu0 0.0
    %4689 = vmatpush1.msra.mxu0 0.0
    %4690 = vmatprep.subr.mxu0 0.0
    %4691 = vmatpush1.msra.mxu0 0.0
    %4692 = vmatprep.subr.mxu0 0.0
    %4693 = vmatpush1.msra.mxu0 0.0
    %4694 = vmatprep.subr.mxu0 0.0
    %4695 = vmatpush1.msra.mxu0 0.0
    %4696 = vmatprep.subr.mxu0 0.0
    %4697 = vmatpush1.msra.mxu0 0.0
    %4698 = vmatprep.subr.mxu0 0.0
    %4699 = vmatpush1.msra.mxu0 0.0
    %4700 = vmatprep.subr.mxu0 0.0
    %4701 = vmatpush1.msra.mxu0 0.0
    %4702 = vmatprep.subr.mxu0 0.0
    %4703 = vmatpush1.msra.mxu0 0.0
    %4704 = vmatprep.subr.mxu0 0.0
    %4705 = vmatpush1.msra.mxu0 0.0
    %4706 = vmatprep.subr.mxu0 0.0
    %4707 = vmatpush1.msra.mxu0 0.0
    %4708 = vmatprep.subr.mxu0 0.0
    %4709 = vmatpush1.msra.mxu0 0.0
    %4710 = vmatprep.subr.mxu0 0.0
    %4711 = vmatpush1.msra.mxu0 0.0
    %4712 = vmatprep.mubr.f32.mxu0 0.0
    %4713 = vmatmul.mubr.f32.gmra.mrb[0].mxu0 %v1646
    %v4714 = vpop.f32.mrb[0].mxu0
    %v4715 = vadd.f32 1e-05, %v4714
    %v4716 = vpop.f32.mrb[0].mxu0
    %4717 = vdwg.mxu0
    %v4718 = vrsqrt.pop %v4715
    %v4719 = vmul.f32 %v4573, %v4718
    %v4720 = vld [vmem:[#allocation17] sm:$0x1]
    %v4722 = vlaneseq
    %v4723 = vshrl.u32 %v4722, 7
    %v4724 = vsub.s32 0, %v4723
    %v4725 = vrot.slane %v4720, %v4724
    %v4727 = vmul.f32 %v4719, %v4725
    %v4728 = vld [vmem:[#allocation19] sm:$0x1]
    %v4730 = vlaneseq
    %v4731 = vshrl.u32 %v4730, 7
    %v4732 = vsub.s32 0, %v4731
    %v4733 = vrot.slane %v4728, %v4732
    %v4735 = vadd.f32 %v4727, %v4733
    %v4736 = vld [vmem:[%s29] sm:$0x3]
    %v4738 = vsel %vm885, %v4736, 0
    %4740 = vmatprep.subr.mxu0 0.0
    %4741 = vmatpush1.msra.mxu0 %v4735
    %4742 = vmatprep.subr.mxu0 0.0
    %4743 = vmatpush1.msra.mxu0 0.0
    %4744 = vmatprep.subr.mxu0 0.0
    %4745 = vmatpush1.msra.mxu0 0.0
    %4746 = vmatprep.subr.mxu0 0.0
    %4747 = vmatpush1.msra.mxu0 0.0
    %4748 = vmatprep.subr.mxu0 0.0
    %4749 = vmatpush1.msra.mxu0 0.0
    %4750 = vmatprep.subr.mxu0 0.0
    %4751 = vmatpush1.msra.mxu0 0.0
    %4752 = vmatprep.subr.mxu0 0.0
    %4753 = vmatpush1.msra.mxu0 0.0
    %4754 = vmatprep.subr.mxu0 0.0
    %4755 = vmatpush1.msra.mxu0 0.0
    %4756 = vmatprep.subr.mxu0 0.0
    %4757 = vmatpush1.msra.mxu0 0.0
    %4758 = vmatprep.subr.mxu0 0.0
    %4759 = vmatpush1.msra.mxu0 0.0
    %4760 = vmatprep.subr.mxu0 0.0
    %4761 = vmatpush1.msra.mxu0 0.0
    %4762 = vmatprep.subr.mxu0 0.0
    %4763 = vmatpush1.msra.mxu0 0.0
    %4764 = vmatprep.subr.mxu0 0.0
    %4765 = vmatpush1.msra.mxu0 0.0
    %4766 = vmatprep.subr.mxu0 0.0
    %4767 = vmatpush1.msra.mxu0 0.0
    %4768 = vmatprep.subr.mxu0 0.0
    %4769 = vmatpush1.msra.mxu0 0.0
    %4770 = vmatprep.subr.mxu0 0.0
    %4771 = vmatpush1.msra.mxu0 0.0
    %4772 = vmatprep.subr.mxu0 0.0
    %4773 = vmatpush1.msra.mxu0 0.0
    %4774 = vmatprep.subr.mxu0 0.0
    %4775 = vmatpush1.msra.mxu0 0.0
    %4776 = vmatprep.subr.mxu0 0.0
    %4777 = vmatpush1.msra.mxu0 0.0
    %4778 = vmatprep.subr.mxu0 0.0
    %4779 = vmatpush1.msra.mxu0 0.0
    %4780 = vmatprep.subr.mxu0 0.0
    %4781 = vmatpush1.msra.mxu0 0.0
    %4782 = vmatprep.subr.mxu0 0.0
    %4783 = vmatpush1.msra.mxu0 0.0
    %4784 = vmatprep.subr.mxu0 0.0
    %4785 = vmatpush1.msra.mxu0 0.0
    %4786 = vmatprep.subr.mxu0 0.0
    %4787 = vmatpush1.msra.mxu0 0.0
    %4788 = vmatprep.subr.mxu0 0.0
    %4789 = vmatpush1.msra.mxu0 0.0
    %4790 = vmatprep.subr.mxu0 0.0
    %4791 = vmatpush1.msra.mxu0 0.0
    %4792 = vmatprep.subr.mxu0 0.0
    %4793 = vmatpush1.msra.mxu0 0.0
    %4794 = vmatprep.subr.mxu0 0.0
    %4795 = vmatpush1.msra.mxu0 0.0
    %4796 = vmatprep.subr.mxu0 0.0
    %4797 = vmatpush1.msra.mxu0 0.0
    %4798 = vmatprep.subr.mxu0 0.0
    %4799 = vmatpush1.msra.mxu0 0.0
    %4800 = vmatprep.subr.mxu0 0.0
    %4801 = vmatpush1.msra.mxu0 0.0
    %4802 = vmatprep.subr.mxu0 0.0
    %4803 = vmatpush1.msra.mxu0 0.0
    %4804 = vmatprep.mubr.f32.mxu0 0.0
    %4805 = vmatmul.mubr.f32.gmra.mrb[0].mxu0 %v4738
    %v4806 = vpop.f32.mrb[0].mxu0
    %v4807 = vadd.f32 0.0, %v4806
    %v4808 = vpop.f32.mrb[0].mxu0
    %4809 = vdwg.mxu0
    %v4810 = vld [vmem:[%s113] sm:$0xff]
    %v4811 = vld [vmem:[%s113 + $0x8] sm:$0xff]
    %v4812 = vld [vmem:[%s113 + $0x10] sm:$0xff]
    %v4813 = vld [vmem:[%s113 + $0x18] sm:$0xff]
    %v4814 = vld [vmem:[#allocation32] sm:$0x1]
    %v4816 = vlaneseq
    %v4817 = vshrl.u32 %v4816, 7
    %v4818 = vsub.s32 0, %v4817
    %v4819 = vrot.slane %v4814, %v4818
    %v4822 = vsel %vm761, %v4807, 0
    %4824 = vmatprep.subr.mxu0 0.0
    %4825 = vmatpush1.msra.mxu0 %v4810
    %4826 = vmatprep.subr.mxu0 0.0
    %4827 = vmatpush1.msra.mxu0 %v4811
    %4828 = vmatprep.subr.mxu0 0.0
    %4829 = vmatpush1.msra.mxu0 %v4812
    %4830 = vmatprep.subr.mxu0 0.0
    %4831 = vmatpush1.msra.mxu0 %v4813
    %4832 = vmatprep.subr.mxu0 0.0
    %4833 = vmatpush1.msra.mxu0 0.0
    %4834 = vmatprep.subr.mxu0 0.0
    %4835 = vmatpush1.msra.mxu0 0.0
    %4836 = vmatprep.subr.mxu0 0.0
    %4837 = vmatpush1.msra.mxu0 0.0
    %4838 = vmatprep.subr.mxu0 0.0
    %4839 = vmatpush1.msra.mxu0 0.0
    %4840 = vmatprep.subr.mxu0 0.0
    %4841 = vmatpush1.msra.mxu0 0.0
    %4842 = vmatprep.subr.mxu0 0.0
    %4843 = vmatpush1.msra.mxu0 0.0
    %4844 = vmatprep.subr.mxu0 0.0
    %4845 = vmatpush1.msra.mxu0 0.0
    %4846 = vmatprep.subr.mxu0 0.0
    %4847 = vmatpush1.msra.mxu0 0.0
    %4848 = vmatprep.subr.mxu0 0.0
    %4849 = vmatpush1.msra.mxu0 0.0
    %4850 = vmatprep.subr.mxu0 0.0
    %4851 = vmatpush1.msra.mxu0 0.0
    %4852 = vmatprep.subr.mxu0 0.0
    %4853 = vmatpush1.msra.mxu0 0.0
    %4854 = vmatprep.subr.mxu0 0.0
    %4855 = vmatpush1.msra.mxu0 0.0
    %4856 = vmatprep.subr.mxu0 0.0
    %4857 = vmatpush1.msra.mxu0 0.0
    %4858 = vmatprep.subr.mxu0 0.0
    %4859 = vmatpush1.msra.mxu0 0.0
    %4860 = vmatprep.subr.mxu0 0.0
    %4861 = vmatpush1.msra.mxu0 0.0
    %4862 = vmatprep.subr.mxu0 0.0
    %4863 = vmatpush1.msra.mxu0 0.0
    %4864 = vmatprep.subr.mxu0 0.0
    %4865 = vmatpush1.msra.mxu0 0.0
    %4866 = vmatprep.subr.mxu0 0.0
    %4867 = vmatpush1.msra.mxu0 0.0
    %4868 = vmatprep.subr.mxu0 0.0
    %4869 = vmatpush1.msra.mxu0 0.0
    %4870 = vmatprep.subr.mxu0 0.0
    %4871 = vmatpush1.msra.mxu0 0.0
    %4872 = vmatprep.subr.mxu0 0.0
    %4873 = vmatpush1.msra.mxu0 0.0
    %4874 = vmatprep.subr.mxu0 0.0
    %4875 = vmatpush1.msra.mxu0 0.0
    %4876 = vmatprep.subr.mxu0 0.0
    %4877 = vmatpush1.msra.mxu0 0.0
    %4878 = vmatprep.subr.mxu0 0.0
    %4879 = vmatpush1.msra.mxu0 0.0
    %4880 = vmatprep.subr.mxu0 0.0
    %4881 = vmatpush1.msra.mxu0 0.0
    %4882 = vmatprep.subr.mxu0 0.0
    %4883 = vmatpush1.msra.mxu0 0.0
    %4884 = vmatprep.subr.mxu0 0.0
    %4885 = vmatpush1.msra.mxu0 0.0
    %4886 = vmatprep.subr.mxu0 0.0
    %4887 = vmatpush1.msra.mxu0 0.0
    %4888 = vmatprep.mubr.f32.mxu0 0.0
    %4889 = vmatmul.mubr.f32.gmra.mrb[0].mxu0 %v4822
    %v4890 = vpop.f32.mrb[0].mxu0
    %v4891 = vadd.f32 %v4819, %v4890
    %v4892 = vpop.f32.mrb[0].mxu0
    %4893 = vdwg.mxu0
    %v4895 = vsel %vm2014, %v4891, 0
    %4897 = vmatprep.subr.mxu0 0.0
    %4898 = vmatpush1.msra.mxu0 %v4895
    %4899 = vmatprep.subr.mxu0 0.0
    %4900 = vmatpush1.msra.mxu0 0.0
    %4901 = vmatprep.subr.mxu0 0.0
    %4902 = vmatpush1.msra.mxu0 0.0
    %4903 = vmatprep.subr.mxu0 0.0
    %4904 = vmatpush1.msra.mxu0 0.0
    %4905 = vmatprep.subr.mxu0 0.0
    %4906 = vmatpush1.msra.mxu0 0.0
    %4907 = vmatprep.subr.mxu0 0.0
    %4908 = vmatpush1.msra.mxu0 0.0
    %4909 = vmatprep.subr.mxu0 0.0
    %4910 = vmatpush1.msra.mxu0 0.0
    %4911 = vmatprep.subr.mxu0 0.0
    %4912 = vmatpush1.msra.mxu0 0.0
    %4913 = vmatprep.subr.mxu0 0.0
    %4914 = vmatpush1.msra.mxu0 0.0
    %4915 = vmatprep.subr.mxu0 0.0
    %4916 = vmatpush1.msra.mxu0 0.0
    %4917 = vmatprep.subr.mxu0 0.0
    %4918 = vmatpush1.msra.mxu0 0.0
    %4919 = vmatprep.subr.mxu0 0.0
    %4920 = vmatpush1.msra.mxu0 0.0
    %4921 = vmatprep.subr.mxu0 0.0
    %4922 = vmatpush1.msra.mxu0 0.0
    %4923 = vmatprep.subr.mxu0 0.0
    %4924 = vmatpush1.msra.mxu0 0.0
    %4925 = vmatprep.subr.mxu0 0.0
    %4926 = vmatpush1.msra.mxu0 0.0
    %4927 = vmatprep.subr.mxu0 0.0
    %4928 = vmatpush1.msra.mxu0 0.0
    %4929 = vmatprep.subr.mxu0 0.0
    %4930 = vmatpush1.msra.mxu0 0.0
    %4931 = vmatprep.subr.mxu0 0.0
    %4932 = vmatpush1.msra.mxu0 0.0
    %4933 = vmatprep.subr.mxu0 0.0
    %4934 = vmatpush1.msra.mxu0 0.0
    %4935 = vmatprep.subr.mxu0 0.0
    %4936 = vmatpush1.msra.mxu0 0.0
    %4937 = vmatprep.subr.mxu0 0.0
    %4938 = vmatpush1.msra.mxu0 0.0
    %4939 = vmatprep.subr.mxu0 0.0
    %4940 = vmatpush1.msra.mxu0 0.0
    %4941 = vmatprep.subr.mxu0 0.0
    %4942 = vmatpush1.msra.mxu0 0.0
    %4943 = vmatprep.subr.mxu0 0.0
    %4944 = vmatpush1.msra.mxu0 0.0
    %4945 = vmatprep.subr.mxu0 0.0
    %4946 = vmatpush1.msra.mxu0 0.0
    %4947 = vmatprep.subr.mxu0 0.0
    %4948 = vmatpush1.msra.mxu0 0.0
    %4949 = vmatprep.subr.mxu0 0.0
    %4950 = vmatpush1.msra.mxu0 0.0
    %4951 = vmatprep.subr.mxu0 0.0
    %4952 = vmatpush1.msra.mxu0 0.0
    %4953 = vmatprep.subr.mxu0 0.0
    %4954 = vmatpush1.msra.mxu0 0.0
    %4955 = vmatprep.subr.mxu0 0.0
    %4956 = vmatpush1.msra.mxu0 0.0
    %4957 = vmatprep.subr.mxu0 0.0
    %4958 = vmatpush1.msra.mxu0 0.0
    %4959 = vmatprep.subr.mxu0 0.0
    %4960 = vmatpush1.msra.mxu0 0.0
    %4961 = vmatprep.mubr.f32.mxu0 0.0
    %4962 = vmatmul.mubr.f32.gmra.mrb[0].mxu0 %v2009
    %v4963 = vpop.f32.mrb[0].mxu0
    %v4964 = vadd.f32 0.0, %v4963
    %v4965 = vpop.f32.mrb[0].mxu0
    %4966 = vmatprep.mubr.f32.mxu0 0.0
    %4967 = vmatmul.mubr.f32.gmra.mrb[0].mxu0 %v2012
    %v4968 = vpop.f32.mrb[0].mxu0
    %v4969 = vadd.f32 0.0, %v4968
    %v4970 = vpop.f32.mrb[0].mxu0
    %4971 = vdwg.mxu0
    %4972 = vmatprep.subr.mxu0 0.0
    %4973 = vmatpush1.msra.mxu0 %v3225
    %4974 = vmatprep.subr.mxu0 0.0
    %4975 = vmatpush1.msra.mxu0 %v3226
    %4976 = vmatprep.subr.mxu0 0.0
    %4977 = vmatpush1.msra.mxu0 0.0
    %4978 = vmatprep.subr.mxu0 0.0
    %4979 = vmatpush1.msra.mxu0 0.0
    %4980 = vmatprep.subr.mxu0 0.0
    %4981 = vmatpush1.msra.mxu0 0.0
    %4982 = vmatprep.subr.mxu0 0.0
    %4983 = vmatpush1.msra.mxu0 0.0
    %4984 = vmatprep.subr.mxu0 0.0
    %4985 = vmatpush1.msra.mxu0 0.0
    %4986 = vmatprep.subr.mxu0 0.0
    %4987 = vmatpush1.msra.mxu0 0.0
    %4988 = vmatprep.subr.mxu0 0.0
    %4989 = vmatpush1.msra.mxu0 0.0
    %4990 = vmatprep.subr.mxu0 0.0
    %4991 = vmatpush1.msra.mxu0 0.0
    %4992 = vmatprep.subr.mxu0 0.0
    %4993 = vmatpush1.msra.mxu0 0.0
    %4994 = vmatprep.subr.mxu0 0.0
    %4995 = vmatpush1.msra.mxu0 0.0
    %4996 = vmatprep.subr.mxu0 0.0
    %4997 = vmatpush1.msra.mxu0 0.0
    %4998 = vmatprep.subr.mxu0 0.0
    %4999 = vmatpush1.msra.mxu0 0.0
    %5000 = vmatprep.subr.mxu0 0.0
    %5001 = vmatpush1.msra.mxu0 0.0
    %5002 = vmatprep.subr.mxu0 0.0
    %5003 = vmatpush1.msra.mxu0 0.0
    %5004 = vmatprep.subr.mxu0 0.0
    %5005 = vmatpush1.msra.mxu0 0.0
    %5006 = vmatprep.subr.mxu0 0.0
    %5007 = vmatpush1.msra.mxu0 0.0
    %5008 = vmatprep.subr.mxu0 0.0
    %5009 = vmatpush1.msra.mxu0 0.0
    %5010 = vmatprep.subr.mxu0 0.0
    %5011 = vmatpush1.msra.mxu0 0.0
    %5012 = vmatprep.subr.mxu0 0.0
    %5013 = vmatpush1.msra.mxu0 0.0
    %5014 = vmatprep.subr.mxu0 0.0
    %5015 = vmatpush1.msra.mxu0 0.0
    %5016 = vmatprep.subr.mxu0 0.0
    %5017 = vmatpush1.msra.mxu0 0.0
    %5018 = vmatprep.subr.mxu0 0.0
    %5019 = vmatpush1.msra.mxu0 0.0
    %5020 = vmatprep.subr.mxu0 0.0
    %5021 = vmatpush1.msra.mxu0 0.0
    %5022 = vmatprep.subr.mxu0 0.0
    %5023 = vmatpush1.msra.mxu0 0.0
    %5024 = vmatprep.subr.mxu0 0.0
    %5025 = vmatpush1.msra.mxu0 0.0
    %5026 = vmatprep.subr.mxu0 0.0
    %5027 = vmatpush1.msra.mxu0 0.0
    %5028 = vmatprep.subr.mxu0 0.0
    %5029 = vmatpush1.msra.mxu0 0.0
    %5030 = vmatprep.subr.mxu0 0.0
    %5031 = vmatpush1.msra.mxu0 0.0
    %5032 = vmatprep.subr.mxu0 0.0
    %5033 = vmatpush1.msra.mxu0 0.0
    %5034 = vmatprep.subr.mxu0 0.0
    %5035 = vmatpush1.msra.mxu0 0.0
    %5036 = vmatprep.mubr.f32.mxu0 0.0
    %5037 = vmatmul.mubr.f32.gmra.mrb[0].mxu0 %v2117
    %v5038 = vpop.f32.mrb[0].mxu0
    %v5039 = vadd.f32 0.0, %v5038
    %v5040 = vpop.f32.mrb[0].mxu0
    %5041 = vmatprep.mubr.f32.mxu0 0.0
    %5042 = vmatmul.mubr.f32.gmra.mrb[0].mxu0 %v2120
    %v5043 = vpop.f32.mrb[0].mxu0
    %v5044 = vadd.f32 0.0, %v5043
    %v5045 = vpop.f32.mrb[0].mxu0
    %5046 = vdwg.mxu0
    %5047 = vmatprep.subr.mxu0 0.0
    %5048 = vmatpush1.msra.mxu0 %v3225
    %5049 = vmatprep.subr.mxu0 0.0
    %5050 = vmatpush1.msra.mxu0 %v3226
    %5051 = vmatprep.subr.mxu0 0.0
    %5052 = vmatpush1.msra.mxu0 0.0
    %5053 = vmatprep.subr.mxu0 0.0
    %5054 = vmatpush1.msra.mxu0 0.0
    %5055 = vmatprep.subr.mxu0 0.0
    %5056 = vmatpush1.msra.mxu0 0.0
    %5057 = vmatprep.subr.mxu0 0.0
    %5058 = vmatpush1.msra.mxu0 0.0
    %5059 = vmatprep.subr.mxu0 0.0
    %5060 = vmatpush1.msra.mxu0 0.0
    %5061 = vmatprep.subr.mxu0 0.0
    %5062 = vmatpush1.msra.mxu0 0.0
    %5063 = vmatprep.subr.mxu0 0.0
    %5064 = vmatpush1.msra.mxu0 0.0
    %5065 = vmatprep.subr.mxu0 0.0
    %5066 = vmatpush1.msra.mxu0 0.0
    %5067 = vmatprep.subr.mxu0 0.0
    %5068 = vmatpush1.msra.mxu0 0.0
    %5069 = vmatprep.subr.mxu0 0.0
    %5070 = vmatpush1.msra.mxu0 0.0
    %5071 = vmatprep.subr.mxu0 0.0
    %5072 = vmatpush1.msra.mxu0 0.0
    %5073 = vmatprep.subr.mxu0 0.0
    %5074 = vmatpush1.msra.mxu0 0.0
    %5075 = vmatprep.subr.mxu0 0.0
    %5076 = vmatpush1.msra.mxu0 0.0
    %5077 = vmatprep.subr.mxu0 0.0
    %5078 = vmatpush1.msra.mxu0 0.0
    %5079 = vmatprep.subr.mxu0 0.0
    %5080 = vmatpush1.msra.mxu0 0.0
    %5081 = vmatprep.subr.mxu0 0.0
    %5082 = vmatpush1.msra.mxu0 0.0
    %5083 = vmatprep.subr.mxu0 0.0
    %5084 = vmatpush1.msra.mxu0 0.0
    %5085 = vmatprep.subr.mxu0 0.0
    %5086 = vmatpush1.msra.mxu0 0.0
    %5087 = vmatprep.subr.mxu0 0.0
    %5088 = vmatpush1.msra.mxu0 0.0
    %5089 = vmatprep.subr.mxu0 0.0
    %5090 = vmatpush1.msra.mxu0 0.0
    %5091 = vmatprep.subr.mxu0 0.0
    %5092 = vmatpush1.msra.mxu0 0.0
    %5093 = vmatprep.subr.mxu0 0.0
    %5094 = vmatpush1.msra.mxu0 0.0
    %5095 = vmatprep.subr.mxu0 0.0
    %5096 = vmatpush1.msra.mxu0 0.0
    %5097 = vmatprep.subr.mxu0 0.0
    %5098 = vmatpush1.msra.mxu0 0.0
    %5099 = vmatprep.subr.mxu0 0.0
    %5100 = vmatpush1.msra.mxu0 0.0
    %5101 = vmatprep.subr.mxu0 0.0
    %5102 = vmatpush1.msra.mxu0 0.0
    %5103 = vmatprep.subr.mxu0 0.0
    %5104 = vmatpush1.msra.mxu0 0.0
    %5105 = vmatprep.subr.mxu0 0.0
    %5106 = vmatpush1.msra.mxu0 0.0
    %5107 = vmatprep.subr.mxu0 0.0
    %5108 = vmatpush1.msra.mxu0 0.0
    %5109 = vmatprep.subr.mxu0 0.0
    %5110 = vmatpush1.msra.mxu0 0.0
    %5111 = vmatprep.mubr.f32.mxu0 0.0
    %5112 = vmatmul.mubr.f32.gmra.mrb[0].mxu0 %v2198
    %v5113 = vpop.f32.mrb[0].mxu0
    %v5114 = vadd.f32 0.0, %v5113
    %v5115 = vpop.f32.mrb[0].mxu0
    %5116 = vmatprep.mubr.f32.mxu0 0.0
    %5117 = vmatmul.mubr.f32.gmra.mrb[0].mxu0 %v2201
    %v5118 = vpop.f32.mrb[0].mxu0
    %v5119 = vadd.f32 0.0, %v5118
    %v5120 = vpop.f32.mrb[0].mxu0
    %5121 = vdwg.mxu0
    %5124 = vrot.lane.b32.xlu0 %v3225, 32
    %v5125 = vpop.permute.xlu0 %5124
    %5126 = vrot.lane.b32.xlu0 %v3226, 32
    %v5127 = vpop.permute.xlu0 %5126
    %5132 = vrot.lane.b32.xlu0 %v5114, 64
    %v5133 = vpop.permute.xlu0 %5132
    %5134 = vrot.lane.b32.xlu0 %v5119, 64
    %v5135 = vpop.permute.xlu0 %5134
    %v5138 = vsel %vm761, %v5039, %v5125
    %v5139 = vsel %vm761, %v5044, %v5127
    %v5140 = vsel %vm883, %v5138, %v5133
    %v5141 = vsel %vm883, %v5139, %v5135
    %v5142 = vld [vmem:[%s93] sm:$0xff]
    %v5143 = vld [vmem:[%s93 + $0x8] sm:$0xff]
    %v5144 = vld [vmem:[%s93 + $0x10] sm:$0xff]
    %v5145 = vld [vmem:[%s93 + $0x18] sm:$0xff]
    %v5146 = vld [vmem:[%s93 + $0x20] sm:$0xff]
    %v5147 = vld [vmem:[%s93 + $0x28] sm:$0xff]
    %v5148 = vld [vmem:[%s93 + $0x30] sm:$0xff]
    %v5149 = vld [vmem:[%s93 + $0x38] sm:$0xff]
    %v5150 = vld [vmem:[%s93 + $0x40] sm:$0xff]
    %v5151 = vld [vmem:[%s93 + $0x48] sm:$0xff]
    %v5152 = vld [vmem:[%s93 + $0x50] sm:$0xff]
    %v5153 = vld [vmem:[%s93 + $0x58] sm:$0xff]
    %v5154 = vld [vmem:[#allocation20] sm:$0x1]
    %v5156 = vlaneseq
    %v5157 = vshrl.u32 %v5156, 7
    %v5158 = vsub.s32 0, %v5157
    %v5159 = vrot.slane %v5154, %v5158
    %v5162 = vsel %vm1040, %v5140, 0
    %v5165 = vsel %vm1040, %v5141, 0
    %5167 = vmatprep.subr.mxu0 0.0
    %5168 = vmatpush1.msra.mxu0 %v5142
    %5169 = vmatprep.subr.mxu0 0.0
    %5170 = vmatpush1.msra.mxu0 %v5143
    %5171 = vmatprep.subr.mxu0 0.0
    %5172 = vmatpush1.msra.mxu0 %v5144
    %5173 = vmatprep.subr.mxu0 0.0
    %5174 = vmatpush1.msra.mxu0 %v5145
    %5175 = vmatprep.subr.mxu0 0.0
    %5176 = vmatpush1.msra.mxu0 %v5146
    %5177 = vmatprep.subr.mxu0 0.0
    %5178 = vmatpush1.msra.mxu0 %v5147
    %5179 = vmatprep.subr.mxu0 0.0
    %5180 = vmatpush1.msra.mxu0 %v5148
    %5181 = vmatprep.subr.mxu0 0.0
    %5182 = vmatpush1.msra.mxu0 %v5149
    %5183 = vmatprep.subr.mxu0 0.0
    %5184 = vmatpush1.msra.mxu0 %v5150
    %5185 = vmatprep.subr.mxu0 0.0
    %5186 = vmatpush1.msra.mxu0 %v5151
    %5187 = vmatprep.subr.mxu0 0.0
    %5188 = vmatpush1.msra.mxu0 %v5152
    %5189 = vmatprep.subr.mxu0 0.0
    %5190 = vmatpush1.msra.mxu0 %v5153
    %5191 = vmatprep.subr.mxu0 0.0
    %5192 = vmatpush1.msra.mxu0 0.0
    %5193 = vmatprep.subr.mxu0 0.0
    %5194 = vmatpush1.msra.mxu0 0.0
    %5195 = vmatprep.subr.mxu0 0.0
    %5196 = vmatpush1.msra.mxu0 0.0
    %5197 = vmatprep.subr.mxu0 0.0
    %5198 = vmatpush1.msra.mxu0 0.0
    %5199 = vmatprep.subr.mxu0 0.0
    %5200 = vmatpush1.msra.mxu0 0.0
    %5201 = vmatprep.subr.mxu0 0.0
    %5202 = vmatpush1.msra.mxu0 0.0
    %5203 = vmatprep.subr.mxu0 0.0
    %5204 = vmatpush1.msra.mxu0 0.0
    %5205 = vmatprep.subr.mxu0 0.0
    %5206 = vmatpush1.msra.mxu0 0.0
    %5207 = vmatprep.subr.mxu0 0.0
    %5208 = vmatpush1.msra.mxu0 0.0
    %5209 = vmatprep.subr.mxu0 0.0
    %5210 = vmatpush1.msra.mxu0 0.0
    %5211 = vmatprep.subr.mxu0 0.0
    %5212 = vmatpush1.msra.mxu0 0.0
    %5213 = vmatprep.subr.mxu0 0.0
    %5214 = vmatpush1.msra.mxu0 0.0
    %5215 = vmatprep.subr.mxu0 0.0
    %5216 = vmatpush1.msra.mxu0 0.0
    %5217 = vmatprep.subr.mxu0 0.0
    %5218 = vmatpush1.msra.mxu0 0.0
    %5219 = vmatprep.subr.mxu0 0.0
    %5220 = vmatpush1.msra.mxu0 0.0
    %5221 = vmatprep.subr.mxu0 0.0
    %5222 = vmatpush1.msra.mxu0 0.0
    %5223 = vmatprep.subr.mxu0 0.0
    %5224 = vmatpush1.msra.mxu0 0.0
    %5225 = vmatprep.subr.mxu0 0.0
    %5226 = vmatpush1.msra.mxu0 0.0
    %5227 = vmatprep.subr.mxu0 0.0
    %5228 = vmatpush1.msra.mxu0 0.0
    %5229 = vmatprep.subr.mxu0 0.0
    %5230 = vmatpush1.msra.mxu0 0.0
    %5231 = vmatprep.mubr.f32.mxu0 0.0
    %5232 = vmatmul.mubr.f32.gmra.mrb[0].mxu0 %v5162
    %v5233 = vpop.f32.mrb[0].mxu0
    %v5234 = vadd.f32 %v5159, %v5233
    %v5235 = vpop.f32.mrb[0].mxu0
    %5236 = vmatprep.mubr.f32.mxu0 0.0
    %5237 = vmatmul.mubr.f32.gmra.mrb[0].mxu0 %v5165
    %v5238 = vpop.f32.mrb[0].mxu0
    %v5239 = vadd.f32 %v5159, %v5238
    %v5240 = vpop.f32.mrb[0].mxu0
    %5241 = vdwg.mxu0
    %v5242 = vmin.f32 %v5234, 20.0
    %v5243 = vmin.f32 %v5239, 20.0
    %v5244 = vmul.f32 %v5242, 1.442695
    %v5245 = vpow.pop %v5244
    %v5246 = vmul.f32 %v5243, 1.442695
    %v5247 = vpow.pop %v5246
    %v5248 = vadd.f32 %v5245, 2.0
    %v5249 = vadd.f32 %v5247, 2.0
    %v5250 = vmul.f32 %v5245, %v5248
    %v5251 = vmul.f32 %v5247, %v5249
    %v5252 = vadd.f32 %v5250, 2.0
    %v5253 = vadd.f32 %v5251, 2.0
    %v5254 = vrcp.pop %v5252
    %v5255 = vmul.f32 %v5250, %v5254
    %v5256 = vrcp.pop %v5253
    %v5257 = vmul.f32 %v5251, %v5256
    %v5258 = vmul.f32 %v5234, %v5255
    %v5259 = vmul.f32 %v5239, %v5257
    %5260 = vmatprep.subr.mxu0 0.0
    %5261 = vmatpush1.msra.mxu0 %v631
    %5262 = vmatprep.subr.mxu0 0.0
    %5263 = vmatpush1.msra.mxu0 %v632
    %5264 = vmatprep.subr.mxu0 0.0
    %5265 = vmatpush1.msra.mxu0 %v633
    %5266 = vmatprep.subr.mxu0 0.0
    %5267 = vmatpush1.msra.mxu0 %v634
    %5268 = vmatprep.subr.mxu0 0.0
    %5269 = vmatpush1.msra.mxu0 %v635
    %5270 = vmatprep.subr.mxu0 0.0
    %5271 = vmatpush1.msra.mxu0 %v636
    %5272 = vmatprep.subr.mxu0 0.0
    %5273 = vmatpush1.msra.mxu0 %v637
    %5274 = vmatprep.subr.mxu0 0.0
    %5275 = vmatpush1.msra.mxu0 %v638
    %5276 = vmatprep.subr.mxu0 0.0
    %5277 = vmatpush1.msra.mxu0 %v639
    %5278 = vmatprep.subr.mxu0 0.0
    %5279 = vmatpush1.msra.mxu0 %v640
    %5280 = vmatprep.subr.mxu0 0.0
    %5281 = vmatpush1.msra.mxu0 %v641
    %5282 = vmatprep.subr.mxu0 0.0
    %5283 = vmatpush1.msra.mxu0 %v642
    %5284 = vmatprep.subr.mxu0 0.0
    %5285 = vmatpush1.msra.mxu0 %v643
    %5286 = vmatprep.subr.mxu0 0.0
    %5287 = vmatpush1.msra.mxu0 %v644
    %5288 = vmatprep.subr.mxu0 0.0
    %5289 = vmatpush1.msra.mxu0 %v645
    %5290 = vmatprep.subr.mxu0 0.0
    %5291 = vmatpush1.msra.mxu0 %v646
    %5292 = vmatprep.subr.mxu0 0.0
    %5293 = vmatpush1.msra.mxu0 0.0
    %5294 = vmatprep.subr.mxu0 0.0
    %5295 = vmatpush1.msra.mxu0 0.0
    %5296 = vmatprep.subr.mxu0 0.0
    %5297 = vmatpush1.msra.mxu0 0.0
    %5298 = vmatprep.subr.mxu0 0.0
    %5299 = vmatpush1.msra.mxu0 0.0
    %5300 = vmatprep.subr.mxu0 0.0
    %5301 = vmatpush1.msra.mxu0 0.0
    %5302 = vmatprep.subr.mxu0 0.0
    %5303 = vmatpush1.msra.mxu0 0.0
    %5304 = vmatprep.subr.mxu0 0.0
    %5305 = vmatpush1.msra.mxu0 0.0
    %5306 = vmatprep.subr.mxu0 0.0
    %5307 = vmatpush1.msra.mxu0 0.0
    %5308 = vmatprep.subr.mxu0 0.0
    %5309 = vmatpush1.msra.mxu0 0.0
    %5310 = vmatprep.subr.mxu0 0.0
    %5311 = vmatpush1.msra.mxu0 0.0
    %5312 = vmatprep.subr.mxu0 0.0
    %5313 = vmatpush1.msra.mxu0 0.0
    %5314 = vmatprep.subr.mxu0 0.0
    %5315 = vmatpush1.msra.mxu0 0.0
    %5316 = vmatprep.subr.mxu0 0.0
    %5317 = vmatpush1.msra.mxu0 0.0
    %5318 = vmatprep.subr.mxu0 0.0
    %5319 = vmatpush1.msra.mxu0 0.0
    %5320 = vmatprep.subr.mxu0 0.0
    %5321 = vmatpush1.msra.mxu0 0.0
    %5322 = vmatprep.subr.mxu0 0.0
    %5323 = vmatpush1.msra.mxu0 0.0
    %5324 = vmatprep.mubr.f32.mxu0 0.0
    %5325 = vmatmul.mubr.f32.gmra.mrb[0].mxu0 %v5258
    %v5326 = vpop.f32.mrb[0].mxu0
    %v5327 = vadd.f32 0.0, %v5326
    %v5328 = vpop.f32.mrb[0].mxu0
    %5329 = vmatprep.mubr.f32.mxu0 0.0
    %5330 = vmatmul.mubr.f32.gmra.mrb[0].mxu0 %v5259
    %v5331 = vpop.f32.mrb[0].mxu0
    %v5332 = vadd.f32 0.0, %v5331
    %v5333 = vpop.f32.mrb[0].mxu0
    %5334 = vdwg.mxu0
    %5335 = vmatprep.subr.mxu0 0.0
    %5336 = vmatpush1.msra.mxu0 %v5327
    %5337 = vmatprep.subr.mxu0 0.0
    %5338 = vmatpush1.msra.mxu0 %v5332
    %5339 = vmatprep.subr.mxu0 0.0
    %5340 = vmatpush1.msra.mxu0 0.0
    %5341 = vmatprep.subr.mxu0 0.0
    %5342 = vmatpush1.msra.mxu0 0.0
    %5343 = vmatprep.subr.mxu0 0.0
    %5344 = vmatpush1.msra.mxu0 0.0
    %5345 = vmatprep.subr.mxu0 0.0
    %5346 = vmatpush1.msra.mxu0 0.0
    %5347 = vmatprep.subr.mxu0 0.0
    %5348 = vmatpush1.msra.mxu0 0.0
    %5349 = vmatprep.subr.mxu0 0.0
    %5350 = vmatpush1.msra.mxu0 0.0
    %5351 = vmatprep.subr.mxu0 0.0
    %5352 = vmatpush1.msra.mxu0 0.0
    %5353 = vmatprep.subr.mxu0 0.0
    %5354 = vmatpush1.msra.mxu0 0.0
    %5355 = vmatprep.subr.mxu0 0.0
    %5356 = vmatpush1.msra.mxu0 0.0
    %5357 = vmatprep.subr.mxu0 0.0
    %5358 = vmatpush1.msra.mxu0 0.0
    %5359 = vmatprep.subr.mxu0 0.0
    %5360 = vmatpush1.msra.mxu0 0.0
    %5361 = vmatprep.subr.mxu0 0.0
    %5362 = vmatpush1.msra.mxu0 0.0
    %5363 = vmatprep.subr.mxu0 0.0
    %5364 = vmatpush1.msra.mxu0 0.0
    %5365 = vmatprep.subr.mxu0 0.0
    %5366 = vmatpush1.msra.mxu0 0.0
    %5367 = vmatprep.subr.mxu0 0.0
    %5368 = vmatpush1.msra.mxu0 0.0
    %5369 = vmatprep.subr.mxu0 0.0
    %5370 = vmatpush1.msra.mxu0 0.0
    %5371 = vmatprep.subr.mxu0 0.0
    %5372 = vmatpush1.msra.mxu0 0.0
    %5373 = vmatprep.subr.mxu0 0.0
    %5374 = vmatpush1.msra.mxu0 0.0
    %5375 = vmatprep.subr.mxu0 0.0
    %5376 = vmatpush1.msra.mxu0 0.0
    %5377 = vmatprep.subr.mxu0 0.0
    %5378 = vmatpush1.msra.mxu0 0.0
    %5379 = vmatprep.subr.mxu0 0.0
    %5380 = vmatpush1.msra.mxu0 0.0
    %5381 = vmatprep.subr.mxu0 0.0
    %5382 = vmatpush1.msra.mxu0 0.0
    %5383 = vmatprep.subr.mxu0 0.0
    %5384 = vmatpush1.msra.mxu0 0.0
    %5385 = vmatprep.subr.mxu0 0.0
    %5386 = vmatpush1.msra.mxu0 0.0
    %5387 = vmatprep.subr.mxu0 0.0
    %5388 = vmatpush1.msra.mxu0 0.0
    %5389 = vmatprep.subr.mxu0 0.0
    %5390 = vmatpush1.msra.mxu0 0.0
    %5391 = vmatprep.subr.mxu0 0.0
    %5392 = vmatpush1.msra.mxu0 0.0
    %5393 = vmatprep.subr.mxu0 0.0
    %5394 = vmatpush1.msra.mxu0 0.0
    %5395 = vmatprep.subr.mxu0 0.0
    %5396 = vmatpush1.msra.mxu0 0.0
    %5397 = vmatprep.subr.mxu0 0.0
    %5398 = vmatpush1.msra.mxu0 0.0
    %5399 = vmatprep.mubr.f32.mxu0 0.0
    %5400 = vmatmul.mubr.f32.gmra.mrb[0].mxu0 %v2962
    %v5401 = vpop.f32.mrb[0].mxu0
    %v5402 = vadd.f32 0.0, %v5401
    %v5403 = vpop.f32.mrb[0].mxu0
    %5404 = vmatprep.mubr.f32.mxu0 0.0
    %5405 = vmatmul.mubr.f32.gmra.mrb[0].mxu0 %v2965
    %v5406 = vpop.f32.mrb[0].mxu0
    %v5407 = vadd.f32 0.0, %v5406
    %v5408 = vpop.f32.mrb[0].mxu0
    %5409 = vdwg.mxu0
    %v5410 = vsub.f32 %v5258, %v5402
    %v5411 = vsub.f32 %v5259, %v5407
    %v5412 = vmul.f32 %v5410, %v5410
    %v5413 = vmul.f32 %v5411, %v5411
    %5414 = vmatprep.subr.mxu0 0.0
    %5415 = vmatpush1.msra.mxu0 %v631
    %5416 = vmatprep.subr.mxu0 0.0
    %5417 = vmatpush1.msra.mxu0 %v632
    %5418 = vmatprep.subr.mxu0 0.0
    %5419 = vmatpush1.msra.mxu0 %v633
    %5420 = vmatprep.subr.mxu0 0.0
    %5421 = vmatpush1.msra.mxu0 %v634
    %5422 = vmatprep.subr.mxu0 0.0
    %5423 = vmatpush1.msra.mxu0 %v635
    %5424 = vmatprep.subr.mxu0 0.0
    %5425 = vmatpush1.msra.mxu0 %v636
    %5426 = vmatprep.subr.mxu0 0.0
    %5427 = vmatpush1.msra.mxu0 %v637
    %5428 = vmatprep.subr.mxu0 0.0
    %5429 = vmatpush1.msra.mxu0 %v638
    %5430 = vmatprep.subr.mxu0 0.0
    %5431 = vmatpush1.msra.mxu0 %v639
    %5432 = vmatprep.subr.mxu0 0.0
    %5433 = vmatpush1.msra.mxu0 %v640
    %5434 = vmatprep.subr.mxu0 0.0
    %5435 = vmatpush1.msra.mxu0 %v641
    %5436 = vmatprep.subr.mxu0 0.0
    %5437 = vmatpush1.msra.mxu0 %v642
    %5438 = vmatprep.subr.mxu0 0.0
    %5439 = vmatpush1.msra.mxu0 %v643
    %5440 = vmatprep.subr.mxu0 0.0
    %5441 = vmatpush1.msra.mxu0 %v644
    %5442 = vmatprep.subr.mxu0 0.0
    %5443 = vmatpush1.msra.mxu0 %v645
    %5444 = vmatprep.subr.mxu0 0.0
    %5445 = vmatpush1.msra.mxu0 %v646
    %5446 = vmatprep.subr.mxu0 0.0
    %5447 = vmatpush1.msra.mxu0 0.0
    %5448 = vmatprep.subr.mxu0 0.0
    %5449 = vmatpush1.msra.mxu0 0.0
    %5450 = vmatprep.subr.mxu0 0.0
    %5451 = vmatpush1.msra.mxu0 0.0
    %5452 = vmatprep.subr.mxu0 0.0
    %5453 = vmatpush1.msra.mxu0 0.0
    %5454 = vmatprep.subr.mxu0 0.0
    %5455 = vmatpush1.msra.mxu0 0.0
    %5456 = vmatprep.subr.mxu0 0.0
    %5457 = vmatpush1.msra.mxu0 0.0
    %5458 = vmatprep.subr.mxu0 0.0
    %5459 = vmatpush1.msra.mxu0 0.0
    %5460 = vmatprep.subr.mxu0 0.0
    %5461 = vmatpush1.msra.mxu0 0.0
    %5462 = vmatprep.subr.mxu0 0.0
    %5463 = vmatpush1.msra.mxu0 0.0
    %5464 = vmatprep.subr.mxu0 0.0
    %5465 = vmatpush1.msra.mxu0 0.0
    %5466 = vmatprep.subr.mxu0 0.0
    %5467 = vmatpush1.msra.mxu0 0.0
    %5468 = vmatprep.subr.mxu0 0.0
    %5469 = vmatpush1.msra.mxu0 0.0
    %5470 = vmatprep.subr.mxu0 0.0
    %5471 = vmatpush1.msra.mxu0 0.0
    %5472 = vmatprep.subr.mxu0 0.0
    %5473 = vmatpush1.msra.mxu0 0.0
    %5474 = vmatprep.subr.mxu0 0.0
    %5475 = vmatpush1.msra.mxu0 0.0
    %5476 = vmatprep.subr.mxu0 0.0
    %5477 = vmatpush1.msra.mxu0 0.0
    %5478 = vmatprep.mubr.f32.mxu0 0.0
    %5479 = vmatmul.mubr.f32.gmra.mrb[0].mxu0 %v5412
    %v5480 = vpop.f32.mrb[0].mxu0
    %v5481 = vadd.f32 0.0, %v5480
    %v5482 = vpop.f32.mrb[0].mxu0
    %5483 = vmatprep.mubr.f32.mxu0 0.0
    %5484 = vmatmul.mubr.f32.gmra.mrb[0].mxu0 %v5413
    %v5485 = vpop.f32.mrb[0].mxu0
    %v5486 = vadd.f32 0.0, %v5485
    %v5487 = vpop.f32.mrb[0].mxu0
    %5488 = vdwg.mxu0
    %5489 = vmatprep.subr.mxu0 0.0
    %5490 = vmatpush1.msra.mxu0 %v5481
    %5491 = vmatprep.subr.mxu0 0.0
    %5492 = vmatpush1.msra.mxu0 %v5486
    %5493 = vmatprep.subr.mxu0 0.0
    %5494 = vmatpush1.msra.mxu0 0.0
    %5495 = vmatprep.subr.mxu0 0.0
    %5496 = vmatpush1.msra.mxu0 0.0
    %5497 = vmatprep.subr.mxu0 0.0
    %5498 = vmatpush1.msra.mxu0 0.0
    %5499 = vmatprep.subr.mxu0 0.0
    %5500 = vmatpush1.msra.mxu0 0.0
    %5501 = vmatprep.subr.mxu0 0.0
    %5502 = vmatpush1.msra.mxu0 0.0
    %5503 = vmatprep.subr.mxu0 0.0
    %5504 = vmatpush1.msra.mxu0 0.0
    %5505 = vmatprep.subr.mxu0 0.0
    %5506 = vmatpush1.msra.mxu0 0.0
    %5507 = vmatprep.subr.mxu0 0.0
    %5508 = vmatpush1.msra.mxu0 0.0
    %5509 = vmatprep.subr.mxu0 0.0
    %5510 = vmatpush1.msra.mxu0 0.0
    %5511 = vmatprep.subr.mxu0 0.0
    %5512 = vmatpush1.msra.mxu0 0.0
    %5513 = vmatprep.subr.mxu0 0.0
    %5514 = vmatpush1.msra.mxu0 0.0
    %5515 = vmatprep.subr.mxu0 0.0
    %5516 = vmatpush1.msra.mxu0 0.0
    %5517 = vmatprep.subr.mxu0 0.0
    %5518 = vmatpush1.msra.mxu0 0.0
    %5519 = vmatprep.subr.mxu0 0.0
    %5520 = vmatpush1.msra.mxu0 0.0
    %5521 = vmatprep.subr.mxu0 0.0
    %5522 = vmatpush1.msra.mxu0 0.0
    %5523 = vmatprep.subr.mxu0 0.0
    %5524 = vmatpush1.msra.mxu0 0.0
    %5525 = vmatprep.subr.mxu0 0.0
    %5526 = vmatpush1.msra.mxu0 0.0
    %5527 = vmatprep.subr.mxu0 0.0
    %5528 = vmatpush1.msra.mxu0 0.0
    %5529 = vmatprep.subr.mxu0 0.0
    %5530 = vmatpush1.msra.mxu0 0.0
    %5531 = vmatprep.subr.mxu0 0.0
    %5532 = vmatpush1.msra.mxu0 0.0
    %5533 = vmatprep.subr.mxu0 0.0
    %5534 = vmatpush1.msra.mxu0 0.0
    %5535 = vmatprep.subr.mxu0 0.0
    %5536 = vmatpush1.msra.mxu0 0.0
    %5537 = vmatprep.subr.mxu0 0.0
    %5538 = vmatpush1.msra.mxu0 0.0
    %5539 = vmatprep.subr.mxu0 0.0
    %5540 = vmatpush1.msra.mxu0 0.0
    %5541 = vmatprep.subr.mxu0 0.0
    %5542 = vmatpush1.msra.mxu0 0.0
    %5543 = vmatprep.subr.mxu0 0.0
    %5544 = vmatpush1.msra.mxu0 0.0
    %5545 = vmatprep.subr.mxu0 0.0
    %5546 = vmatpush1.msra.mxu0 0.0
    %5547 = vmatprep.subr.mxu0 0.0
    %5548 = vmatpush1.msra.mxu0 0.0
    %5549 = vmatprep.subr.mxu0 0.0
    %5550 = vmatpush1.msra.mxu0 0.0
    %5551 = vmatprep.subr.mxu0 0.0
    %5552 = vmatpush1.msra.mxu0 0.0
    %5553 = vmatprep.mubr.f32.mxu0 0.0
    %5554 = vmatmul.mubr.f32.gmra.mrb[0].mxu0 %v2962
    %v5555 = vpop.f32.mrb[0].mxu0
    %v5556 = vadd.f32 1e-05, %v5555
    %v5557 = vpop.f32.mrb[0].mxu0
    %5558 = vmatprep.mubr.f32.mxu0 0.0
    %5559 = vmatmul.mubr.f32.gmra.mrb[0].mxu0 %v2965
    %v5560 = vpop.f32.mrb[0].mxu0
    %v5561 = vadd.f32 1e-05, %v5560
    %v5562 = vpop.f32.mrb[0].mxu0
    %5563 = vdwg.mxu0
    %v5564 = vrsqrt.pop %v5556
    %v5565 = vrsqrt.pop %v5561
    %v5566 = vmul.f32 %v5410, %v5564
    %v5567 = vmul.f32 %v5411, %v5565
    %v5568 = vld [vmem:[#allocation23] sm:$0x1]
    %v5570 = vlaneseq
    %v5571 = vshrl.u32 %v5570, 7
    %v5572 = vsub.s32 0, %v5571
    %v5573 = vrot.slane %v5568, %v5572
    %v5575 = vmul.f32 %v5566, %v5573
    %v5576 = vmul.f32 %v5567, %v5573
    %v5577 = vld [vmem:[#allocation25] sm:$0x1]
    %v5579 = vlaneseq
    %v5580 = vshrl.u32 %v5579, 7
    %v5581 = vsub.s32 0, %v5580
    %v5582 = vrot.slane %v5577, %v5581
    %v5584 = vadd.f32 %v5575, %v5582
    %v5585 = vadd.f32 %v5576, %v5582
    %5586 = vmatprep.subr.mxu0 0.0
    %5587 = vmatpush1.msra.mxu0 %v5584
    %5588 = vmatprep.subr.mxu0 0.0
    %5589 = vmatpush1.msra.mxu0 %v5585
    %5590 = vmatprep.subr.mxu0 0.0
    %5591 = vmatpush1.msra.mxu0 0.0
    %5592 = vmatprep.subr.mxu0 0.0
    %5593 = vmatpush1.msra.mxu0 0.0
    %5594 = vmatprep.subr.mxu0 0.0
    %5595 = vmatpush1.msra.mxu0 0.0
    %5596 = vmatprep.subr.mxu0 0.0
    %5597 = vmatpush1.msra.mxu0 0.0
    %5598 = vmatprep.subr.mxu0 0.0
    %5599 = vmatpush1.msra.mxu0 0.0
    %5600 = vmatprep.subr.mxu0 0.0
    %5601 = vmatpush1.msra.mxu0 0.0
    %5602 = vmatprep.subr.mxu0 0.0
    %5603 = vmatpush1.msra.mxu0 0.0
    %5604 = vmatprep.subr.mxu0 0.0
    %5605 = vmatpush1.msra.mxu0 0.0
    %5606 = vmatprep.subr.mxu0 0.0
    %5607 = vmatpush1.msra.mxu0 0.0
    %5608 = vmatprep.subr.mxu0 0.0
    %5609 = vmatpush1.msra.mxu0 0.0
    %5610 = vmatprep.subr.mxu0 0.0
    %5611 = vmatpush1.msra.mxu0 0.0
    %5612 = vmatprep.subr.mxu0 0.0
    %5613 = vmatpush1.msra.mxu0 0.0
    %5614 = vmatprep.subr.mxu0 0.0
    %5615 = vmatpush1.msra.mxu0 0.0
    %5616 = vmatprep.subr.mxu0 0.0
    %5617 = vmatpush1.msra.mxu0 0.0
    %5618 = vmatprep.subr.mxu0 0.0
    %5619 = vmatpush1.msra.mxu0 0.0
    %5620 = vmatprep.subr.mxu0 0.0
    %5621 = vmatpush1.msra.mxu0 0.0
    %5622 = vmatprep.subr.mxu0 0.0
    %5623 = vmatpush1.msra.mxu0 0.0
    %5624 = vmatprep.subr.mxu0 0.0
    %5625 = vmatpush1.msra.mxu0 0.0
    %5626 = vmatprep.subr.mxu0 0.0
    %5627 = vmatpush1.msra.mxu0 0.0
    %5628 = vmatprep.subr.mxu0 0.0
    %5629 = vmatpush1.msra.mxu0 0.0
    %5630 = vmatprep.subr.mxu0 0.0
    %5631 = vmatpush1.msra.mxu0 0.0
    %5632 = vmatprep.subr.mxu0 0.0
    %5633 = vmatpush1.msra.mxu0 0.0
    %5634 = vmatprep.subr.mxu0 0.0
    %5635 = vmatpush1.msra.mxu0 0.0
    %5636 = vmatprep.subr.mxu0 0.0
    %5637 = vmatpush1.msra.mxu0 0.0
    %5638 = vmatprep.subr.mxu0 0.0
    %5639 = vmatpush1.msra.mxu0 0.0
    %5640 = vmatprep.subr.mxu0 0.0
    %5641 = vmatpush1.msra.mxu0 0.0
    %5642 = vmatprep.subr.mxu0 0.0
    %5643 = vmatpush1.msra.mxu0 0.0
    %5644 = vmatprep.subr.mxu0 0.0
    %5645 = vmatpush1.msra.mxu0 0.0
    %5646 = vmatprep.subr.mxu0 0.0
    %5647 = vmatpush1.msra.mxu0 0.0
    %5648 = vmatprep.subr.mxu0 0.0
    %5649 = vmatpush1.msra.mxu0 0.0
    %5650 = vmatprep.mubr.f32.mxu0 0.0
    %5651 = vmatmul.mubr.f32.gmra.mrb[0].mxu0 %v2117
    %v5652 = vpop.f32.mrb[0].mxu0
    %v5653 = vadd.f32 0.0, %v5652
    %v5654 = vpop.f32.mrb[0].mxu0
    %5655 = vmatprep.mubr.f32.mxu0 0.0
    %5656 = vmatmul.mubr.f32.gmra.mrb[0].mxu0 %v2120
    %v5657 = vpop.f32.mrb[0].mxu0
    %v5658 = vadd.f32 0.0, %v5657
    %v5659 = vpop.f32.mrb[0].mxu0
    %5660 = vdwg.mxu0
    %5661 = vmatprep.subr.mxu0 0.0
    %5662 = vmatpush1.msra.mxu0 %v5584
    %5663 = vmatprep.subr.mxu0 0.0
    %5664 = vmatpush1.msra.mxu0 %v5585
    %5665 = vmatprep.subr.mxu0 0.0
    %5666 = vmatpush1.msra.mxu0 0.0
    %5667 = vmatprep.subr.mxu0 0.0
    %5668 = vmatpush1.msra.mxu0 0.0
    %5669 = vmatprep.subr.mxu0 0.0
    %5670 = vmatpush1.msra.mxu0 0.0
    %5671 = vmatprep.subr.mxu0 0.0
    %5672 = vmatpush1.msra.mxu0 0.0
    %5673 = vmatprep.subr.mxu0 0.0
    %5674 = vmatpush1.msra.mxu0 0.0
    %5675 = vmatprep.subr.mxu0 0.0
    %5676 = vmatpush1.msra.mxu0 0.0
    %5677 = vmatprep.subr.mxu0 0.0
    %5678 = vmatpush1.msra.mxu0 0.0
    %5679 = vmatprep.subr.mxu0 0.0
    %5680 = vmatpush1.msra.mxu0 0.0
    %5681 = vmatprep.subr.mxu0 0.0
    %5682 = vmatpush1.msra.mxu0 0.0
    %5683 = vmatprep.subr.mxu0 0.0
    %5684 = vmatpush1.msra.mxu0 0.0
    %5685 = vmatprep.subr.mxu0 0.0
    %5686 = vmatpush1.msra.mxu0 0.0
    %5687 = vmatprep.subr.mxu0 0.0
    %5688 = vmatpush1.msra.mxu0 0.0
    %5689 = vmatprep.subr.mxu0 0.0
    %5690 = vmatpush1.msra.mxu0 0.0
    %5691 = vmatprep.subr.mxu0 0.0
    %5692 = vmatpush1.msra.mxu0 0.0
    %5693 = vmatprep.subr.mxu0 0.0
    %5694 = vmatpush1.msra.mxu0 0.0
    %5695 = vmatprep.subr.mxu0 0.0
    %5696 = vmatpush1.msra.mxu0 0.0
    %5697 = vmatprep.subr.mxu0 0.0
    %5698 = vmatpush1.msra.mxu0 0.0
    %5699 = vmatprep.subr.mxu0 0.0
    %5700 = vmatpush1.msra.mxu0 0.0
    %5701 = vmatprep.subr.mxu0 0.0
    %5702 = vmatpush1.msra.mxu0 0.0
    %5703 = vmatprep.subr.mxu0 0.0
    %5704 = vmatpush1.msra.mxu0 0.0
    %5705 = vmatprep.subr.mxu0 0.0
    %5706 = vmatpush1.msra.mxu0 0.0
    %5707 = vmatprep.subr.mxu0 0.0
    %5708 = vmatpush1.msra.mxu0 0.0
    %5709 = vmatprep.subr.mxu0 0.0
    %5710 = vmatpush1.msra.mxu0 0.0
    %5711 = vmatprep.subr.mxu0 0.0
    %5712 = vmatpush1.msra.mxu0 0.0
    %5713 = vmatprep.subr.mxu0 0.0
    %5714 = vmatpush1.msra.mxu0 0.0
    %5715 = vmatprep.subr.mxu0 0.0
    %5716 = vmatpush1.msra.mxu0 0.0
    %5717 = vmatprep.subr.mxu0 0.0
    %5718 = vmatpush1.msra.mxu0 0.0
    %5719 = vmatprep.subr.mxu0 0.0
    %5720 = vmatpush1.msra.mxu0 0.0
    %5721 = vmatprep.subr.mxu0 0.0
    %5722 = vmatpush1.msra.mxu0 0.0
    %5723 = vmatprep.subr.mxu0 0.0
    %5724 = vmatpush1.msra.mxu0 0.0
    %5725 = vmatprep.mubr.f32.mxu0 0.0
    %5726 = vmatmul.mubr.f32.gmra.mrb[0].mxu0 %v2198
    %v5727 = vpop.f32.mrb[0].mxu0
    %v5728 = vadd.f32 0.0, %v5727
    %v5729 = vpop.f32.mrb[0].mxu0
    %5730 = vmatprep.mubr.f32.mxu0 0.0
    %5731 = vmatmul.mubr.f32.gmra.mrb[0].mxu0 %v2201
    %v5732 = vpop.f32.mrb[0].mxu0
    %v5733 = vadd.f32 0.0, %v5732
    %v5734 = vpop.f32.mrb[0].mxu0
    %5735 = vdwg.mxu0
    %v5736 = vld [vmem:[%s97] sm:$0xff]
    %v5737 = vld [vmem:[%s97 + $0x8] sm:$0xff]
    %v5738 = vld [vmem:[%s97 + $0x10] sm:$0xff]
    %v5739 = vld [vmem:[%s97 + $0x18] sm:$0xff]
    %v5740 = vld [vmem:[%s97 + $0x20] sm:$0xff]
    %v5741 = vld [vmem:[%s97 + $0x28] sm:$0xff]
    %v5742 = vld [vmem:[%s97 + $0x30] sm:$0xff]
    %v5743 = vld [vmem:[%s97 + $0x38] sm:$0xff]
    %v5744 = vld [vmem:[%s97 + $0x40] sm:$0xff]
    %v5745 = vld [vmem:[%s97 + $0x48] sm:$0xff]
    %v5746 = vld [vmem:[%s97 + $0x50] sm:$0xff]
    %v5747 = vld [vmem:[%s97 + $0x58] sm:$0xff]
    %v5748 = vld [vmem:[%s97 + $0x60] sm:$0xff]
    %v5749 = vld [vmem:[%s97 + $0x68] sm:$0xff]
    %v5750 = vld [vmem:[%s97 + $0x70] sm:$0xff]
    %v5751 = vld [vmem:[%s97 + $0x78] sm:$0xff]
    %v5752 = vld [vmem:[%s97 + $0x80] sm:$0xff]
    %v5753 = vld [vmem:[%s97 + $0x88] sm:$0xff]
    %v5754 = vld [vmem:[%s97 + $0x90] sm:$0xff]
    %v5755 = vld [vmem:[%s97 + $0x98] sm:$0xff]
    %v5756 = vld [vmem:[%s97 + $0xa0] sm:$0xff]
    %v5757 = vld [vmem:[%s97 + $0xa8] sm:$0xff]
    %v5758 = vld [vmem:[%s97 + $0xb0] sm:$0xff]
    %v5759 = vld [vmem:[%s97 + $0xb8] sm:$0xff]
    %v5760 = vld [vmem:[%s97 + $0xc0] sm:$0xff]
    %v5761 = vld [vmem:[%s97 + $0xc8] sm:$0xff]
    %v5762 = vld [vmem:[%s97 + $0xd0] sm:$0xff]
    %v5763 = vld [vmem:[%s97 + $0xd8] sm:$0xff]
    %v5764 = vld [vmem:[%s97 + $0xe0] sm:$0xff]
    %v5765 = vld [vmem:[%s97 + $0xe8] sm:$0xff]
    %v5766 = vld [vmem:[%s97 + $0xf0] sm:$0xff]
    %v5767 = vld [vmem:[%s97 + $0xf8] sm:$0xff]
    %v5768 = vld [vmem:[%s97 + $0x100] sm:$0xff]
    %v5769 = vld [vmem:[%s97 + $0x108] sm:$0xff]
    %v5770 = vld [vmem:[%s97 + $0x110] sm:$0xff]
    %v5771 = vld [vmem:[%s97 + $0x118] sm:$0xff]
    %v5772 = vld [vmem:[%s97 + $0x120] sm:$0xff]
    %v5773 = vld [vmem:[%s97 + $0x128] sm:$0xff]
    %v5774 = vld [vmem:[%s97 + $0x130] sm:$0xff]
    %v5775 = vld [vmem:[%s97 + $0x138] sm:$0xff]
    %v5776 = vld [vmem:[%s97 + $0x140] sm:$0xff]
    %v5777 = vld [vmem:[%s97 + $0x148] sm:$0xff]
    %v5778 = vld [vmem:[%s97 + $0x150] sm:$0xff]
    %v5779 = vld [vmem:[%s97 + $0x158] sm:$0xff]
    %v5780 = vld [vmem:[%s97 + $0x160] sm:$0xff]
    %v5781 = vld [vmem:[%s97 + $0x168] sm:$0xff]
    %v5782 = vld [vmem:[%s97 + $0x170] sm:$0xff]
    %v5783 = vld [vmem:[%s97 + $0x178] sm:$0xff]
    %v5784 = vld [vmem:[#allocation22] sm:$0x1]
    %v5786 = vlaneseq
    %v5787 = vshrl.u32 %v5786, 7
    %v5788 = vsub.s32 0, %v5787
    %v5789 = vrot.slane %v5784, %v5788
    %5791 = vmatprep.subr.mxu0 0.0
    %5792 = vmatpush1.msra.mxu0 %v5736
    %5793 = vmatprep.subr.mxu0 0.0
    %5794 = vmatpush1.msra.mxu0 %v5737
    %5795 = vmatprep.subr.mxu0 0.0
    %5796 = vmatpush1.msra.mxu0 %v5738
    %5797 = vmatprep.subr.mxu0 0.0
    %5798 = vmatpush1.msra.mxu0 %v5739
    %5799 = vmatprep.subr.mxu0 0.0
    %5800 = vmatpush1.msra.mxu0 %v5740
    %5801 = vmatprep.subr.mxu0 0.0
    %5802 = vmatpush1.msra.mxu0 %v5741
    %5803 = vmatprep.subr.mxu0 0.0
    %5804 = vmatpush1.msra.mxu0 %v5742
    %5805 = vmatprep.subr.mxu0 0.0
    %5806 = vmatpush1.msra.mxu0 %v5743
    %5807 = vmatprep.subr.mxu0 0.0
    %5808 = vmatpush1.msra.mxu0 %v5744
    %5809 = vmatprep.subr.mxu0 0.0
    %5810 = vmatpush1.msra.mxu0 %v5745
    %5811 = vmatprep.subr.mxu0 0.0
    %5812 = vmatpush1.msra.mxu0 %v5746
    %5813 = vmatprep.subr.mxu0 0.0
    %5814 = vmatpush1.msra.mxu0 %v5747
    %5815 = vmatprep.subr.mxu0 0.0
    %5816 = vmatpush1.msra.mxu0 %v5748
    %5817 = vmatprep.subr.mxu0 0.0
    %5818 = vmatpush1.msra.mxu0 %v5749
    %5819 = vmatprep.subr.mxu0 0.0
    %5820 = vmatpush1.msra.mxu0 %v5750
    %5821 = vmatprep.subr.mxu0 0.0
    %5822 = vmatpush1.msra.mxu0 %v5751
    %5823 = vmatprep.subr.mxu0 0.0
    %5824 = vmatpush1.msra.mxu0 %v5752
    %5825 = vmatprep.subr.mxu0 0.0
    %5826 = vmatpush1.msra.mxu0 %v5753
    %5827 = vmatprep.subr.mxu0 0.0
    %5828 = vmatpush1.msra.mxu0 %v5754
    %5829 = vmatprep.subr.mxu0 0.0
    %5830 = vmatpush1.msra.mxu0 %v5755
    %5831 = vmatprep.subr.mxu0 0.0
    %5832 = vmatpush1.msra.mxu0 %v5756
    %5833 = vmatprep.subr.mxu0 0.0
    %5834 = vmatpush1.msra.mxu0 %v5757
    %5835 = vmatprep.subr.mxu0 0.0
    %5836 = vmatpush1.msra.mxu0 %v5758
    %5837 = vmatprep.subr.mxu0 0.0
    %5838 = vmatpush1.msra.mxu0 %v5759
    %5839 = vmatprep.subr.mxu0 0.0
    %5840 = vmatpush1.msra.mxu0 %v5760
    %5841 = vmatprep.subr.mxu0 0.0
    %5842 = vmatpush1.msra.mxu0 %v5761
    %5843 = vmatprep.subr.mxu0 0.0
    %5844 = vmatpush1.msra.mxu0 %v5762
    %5845 = vmatprep.subr.mxu0 0.0
    %5846 = vmatpush1.msra.mxu0 %v5763
    %5847 = vmatprep.subr.mxu0 0.0
    %5848 = vmatpush1.msra.mxu0 %v5764
    %5849 = vmatprep.subr.mxu0 0.0
    %5850 = vmatpush1.msra.mxu0 %v5765
    %5851 = vmatprep.subr.mxu0 0.0
    %5852 = vmatpush1.msra.mxu0 %v5766
    %5853 = vmatprep.subr.mxu0 0.0
    %5854 = vmatpush1.msra.mxu0 %v5767
    %5855 = vmatprep.mubr.f32.mxu0 %v5584
    %5856 = vmatmul.mubr.f32.gmra.mrb[0].mxu0 %v5653
    %v5857 = vpop.f32.mrb[0].mxu0
    %v5858 = vadd.f32 %v5789, %v5857
    %v5859 = vpop.f32.mrb[0].mxu0
    %5860 = vmatprep.mubr.f32.mxu0 %v5585
    %5861 = vmatmul.mubr.f32.gmra.mrb[0].mxu0 %v5658
    %v5862 = vpop.f32.mrb[0].mxu0
    %v5863 = vadd.f32 %v5789, %v5862
    %v5864 = vpop.f32.mrb[0].mxu0
    %5865 = vdwg.mxu0
    %5866 = vmatprep.subr.mxu0 0.0
    %5867 = vmatpush1.msra.mxu0 %v5768
    %5868 = vmatprep.subr.mxu0 0.0
    %5869 = vmatpush1.msra.mxu0 %v5769
    %5870 = vmatprep.subr.mxu0 0.0
    %5871 = vmatpush1.msra.mxu0 %v5770
    %5872 = vmatprep.subr.mxu0 0.0
    %5873 = vmatpush1.msra.mxu0 %v5771
    %5874 = vmatprep.subr.mxu0 0.0
    %5875 = vmatpush1.msra.mxu0 %v5772
    %5876 = vmatprep.subr.mxu0 0.0
    %5877 = vmatpush1.msra.mxu0 %v5773
    %5878 = vmatprep.subr.mxu0 0.0
    %5879 = vmatpush1.msra.mxu0 %v5774
    %5880 = vmatprep.subr.mxu0 0.0
    %5881 = vmatpush1.msra.mxu0 %v5775
    %5882 = vmatprep.subr.mxu0 0.0
    %5883 = vmatpush1.msra.mxu0 %v5776
    %5884 = vmatprep.subr.mxu0 0.0
    %5885 = vmatpush1.msra.mxu0 %v5777
    %5886 = vmatprep.subr.mxu0 0.0
    %5887 = vmatpush1.msra.mxu0 %v5778
    %5888 = vmatprep.subr.mxu0 0.0
    %5889 = vmatpush1.msra.mxu0 %v5779
    %5890 = vmatprep.subr.mxu0 0.0
    %5891 = vmatpush1.msra.mxu0 %v5780
    %5892 = vmatprep.subr.mxu0 0.0
    %5893 = vmatpush1.msra.mxu0 %v5781
    %5894 = vmatprep.subr.mxu0 0.0
    %5895 = vmatpush1.msra.mxu0 %v5782
    %5896 = vmatprep.subr.mxu0 0.0
    %5897 = vmatpush1.msra.mxu0 %v5783
    %5898 = vmatprep.subr.mxu0 0.0
    %5899 = vmatpush1.msra.mxu0 0.0
    %5900 = vmatprep.subr.mxu0 0.0
    %5901 = vmatpush1.msra.mxu0 0.0
    %5902 = vmatprep.subr.mxu0 0.0
    %5903 = vmatpush1.msra.mxu0 0.0
    %5904 = vmatprep.subr.mxu0 0.0
    %5905 = vmatpush1.msra.mxu0 0.0
    %5906 = vmatprep.subr.mxu0 0.0
    %5907 = vmatpush1.msra.mxu0 0.0
    %5908 = vmatprep.subr.mxu0 0.0
    %5909 = vmatpush1.msra.mxu0 0.0
    %5910 = vmatprep.subr.mxu0 0.0
    %5911 = vmatpush1.msra.mxu0 0.0
    %5912 = vmatprep.subr.mxu0 0.0
    %5913 = vmatpush1.msra.mxu0 0.0
    %5914 = vmatprep.subr.mxu0 0.0
    %5915 = vmatpush1.msra.mxu0 0.0
    %5916 = vmatprep.subr.mxu0 0.0
    %5917 = vmatpush1.msra.mxu0 0.0
    %5918 = vmatprep.subr.mxu0 0.0
    %5919 = vmatpush1.msra.mxu0 0.0
    %5920 = vmatprep.subr.mxu0 0.0
    %5921 = vmatpush1.msra.mxu0 0.0
    %5922 = vmatprep.subr.mxu0 0.0
    %5923 = vmatpush1.msra.mxu0 0.0
    %5924 = vmatprep.subr.mxu0 0.0
    %5925 = vmatpush1.msra.mxu0 0.0
    %5926 = vmatprep.subr.mxu0 0.0
    %5927 = vmatpush1.msra.mxu0 0.0
    %5928 = vmatprep.subr.mxu0 0.0
    %5929 = vmatpush1.msra.mxu0 0.0
    %5930 = vmatprep.mubr.f32.mxu0 0.0
    %5931 = vmatmul.mubr.f32.gmra.mrb[0].mxu0 %v5728
    %v5932 = vpop.f32.mrb[0].mxu0
    %v5933 = vadd.f32 %v5858, %v5932
    %v5934 = vpop.f32.mrb[0].mxu0
    %5935 = vmatprep.mubr.f32.mxu0 0.0
    %5936 = vmatmul.mubr.f32.gmra.mrb[0].mxu0 %v5733
    %v5937 = vpop.f32.mrb[0].mxu0
    %v5938 = vadd.f32 %v5863, %v5937
    %v5939 = vpop.f32.mrb[0].mxu0
    %5940 = vdwg.mxu0
    %v5941 = vadd.f32 %v3222, %v4964
    %v5942 = vadd.f32 %v3223, %v4969
    %v5943 = vadd.f32 %v5941, %v5933
    %v5944 = vadd.f32 %v5942, %v5938
    %v5946 = vsel %vm761, %v5943, 0
    %v5949 = vsel %vm761, %v5944, 0
    %5951 = vmatprep.subr.mxu0 0.0
    %5952 = vmatpush1.msra.mxu0 %v627
    %5953 = vmatprep.subr.mxu0 0.0
    %5954 = vmatpush1.msra.mxu0 %v628
    %5955 = vmatprep.subr.mxu0 0.0
    %5956 = vmatpush1.msra.mxu0 %v629
    %5957 = vmatprep.subr.mxu0 0.0
    %5958 = vmatpush1.msra.mxu0 %v630
    %5959 = vmatprep.subr.mxu0 0.0
    %5960 = vmatpush1.msra.mxu0 0.0
    %5961 = vmatprep.subr.mxu0 0.0
    %5962 = vmatpush1.msra.mxu0 0.0
    %5963 = vmatprep.subr.mxu0 0.0
    %5964 = vmatpush1.msra.mxu0 0.0
    %5965 = vmatprep.subr.mxu0 0.0
    %5966 = vmatpush1.msra.mxu0 0.0
    %5967 = vmatprep.subr.mxu0 0.0
    %5968 = vmatpush1.msra.mxu0 0.0
    %5969 = vmatprep.subr.mxu0 0.0
    %5970 = vmatpush1.msra.mxu0 0.0
    %5971 = vmatprep.subr.mxu0 0.0
    %5972 = vmatpush1.msra.mxu0 0.0
    %5973 = vmatprep.subr.mxu0 0.0
    %5974 = vmatpush1.msra.mxu0 0.0
    %5975 = vmatprep.subr.mxu0 0.0
    %5976 = vmatpush1.msra.mxu0 0.0
    %5977 = vmatprep.subr.mxu0 0.0
    %5978 = vmatpush1.msra.mxu0 0.0
    %5979 = vmatprep.subr.mxu0 0.0
    %5980 = vmatpush1.msra.mxu0 0.0
    %5981 = vmatprep.subr.mxu0 0.0
    %5982 = vmatpush1.msra.mxu0 0.0
    %5983 = vmatprep.subr.mxu0 0.0
    %5984 = vmatpush1.msra.mxu0 0.0
    %5985 = vmatprep.subr.mxu0 0.0
    %5986 = vmatpush1.msra.mxu0 0.0
    %5987 = vmatprep.subr.mxu0 0.0
    %5988 = vmatpush1.msra.mxu0 0.0
    %5989 = vmatprep.subr.mxu0 0.0
    %5990 = vmatpush1.msra.mxu0 0.0
    %5991 = vmatprep.subr.mxu0 0.0
    %5992 = vmatpush1.msra.mxu0 0.0
    %5993 = vmatprep.subr.mxu0 0.0
    %5994 = vmatpush1.msra.mxu0 0.0
    %5995 = vmatprep.subr.mxu0 0.0
    %5996 = vmatpush1.msra.mxu0 0.0
    %5997 = vmatprep.subr.mxu0 0.0
    %5998 = vmatpush1.msra.mxu0 0.0
    %5999 = vmatprep.subr.mxu0 0.0
    %6000 = vmatpush1.msra.mxu0 0.0
    %6001 = vmatprep.subr.mxu0 0.0
    %6002 = vmatpush1.msra.mxu0 0.0
    %6003 = vmatprep.subr.mxu0 0.0
    %6004 = vmatpush1.msra.mxu0 0.0
    %6005 = vmatprep.subr.mxu0 0.0
    %6006 = vmatpush1.msra.mxu0 0.0
    %6007 = vmatprep.subr.mxu0 0.0
    %6008 = vmatpush1.msra.mxu0 0.0
    %6009 = vmatprep.subr.mxu0 0.0
    %6010 = vmatpush1.msra.mxu0 0.0
    %6011 = vmatprep.subr.mxu0 0.0
    %6012 = vmatpush1.msra.mxu0 0.0
    %6013 = vmatprep.subr.mxu0 0.0
    %6014 = vmatpush1.msra.mxu0 0.0
    %6015 = vmatprep.mubr.f32.mxu0 0.0
    %6016 = vmatmul.mubr.f32.gmra.mrb[0].mxu0 %v5946
    %v6017 = vpop.f32.mrb[0].mxu0
    %v6018 = vadd.f32 0.0, %v6017
    %v6019 = vpop.f32.mrb[0].mxu0
    %6020 = vmatprep.mubr.f32.mxu0 0.0
    %6021 = vmatmul.mubr.f32.gmra.mrb[0].mxu0 %v5949
    %v6022 = vpop.f32.mrb[0].mxu0
    %v6023 = vadd.f32 0.0, %v6022
    %v6024 = vpop.f32.mrb[0].mxu0
    %6025 = vdwg.mxu0
    %6026 = vmatprep.subr.mxu0 0.0
    %6027 = vmatpush1.msra.mxu0 %v6018
    %6028 = vmatprep.subr.mxu0 0.0
    %6029 = vmatpush1.msra.mxu0 %v6023
    %6030 = vmatprep.subr.mxu0 0.0
    %6031 = vmatpush1.msra.mxu0 0.0
    %6032 = vmatprep.subr.mxu0 0.0
    %6033 = vmatpush1.msra.mxu0 0.0
    %6034 = vmatprep.subr.mxu0 0.0
    %6035 = vmatpush1.msra.mxu0 0.0
    %6036 = vmatprep.subr.mxu0 0.0
    %6037 = vmatpush1.msra.mxu0 0.0
    %6038 = vmatprep.subr.mxu0 0.0
    %6039 = vmatpush1.msra.mxu0 0.0
    %6040 = vmatprep.subr.mxu0 0.0
    %6041 = vmatpush1.msra.mxu0 0.0
    %6042 = vmatprep.subr.mxu0 0.0
    %6043 = vmatpush1.msra.mxu0 0.0
    %6044 = vmatprep.subr.mxu0 0.0
    %6045 = vmatpush1.msra.mxu0 0.0
    %6046 = vmatprep.subr.mxu0 0.0
    %6047 = vmatpush1.msra.mxu0 0.0
    %6048 = vmatprep.subr.mxu0 0.0
    %6049 = vmatpush1.msra.mxu0 0.0
    %6050 = vmatprep.subr.mxu0 0.0
    %6051 = vmatpush1.msra.mxu0 0.0
    %6052 = vmatprep.subr.mxu0 0.0
    %6053 = vmatpush1.msra.mxu0 0.0
    %6054 = vmatprep.subr.mxu0 0.0
    %6055 = vmatpush1.msra.mxu0 0.0
    %6056 = vmatprep.subr.mxu0 0.0
    %6057 = vmatpush1.msra.mxu0 0.0
    %6058 = vmatprep.subr.mxu0 0.0
    %6059 = vmatpush1.msra.mxu0 0.0
    %6060 = vmatprep.subr.mxu0 0.0
    %6061 = vmatpush1.msra.mxu0 0.0
    %6062 = vmatprep.subr.mxu0 0.0
    %6063 = vmatpush1.msra.mxu0 0.0
    %6064 = vmatprep.subr.mxu0 0.0
    %6065 = vmatpush1.msra.mxu0 0.0
    %6066 = vmatprep.subr.mxu0 0.0
    %6067 = vmatpush1.msra.mxu0 0.0
    %6068 = vmatprep.subr.mxu0 0.0
    %6069 = vmatpush1.msra.mxu0 0.0
    %6070 = vmatprep.subr.mxu0 0.0
    %6071 = vmatpush1.msra.mxu0 0.0
    %6072 = vmatprep.subr.mxu0 0.0
    %6073 = vmatpush1.msra.mxu0 0.0
    %6074 = vmatprep.subr.mxu0 0.0
    %6075 = vmatpush1.msra.mxu0 0.0
    %6076 = vmatprep.subr.mxu0 0.0
    %6077 = vmatpush1.msra.mxu0 0.0
    %6078 = vmatprep.subr.mxu0 0.0
    %6079 = vmatpush1.msra.mxu0 0.0
    %6080 = vmatprep.subr.mxu0 0.0
    %6081 = vmatpush1.msra.mxu0 0.0
    %6082 = vmatprep.subr.mxu0 0.0
    %6083 = vmatpush1.msra.mxu0 0.0
    %6084 = vmatprep.subr.mxu0 0.0
    %6085 = vmatpush1.msra.mxu0 0.0
    %6086 = vmatprep.subr.mxu0 0.0
    %6087 = vmatpush1.msra.mxu0 0.0
    %6088 = vmatprep.subr.mxu0 0.0
    %6089 = vmatpush1.msra.mxu0 0.0
    %6090 = vmatprep.mubr.f32.mxu0 0.0
    %6091 = vmatmul.mubr.f32.gmra.mrb[0].mxu0 %v2962
    %v6092 = vpop.f32.mrb[0].mxu0
    %v6093 = vadd.f32 0.0, %v6092
    %v6094 = vpop.f32.mrb[0].mxu0
    %6095 = vmatprep.mubr.f32.mxu0 0.0
    %6096 = vmatmul.mubr.f32.gmra.mrb[0].mxu0 %v2965
    %v6097 = vpop.f32.mrb[0].mxu0
    %v6098 = vadd.f32 0.0, %v6097
    %v6099 = vpop.f32.mrb[0].mxu0
    %6100 = vdwg.mxu0
    %v6101 = vsub.f32 %v5943, %v6093
    %v6102 = vsub.f32 %v5944, %v6098
    %v6103 = vmul.f32 %v6101, %v6101
    %v6104 = vmul.f32 %v6102, %v6102
    %v6106 = vsel %vm761, %v6103, 0
    %v6109 = vsel %vm761, %v6104, 0
    %6111 = vmatprep.subr.mxu0 0.0
    %6112 = vmatpush1.msra.mxu0 %v627
    %6113 = vmatprep.subr.mxu0 0.0
    %6114 = vmatpush1.msra.mxu0 %v628
    %6115 = vmatprep.subr.mxu0 0.0
    %6116 = vmatpush1.msra.mxu0 %v629
    %6117 = vmatprep.subr.mxu0 0.0
    %6118 = vmatpush1.msra.mxu0 %v630
    %6119 = vmatprep.subr.mxu0 0.0
    %6120 = vmatpush1.msra.mxu0 0.0
    %6121 = vmatprep.subr.mxu0 0.0
    %6122 = vmatpush1.msra.mxu0 0.0
    %6123 = vmatprep.subr.mxu0 0.0
    %6124 = vmatpush1.msra.mxu0 0.0
    %6125 = vmatprep.subr.mxu0 0.0
    %6126 = vmatpush1.msra.mxu0 0.0
    %6127 = vmatprep.subr.mxu0 0.0
    %6128 = vmatpush1.msra.mxu0 0.0
    %6129 = vmatprep.subr.mxu0 0.0
    %6130 = vmatpush1.msra.mxu0 0.0
    %6131 = vmatprep.subr.mxu0 0.0
    %6132 = vmatpush1.msra.mxu0 0.0
    %6133 = vmatprep.subr.mxu0 0.0
    %6134 = vmatpush1.msra.mxu0 0.0
    %6135 = vmatprep.subr.mxu0 0.0
    %6136 = vmatpush1.msra.mxu0 0.0
    %6137 = vmatprep.subr.mxu0 0.0
    %6138 = vmatpush1.msra.mxu0 0.0
    %6139 = vmatprep.subr.mxu0 0.0
    %6140 = vmatpush1.msra.mxu0 0.0
    %6141 = vmatprep.subr.mxu0 0.0
    %6142 = vmatpush1.msra.mxu0 0.0
    %6143 = vmatprep.subr.mxu0 0.0
    %6144 = vmatpush1.msra.mxu0 0.0
    %6145 = vmatprep.subr.mxu0 0.0
    %6146 = vmatpush1.msra.mxu0 0.0
    %6147 = vmatprep.subr.mxu0 0.0
    %6148 = vmatpush1.msra.mxu0 0.0
    %6149 = vmatprep.subr.mxu0 0.0
    %6150 = vmatpush1.msra.mxu0 0.0
    %6151 = vmatprep.subr.mxu0 0.0
    %6152 = vmatpush1.msra.mxu0 0.0
    %6153 = vmatprep.subr.mxu0 0.0
    %6154 = vmatpush1.msra.mxu0 0.0
    %6155 = vmatprep.subr.mxu0 0.0
    %6156 = vmatpush1.msra.mxu0 0.0
    %6157 = vmatprep.subr.mxu0 0.0
    %6158 = vmatpush1.msra.mxu0 0.0
    %6159 = vmatprep.subr.mxu0 0.0
    %6160 = vmatpush1.msra.mxu0 0.0
    %6161 = vmatprep.subr.mxu0 0.0
    %6162 = vmatpush1.msra.mxu0 0.0
    %6163 = vmatprep.subr.mxu0 0.0
    %6164 = vmatpush1.msra.mxu0 0.0
    %6165 = vmatprep.subr.mxu0 0.0
    %6166 = vmatpush1.msra.mxu0 0.0
    %6167 = vmatprep.subr.mxu0 0.0
    %6168 = vmatpush1.msra.mxu0 0.0
    %6169 = vmatprep.subr.mxu0 0.0
    %6170 = vmatpush1.msra.mxu0 0.0
    %6171 = vmatprep.subr.mxu0 0.0
    %6172 = vmatpush1.msra.mxu0 0.0
    %6173 = vmatprep.subr.mxu0 0.0
    %6174 = vmatpush1.msra.mxu0 0.0
    %6175 = vmatprep.mubr.f32.mxu0 0.0
    %6176 = vmatmul.mubr.f32.gmra.mrb[0].mxu0 %v6106
    %v6177 = vpop.f32.mrb[0].mxu0
    %v6178 = vadd.f32 0.0, %v6177
    %v6179 = vpop.f32.mrb[0].mxu0
    %6180 = vmatprep.mubr.f32.mxu0 0.0
    %6181 = vmatmul.mubr.f32.gmra.mrb[0].mxu0 %v6109
    %v6182 = vpop.f32.mrb[0].mxu0
    %v6183 = vadd.f32 0.0, %v6182
    %v6184 = vpop.f32.mrb[0].mxu0
    %6185 = vdwg.mxu0
    %6186 = vmatprep.subr.mxu0 0.0
    %6187 = vmatpush1.msra.mxu0 %v6178
    %6188 = vmatprep.subr.mxu0 0.0
    %6189 = vmatpush1.msra.mxu0 %v6183
    %6190 = vmatprep.subr.mxu0 0.0
    %6191 = vmatpush1.msra.mxu0 0.0
    %6192 = vmatprep.subr.mxu0 0.0
    %6193 = vmatpush1.msra.mxu0 0.0
    %6194 = vmatprep.subr.mxu0 0.0
    %6195 = vmatpush1.msra.mxu0 0.0
    %6196 = vmatprep.subr.mxu0 0.0
    %6197 = vmatpush1.msra.mxu0 0.0
    %6198 = vmatprep.subr.mxu0 0.0
    %6199 = vmatpush1.msra.mxu0 0.0
    %6200 = vmatprep.subr.mxu0 0.0
    %6201 = vmatpush1.msra.mxu0 0.0
    %6202 = vmatprep.subr.mxu0 0.0
    %6203 = vmatpush1.msra.mxu0 0.0
    %6204 = vmatprep.subr.mxu0 0.0
    %6205 = vmatpush1.msra.mxu0 0.0
    %6206 = vmatprep.subr.mxu0 0.0
    %6207 = vmatpush1.msra.mxu0 0.0
    %6208 = vmatprep.subr.mxu0 0.0
    %6209 = vmatpush1.msra.mxu0 0.0
    %6210 = vmatprep.subr.mxu0 0.0
    %6211 = vmatpush1.msra.mxu0 0.0
    %6212 = vmatprep.subr.mxu0 0.0
    %6213 = vmatpush1.msra.mxu0 0.0
    %6214 = vmatprep.subr.mxu0 0.0
    %6215 = vmatpush1.msra.mxu0 0.0
    %6216 = vmatprep.subr.mxu0 0.0
    %6217 = vmatpush1.msra.mxu0 0.0
    %6218 = vmatprep.subr.mxu0 0.0
    %6219 = vmatpush1.msra.mxu0 0.0
    %6220 = vmatprep.subr.mxu0 0.0
    %6221 = vmatpush1.msra.mxu0 0.0
    %6222 = vmatprep.subr.mxu0 0.0
    %6223 = vmatpush1.msra.mxu0 0.0
    %6224 = vmatprep.subr.mxu0 0.0
    %6225 = vmatpush1.msra.mxu0 0.0
    %6226 = vmatprep.subr.mxu0 0.0
    %6227 = vmatpush1.msra.mxu0 0.0
    %6228 = vmatprep.subr.mxu0 0.0
    %6229 = vmatpush1.msra.mxu0 0.0
    %6230 = vmatprep.subr.mxu0 0.0
    %6231 = vmatpush1.msra.mxu0 0.0
    %6232 = vmatprep.subr.mxu0 0.0
    %6233 = vmatpush1.msra.mxu0 0.0
    %6234 = vmatprep.subr.mxu0 0.0
    %6235 = vmatpush1.msra.mxu0 0.0
    %6236 = vmatprep.subr.mxu0 0.0
    %6237 = vmatpush1.msra.mxu0 0.0
    %6238 = vmatprep.subr.mxu0 0.0
    %6239 = vmatpush1.msra.mxu0 0.0
    %6240 = vmatprep.subr.mxu0 0.0
    %6241 = vmatpush1.msra.mxu0 0.0
    %6242 = vmatprep.subr.mxu0 0.0
    %6243 = vmatpush1.msra.mxu0 0.0
    %6244 = vmatprep.subr.mxu0 0.0
    %6245 = vmatpush1.msra.mxu0 0.0
    %6246 = vmatprep.subr.mxu0 0.0
    %6247 = vmatpush1.msra.mxu0 0.0
    %6248 = vmatprep.subr.mxu0 0.0
    %6249 = vmatpush1.msra.mxu0 0.0
    %6250 = vmatprep.mubr.f32.mxu0 0.0
    %6251 = vmatmul.mubr.f32.gmra.mrb[0].mxu0 %v2962
    %v6252 = vpop.f32.mrb[0].mxu0
    %v6253 = vadd.f32 1e-05, %v6252
    %v6254 = vpop.f32.mrb[0].mxu0
    %6255 = vmatprep.mubr.f32.mxu0 0.0
    %6256 = vmatmul.mubr.f32.gmra.mrb[0].mxu0 %v2965
    %v6257 = vpop.f32.mrb[0].mxu0
    %v6258 = vadd.f32 1e-05, %v6257
    %v6259 = vpop.f32.mrb[0].mxu0
    %6260 = vdwg.mxu0
    %v6261 = vrsqrt.pop %v6253
    %v6262 = vrsqrt.pop %v6258
    %v6263 = vmul.f32 %v6101, %v6261
    %v6264 = vmul.f32 %v6102, %v6262
    %v6265 = vld [vmem:[#allocation26] sm:$0x1]
    %v6267 = vlaneseq
    %v6268 = vshrl.u32 %v6267, 7
    %v6269 = vsub.s32 0, %v6268
    %v6270 = vrot.slane %v6265, %v6269
    %v6272 = vmul.f32 %v6263, %v6270
    %v6273 = vmul.f32 %v6264, %v6270
    %v6274 = vld [vmem:[#allocation28] sm:$0x1]
    %v6276 = vlaneseq
    %v6277 = vshrl.u32 %v6276, 7
    %v6278 = vsub.s32 0, %v6277
    %v6279 = vrot.slane %v6274, %v6278
    %v6281 = vadd.f32 %v6272, %v6279
    %v6282 = vadd.f32 %v6273, %v6279
    %v6283 = vadd.f32 %v3225, %v6281
    %v6284 = vadd.f32 %v3226, %v6282
    %v6285 = vmin.f32 %v6283, 20.0
    %v6286 = vmin.f32 %v6284, 20.0
    %v6287 = vmul.f32 %v6285, 1.442695
    %v6288 = vpow.pop %v6287
    %v6289 = vmul.f32 %v6286, 1.442695
    %v6290 = vpow.pop %v6289
    %v6291 = vadd.f32 %v6288, 2.0
    %v6292 = vadd.f32 %v6290, 2.0
    %v6293 = vmul.f32 %v6288, %v6291
    %v6294 = vmul.f32 %v6290, %v6292
    %v6295 = vadd.f32 %v6293, 2.0
    %v6296 = vadd.f32 %v6294, 2.0
    %v6297 = vrcp.pop %v6295
    %v6298 = vmul.f32 %v6293, %v6297
    %v6299 = vrcp.pop %v6296
    %v6300 = vmul.f32 %v6294, %v6299
    %v6301 = vmul.f32 %v6283, %v6298
    %v6302 = vmul.f32 %v6284, %v6300
    %v6304 = vsel %vm761, %v6301, 0
    %v6307 = vsel %vm761, %v6302, 0
    %6309 = vmatprep.subr.mxu0 0.0
    %6310 = vmatpush1.msra.mxu0 %v627
    %6311 = vmatprep.subr.mxu0 0.0
    %6312 = vmatpush1.msra.mxu0 %v628
    %6313 = vmatprep.subr.mxu0 0.0
    %6314 = vmatpush1.msra.mxu0 %v629
    %6315 = vmatprep.subr.mxu0 0.0
    %6316 = vmatpush1.msra.mxu0 %v630
    %6317 = vmatprep.subr.mxu0 0.0
    %6318 = vmatpush1.msra.mxu0 0.0
    %6319 = vmatprep.subr.mxu0 0.0
    %6320 = vmatpush1.msra.mxu0 0.0
    %6321 = vmatprep.subr.mxu0 0.0
    %6322 = vmatpush1.msra.mxu0 0.0
    %6323 = vmatprep.subr.mxu0 0.0
    %6324 = vmatpush1.msra.mxu0 0.0
    %6325 = vmatprep.subr.mxu0 0.0
    %6326 = vmatpush1.msra.mxu0 0.0
    %6327 = vmatprep.subr.mxu0 0.0
    %6328 = vmatpush1.msra.mxu0 0.0
    %6329 = vmatprep.subr.mxu0 0.0
    %6330 = vmatpush1.msra.mxu0 0.0
    %6331 = vmatprep.subr.mxu0 0.0
    %6332 = vmatpush1.msra.mxu0 0.0
    %6333 = vmatprep.subr.mxu0 0.0
    %6334 = vmatpush1.msra.mxu0 0.0
    %6335 = vmatprep.subr.mxu0 0.0
    %6336 = vmatpush1.msra.mxu0 0.0
    %6337 = vmatprep.subr.mxu0 0.0
    %6338 = vmatpush1.msra.mxu0 0.0
    %6339 = vmatprep.subr.mxu0 0.0
    %6340 = vmatpush1.msra.mxu0 0.0
    %6341 = vmatprep.subr.mxu0 0.0
    %6342 = vmatpush1.msra.mxu0 0.0
    %6343 = vmatprep.subr.mxu0 0.0
    %6344 = vmatpush1.msra.mxu0 0.0
    %6345 = vmatprep.subr.mxu0 0.0
    %6346 = vmatpush1.msra.mxu0 0.0
    %6347 = vmatprep.subr.mxu0 0.0
    %6348 = vmatpush1.msra.mxu0 0.0
    %6349 = vmatprep.subr.mxu0 0.0
    %6350 = vmatpush1.msra.mxu0 0.0
    %6351 = vmatprep.subr.mxu0 0.0
    %6352 = vmatpush1.msra.mxu0 0.0
    %6353 = vmatprep.subr.mxu0 0.0
    %6354 = vmatpush1.msra.mxu0 0.0
    %6355 = vmatprep.subr.mxu0 0.0
    %6356 = vmatpush1.msra.mxu0 0.0
    %6357 = vmatprep.subr.mxu0 0.0
    %6358 = vmatpush1.msra.mxu0 0.0
    %6359 = vmatprep.subr.mxu0 0.0
    %6360 = vmatpush1.msra.mxu0 0.0
    %6361 = vmatprep.subr.mxu0 0.0
    %6362 = vmatpush1.msra.mxu0 0.0
    %6363 = vmatprep.subr.mxu0 0.0
    %6364 = vmatpush1.msra.mxu0 0.0
    %6365 = vmatprep.subr.mxu0 0.0
    %6366 = vmatpush1.msra.mxu0 0.0
    %6367 = vmatprep.subr.mxu0 0.0
    %6368 = vmatpush1.msra.mxu0 0.0
    %6369 = vmatprep.subr.mxu0 0.0
    %6370 = vmatpush1.msra.mxu0 0.0
    %6371 = vmatprep.subr.mxu0 0.0
    %6372 = vmatpush1.msra.mxu0 0.0
    %6373 = vmatprep.mubr.f32.mxu0 0.0
    %6374 = vmatmul.mubr.f32.gmra.mrb[0].mxu0 %v6304
    %v6375 = vpop.f32.mrb[0].mxu0
    %v6376 = vadd.f32 0.0, %v6375
    %v6377 = vpop.f32.mrb[0].mxu0
    %6378 = vmatprep.mubr.f32.mxu0 0.0
    %6379 = vmatmul.mubr.f32.gmra.mrb[0].mxu0 %v6307
    %v6380 = vpop.f32.mrb[0].mxu0
    %v6381 = vadd.f32 0.0, %v6380
    %v6382 = vpop.f32.mrb[0].mxu0
    %6383 = vdwg.mxu0
    %6384 = vmatprep.subr.mxu0 0.0
    %6385 = vmatpush1.msra.mxu0 %v6376
    %6386 = vmatprep.subr.mxu0 0.0
    %6387 = vmatpush1.msra.mxu0 %v6381
    %6388 = vmatprep.subr.mxu0 0.0
    %6389 = vmatpush1.msra.mxu0 0.0
    %6390 = vmatprep.subr.mxu0 0.0
    %6391 = vmatpush1.msra.mxu0 0.0
    %6392 = vmatprep.subr.mxu0 0.0
    %6393 = vmatpush1.msra.mxu0 0.0
    %6394 = vmatprep.subr.mxu0 0.0
    %6395 = vmatpush1.msra.mxu0 0.0
    %6396 = vmatprep.subr.mxu0 0.0
    %6397 = vmatpush1.msra.mxu0 0.0
    %6398 = vmatprep.subr.mxu0 0.0
    %6399 = vmatpush1.msra.mxu0 0.0
    %6400 = vmatprep.subr.mxu0 0.0
    %6401 = vmatpush1.msra.mxu0 0.0
    %6402 = vmatprep.subr.mxu0 0.0
    %6403 = vmatpush1.msra.mxu0 0.0
    %6404 = vmatprep.subr.mxu0 0.0
    %6405 = vmatpush1.msra.mxu0 0.0
    %6406 = vmatprep.subr.mxu0 0.0
    %6407 = vmatpush1.msra.mxu0 0.0
    %6408 = vmatprep.subr.mxu0 0.0
    %6409 = vmatpush1.msra.mxu0 0.0
    %6410 = vmatprep.subr.mxu0 0.0
    %6411 = vmatpush1.msra.mxu0 0.0
    %6412 = vmatprep.subr.mxu0 0.0
    %6413 = vmatpush1.msra.mxu0 0.0
    %6414 = vmatprep.subr.mxu0 0.0
    %6415 = vmatpush1.msra.mxu0 0.0
    %6416 = vmatprep.subr.mxu0 0.0
    %6417 = vmatpush1.msra.mxu0 0.0
    %6418 = vmatprep.subr.mxu0 0.0
    %6419 = vmatpush1.msra.mxu0 0.0
    %6420 = vmatprep.subr.mxu0 0.0
    %6421 = vmatpush1.msra.mxu0 0.0
    %6422 = vmatprep.subr.mxu0 0.0
    %6423 = vmatpush1.msra.mxu0 0.0
    %6424 = vmatprep.subr.mxu0 0.0
    %6425 = vmatpush1.msra.mxu0 0.0
    %6426 = vmatprep.subr.mxu0 0.0
    %6427 = vmatpush1.msra.mxu0 0.0
    %6428 = vmatprep.subr.mxu0 0.0
    %6429 = vmatpush1.msra.mxu0 0.0
    %6430 = vmatprep.subr.mxu0 0.0
    %6431 = vmatpush1.msra.mxu0 0.0
    %6432 = vmatprep.subr.mxu0 0.0
    %6433 = vmatpush1.msra.mxu0 0.0
    %6434 = vmatprep.subr.mxu0 0.0
    %6435 = vmatpush1.msra.mxu0 0.0
    %6436 = vmatprep.subr.mxu0 0.0
    %6437 = vmatpush1.msra.mxu0 0.0
    %6438 = vmatprep.subr.mxu0 0.0
    %6439 = vmatpush1.msra.mxu0 0.0
    %6440 = vmatprep.subr.mxu0 0.0
    %6441 = vmatpush1.msra.mxu0 0.0
    %6442 = vmatprep.subr.mxu0 0.0
    %6443 = vmatpush1.msra.mxu0 0.0
    %6444 = vmatprep.subr.mxu0 0.0
    %6445 = vmatpush1.msra.mxu0 0.0
    %6446 = vmatprep.subr.mxu0 0.0
    %6447 = vmatpush1.msra.mxu0 0.0
    %6448 = vmatprep.mubr.f32.mxu0 0.0
    %6449 = vmatmul.mubr.f32.gmra.mrb[0].mxu0 %v2962
    %v6450 = vpop.f32.mrb[0].mxu0
    %v6451 = vadd.f32 0.0, %v6450
    %v6452 = vpop.f32.mrb[0].mxu0
    %6453 = vmatprep.mubr.f32.mxu0 0.0
    %6454 = vmatmul.mubr.f32.gmra.mrb[0].mxu0 %v2965
    %v6455 = vpop.f32.mrb[0].mxu0
    %v6456 = vadd.f32 0.0, %v6455
    %v6457 = vpop.f32.mrb[0].mxu0
    %6458 = vdwg.mxu0
    %v6459 = vsub.f32 %v6301, %v6451
    %v6460 = vsub.f32 %v6302, %v6456
    %v6461 = vmul.f32 %v6459, %v6459
    %v6462 = vmul.f32 %v6460, %v6460
    %v6464 = vsel %vm761, %v6461, 0
    %v6467 = vsel %vm761, %v6462, 0
    %6469 = vmatprep.subr.mxu0 0.0
    %6470 = vmatpush1.msra.mxu0 %v627
    %6471 = vmatprep.subr.mxu0 0.0
    %6472 = vmatpush1.msra.mxu0 %v628
    %6473 = vmatprep.subr.mxu0 0.0
    %6474 = vmatpush1.msra.mxu0 %v629
    %6475 = vmatprep.subr.mxu0 0.0
    %6476 = vmatpush1.msra.mxu0 %v630
    %6477 = vmatprep.subr.mxu0 0.0
    %6478 = vmatpush1.msra.mxu0 0.0
    %6479 = vmatprep.subr.mxu0 0.0
    %6480 = vmatpush1.msra.mxu0 0.0
    %6481 = vmatprep.subr.mxu0 0.0
    %6482 = vmatpush1.msra.mxu0 0.0
    %6483 = vmatprep.subr.mxu0 0.0
    %6484 = vmatpush1.msra.mxu0 0.0
    %6485 = vmatprep.subr.mxu0 0.0
    %6486 = vmatpush1.msra.mxu0 0.0
    %6487 = vmatprep.subr.mxu0 0.0
    %6488 = vmatpush1.msra.mxu0 0.0
    %6489 = vmatprep.subr.mxu0 0.0
    %6490 = vmatpush1.msra.mxu0 0.0
    %6491 = vmatprep.subr.mxu0 0.0
    %6492 = vmatpush1.msra.mxu0 0.0
    %6493 = vmatprep.subr.mxu0 0.0
    %6494 = vmatpush1.msra.mxu0 0.0
    %6495 = vmatprep.subr.mxu0 0.0
    %6496 = vmatpush1.msra.mxu0 0.0
    %6497 = vmatprep.subr.mxu0 0.0
    %6498 = vmatpush1.msra.mxu0 0.0
    %6499 = vmatprep.subr.mxu0 0.0
    %6500 = vmatpush1.msra.mxu0 0.0
    %6501 = vmatprep.subr.mxu0 0.0
    %6502 = vmatpush1.msra.mxu0 0.0
    %6503 = vmatprep.subr.mxu0 0.0
    %6504 = vmatpush1.msra.mxu0 0.0
    %6505 = vmatprep.subr.mxu0 0.0
    %6506 = vmatpush1.msra.mxu0 0.0
    %6507 = vmatprep.subr.mxu0 0.0
    %6508 = vmatpush1.msra.mxu0 0.0
    %6509 = vmatprep.subr.mxu0 0.0
    %6510 = vmatpush1.msra.mxu0 0.0
    %6511 = vmatprep.subr.mxu0 0.0
    %6512 = vmatpush1.msra.mxu0 0.0
    %6513 = vmatprep.subr.mxu0 0.0
    %6514 = vmatpush1.msra.mxu0 0.0
    %6515 = vmatprep.subr.mxu0 0.0
    %6516 = vmatpush1.msra.mxu0 0.0
    %6517 = vmatprep.subr.mxu0 0.0
    %6518 = vmatpush1.msra.mxu0 0.0
    %6519 = vmatprep.subr.mxu0 0.0
    %6520 = vmatpush1.msra.mxu0 0.0
    %6521 = vmatprep.subr.mxu0 0.0
    %6522 = vmatpush1.msra.mxu0 0.0
    %6523 = vmatprep.subr.mxu0 0.0
    %6524 = vmatpush1.msra.mxu0 0.0
    %6525 = vmatprep.subr.mxu0 0.0
    %6526 = vmatpush1.msra.mxu0 0.0
    %6527 = vmatprep.subr.mxu0 0.0
    %6528 = vmatpush1.msra.mxu0 0.0
    %6529 = vmatprep.subr.mxu0 0.0
    %6530 = vmatpush1.msra.mxu0 0.0
    %6531 = vmatprep.subr.mxu0 0.0
    %6532 = vmatpush1.msra.mxu0 0.0
    %6533 = vmatprep.mubr.f32.mxu0 0.0
    %6534 = vmatmul.mubr.f32.gmra.mrb[0].mxu0 %v6464
    %v6535 = vpop.f32.mrb[0].mxu0
    %v6536 = vadd.f32 0.0, %v6535
    %v6537 = vpop.f32.mrb[0].mxu0
    %6538 = vmatprep.mubr.f32.mxu0 0.0
    %6539 = vmatmul.mubr.f32.gmra.mrb[0].mxu0 %v6467
    %v6540 = vpop.f32.mrb[0].mxu0
    %v6541 = vadd.f32 0.0, %v6540
    %v6542 = vpop.f32.mrb[0].mxu0
    %6543 = vdwg.mxu0
    %6544 = vmatprep.subr.mxu0 0.0
    %6545 = vmatpush1.msra.mxu0 %v6536
    %6546 = vmatprep.subr.mxu0 0.0
    %6547 = vmatpush1.msra.mxu0 %v6541
    %6548 = vmatprep.subr.mxu0 0.0
    %6549 = vmatpush1.msra.mxu0 0.0
    %6550 = vmatprep.subr.mxu0 0.0
    %6551 = vmatpush1.msra.mxu0 0.0
    %6552 = vmatprep.subr.mxu0 0.0
    %6553 = vmatpush1.msra.mxu0 0.0
    %6554 = vmatprep.subr.mxu0 0.0
    %6555 = vmatpush1.msra.mxu0 0.0
    %6556 = vmatprep.subr.mxu0 0.0
    %6557 = vmatpush1.msra.mxu0 0.0
    %6558 = vmatprep.subr.mxu0 0.0
    %6559 = vmatpush1.msra.mxu0 0.0
    %6560 = vmatprep.subr.mxu0 0.0
    %6561 = vmatpush1.msra.mxu0 0.0
    %6562 = vmatprep.subr.mxu0 0.0
    %6563 = vmatpush1.msra.mxu0 0.0
    %6564 = vmatprep.subr.mxu0 0.0
    %6565 = vmatpush1.msra.mxu0 0.0
    %6566 = vmatprep.subr.mxu0 0.0
    %6567 = vmatpush1.msra.mxu0 0.0
    %6568 = vmatprep.subr.mxu0 0.0
    %6569 = vmatpush1.msra.mxu0 0.0
    %6570 = vmatprep.subr.mxu0 0.0
    %6571 = vmatpush1.msra.mxu0 0.0
    %6572 = vmatprep.subr.mxu0 0.0
    %6573 = vmatpush1.msra.mxu0 0.0
    %6574 = vmatprep.subr.mxu0 0.0
    %6575 = vmatpush1.msra.mxu0 0.0
    %6576 = vmatprep.subr.mxu0 0.0
    %6577 = vmatpush1.msra.mxu0 0.0
    %6578 = vmatprep.subr.mxu0 0.0
    %6579 = vmatpush1.msra.mxu0 0.0
    %6580 = vmatprep.subr.mxu0 0.0
    %6581 = vmatpush1.msra.mxu0 0.0
    %6582 = vmatprep.subr.mxu0 0.0
    %6583 = vmatpush1.msra.mxu0 0.0
    %6584 = vmatprep.subr.mxu0 0.0
    %6585 = vmatpush1.msra.mxu0 0.0
    %6586 = vmatprep.subr.mxu0 0.0
    %6587 = vmatpush1.msra.mxu0 0.0
    %6588 = vmatprep.subr.mxu0 0.0
    %6589 = vmatpush1.msra.mxu0 0.0
    %6590 = vmatprep.subr.mxu0 0.0
    %6591 = vmatpush1.msra.mxu0 0.0
    %6592 = vmatprep.subr.mxu0 0.0
    %6593 = vmatpush1.msra.mxu0 0.0
    %6594 = vmatprep.subr.mxu0 0.0
    %6595 = vmatpush1.msra.mxu0 0.0
    %6596 = vmatprep.subr.mxu0 0.0
    %6597 = vmatpush1.msra.mxu0 0.0
    %6598 = vmatprep.subr.mxu0 0.0
    %6599 = vmatpush1.msra.mxu0 0.0
    %6600 = vmatprep.subr.mxu0 0.0
    %6601 = vmatpush1.msra.mxu0 0.0
    %6602 = vmatprep.subr.mxu0 0.0
    %6603 = vmatpush1.msra.mxu0 0.0
    %6604 = vmatprep.subr.mxu0 0.0
    %6605 = vmatpush1.msra.mxu0 0.0
    %6606 = vmatprep.subr.mxu0 0.0
    %6607 = vmatpush1.msra.mxu0 0.0
    %6608 = vmatprep.mubr.f32.mxu0 0.0
    %6609 = vmatmul.mubr.f32.gmra.mrb[0].mxu0 %v2962
    %v6610 = vpop.f32.mrb[0].mxu0
    %v6611 = vadd.f32 1e-05, %v6610
    %v6612 = vpop.f32.mrb[0].mxu0
    %6613 = vmatprep.mubr.f32.mxu0 0.0
    %6614 = vmatmul.mubr.f32.gmra.mrb[0].mxu0 %v2965
    %v6615 = vpop.f32.mrb[0].mxu0
    %v6616 = vadd.f32 1e-05, %v6615
    %v6617 = vpop.f32.mrb[0].mxu0
    %6618 = vdwg.mxu0
    %v6619 = vrsqrt.pop %v6611
    %v6620 = vrsqrt.pop %v6616
    %v6621 = vmul.f32 %v6459, %v6619
    %v6622 = vmul.f32 %v6460, %v6620
    %v6623 = vld [vmem:[#allocation29] sm:$0x1]
    %v6625 = vlaneseq
    %v6626 = vshrl.u32 %v6625, 7
    %v6627 = vsub.s32 0, %v6626
    %v6628 = vrot.slane %v6623, %v6627
    %v6630 = vmul.f32 %v6621, %v6628
    %v6631 = vmul.f32 %v6622, %v6628
    %v6632 = vld [vmem:[#allocation31] sm:$0x1]
    %v6634 = vlaneseq
    %v6635 = vshrl.u32 %v6634, 7
    %v6636 = vsub.s32 0, %v6635
    %v6637 = vrot.slane %v6632, %v6636
    %v6639 = vadd.f32 %v6630, %v6637
    %v6640 = vadd.f32 %v6631, %v6637
    %6641 = vmatprep.subr.mxu0 0.0
    %6642 = vmatpush1.msra.mxu0 %v4735
    %6643 = vmatprep.subr.mxu0 0.0
    %6644 = vmatpush1.msra.mxu0 0.0
    %6645 = vmatprep.subr.mxu0 0.0
    %6646 = vmatpush1.msra.mxu0 0.0
    %6647 = vmatprep.subr.mxu0 0.0
    %6648 = vmatpush1.msra.mxu0 0.0
    %6649 = vmatprep.subr.mxu0 0.0
    %6650 = vmatpush1.msra.mxu0 0.0
    %6651 = vmatprep.subr.mxu0 0.0
    %6652 = vmatpush1.msra.mxu0 0.0
    %6653 = vmatprep.subr.mxu0 0.0
    %6654 = vmatpush1.msra.mxu0 0.0
    %6655 = vmatprep.subr.mxu0 0.0
    %6656 = vmatpush1.msra.mxu0 0.0
    %6657 = vmatprep.subr.mxu0 0.0
    %6658 = vmatpush1.msra.mxu0 0.0
    %6659 = vmatprep.subr.mxu0 0.0
    %6660 = vmatpush1.msra.mxu0 0.0
    %6661 = vmatprep.subr.mxu0 0.0
    %6662 = vmatpush1.msra.mxu0 0.0
    %6663 = vmatprep.subr.mxu0 0.0
    %6664 = vmatpush1.msra.mxu0 0.0
    %6665 = vmatprep.subr.mxu0 0.0
    %6666 = vmatpush1.msra.mxu0 0.0
    %6667 = vmatprep.subr.mxu0 0.0
    %6668 = vmatpush1.msra.mxu0 0.0
    %6669 = vmatprep.subr.mxu0 0.0
    %6670 = vmatpush1.msra.mxu0 0.0
    %6671 = vmatprep.subr.mxu0 0.0
    %6672 = vmatpush1.msra.mxu0 0.0
    %6673 = vmatprep.subr.mxu0 0.0
    %6674 = vmatpush1.msra.mxu0 0.0
    %6675 = vmatprep.subr.mxu0 0.0
    %6676 = vmatpush1.msra.mxu0 0.0
    %6677 = vmatprep.subr.mxu0 0.0
    %6678 = vmatpush1.msra.mxu0 0.0
    %6679 = vmatprep.subr.mxu0 0.0
    %6680 = vmatpush1.msra.mxu0 0.0
    %6681 = vmatprep.subr.mxu0 0.0
    %6682 = vmatpush1.msra.mxu0 0.0
    %6683 = vmatprep.subr.mxu0 0.0
    %6684 = vmatpush1.msra.mxu0 0.0
    %6685 = vmatprep.subr.mxu0 0.0
    %6686 = vmatpush1.msra.mxu0 0.0
    %6687 = vmatprep.subr.mxu0 0.0
    %6688 = vmatpush1.msra.mxu0 0.0
    %6689 = vmatprep.subr.mxu0 0.0
    %6690 = vmatpush1.msra.mxu0 0.0
    %6691 = vmatprep.subr.mxu0 0.0
    %6692 = vmatpush1.msra.mxu0 0.0
    %6693 = vmatprep.subr.mxu0 0.0
    %6694 = vmatpush1.msra.mxu0 0.0
    %6695 = vmatprep.subr.mxu0 0.0
    %6696 = vmatpush1.msra.mxu0 0.0
    %6697 = vmatprep.subr.mxu0 0.0
    %6698 = vmatpush1.msra.mxu0 0.0
    %6699 = vmatprep.subr.mxu0 0.0
    %6700 = vmatpush1.msra.mxu0 0.0
    %6701 = vmatprep.subr.mxu0 0.0
    %6702 = vmatpush1.msra.mxu0 0.0
    %6703 = vmatprep.subr.mxu0 0.0
    %6704 = vmatpush1.msra.mxu0 0.0
    %6705 = vmatprep.mubr.f32.mxu0 0.0
    %6706 = vmatmul.mubr.f32.gmra.mrb[0].mxu0 %v887
    %v6707 = vpop.f32.mrb[0].mxu0
    %v6708 = vadd.f32 0.0, %v6707
    %v6709 = vpop.f32.mrb[0].mxu0
    %6710 = vdwg.mxu0
    %6711 = vmatprep.subr.mxu0 0.0
    %6712 = vmatpush1.msra.mxu0 %v4735
    %6713 = vmatprep.subr.mxu0 0.0
    %6714 = vmatpush1.msra.mxu0 0.0
    %6715 = vmatprep.subr.mxu0 0.0
    %6716 = vmatpush1.msra.mxu0 0.0
    %6717 = vmatprep.subr.mxu0 0.0
    %6718 = vmatpush1.msra.mxu0 0.0
    %6719 = vmatprep.subr.mxu0 0.0
    %6720 = vmatpush1.msra.mxu0 0.0
    %6721 = vmatprep.subr.mxu0 0.0
    %6722 = vmatpush1.msra.mxu0 0.0
    %6723 = vmatprep.subr.mxu0 0.0
    %6724 = vmatpush1.msra.mxu0 0.0
    %6725 = vmatprep.subr.mxu0 0.0
    %6726 = vmatpush1.msra.mxu0 0.0
    %6727 = vmatprep.subr.mxu0 0.0
    %6728 = vmatpush1.msra.mxu0 0.0
    %6729 = vmatprep.subr.mxu0 0.0
    %6730 = vmatpush1.msra.mxu0 0.0
    %6731 = vmatprep.subr.mxu0 0.0
    %6732 = vmatpush1.msra.mxu0 0.0
    %6733 = vmatprep.subr.mxu0 0.0
    %6734 = vmatpush1.msra.mxu0 0.0
    %6735 = vmatprep.subr.mxu0 0.0
    %6736 = vmatpush1.msra.mxu0 0.0
    %6737 = vmatprep.subr.mxu0 0.0
    %6738 = vmatpush1.msra.mxu0 0.0
    %6739 = vmatprep.subr.mxu0 0.0
    %6740 = vmatpush1.msra.mxu0 0.0
    %6741 = vmatprep.subr.mxu0 0.0
    %6742 = vmatpush1.msra.mxu0 0.0
    %6743 = vmatprep.subr.mxu0 0.0
    %6744 = vmatpush1.msra.mxu0 0.0
    %6745 = vmatprep.subr.mxu0 0.0
    %6746 = vmatpush1.msra.mxu0 0.0
    %6747 = vmatprep.subr.mxu0 0.0
    %6748 = vmatpush1.msra.mxu0 0.0
    %6749 = vmatprep.subr.mxu0 0.0
    %6750 = vmatpush1.msra.mxu0 0.0
    %6751 = vmatprep.subr.mxu0 0.0
    %6752 = vmatpush1.msra.mxu0 0.0
    %6753 = vmatprep.subr.mxu0 0.0
    %6754 = vmatpush1.msra.mxu0 0.0
    %6755 = vmatprep.subr.mxu0 0.0
    %6756 = vmatpush1.msra.mxu0 0.0
    %6757 = vmatprep.subr.mxu0 0.0
    %6758 = vmatpush1.msra.mxu0 0.0
    %6759 = vmatprep.subr.mxu0 0.0
    %6760 = vmatpush1.msra.mxu0 0.0
    %6761 = vmatprep.subr.mxu0 0.0
    %6762 = vmatpush1.msra.mxu0 0.0
    %6763 = vmatprep.subr.mxu0 0.0
    %6764 = vmatpush1.msra.mxu0 0.0
    %6765 = vmatprep.subr.mxu0 0.0
    %6766 = vmatpush1.msra.mxu0 0.0
    %6767 = vmatprep.subr.mxu0 0.0
    %6768 = vmatpush1.msra.mxu0 0.0
    %6769 = vmatprep.subr.mxu0 0.0
    %6770 = vmatpush1.msra.mxu0 0.0
    %6771 = vmatprep.subr.mxu0 0.0
    %6772 = vmatpush1.msra.mxu0 0.0
    %6773 = vmatprep.subr.mxu0 0.0
    %6774 = vmatpush1.msra.mxu0 0.0
    %6775 = vmatprep.mubr.f32.mxu0 0.0
    %6776 = vmatmul.mubr.f32.gmra.mrb[0].mxu0 %v960
    %v6777 = vpop.f32.mrb[0].mxu0
    %v6778 = vadd.f32 0.0, %v6777
    %v6779 = vpop.f32.mrb[0].mxu0
    %6780 = vdwg.mxu0
    %6782 = vrot.lane.b32.xlu0 %v4735, 32
    %v6783 = vpop.permute.xlu0 %6782
    %6786 = vrot.lane.b32.xlu0 %v6778, 64
    %v6787 = vpop.permute.xlu0 %6786
    %v6789 = vsel %vm761, %v6708, %v6783
    %v6790 = vsel %vm883, %v6789, %v6787
    %v6791 = vld [vmem:[%s117] sm:$0xff]
    %v6792 = vld [vmem:[%s117 + $0x8] sm:$0xff]
    %v6793 = vld [vmem:[%s117 + $0x10] sm:$0xff]
    %v6794 = vld [vmem:[%s117 + $0x18] sm:$0xff]
    %v6795 = vld [vmem:[%s117 + $0x20] sm:$0xff]
    %v6796 = vld [vmem:[%s117 + $0x28] sm:$0xff]
    %v6797 = vld [vmem:[%s117 + $0x30] sm:$0xff]
    %v6798 = vld [vmem:[%s117 + $0x38] sm:$0xff]
    %v6799 = vld [vmem:[%s117 + $0x40] sm:$0xff]
    %v6800 = vld [vmem:[%s117 + $0x48] sm:$0xff]
    %v6801 = vld [vmem:[%s117 + $0x50] sm:$0xff]
    %v6802 = vld [vmem:[%s117 + $0x58] sm:$0xff]
    %v6803 = vld [vmem:[#allocation34] sm:$0x1]
    %v6805 = vlaneseq
    %v6806 = vshrl.u32 %v6805, 7
    %v6807 = vsub.s32 0, %v6806
    %v6808 = vrot.slane %v6803, %v6807
    %v6811 = vsel %vm1040, %v6790, 0
    %6813 = vmatprep.subr.mxu0 0.0
    %6814 = vmatpush1.msra.mxu0 %v6791
    %6815 = vmatprep.subr.mxu0 0.0
    %6816 = vmatpush1.msra.mxu0 %v6792
    %6817 = vmatprep.subr.mxu0 0.0
    %6818 = vmatpush1.msra.mxu0 %v6793
    %6819 = vmatprep.subr.mxu0 0.0
    %6820 = vmatpush1.msra.mxu0 %v6794
    %6821 = vmatprep.subr.mxu0 0.0
    %6822 = vmatpush1.msra.mxu0 %v6795
    %6823 = vmatprep.subr.mxu0 0.0
    %6824 = vmatpush1.msra.mxu0 %v6796
    %6825 = vmatprep.subr.mxu0 0.0
    %6826 = vmatpush1.msra.mxu0 %v6797
    %6827 = vmatprep.subr.mxu0 0.0
    %6828 = vmatpush1.msra.mxu0 %v6798
    %6829 = vmatprep.subr.mxu0 0.0
    %6830 = vmatpush1.msra.mxu0 %v6799
    %6831 = vmatprep.subr.mxu0 0.0
    %6832 = vmatpush1.msra.mxu0 %v6800
    %6833 = vmatprep.subr.mxu0 0.0
    %6834 = vmatpush1.msra.mxu0 %v6801
    %6835 = vmatprep.subr.mxu0 0.0
    %6836 = vmatpush1.msra.mxu0 %v6802
    %6837 = vmatprep.subr.mxu0 0.0
    %6838 = vmatpush1.msra.mxu0 0.0
    %6839 = vmatprep.subr.mxu0 0.0
    %6840 = vmatpush1.msra.mxu0 0.0
    %6841 = vmatprep.subr.mxu0 0.0
    %6842 = vmatpush1.msra.mxu0 0.0
    %6843 = vmatprep.subr.mxu0 0.0
    %6844 = vmatpush1.msra.mxu0 0.0
    %6845 = vmatprep.subr.mxu0 0.0
    %6846 = vmatpush1.msra.mxu0 0.0
    %6847 = vmatprep.subr.mxu0 0.0
    %6848 = vmatpush1.msra.mxu0 0.0
    %6849 = vmatprep.subr.mxu0 0.0
    %6850 = vmatpush1.msra.mxu0 0.0
    %6851 = vmatprep.subr.mxu0 0.0
    %6852 = vmatpush1.msra.mxu0 0.0
    %6853 = vmatprep.subr.mxu0 0.0
    %6854 = vmatpush1.msra.mxu0 0.0
    %6855 = vmatprep.subr.mxu0 0.0
    %6856 = vmatpush1.msra.mxu0 0.0
    %6857 = vmatprep.subr.mxu0 0.0
    %6858 = vmatpush1.msra.mxu0 0.0
    %6859 = vmatprep.subr.mxu0 0.0
    %6860 = vmatpush1.msra.mxu0 0.0
    %6861 = vmatprep.subr.mxu0 0.0
    %6862 = vmatpush1.msra.mxu0 0.0
    %6863 = vmatprep.subr.mxu0 0.0
    %6864 = vmatpush1.msra.mxu0 0.0
    %6865 = vmatprep.subr.mxu0 0.0
    %6866 = vmatpush1.msra.mxu0 0.0
    %6867 = vmatprep.subr.mxu0 0.0
    %6868 = vmatpush1.msra.mxu0 0.0
    %6869 = vmatprep.subr.mxu0 0.0
    %6870 = vmatpush1.msra.mxu0 0.0
    %6871 = vmatprep.subr.mxu0 0.0
    %6872 = vmatpush1.msra.mxu0 0.0
    %6873 = vmatprep.subr.mxu0 0.0
    %6874 = vmatpush1.msra.mxu0 0.0
    %6875 = vmatprep.subr.mxu0 0.0
    %6876 = vmatpush1.msra.mxu0 0.0
    %6877 = vmatprep.mubr.f32.mxu0 0.0
    %6878 = vmatmul.mubr.f32.gmra.mrb[0].mxu0 %v6811
    %v6879 = vpop.f32.mrb[0].mxu0
    %v6880 = vadd.f32 %v6808, %v6879
    %v6881 = vpop.f32.mrb[0].mxu0
    %6882 = vdwg.mxu0
    %v6884 = vsel %vm761, %v6880, 0
    %6886 = vmatprep.subr.mxu0 0.0
    %6887 = vmatpush1.msra.mxu0 %v627
    %6888 = vmatprep.subr.mxu0 0.0
    %6889 = vmatpush1.msra.mxu0 %v628
    %6890 = vmatprep.subr.mxu0 0.0
    %6891 = vmatpush1.msra.mxu0 %v629
    %6892 = vmatprep.subr.mxu0 0.0
    %6893 = vmatpush1.msra.mxu0 %v630
    %6894 = vmatprep.subr.mxu0 0.0
    %6895 = vmatpush1.msra.mxu0 0.0
    %6896 = vmatprep.subr.mxu0 0.0
    %6897 = vmatpush1.msra.mxu0 0.0
    %6898 = vmatprep.subr.mxu0 0.0
    %6899 = vmatpush1.msra.mxu0 0.0
    %6900 = vmatprep.subr.mxu0 0.0
    %6901 = vmatpush1.msra.mxu0 0.0
    %6902 = vmatprep.subr.mxu0 0.0
    %6903 = vmatpush1.msra.mxu0 0.0
    %6904 = vmatprep.subr.mxu0 0.0
    %6905 = vmatpush1.msra.mxu0 0.0
    %6906 = vmatprep.subr.mxu0 0.0
    %6907 = vmatpush1.msra.mxu0 0.0
    %6908 = vmatprep.subr.mxu0 0.0
    %6909 = vmatpush1.msra.mxu0 0.0
    %6910 = vmatprep.subr.mxu0 0.0
    %6911 = vmatpush1.msra.mxu0 0.0
    %6912 = vmatprep.subr.mxu0 0.0
    %6913 = vmatpush1.msra.mxu0 0.0
    %6914 = vmatprep.subr.mxu0 0.0
    %6915 = vmatpush1.msra.mxu0 0.0
    %6916 = vmatprep.subr.mxu0 0.0
    %6917 = vmatpush1.msra.mxu0 0.0
    %6918 = vmatprep.subr.mxu0 0.0
    %6919 = vmatpush1.msra.mxu0 0.0
    %6920 = vmatprep.subr.mxu0 0.0
    %6921 = vmatpush1.msra.mxu0 0.0
    %6922 = vmatprep.subr.mxu0 0.0
    %6923 = vmatpush1.msra.mxu0 0.0
    %6924 = vmatprep.subr.mxu0 0.0
    %6925 = vmatpush1.msra.mxu0 0.0
    %6926 = vmatprep.subr.mxu0 0.0
    %6927 = vmatpush1.msra.mxu0 0.0
    %6928 = vmatprep.subr.mxu0 0.0
    %6929 = vmatpush1.msra.mxu0 0.0
    %6930 = vmatprep.subr.mxu0 0.0
    %6931 = vmatpush1.msra.mxu0 0.0
    %6932 = vmatprep.subr.mxu0 0.0
    %6933 = vmatpush1.msra.mxu0 0.0
    %6934 = vmatprep.subr.mxu0 0.0
    %6935 = vmatpush1.msra.mxu0 0.0
    %6936 = vmatprep.subr.mxu0 0.0
    %6937 = vmatpush1.msra.mxu0 0.0
    %6938 = vmatprep.subr.mxu0 0.0
    %6939 = vmatpush1.msra.mxu0 0.0
    %6940 = vmatprep.subr.mxu0 0.0
    %6941 = vmatpush1.msra.mxu0 0.0
    %6942 = vmatprep.subr.mxu0 0.0
    %6943 = vmatpush1.msra.mxu0 0.0
    %6944 = vmatprep.subr.mxu0 0.0
    %6945 = vmatpush1.msra.mxu0 0.0
    %6946 = vmatprep.subr.mxu0 0.0
    %6947 = vmatpush1.msra.mxu0 0.0
    %6948 = vmatprep.subr.mxu0 0.0
    %6949 = vmatpush1.msra.mxu0 0.0
    %6950 = vmatprep.mubr.f32.mxu0 0.0
    %6951 = vmatmul.mubr.f32.gmra.mrb[0].mxu0 %v6884
    %v6952 = vpop.f32.mrb[0].mxu0
    %v6953 = vadd.f32 0.0, %v6952
    %v6954 = vpop.f32.mrb[0].mxu0
    %6955 = vdwg.mxu0
    %6956 = vmatprep.subr.mxu0 0.0
    %6957 = vmatpush1.msra.mxu0 %v6953
    %6958 = vmatprep.subr.mxu0 0.0
    %6959 = vmatpush1.msra.mxu0 0.0
    %6960 = vmatprep.subr.mxu0 0.0
    %6961 = vmatpush1.msra.mxu0 0.0
    %6962 = vmatprep.subr.mxu0 0.0
    %6963 = vmatpush1.msra.mxu0 0.0
    %6964 = vmatprep.subr.mxu0 0.0
    %6965 = vmatpush1.msra.mxu0 0.0
    %6966 = vmatprep.subr.mxu0 0.0
    %6967 = vmatpush1.msra.mxu0 0.0
    %6968 = vmatprep.subr.mxu0 0.0
    %6969 = vmatpush1.msra.mxu0 0.0
    %6970 = vmatprep.subr.mxu0 0.0
    %6971 = vmatpush1.msra.mxu0 0.0
    %6972 = vmatprep.subr.mxu0 0.0
    %6973 = vmatpush1.msra.mxu0 0.0
    %6974 = vmatprep.subr.mxu0 0.0
    %6975 = vmatpush1.msra.mxu0 0.0
    %6976 = vmatprep.subr.mxu0 0.0
    %6977 = vmatpush1.msra.mxu0 0.0
    %6978 = vmatprep.subr.mxu0 0.0
    %6979 = vmatpush1.msra.mxu0 0.0
    %6980 = vmatprep.subr.mxu0 0.0
    %6981 = vmatpush1.msra.mxu0 0.0
    %6982 = vmatprep.subr.mxu0 0.0
    %6983 = vmatpush1.msra.mxu0 0.0
    %6984 = vmatprep.subr.mxu0 0.0
    %6985 = vmatpush1.msra.mxu0 0.0
    %6986 = vmatprep.subr.mxu0 0.0
    %6987 = vmatpush1.msra.mxu0 0.0
    %6988 = vmatprep.subr.mxu0 0.0
    %6989 = vmatpush1.msra.mxu0 0.0
    %6990 = vmatprep.subr.mxu0 0.0
    %6991 = vmatpush1.msra.mxu0 0.0
    %6992 = vmatprep.subr.mxu0 0.0
    %6993 = vmatpush1.msra.mxu0 0.0
    %6994 = vmatprep.subr.mxu0 0.0
    %6995 = vmatpush1.msra.mxu0 0.0
    %6996 = vmatprep.subr.mxu0 0.0
    %6997 = vmatpush1.msra.mxu0 0.0
    %6998 = vmatprep.subr.mxu0 0.0
    %6999 = vmatpush1.msra.mxu0 0.0
    %7000 = vmatprep.subr.mxu0 0.0
    %7001 = vmatpush1.msra.mxu0 0.0
    %7002 = vmatprep.subr.mxu0 0.0
    %7003 = vmatpush1.msra.mxu0 0.0
    %7004 = vmatprep.subr.mxu0 0.0
    %7005 = vmatpush1.msra.mxu0 0.0
    %7006 = vmatprep.subr.mxu0 0.0
    %7007 = vmatpush1.msra.mxu0 0.0
    %7008 = vmatprep.subr.mxu0 0.0
    %7009 = vmatpush1.msra.mxu0 0.0
    %7010 = vmatprep.subr.mxu0 0.0
    %7011 = vmatpush1.msra.mxu0 0.0
    %7012 = vmatprep.subr.mxu0 0.0
    %7013 = vmatpush1.msra.mxu0 0.0
    %7014 = vmatprep.subr.mxu0 0.0
    %7015 = vmatpush1.msra.mxu0 0.0
    %7016 = vmatprep.subr.mxu0 0.0
    %7017 = vmatpush1.msra.mxu0 0.0
    %7018 = vmatprep.subr.mxu0 0.0
    %7019 = vmatpush1.msra.mxu0 0.0
    %7020 = vmatprep.mubr.f32.mxu0 0.0
    %7021 = vmatmul.mubr.f32.gmra.mrb[0].mxu0 %v1646
    %v7022 = vpop.f32.mrb[0].mxu0
    %v7023 = vadd.f32 0.0, %v7022
    %v7024 = vpop.f32.mrb[0].mxu0
    %7025 = vdwg.mxu0
    %v7026 = vsub.f32 %v6880, %v7023
    %v7027 = vmul.f32 %v7026, %v7026
    %v7029 = vsel %vm761, %v7027, 0
    %7031 = vmatprep.subr.mxu0 0.0
    %7032 = vmatpush1.msra.mxu0 %v627
    %7033 = vmatprep.subr.mxu0 0.0
    %7034 = vmatpush1.msra.mxu0 %v628
    %7035 = vmatprep.subr.mxu0 0.0
    %7036 = vmatpush1.msra.mxu0 %v629
    %7037 = vmatprep.subr.mxu0 0.0
    %7038 = vmatpush1.msra.mxu0 %v630
    %7039 = vmatprep.subr.mxu0 0.0
    %7040 = vmatpush1.msra.mxu0 0.0
    %7041 = vmatprep.subr.mxu0 0.0
    %7042 = vmatpush1.msra.mxu0 0.0
    %7043 = vmatprep.subr.mxu0 0.0
    %7044 = vmatpush1.msra.mxu0 0.0
    %7045 = vmatprep.subr.mxu0 0.0
    %7046 = vmatpush1.msra.mxu0 0.0
    %7047 = vmatprep.subr.mxu0 0.0
    %7048 = vmatpush1.msra.mxu0 0.0
    %7049 = vmatprep.subr.mxu0 0.0
    %7050 = vmatpush1.msra.mxu0 0.0
    %7051 = vmatprep.subr.mxu0 0.0
    %7052 = vmatpush1.msra.mxu0 0.0
    %7053 = vmatprep.subr.mxu0 0.0
    %7054 = vmatpush1.msra.mxu0 0.0
    %7055 = vmatprep.subr.mxu0 0.0
    %7056 = vmatpush1.msra.mxu0 0.0
    %7057 = vmatprep.subr.mxu0 0.0
    %7058 = vmatpush1.msra.mxu0 0.0
    %7059 = vmatprep.subr.mxu0 0.0
    %7060 = vmatpush1.msra.mxu0 0.0
    %7061 = vmatprep.subr.mxu0 0.0
    %7062 = vmatpush1.msra.mxu0 0.0
    %7063 = vmatprep.subr.mxu0 0.0
    %7064 = vmatpush1.msra.mxu0 0.0
    %7065 = vmatprep.subr.mxu0 0.0
    %7066 = vmatpush1.msra.mxu0 0.0
    %7067 = vmatprep.subr.mxu0 0.0
    %7068 = vmatpush1.msra.mxu0 0.0
    %7069 = vmatprep.subr.mxu0 0.0
    %7070 = vmatpush1.msra.mxu0 0.0
    %7071 = vmatprep.subr.mxu0 0.0
    %7072 = vmatpush1.msra.mxu0 0.0
    %7073 = vmatprep.subr.mxu0 0.0
    %7074 = vmatpush1.msra.mxu0 0.0
    %7075 = vmatprep.subr.mxu0 0.0
    %7076 = vmatpush1.msra.mxu0 0.0
    %7077 = vmatprep.subr.mxu0 0.0
    %7078 = vmatpush1.msra.mxu0 0.0
    %7079 = vmatprep.subr.mxu0 0.0
    %7080 = vmatpush1.msra.mxu0 0.0
    %7081 = vmatprep.subr.mxu0 0.0
    %7082 = vmatpush1.msra.mxu0 0.0
    %7083 = vmatprep.subr.mxu0 0.0
    %7084 = vmatpush1.msra.mxu0 0.0
    %7085 = vmatprep.subr.mxu0 0.0
    %7086 = vmatpush1.msra.mxu0 0.0
    %7087 = vmatprep.subr.mxu0 0.0
    %7088 = vmatpush1.msra.mxu0 0.0
    %7089 = vmatprep.subr.mxu0 0.0
    %7090 = vmatpush1.msra.mxu0 0.0
    %7091 = vmatprep.subr.mxu0 0.0
    %7092 = vmatpush1.msra.mxu0 0.0
    %7093 = vmatprep.subr.mxu0 0.0
    %7094 = vmatpush1.msra.mxu0 0.0
    %7095 = vmatprep.mubr.f32.mxu0 0.0
    %7096 = vmatmul.mubr.f32.gmra.mrb[0].mxu0 %v7029
    %v7097 = vpop.f32.mrb[0].mxu0
    %v7098 = vadd.f32 0.0, %v7097
    %v7099 = vpop.f32.mrb[0].mxu0
    %7100 = vdwg.mxu0
    %7101 = vmatprep.subr.mxu0 0.0
    %7102 = vmatpush1.msra.mxu0 %v7098
    %7103 = vmatprep.subr.mxu0 0.0
    %7104 = vmatpush1.msra.mxu0 0.0
    %7105 = vmatprep.subr.mxu0 0.0
    %7106 = vmatpush1.msra.mxu0 0.0
    %7107 = vmatprep.subr.mxu0 0.0
    %7108 = vmatpush1.msra.mxu0 0.0
    %7109 = vmatprep.subr.mxu0 0.0
    %7110 = vmatpush1.msra.mxu0 0.0
    %7111 = vmatprep.subr.mxu0 0.0
    %7112 = vmatpush1.msra.mxu0 0.0
    %7113 = vmatprep.subr.mxu0 0.0
    %7114 = vmatpush1.msra.mxu0 0.0
    %7115 = vmatprep.subr.mxu0 0.0
    %7116 = vmatpush1.msra.mxu0 0.0
    %7117 = vmatprep.subr.mxu0 0.0
    %7118 = vmatpush1.msra.mxu0 0.0
    %7119 = vmatprep.subr.mxu0 0.0
    %7120 = vmatpush1.msra.mxu0 0.0
    %7121 = vmatprep.subr.mxu0 0.0
    %7122 = vmatpush1.msra.mxu0 0.0
    %7123 = vmatprep.subr.mxu0 0.0
    %7124 = vmatpush1.msra.mxu0 0.0
    %7125 = vmatprep.subr.mxu0 0.0
    %7126 = vmatpush1.msra.mxu0 0.0
    %7127 = vmatprep.subr.mxu0 0.0
    %7128 = vmatpush1.msra.mxu0 0.0
    %7129 = vmatprep.subr.mxu0 0.0
    %7130 = vmatpush1.msra.mxu0 0.0
    %7131 = vmatprep.subr.mxu0 0.0
    %7132 = vmatpush1.msra.mxu0 0.0
    %7133 = vmatprep.subr.mxu0 0.0
    %7134 = vmatpush1.msra.mxu0 0.0
    %7135 = vmatprep.subr.mxu0 0.0
    %7136 = vmatpush1.msra.mxu0 0.0
    %7137 = vmatprep.subr.mxu0 0.0
    %7138 = vmatpush1.msra.mxu0 0.0
    %7139 = vmatprep.subr.mxu0 0.0
    %7140 = vmatpush1.msra.mxu0 0.0
    %7141 = vmatprep.subr.mxu0 0.0
    %7142 = vmatpush1.msra.mxu0 0.0
    %7143 = vmatprep.subr.mxu0 0.0
    %7144 = vmatpush1.msra.mxu0 0.0
    %7145 = vmatprep.subr.mxu0 0.0
    %7146 = vmatpush1.msra.mxu0 0.0
    %7147 = vmatprep.subr.mxu0 0.0
    %7148 = vmatpush1.msra.mxu0 0.0
    %7149 = vmatprep.subr.mxu0 0.0
    %7150 = vmatpush1.msra.mxu0 0.0
    %7151 = vmatprep.subr.mxu0 0.0
    %7152 = vmatpush1.msra.mxu0 0.0
    %7153 = vmatprep.subr.mxu0 0.0
    %7154 = vmatpush1.msra.mxu0 0.0
    %7155 = vmatprep.subr.mxu0 0.0
    %7156 = vmatpush1.msra.mxu0 0.0
    %7157 = vmatprep.subr.mxu0 0.0
    %7158 = vmatpush1.msra.mxu0 0.0
    %7159 = vmatprep.subr.mxu0 0.0
    %7160 = vmatpush1.msra.mxu0 0.0
    %7161 = vmatprep.subr.mxu0 0.0
    %7162 = vmatpush1.msra.mxu0 0.0
    %7163 = vmatprep.subr.mxu0 0.0
    %7164 = vmatpush1.msra.mxu0 0.0
    %7165 = vmatprep.mubr.f32.mxu0 0.0
    %7166 = vmatmul.mubr.f32.gmra.mrb[0].mxu0 %v1646
    %v7167 = vpop.f32.mrb[0].mxu0
    %v7168 = vadd.f32 1e-05, %v7167
    %v7169 = vpop.f32.mrb[0].mxu0
    %7170 = vdwg.mxu0
    %v7171 = vrsqrt.pop %v7168
    %v7172 = vmul.f32 %v7026, %v7171
    %v7173 = vld [vmem:[#allocation35] sm:$0x1]
    %v7175 = vlaneseq
    %v7176 = vshrl.u32 %v7175, 7
    %v7177 = vsub.s32 0, %v7176
    %v7178 = vrot.slane %v7173, %v7177
    %v7180 = vmul.f32 %v7172, %v7178
    %v7181 = vld [vmem:[#allocation37] sm:$0x1]
    %v7183 = vlaneseq
    %v7184 = vshrl.u32 %v7183, 7
    %v7185 = vsub.s32 0, %v7184
    %v7186 = vrot.slane %v7181, %v7185
    %v7188 = vadd.f32 %v7180, %v7186
    %v7189 = vmin.f32 %v7188, 20.0
    %v7190 = vmul.f32 %v7189, 1.442695
    %v7191 = vpow.pop %v7190
    %v7192 = vadd.f32 %v7191, 2.0
    %v7193 = vmul.f32 %v7191, %v7192
    %v7194 = vadd.f32 %v7193, 2.0
    %v7195 = vrcp.pop %v7194
    %v7196 = vmul.f32 %v7193, %v7195
    %v7197 = vmul.f32 %v7188, %v7196
    %v7198 = vld [vmem:[%s125] sm:$0xff]
    %v7199 = vld [vmem:[%s125 + $0x8] sm:$0xff]
    %v7200 = vld [vmem:[%s125 + $0x10] sm:$0xff]
    %v7201 = vld [vmem:[%s125 + $0x18] sm:$0xff]
    %v7202 = vld [vmem:[#allocation38] sm:$0x1]
    %v7204 = vlaneseq
    %v7205 = vshrl.u32 %v7204, 7
    %v7206 = vsub.s32 0, %v7205
    %v7207 = vrot.slane %v7202, %v7206
    %v7210 = vsel %vm761, %v7197, 0
    %7212 = vmatprep.subr.mxu0 0.0
    %7213 = vmatpush1.msra.mxu0 %v7198
    %7214 = vmatprep.subr.mxu0 0.0
    %7215 = vmatpush1.msra.mxu0 %v7199
    %7216 = vmatprep.subr.mxu0 0.0
    %7217 = vmatpush1.msra.mxu0 %v7200
    %7218 = vmatprep.subr.mxu0 0.0
    %7219 = vmatpush1.msra.mxu0 %v7201
    %7220 = vmatprep.subr.mxu0 0.0
    %7221 = vmatpush1.msra.mxu0 0.0
    %7222 = vmatprep.subr.mxu0 0.0
    %7223 = vmatpush1.msra.mxu0 0.0
    %7224 = vmatprep.subr.mxu0 0.0
    %7225 = vmatpush1.msra.mxu0 0.0
    %7226 = vmatprep.subr.mxu0 0.0
    %7227 = vmatpush1.msra.mxu0 0.0
    %7228 = vmatprep.subr.mxu0 0.0
    %7229 = vmatpush1.msra.mxu0 0.0
    %7230 = vmatprep.subr.mxu0 0.0
    %7231 = vmatpush1.msra.mxu0 0.0
    %7232 = vmatprep.subr.mxu0 0.0
    %7233 = vmatpush1.msra.mxu0 0.0
    %7234 = vmatprep.subr.mxu0 0.0
    %7235 = vmatpush1.msra.mxu0 0.0
    %7236 = vmatprep.subr.mxu0 0.0
    %7237 = vmatpush1.msra.mxu0 0.0
    %7238 = vmatprep.subr.mxu0 0.0
    %7239 = vmatpush1.msra.mxu0 0.0
    %7240 = vmatprep.subr.mxu0 0.0
    %7241 = vmatpush1.msra.mxu0 0.0
    %7242 = vmatprep.subr.mxu0 0.0
    %7243 = vmatpush1.msra.mxu0 0.0
    %7244 = vmatprep.subr.mxu0 0.0
    %7245 = vmatpush1.msra.mxu0 0.0
    %7246 = vmatprep.subr.mxu0 0.0
    %7247 = vmatpush1.msra.mxu0 0.0
    %7248 = vmatprep.subr.mxu0 0.0
    %7249 = vmatpush1.msra.mxu0 0.0
    %7250 = vmatprep.subr.mxu0 0.0
    %7251 = vmatpush1.msra.mxu0 0.0
    %7252 = vmatprep.subr.mxu0 0.0
    %7253 = vmatpush1.msra.mxu0 0.0
    %7254 = vmatprep.subr.mxu0 0.0
    %7255 = vmatpush1.msra.mxu0 0.0
    %7256 = vmatprep.subr.mxu0 0.0
    %7257 = vmatpush1.msra.mxu0 0.0
    %7258 = vmatprep.subr.mxu0 0.0
    %7259 = vmatpush1.msra.mxu0 0.0
    %7260 = vmatprep.subr.mxu0 0.0
    %7261 = vmatpush1.msra.mxu0 0.0
    %7262 = vmatprep.subr.mxu0 0.0
    %7263 = vmatpush1.msra.mxu0 0.0
    %7264 = vmatprep.subr.mxu0 0.0
    %7265 = vmatpush1.msra.mxu0 0.0
    %7266 = vmatprep.subr.mxu0 0.0
    %7267 = vmatpush1.msra.mxu0 0.0
    %7268 = vmatprep.subr.mxu0 0.0
    %7269 = vmatpush1.msra.mxu0 0.0
    %7270 = vmatprep.subr.mxu0 0.0
    %7271 = vmatpush1.msra.mxu0 0.0
    %7272 = vmatprep.subr.mxu0 0.0
    %7273 = vmatpush1.msra.mxu0 0.0
    %7274 = vmatprep.subr.mxu0 0.0
    %7275 = vmatpush1.msra.mxu0 0.0
    %7276 = vmatprep.mubr.f32.mxu0 0.0
    %7277 = vmatmul.mubr.f32.gmra.mrb[0].mxu0 %v7210
    %v7278 = vpop.f32.mrb[0].mxu0
    %v7279 = vadd.f32 %v7207, %v7278
    %v7280 = vpop.f32.mrb[0].mxu0
    %7281 = vdwg.mxu0
    %7282 = vmatprep.subr.mxu0 0.0
    %7283 = vmatpush1.msra.mxu0 %v6639
    %7284 = vmatprep.subr.mxu0 0.0
    %7285 = vmatpush1.msra.mxu0 %v6640
    %7286 = vmatprep.subr.mxu0 0.0
    %7287 = vmatpush1.msra.mxu0 0.0
    %7288 = vmatprep.subr.mxu0 0.0
    %7289 = vmatpush1.msra.mxu0 0.0
    %7290 = vmatprep.subr.mxu0 0.0
    %7291 = vmatpush1.msra.mxu0 0.0
    %7292 = vmatprep.subr.mxu0 0.0
    %7293 = vmatpush1.msra.mxu0 0.0
    %7294 = vmatprep.subr.mxu0 0.0
    %7295 = vmatpush1.msra.mxu0 0.0
    %7296 = vmatprep.subr.mxu0 0.0
    %7297 = vmatpush1.msra.mxu0 0.0
    %7298 = vmatprep.subr.mxu0 0.0
    %7299 = vmatpush1.msra.mxu0 0.0
    %7300 = vmatprep.subr.mxu0 0.0
    %7301 = vmatpush1.msra.mxu0 0.0
    %7302 = vmatprep.subr.mxu0 0.0
    %7303 = vmatpush1.msra.mxu0 0.0
    %7304 = vmatprep.subr.mxu0 0.0
    %7305 = vmatpush1.msra.mxu0 0.0
    %7306 = vmatprep.subr.mxu0 0.0
    %7307 = vmatpush1.msra.mxu0 0.0
    %7308 = vmatprep.subr.mxu0 0.0
    %7309 = vmatpush1.msra.mxu0 0.0
    %7310 = vmatprep.subr.mxu0 0.0
    %7311 = vmatpush1.msra.mxu0 0.0
    %7312 = vmatprep.subr.mxu0 0.0
    %7313 = vmatpush1.msra.mxu0 0.0
    %7314 = vmatprep.subr.mxu0 0.0
    %7315 = vmatpush1.msra.mxu0 0.0
    %7316 = vmatprep.subr.mxu0 0.0
    %7317 = vmatpush1.msra.mxu0 0.0
    %7318 = vmatprep.subr.mxu0 0.0
    %7319 = vmatpush1.msra.mxu0 0.0
    %7320 = vmatprep.subr.mxu0 0.0
    %7321 = vmatpush1.msra.mxu0 0.0
    %7322 = vmatprep.subr.mxu0 0.0
    %7323 = vmatpush1.msra.mxu0 0.0
    %7324 = vmatprep.subr.mxu0 0.0
    %7325 = vmatpush1.msra.mxu0 0.0
    %7326 = vmatprep.subr.mxu0 0.0
    %7327 = vmatpush1.msra.mxu0 0.0
    %7328 = vmatprep.subr.mxu0 0.0
    %7329 = vmatpush1.msra.mxu0 0.0
    %7330 = vmatprep.subr.mxu0 0.0
    %7331 = vmatpush1.msra.mxu0 0.0
    %7332 = vmatprep.subr.mxu0 0.0
    %7333 = vmatpush1.msra.mxu0 0.0
    %7334 = vmatprep.subr.mxu0 0.0
    %7335 = vmatpush1.msra.mxu0 0.0
    %7336 = vmatprep.subr.mxu0 0.0
    %7337 = vmatpush1.msra.mxu0 0.0
    %7338 = vmatprep.subr.mxu0 0.0
    %7339 = vmatpush1.msra.mxu0 0.0
    %7340 = vmatprep.subr.mxu0 0.0
    %7341 = vmatpush1.msra.mxu0 0.0
    %7342 = vmatprep.subr.mxu0 0.0
    %7343 = vmatpush1.msra.mxu0 0.0
    %7344 = vmatprep.subr.mxu0 0.0
    %7345 = vmatpush1.msra.mxu0 0.0
    %7346 = vmatprep.mubr.f32.mxu0 0.0
    %7347 = vmatmul.mubr.f32.gmra.mrb[0].mxu0 %v2117
    %v7348 = vpop.f32.mrb[0].mxu0
    %v7349 = vadd.f32 0.0, %v7348
    %v7350 = vpop.f32.mrb[0].mxu0
    %7351 = vmatprep.mubr.f32.mxu0 0.0
    %7352 = vmatmul.mubr.f32.gmra.mrb[0].mxu0 %v2120
    %v7353 = vpop.f32.mrb[0].mxu0
    %v7354 = vadd.f32 0.0, %v7353
    %v7355 = vpop.f32.mrb[0].mxu0
    %7356 = vdwg.mxu0
    %7357 = vmatprep.subr.mxu0 0.0
    %7358 = vmatpush1.msra.mxu0 %v6639
    %7359 = vmatprep.subr.mxu0 0.0
    %7360 = vmatpush1.msra.mxu0 %v6640
    %7361 = vmatprep.subr.mxu0 0.0
    %7362 = vmatpush1.msra.mxu0 0.0
    %7363 = vmatprep.subr.mxu0 0.0
    %7364 = vmatpush1.msra.mxu0 0.0
    %7365 = vmatprep.subr.mxu0 0.0
    %7366 = vmatpush1.msra.mxu0 0.0
    %7367 = vmatprep.subr.mxu0 0.0
    %7368 = vmatpush1.msra.mxu0 0.0
    %7369 = vmatprep.subr.mxu0 0.0
    %7370 = vmatpush1.msra.mxu0 0.0
    %7371 = vmatprep.subr.mxu0 0.0
    %7372 = vmatpush1.msra.mxu0 0.0
    %7373 = vmatprep.subr.mxu0 0.0
    %7374 = vmatpush1.msra.mxu0 0.0
    %7375 = vmatprep.subr.mxu0 0.0
    %7376 = vmatpush1.msra.mxu0 0.0
    %7377 = vmatprep.subr.mxu0 0.0
    %7378 = vmatpush1.msra.mxu0 0.0
    %7379 = vmatprep.subr.mxu0 0.0
    %7380 = vmatpush1.msra.mxu0 0.0
    %7381 = vmatprep.subr.mxu0 0.0
    %7382 = vmatpush1.msra.mxu0 0.0
    %7383 = vmatprep.subr.mxu0 0.0
    %7384 = vmatpush1.msra.mxu0 0.0
    %7385 = vmatprep.subr.mxu0 0.0
    %7386 = vmatpush1.msra.mxu0 0.0
    %7387 = vmatprep.subr.mxu0 0.0
    %7388 = vmatpush1.msra.mxu0 0.0
    %7389 = vmatprep.subr.mxu0 0.0
    %7390 = vmatpush1.msra.mxu0 0.0
    %7391 = vmatprep.subr.mxu0 0.0
    %7392 = vmatpush1.msra.mxu0 0.0
    %7393 = vmatprep.subr.mxu0 0.0
    %7394 = vmatpush1.msra.mxu0 0.0
    %7395 = vmatprep.subr.mxu0 0.0
    %7396 = vmatpush1.msra.mxu0 0.0
    %7397 = vmatprep.subr.mxu0 0.0
    %7398 = vmatpush1.msra.mxu0 0.0
    %7399 = vmatprep.subr.mxu0 0.0
    %7400 = vmatpush1.msra.mxu0 0.0
    %7401 = vmatprep.subr.mxu0 0.0
    %7402 = vmatpush1.msra.mxu0 0.0
    %7403 = vmatprep.subr.mxu0 0.0
    %7404 = vmatpush1.msra.mxu0 0.0
    %7405 = vmatprep.subr.mxu0 0.0
    %7406 = vmatpush1.msra.mxu0 0.0
    %7407 = vmatprep.subr.mxu0 0.0
    %7408 = vmatpush1.msra.mxu0 0.0
    %7409 = vmatprep.subr.mxu0 0.0
    %7410 = vmatpush1.msra.mxu0 0.0
    %7411 = vmatprep.subr.mxu0 0.0
    %7412 = vmatpush1.msra.mxu0 0.0
    %7413 = vmatprep.subr.mxu0 0.0
    %7414 = vmatpush1.msra.mxu0 0.0
    %7415 = vmatprep.subr.mxu0 0.0
    %7416 = vmatpush1.msra.mxu0 0.0
    %7417 = vmatprep.subr.mxu0 0.0
    %7418 = vmatpush1.msra.mxu0 0.0
    %7419 = vmatprep.subr.mxu0 0.0
    %7420 = vmatpush1.msra.mxu0 0.0
    %7421 = vmatprep.mubr.f32.mxu0 0.0
    %7422 = vmatmul.mubr.f32.gmra.mrb[0].mxu0 %v2198
    %v7423 = vpop.f32.mrb[0].mxu0
    %v7424 = vadd.f32 0.0, %v7423
    %v7425 = vpop.f32.mrb[0].mxu0
    %7426 = vmatprep.mubr.f32.mxu0 0.0
    %7427 = vmatmul.mubr.f32.gmra.mrb[0].mxu0 %v2201
    %v7428 = vpop.f32.mrb[0].mxu0
    %v7429 = vadd.f32 0.0, %v7428
    %v7430 = vpop.f32.mrb[0].mxu0
    %7431 = vdwg.mxu0
    %7434 = vrot.lane.b32.xlu0 %v6639, 32
    %v7435 = vpop.permute.xlu0 %7434
    %7436 = vrot.lane.b32.xlu0 %v6640, 32
    %v7437 = vpop.permute.xlu0 %7436
    %7442 = vrot.lane.b32.xlu0 %v7424, 64
    %v7443 = vpop.permute.xlu0 %7442
    %7444 = vrot.lane.b32.xlu0 %v7429, 64
    %v7445 = vpop.permute.xlu0 %7444
    %v7448 = vsel %vm761, %v7349, %v7435
    %v7449 = vsel %vm761, %v7354, %v7437
    %v7450 = vsel %vm883, %v7448, %v7443
    %v7451 = vsel %vm883, %v7449, %v7445
    %v7452 = vld [vmem:[%s129] sm:$0xff]
    %v7453 = vld [vmem:[%s129 + $0x8] sm:$0xff]
    %v7454 = vld [vmem:[%s129 + $0x10] sm:$0xff]
    %v7455 = vld [vmem:[%s129 + $0x18] sm:$0xff]
    %v7456 = vld [vmem:[%s129 + $0x20] sm:$0xff]
    %v7457 = vld [vmem:[%s129 + $0x28] sm:$0xff]
    %v7458 = vld [vmem:[%s129 + $0x30] sm:$0xff]
    %v7459 = vld [vmem:[%s129 + $0x38] sm:$0xff]
    %v7460 = vld [vmem:[%s129 + $0x40] sm:$0xff]
    %v7461 = vld [vmem:[%s129 + $0x48] sm:$0xff]
    %v7462 = vld [vmem:[%s129 + $0x50] sm:$0xff]
    %v7463 = vld [vmem:[%s129 + $0x58] sm:$0xff]
    %v7464 = vld [vmem:[#allocation40] sm:$0x1]
    %v7466 = vlaneseq
    %v7467 = vshrl.u32 %v7466, 7
    %v7468 = vsub.s32 0, %v7467
    %v7469 = vrot.slane %v7464, %v7468
    %v7472 = vsel %vm1040, %v7450, 0
    %v7475 = vsel %vm1040, %v7451, 0
    %7477 = vmatprep.subr.mxu0 0.0
    %7478 = vmatpush1.msra.mxu0 %v7452
    %7479 = vmatprep.subr.mxu0 0.0
    %7480 = vmatpush1.msra.mxu0 %v7453
    %7481 = vmatprep.subr.mxu0 0.0
    %7482 = vmatpush1.msra.mxu0 %v7454
    %7483 = vmatprep.subr.mxu0 0.0
    %7484 = vmatpush1.msra.mxu0 %v7455
    %7485 = vmatprep.subr.mxu0 0.0
    %7486 = vmatpush1.msra.mxu0 %v7456
    %7487 = vmatprep.subr.mxu0 0.0
    %7488 = vmatpush1.msra.mxu0 %v7457
    %7489 = vmatprep.subr.mxu0 0.0
    %7490 = vmatpush1.msra.mxu0 %v7458
    %7491 = vmatprep.subr.mxu0 0.0
    %7492 = vmatpush1.msra.mxu0 %v7459
    %7493 = vmatprep.subr.mxu0 0.0
    %7494 = vmatpush1.msra.mxu0 %v7460
    %7495 = vmatprep.subr.mxu0 0.0
    %7496 = vmatpush1.msra.mxu0 %v7461
    %7497 = vmatprep.subr.mxu0 0.0
    %7498 = vmatpush1.msra.mxu0 %v7462
    %7499 = vmatprep.subr.mxu0 0.0
    %7500 = vmatpush1.msra.mxu0 %v7463
    %7501 = vmatprep.subr.mxu0 0.0
    %7502 = vmatpush1.msra.mxu0 0.0
    %7503 = vmatprep.subr.mxu0 0.0
    %7504 = vmatpush1.msra.mxu0 0.0
    %7505 = vmatprep.subr.mxu0 0.0
    %7506 = vmatpush1.msra.mxu0 0.0
    %7507 = vmatprep.subr.mxu0 0.0
    %7508 = vmatpush1.msra.mxu0 0.0
    %7509 = vmatprep.subr.mxu0 0.0
    %7510 = vmatpush1.msra.mxu0 0.0
    %7511 = vmatprep.subr.mxu0 0.0
    %7512 = vmatpush1.msra.mxu0 0.0
    %7513 = vmatprep.subr.mxu0 0.0
    %7514 = vmatpush1.msra.mxu0 0.0
    %7515 = vmatprep.subr.mxu0 0.0
    %7516 = vmatpush1.msra.mxu0 0.0
    %7517 = vmatprep.subr.mxu0 0.0
    %7518 = vmatpush1.msra.mxu0 0.0
    %7519 = vmatprep.subr.mxu0 0.0
    %7520 = vmatpush1.msra.mxu0 0.0
    %7521 = vmatprep.subr.mxu0 0.0
    %7522 = vmatpush1.msra.mxu0 0.0
    %7523 = vmatprep.subr.mxu0 0.0
    %7524 = vmatpush1.msra.mxu0 0.0
    %7525 = vmatprep.subr.mxu0 0.0
    %7526 = vmatpush1.msra.mxu0 0.0
    %7527 = vmatprep.subr.mxu0 0.0
    %7528 = vmatpush1.msra.mxu0 0.0
    %7529 = vmatprep.subr.mxu0 0.0
    %7530 = vmatpush1.msra.mxu0 0.0
    %7531 = vmatprep.subr.mxu0 0.0
    %7532 = vmatpush1.msra.mxu0 0.0
    %7533 = vmatprep.subr.mxu0 0.0
    %7534 = vmatpush1.msra.mxu0 0.0
    %7535 = vmatprep.subr.mxu0 0.0
    %7536 = vmatpush1.msra.mxu0 0.0
    %7537 = vmatprep.subr.mxu0 0.0
    %7538 = vmatpush1.msra.mxu0 0.0
    %7539 = vmatprep.subr.mxu0 0.0
    %7540 = vmatpush1.msra.mxu0 0.0
    %7541 = vmatprep.mubr.f32.mxu0 0.0
    %7542 = vmatmul.mubr.f32.gmra.mrb[0].mxu0 %v7472
    %v7543 = vpop.f32.mrb[0].mxu0
    %v7544 = vadd.f32 %v7469, %v7543
    %v7545 = vpop.f32.mrb[0].mxu0
    %7546 = vmatprep.mubr.f32.mxu0 0.0
    %7547 = vmatmul.mubr.f32.gmra.mrb[0].mxu0 %v7475
    %v7548 = vpop.f32.mrb[0].mxu0
    %v7549 = vadd.f32 %v7469, %v7548
    %v7550 = vpop.f32.mrb[0].mxu0
    %7551 = vdwg.mxu0
    %v7553 = vsel %vm761, %v7544, 0
    %v7556 = vsel %vm761, %v7549, 0
    %7558 = vmatprep.subr.mxu0 0.0
    %7559 = vmatpush1.msra.mxu0 %v627
    %7560 = vmatprep.subr.mxu0 0.0
    %7561 = vmatpush1.msra.mxu0 %v628
    %7562 = vmatprep.subr.mxu0 0.0
    %7563 = vmatpush1.msra.mxu0 %v629
    %7564 = vmatprep.subr.mxu0 0.0
    %7565 = vmatpush1.msra.mxu0 %v630
    %7566 = vmatprep.subr.mxu0 0.0
    %7567 = vmatpush1.msra.mxu0 0.0
    %7568 = vmatprep.subr.mxu0 0.0
    %7569 = vmatpush1.msra.mxu0 0.0
    %7570 = vmatprep.subr.mxu0 0.0
    %7571 = vmatpush1.msra.mxu0 0.0
    %7572 = vmatprep.subr.mxu0 0.0
    %7573 = vmatpush1.msra.mxu0 0.0
    %7574 = vmatprep.subr.mxu0 0.0
    %7575 = vmatpush1.msra.mxu0 0.0
    %7576 = vmatprep.subr.mxu0 0.0
    %7577 = vmatpush1.msra.mxu0 0.0
    %7578 = vmatprep.subr.mxu0 0.0
    %7579 = vmatpush1.msra.mxu0 0.0
    %7580 = vmatprep.subr.mxu0 0.0
    %7581 = vmatpush1.msra.mxu0 0.0
    %7582 = vmatprep.subr.mxu0 0.0
    %7583 = vmatpush1.msra.mxu0 0.0
    %7584 = vmatprep.subr.mxu0 0.0
    %7585 = vmatpush1.msra.mxu0 0.0
    %7586 = vmatprep.subr.mxu0 0.0
    %7587 = vmatpush1.msra.mxu0 0.0
    %7588 = vmatprep.subr.mxu0 0.0
    %7589 = vmatpush1.msra.mxu0 0.0
    %7590 = vmatprep.subr.mxu0 0.0
    %7591 = vmatpush1.msra.mxu0 0.0
    %7592 = vmatprep.subr.mxu0 0.0
    %7593 = vmatpush1.msra.mxu0 0.0
    %7594 = vmatprep.subr.mxu0 0.0
    %7595 = vmatpush1.msra.mxu0 0.0
    %7596 = vmatprep.subr.mxu0 0.0
    %7597 = vmatpush1.msra.mxu0 0.0
    %7598 = vmatprep.subr.mxu0 0.0
    %7599 = vmatpush1.msra.mxu0 0.0
    %7600 = vmatprep.subr.mxu0 0.0
    %7601 = vmatpush1.msra.mxu0 0.0
    %7602 = vmatprep.subr.mxu0 0.0
    %7603 = vmatpush1.msra.mxu0 0.0
    %7604 = vmatprep.subr.mxu0 0.0
    %7605 = vmatpush1.msra.mxu0 0.0
    %7606 = vmatprep.subr.mxu0 0.0
    %7607 = vmatpush1.msra.mxu0 0.0
    %7608 = vmatprep.subr.mxu0 0.0
    %7609 = vmatpush1.msra.mxu0 0.0
    %7610 = vmatprep.subr.mxu0 0.0
    %7611 = vmatpush1.msra.mxu0 0.0
    %7612 = vmatprep.subr.mxu0 0.0
    %7613 = vmatpush1.msra.mxu0 0.0
    %7614 = vmatprep.subr.mxu0 0.0
    %7615 = vmatpush1.msra.mxu0 0.0
    %7616 = vmatprep.subr.mxu0 0.0
    %7617 = vmatpush1.msra.mxu0 0.0
    %7618 = vmatprep.subr.mxu0 0.0
    %7619 = vmatpush1.msra.mxu0 0.0
    %7620 = vmatprep.subr.mxu0 0.0
    %7621 = vmatpush1.msra.mxu0 0.0
    %7622 = vmatprep.mubr.f32.mxu0 0.0
    %7623 = vmatmul.mubr.f32.gmra.mrb[0].mxu0 %v7553
    %v7624 = vpop.f32.mrb[0].mxu0
    %v7625 = vadd.f32 0.0, %v7624
    %v7626 = vpop.f32.mrb[0].mxu0
    %7627 = vmatprep.mubr.f32.mxu0 0.0
    %7628 = vmatmul.mubr.f32.gmra.mrb[0].mxu0 %v7556
    %v7629 = vpop.f32.mrb[0].mxu0
    %v7630 = vadd.f32 0.0, %v7629
    %v7631 = vpop.f32.mrb[0].mxu0
    %7632 = vdwg.mxu0
    %7633 = vmatprep.subr.mxu0 0.0
    %7634 = vmatpush1.msra.mxu0 %v7625
    %7635 = vmatprep.subr.mxu0 0.0
    %7636 = vmatpush1.msra.mxu0 %v7630
    %7637 = vmatprep.subr.mxu0 0.0
    %7638 = vmatpush1.msra.mxu0 0.0
    %7639 = vmatprep.subr.mxu0 0.0
    %7640 = vmatpush1.msra.mxu0 0.0
    %7641 = vmatprep.subr.mxu0 0.0
    %7642 = vmatpush1.msra.mxu0 0.0
    %7643 = vmatprep.subr.mxu0 0.0
    %7644 = vmatpush1.msra.mxu0 0.0
    %7645 = vmatprep.subr.mxu0 0.0
    %7646 = vmatpush1.msra.mxu0 0.0
    %7647 = vmatprep.subr.mxu0 0.0
    %7648 = vmatpush1.msra.mxu0 0.0
    %7649 = vmatprep.subr.mxu0 0.0
    %7650 = vmatpush1.msra.mxu0 0.0
    %7651 = vmatprep.subr.mxu0 0.0
    %7652 = vmatpush1.msra.mxu0 0.0
    %7653 = vmatprep.subr.mxu0 0.0
    %7654 = vmatpush1.msra.mxu0 0.0
    %7655 = vmatprep.subr.mxu0 0.0
    %7656 = vmatpush1.msra.mxu0 0.0
    %7657 = vmatprep.subr.mxu0 0.0
    %7658 = vmatpush1.msra.mxu0 0.0
    %7659 = vmatprep.subr.mxu0 0.0
    %7660 = vmatpush1.msra.mxu0 0.0
    %7661 = vmatprep.subr.mxu0 0.0
    %7662 = vmatpush1.msra.mxu0 0.0
    %7663 = vmatprep.subr.mxu0 0.0
    %7664 = vmatpush1.msra.mxu0 0.0
    %7665 = vmatprep.subr.mxu0 0.0
    %7666 = vmatpush1.msra.mxu0 0.0
    %7667 = vmatprep.subr.mxu0 0.0
    %7668 = vmatpush1.msra.mxu0 0.0
    %7669 = vmatprep.subr.mxu0 0.0
    %7670 = vmatpush1.msra.mxu0 0.0
    %7671 = vmatprep.subr.mxu0 0.0
    %7672 = vmatpush1.msra.mxu0 0.0
    %7673 = vmatprep.subr.mxu0 0.0
    %7674 = vmatpush1.msra.mxu0 0.0
    %7675 = vmatprep.subr.mxu0 0.0
    %7676 = vmatpush1.msra.mxu0 0.0
    %7677 = vmatprep.subr.mxu0 0.0
    %7678 = vmatpush1.msra.mxu0 0.0
    %7679 = vmatprep.subr.mxu0 0.0
    %7680 = vmatpush1.msra.mxu0 0.0
    %7681 = vmatprep.subr.mxu0 0.0
    %7682 = vmatpush1.msra.mxu0 0.0
    %7683 = vmatprep.subr.mxu0 0.0
    %7684 = vmatpush1.msra.mxu0 0.0
    %7685 = vmatprep.subr.mxu0 0.0
    %7686 = vmatpush1.msra.mxu0 0.0
    %7687 = vmatprep.subr.mxu0 0.0
    %7688 = vmatpush1.msra.mxu0 0.0
    %7689 = vmatprep.subr.mxu0 0.0
    %7690 = vmatpush1.msra.mxu0 0.0
    %7691 = vmatprep.subr.mxu0 0.0
    %7692 = vmatpush1.msra.mxu0 0.0
    %7693 = vmatprep.subr.mxu0 0.0
    %7694 = vmatpush1.msra.mxu0 0.0
    %7695 = vmatprep.subr.mxu0 0.0
    %7696 = vmatpush1.msra.mxu0 0.0
    %7697 = vmatprep.mubr.f32.mxu0 0.0
    %7698 = vmatmul.mubr.f32.gmra.mrb[0].mxu0 %v2962
    %v7699 = vpop.f32.mrb[0].mxu0
    %v7700 = vadd.f32 0.0, %v7699
    %v7701 = vpop.f32.mrb[0].mxu0
    %7702 = vmatprep.mubr.f32.mxu0 0.0
    %7703 = vmatmul.mubr.f32.gmra.mrb[0].mxu0 %v2965
    %v7704 = vpop.f32.mrb[0].mxu0
    %v7705 = vadd.f32 0.0, %v7704
    %v7706 = vpop.f32.mrb[0].mxu0
    %7707 = vdwg.mxu0
    %v7708 = vsub.f32 %v7544, %v7700
    %v7709 = vsub.f32 %v7549, %v7705
    %v7710 = vmul.f32 %v7708, %v7708
    %v7711 = vmul.f32 %v7709, %v7709
    %v7713 = vsel %vm761, %v7710, 0
    %v7716 = vsel %vm761, %v7711, 0
    %7718 = vmatprep.subr.mxu0 0.0
    %7719 = vmatpush1.msra.mxu0 %v627
    %7720 = vmatprep.subr.mxu0 0.0
    %7721 = vmatpush1.msra.mxu0 %v628
    %7722 = vmatprep.subr.mxu0 0.0
    %7723 = vmatpush1.msra.mxu0 %v629
    %7724 = vmatprep.subr.mxu0 0.0
    %7725 = vmatpush1.msra.mxu0 %v630
    %7726 = vmatprep.subr.mxu0 0.0
    %7727 = vmatpush1.msra.mxu0 0.0
    %7728 = vmatprep.subr.mxu0 0.0
    %7729 = vmatpush1.msra.mxu0 0.0
    %7730 = vmatprep.subr.mxu0 0.0
    %7731 = vmatpush1.msra.mxu0 0.0
    %7732 = vmatprep.subr.mxu0 0.0
    %7733 = vmatpush1.msra.mxu0 0.0
    %7734 = vmatprep.subr.mxu0 0.0
    %7735 = vmatpush1.msra.mxu0 0.0
    %7736 = vmatprep.subr.mxu0 0.0
    %7737 = vmatpush1.msra.mxu0 0.0
    %7738 = vmatprep.subr.mxu0 0.0
    %7739 = vmatpush1.msra.mxu0 0.0
    %7740 = vmatprep.subr.mxu0 0.0
    %7741 = vmatpush1.msra.mxu0 0.0
    %7742 = vmatprep.subr.mxu0 0.0
    %7743 = vmatpush1.msra.mxu0 0.0
    %7744 = vmatprep.subr.mxu0 0.0
    %7745 = vmatpush1.msra.mxu0 0.0
    %7746 = vmatprep.subr.mxu0 0.0
    %7747 = vmatpush1.msra.mxu0 0.0
    %7748 = vmatprep.subr.mxu0 0.0
    %7749 = vmatpush1.msra.mxu0 0.0
    %7750 = vmatprep.subr.mxu0 0.0
    %7751 = vmatpush1.msra.mxu0 0.0
    %7752 = vmatprep.subr.mxu0 0.0
    %7753 = vmatpush1.msra.mxu0 0.0
    %7754 = vmatprep.subr.mxu0 0.0
    %7755 = vmatpush1.msra.mxu0 0.0
    %7756 = vmatprep.subr.mxu0 0.0
    %7757 = vmatpush1.msra.mxu0 0.0
    %7758 = vmatprep.subr.mxu0 0.0
    %7759 = vmatpush1.msra.mxu0 0.0
    %7760 = vmatprep.subr.mxu0 0.0
    %7761 = vmatpush1.msra.mxu0 0.0
    %7762 = vmatprep.subr.mxu0 0.0
    %7763 = vmatpush1.msra.mxu0 0.0
    %7764 = vmatprep.subr.mxu0 0.0
    %7765 = vmatpush1.msra.mxu0 0.0
    %7766 = vmatprep.subr.mxu0 0.0
    %7767 = vmatpush1.msra.mxu0 0.0
    %7768 = vmatprep.subr.mxu0 0.0
    %7769 = vmatpush1.msra.mxu0 0.0
    %7770 = vmatprep.subr.mxu0 0.0
    %7771 = vmatpush1.msra.mxu0 0.0
    %7772 = vmatprep.subr.mxu0 0.0
    %7773 = vmatpush1.msra.mxu0 0.0
    %7774 = vmatprep.subr.mxu0 0.0
    %7775 = vmatpush1.msra.mxu0 0.0
    %7776 = vmatprep.subr.mxu0 0.0
    %7777 = vmatpush1.msra.mxu0 0.0
    %7778 = vmatprep.subr.mxu0 0.0
    %7779 = vmatpush1.msra.mxu0 0.0
    %7780 = vmatprep.subr.mxu0 0.0
    %7781 = vmatpush1.msra.mxu0 0.0
    %7782 = vmatprep.mubr.f32.mxu0 0.0
    %7783 = vmatmul.mubr.f32.gmra.mrb[0].mxu0 %v7713
    %v7784 = vpop.f32.mrb[0].mxu0
    %v7785 = vadd.f32 0.0, %v7784
    %v7786 = vpop.f32.mrb[0].mxu0
    %7787 = vmatprep.mubr.f32.mxu0 0.0
    %7788 = vmatmul.mubr.f32.gmra.mrb[0].mxu0 %v7716
    %v7789 = vpop.f32.mrb[0].mxu0
    %v7790 = vadd.f32 0.0, %v7789
    %v7791 = vpop.f32.mrb[0].mxu0
    %7792 = vdwg.mxu0
    %7793 = vmatprep.subr.mxu0 0.0
    %7794 = vmatpush1.msra.mxu0 %v7785
    %7795 = vmatprep.subr.mxu0 0.0
    %7796 = vmatpush1.msra.mxu0 %v7790
    %7797 = vmatprep.subr.mxu0 0.0
    %7798 = vmatpush1.msra.mxu0 0.0
    %7799 = vmatprep.subr.mxu0 0.0
    %7800 = vmatpush1.msra.mxu0 0.0
    %7801 = vmatprep.subr.mxu0 0.0
    %7802 = vmatpush1.msra.mxu0 0.0
    %7803 = vmatprep.subr.mxu0 0.0
    %7804 = vmatpush1.msra.mxu0 0.0
    %7805 = vmatprep.subr.mxu0 0.0
    %7806 = vmatpush1.msra.mxu0 0.0
    %7807 = vmatprep.subr.mxu0 0.0
    %7808 = vmatpush1.msra.mxu0 0.0
    %7809 = vmatprep.subr.mxu0 0.0
    %7810 = vmatpush1.msra.mxu0 0.0
    %7811 = vmatprep.subr.mxu0 0.0
    %7812 = vmatpush1.msra.mxu0 0.0
    %7813 = vmatprep.subr.mxu0 0.0
    %7814 = vmatpush1.msra.mxu0 0.0
    %7815 = vmatprep.subr.mxu0 0.0
    %7816 = vmatpush1.msra.mxu0 0.0
    %7817 = vmatprep.subr.mxu0 0.0
    %7818 = vmatpush1.msra.mxu0 0.0
    %7819 = vmatprep.subr.mxu0 0.0
    %7820 = vmatpush1.msra.mxu0 0.0
    %7821 = vmatprep.subr.mxu0 0.0
    %7822 = vmatpush1.msra.mxu0 0.0
    %7823 = vmatprep.subr.mxu0 0.0
    %7824 = vmatpush1.msra.mxu0 0.0
    %7825 = vmatprep.subr.mxu0 0.0
    %7826 = vmatpush1.msra.mxu0 0.0
    %7827 = vmatprep.subr.mxu0 0.0
    %7828 = vmatpush1.msra.mxu0 0.0
    %7829 = vmatprep.subr.mxu0 0.0
    %7830 = vmatpush1.msra.mxu0 0.0
    %7831 = vmatprep.subr.mxu0 0.0
    %7832 = vmatpush1.msra.mxu0 0.0
    %7833 = vmatprep.subr.mxu0 0.0
    %7834 = vmatpush1.msra.mxu0 0.0
    %7835 = vmatprep.subr.mxu0 0.0
    %7836 = vmatpush1.msra.mxu0 0.0
    %7837 = vmatprep.subr.mxu0 0.0
    %7838 = vmatpush1.msra.mxu0 0.0
    %7839 = vmatprep.subr.mxu0 0.0
    %7840 = vmatpush1.msra.mxu0 0.0
    %7841 = vmatprep.subr.mxu0 0.0
    %7842 = vmatpush1.msra.mxu0 0.0
    %7843 = vmatprep.subr.mxu0 0.0
    %7844 = vmatpush1.msra.mxu0 0.0
    %7845 = vmatprep.subr.mxu0 0.0
    %7846 = vmatpush1.msra.mxu0 0.0
    %7847 = vmatprep.subr.mxu0 0.0
    %7848 = vmatpush1.msra.mxu0 0.0
    %7849 = vmatprep.subr.mxu0 0.0
    %7850 = vmatpush1.msra.mxu0 0.0
    %7851 = vmatprep.subr.mxu0 0.0
    %7852 = vmatpush1.msra.mxu0 0.0
    %7853 = vmatprep.subr.mxu0 0.0
    %7854 = vmatpush1.msra.mxu0 0.0
    %7855 = vmatprep.subr.mxu0 0.0
    %7856 = vmatpush1.msra.mxu0 0.0
    %7857 = vmatprep.mubr.f32.mxu0 0.0
    %7858 = vmatmul.mubr.f32.gmra.mrb[0].mxu0 %v2962
    %v7859 = vpop.f32.mrb[0].mxu0
    %v7860 = vadd.f32 1e-05, %v7859
    %v7861 = vpop.f32.mrb[0].mxu0
    %7862 = vmatprep.mubr.f32.mxu0 0.0
    %7863 = vmatmul.mubr.f32.gmra.mrb[0].mxu0 %v2965
    %v7864 = vpop.f32.mrb[0].mxu0
    %v7865 = vadd.f32 1e-05, %v7864
    %v7866 = vpop.f32.mrb[0].mxu0
    %7867 = vdwg.mxu0
    %v7868 = vrsqrt.pop %v7860
    %v7869 = vrsqrt.pop %v7865
    %v7870 = vmul.f32 %v7708, %v7868
    %v7871 = vmul.f32 %v7709, %v7869
    %v7872 = vld [vmem:[#allocation41] sm:$0x1]
    %v7874 = vlaneseq
    %v7875 = vshrl.u32 %v7874, 7
    %v7876 = vsub.s32 0, %v7875
    %v7877 = vrot.slane %v7872, %v7876
    %v7879 = vmul.f32 %v7870, %v7877
    %v7880 = vmul.f32 %v7871, %v7877
    %v7881 = vld [vmem:[#allocation43] sm:$0x1]
    %v7883 = vlaneseq
    %v7884 = vshrl.u32 %v7883, 7
    %v7885 = vsub.s32 0, %v7884
    %v7886 = vrot.slane %v7881, %v7885
    %v7888 = vadd.f32 %v7879, %v7886
    %v7889 = vadd.f32 %v7880, %v7886
    %v7890 = vmin.f32 %v7888, 20.0
    %v7891 = vmin.f32 %v7889, 20.0
    %v7892 = vmul.f32 %v7890, 1.442695
    %v7893 = vpow.pop %v7892
    %v7894 = vmul.f32 %v7891, 1.442695
    %v7895 = vpow.pop %v7894
    %v7896 = vadd.f32 %v7893, 2.0
    %v7897 = vadd.f32 %v7895, 2.0
    %v7898 = vmul.f32 %v7893, %v7896
    %v7899 = vmul.f32 %v7895, %v7897
    %v7900 = vadd.f32 %v7898, 2.0
    %v7901 = vadd.f32 %v7899, 2.0
    %v7902 = vrcp.pop %v7900
    %v7903 = vmul.f32 %v7898, %v7902
    %v7904 = vrcp.pop %v7901
    %v7905 = vmul.f32 %v7899, %v7904
    %v7906 = vmul.f32 %v7888, %v7903
    %v7907 = vmul.f32 %v7889, %v7905
    %v7908 = vld [vmem:[%s137] sm:$0xff]
    %v7909 = vld [vmem:[%s137 + $0x8] sm:$0xff]
    %v7910 = vld [vmem:[%s137 + $0x10] sm:$0xff]
    %v7911 = vld [vmem:[%s137 + $0x18] sm:$0xff]
    %v7912 = vld [vmem:[#allocation44] sm:$0x1]
    %v7914 = vlaneseq
    %v7915 = vshrl.u32 %v7914, 7
    %v7916 = vsub.s32 0, %v7915
    %v7917 = vrot.slane %v7912, %v7916
    %v7920 = vsel %vm761, %v7906, 0
    %v7923 = vsel %vm761, %v7907, 0
    %7925 = vmatprep.subr.mxu0 0.0
    %7926 = vmatpush1.msra.mxu0 %v7908
    %7927 = vmatprep.subr.mxu0 0.0
    %7928 = vmatpush1.msra.mxu0 %v7909
    %7929 = vmatprep.subr.mxu0 0.0
    %7930 = vmatpush1.msra.mxu0 %v7910
    %7931 = vmatprep.subr.mxu0 0.0
    %7932 = vmatpush1.msra.mxu0 %v7911
    %7933 = vmatprep.subr.mxu0 0.0
    %7934 = vmatpush1.msra.mxu0 0.0
    %7935 = vmatprep.subr.mxu0 0.0
    %7936 = vmatpush1.msra.mxu0 0.0
    %7937 = vmatprep.subr.mxu0 0.0
    %7938 = vmatpush1.msra.mxu0 0.0
    %7939 = vmatprep.subr.mxu0 0.0
    %7940 = vmatpush1.msra.mxu0 0.0
    %7941 = vmatprep.subr.mxu0 0.0
    %7942 = vmatpush1.msra.mxu0 0.0
    %7943 = vmatprep.subr.mxu0 0.0
    %7944 = vmatpush1.msra.mxu0 0.0
    %7945 = vmatprep.subr.mxu0 0.0
    %7946 = vmatpush1.msra.mxu0 0.0
    %7947 = vmatprep.subr.mxu0 0.0
    %7948 = vmatpush1.msra.mxu0 0.0
    %7949 = vmatprep.subr.mxu0 0.0
    %7950 = vmatpush1.msra.mxu0 0.0
    %7951 = vmatprep.subr.mxu0 0.0
    %7952 = vmatpush1.msra.mxu0 0.0
    %7953 = vmatprep.subr.mxu0 0.0
    %7954 = vmatpush1.msra.mxu0 0.0
    %7955 = vmatprep.subr.mxu0 0.0
    %7956 = vmatpush1.msra.mxu0 0.0
    %7957 = vmatprep.subr.mxu0 0.0
    %7958 = vmatpush1.msra.mxu0 0.0
    %7959 = vmatprep.subr.mxu0 0.0
    %7960 = vmatpush1.msra.mxu0 0.0
    %7961 = vmatprep.subr.mxu0 0.0
    %7962 = vmatpush1.msra.mxu0 0.0
    %7963 = vmatprep.subr.mxu0 0.0
    %7964 = vmatpush1.msra.mxu0 0.0
    %7965 = vmatprep.subr.mxu0 0.0
    %7966 = vmatpush1.msra.mxu0 0.0
    %7967 = vmatprep.subr.mxu0 0.0
    %7968 = vmatpush1.msra.mxu0 0.0
    %7969 = vmatprep.subr.mxu0 0.0
    %7970 = vmatpush1.msra.mxu0 0.0
    %7971 = vmatprep.subr.mxu0 0.0
    %7972 = vmatpush1.msra.mxu0 0.0
    %7973 = vmatprep.subr.mxu0 0.0
    %7974 = vmatpush1.msra.mxu0 0.0
    %7975 = vmatprep.subr.mxu0 0.0
    %7976 = vmatpush1.msra.mxu0 0.0
    %7977 = vmatprep.subr.mxu0 0.0
    %7978 = vmatpush1.msra.mxu0 0.0
    %7979 = vmatprep.subr.mxu0 0.0
    %7980 = vmatpush1.msra.mxu0 0.0
    %7981 = vmatprep.subr.mxu0 0.0
    %7982 = vmatpush1.msra.mxu0 0.0
    %7983 = vmatprep.subr.mxu0 0.0
    %7984 = vmatpush1.msra.mxu0 0.0
    %7985 = vmatprep.subr.mxu0 0.0
    %7986 = vmatpush1.msra.mxu0 0.0
    %7987 = vmatprep.subr.mxu0 0.0
    %7988 = vmatpush1.msra.mxu0 0.0
    %7989 = vmatprep.mubr.f32.mxu0 0.0
    %7990 = vmatmul.mubr.f32.gmra.mrb[0].mxu0 %v7920
    %v7991 = vpop.f32.mrb[0].mxu0
    %v7992 = vadd.f32 %v7917, %v7991
    %v7993 = vpop.f32.mrb[0].mxu0
    %7994 = vmatprep.mubr.f32.mxu0 0.0
    %7995 = vmatmul.mubr.f32.gmra.mrb[0].mxu0 %v7923
    %v7996 = vpop.f32.mrb[0].mxu0
    %v7997 = vadd.f32 %v7917, %v7996
    %v7998 = vpop.f32.mrb[0].mxu0
    %7999 = vdwg.mxu0
    %8000 = vst.msk [vmem:[#allocation46] sm:$0xff] %vm761, %v4735
    %8001 = vst.msk [vmem:[#allocation47] sm:$0xff] %vm761, %v6639
    %8002 = vst.msk [vmem:[#allocation47 + $0x8] sm:$0xff] %vm761, %v6640
    %8003 = vst.msk [vmem:[%s145] sm:$0xff] %vm659, %v7279
    %8004 = vst.msk [vmem:[%s147] sm:$0xff] %vm659, %v7992
    %8005 = vst.msk [vmem:[%s147 + $0x8] sm:$0xff] %vm659, %v7997
    // Predicated region
    $region394: #{forward.1} parent=1 // pred_check
      _
    $region395: #{forward.1} parent=1 // pred_check_branch
      %8007 = sbr.rel (0) target = $region397
    $region396: #{forward.1} parent=1 // pred_region
      %s8009 = ssub.s32 128, 128
      %8010 = vsyncadd [#allocation4], %s8009
      %s8012 = sshll.u32 [#allocation46], 4
      %s8013 = int_to_ptr.vmem [resolvable:$true] %s8012
      %8015 = dma.vmem_to_hbm [thread:$0]  %s8013, 128, %s141, [#allocation4]
    $region397: #{forward.1} parent=1 // pred_fallthru
      _
    // Predicated region
    $region398: #{forward.1} parent=1 // pred_check
      _
    $region399: #{forward.1} parent=1 // pred_check_branch
      %8017 = sbr.rel (0) target = $region401
    $region400: #{forward.1} parent=1 // pred_region
      %s8019 = ssub.s32 256, 256
      %8020 = vsyncadd [#allocation48], %s8019
      %s8021 = sshll.u32 [#allocation47], 4
      %s8022 = int_to_ptr.vmem [resolvable:$true] %s8021
      %8027 = dma.vmem_to_hbm [thread:$0]  %s8022, 256, %s143, [#allocation48], 128, 128, 8
    $region401: #{forward.1} parent=1 // pred_fallthru
      _
    // Predicated region
    $region402: #{forward.1} parent=1 // pred_check
      _
    $region403: #{forward.1} parent=1 // pred_check_branch
      %8029 = sbr.rel (0) target = $region405
    $region404: #{forward.1} parent=1 // pred_region
      _
    $region405: #{forward.1} parent=1 // pred_fallthru
      _
    // Predicated region
    $region406: #{forward.1} parent=1 // pred_check
      _
    $region407: #{forward.1} parent=1 // pred_check_branch
      %8031 = sbr.rel (0) target = $region409
    $region408: #{forward.1} parent=1 // pred_region
      _
    $region409: #{forward.1} parent=1 // pred_fallthru
      _
    // Predicated region
    $region410: #{forward.1} parent=1 // pred_check
      _
    $region411: #{forward.1} parent=1 // pred_check_branch
      %8033 = sbr.rel (0) target = $region413
    $region412: #{forward.1} parent=1 // pred_region
      %8034 = dma.done [#allocation4], 128
    $region413: #{forward.1} parent=1 // pred_fallthru
      _
    // Predicated region
    $region414: #{forward.1} parent=1 // pred_check
      _
    $region415: #{forward.1} parent=1 // pred_check_branch
      %8036 = sbr.rel (0) target = $region417
    $region416: #{forward.1} parent=1 // pred_region
      %8037 = dma.done [#allocation48], 256
    $region417: #{forward.1} parent=1 // pred_fallthru
      _
    // Predicated region
    $region418: #{forward.1} parent=1 // pred_check
      _
    $region419: #{forward.1} parent=1 // pred_check_branch
      %8039 = sbr.rel (0) target = $region421
    $region420: #{forward.1} parent=1 // pred_region
      _
    $region421: #{forward.1} parent=1 // pred_fallthru
      _
    // Predicated region
    $region422: #{forward.1} parent=1 // pred_check
      _
    $region423: #{forward.1} parent=1 // pred_check_branch
      %8041 = sbr.rel (0) target = $region425
    $region424: #{forward.1} parent=1 // pred_region
      _
    $region425: #{forward.1} parent=1 // pred_fallthru
      _
    %8042 = vsyncpa [#allocation3], 1
    %8043 = vsyncpa [#allocation6], 1
    %8044 = vsyncpa [#allocation9], 1
    %8045 = vsyncpa [#allocation12], 1
    %8046 = vsyncpa [#allocation15], 1
    %8047 = vsyncpa [#allocation18], 1
    %8048 = vsyncpa [#allocation21], 1
    %8049 = vsyncpa [#allocation24], 1
    %8050 = vsyncpa [#allocation27], 1
    %8051 = vsyncpa [#allocation30], 1
    %8052 = vsyncpa [#allocation33], 1
    %8053 = vsyncpa [#allocation36], 1
    %8054 = vsyncpa [#allocation39], 1
    %8055 = vsyncpa [#allocation42], 1
    %8056 = vsyncpa [#allocation45], 1
    %8057 = vsyncpa [#allocation4], 1
    %8058 = vsyncpa [#allocation48], 1

</llo_original>
